<compile_context>
chip_gen: v7x
topology: tpu7x:2x2x1
jax: 0.10.0
libtpu: 0.0.40
codegen_flags: <defaults>
</compile_context>

<pallas_src>
import functools

import jax
import jax.numpy as jnp
import numpy as np
from jax.experimental import pallas as pl
from jax.experimental.pallas import tpu as pltpu


def _round_up(v, m):
    return (v + m - 1) // m * m


# ----------------------------------------------------------------------------
# Fused ODEfunc kernel: GN1+LReLU -> conv1 -> GN2+LReLU -> conv2 -> GN3
# for one batch element, entirely in VMEM.
# ----------------------------------------------------------------------------
def _odefunc_kernel(x_ref, min_ref, mcol_ref, vec_ref, p_ref, w_ref, o_ref,
                    buf1, buf2, *, K, Wp, Lo, off2, lead, cg1, count, eps, slope):
    # x_ref   : (1, Lp, Cp)  spatially padded, channel-padded, row-flattened image
    # min_ref : (Lp, 1)      interior mask of the padded input layout
    # mcol_ref: (Lo, 1)      valid-column mask of the flat conv-output layout
    # vec_ref : (9, Cp)      [g1, b1, g2, b2, g3, b3, conv1_b, conv2_b, t*onehot_C]
    # p_ref   : (Cp, Cp)     group-membership projector / (H*W*Cg)
    # w_ref   : (2*K*K, Cp, Cp) per-tap weights (conv1 taps then conv2 taps)
    # o_ref   : (1, Lo, Cp)  flat conv-output layout (garbage cols zeroed)
    # buf1    : (Lp, Cp)     VMEM padded image for conv1
    # buf2    : (Lp+lead, Cp) VMEM padded image for conv2 (lead rows for alignment)
    v = vec_ref[...].astype(jnp.float32)
    g1, b1 = v[0:1], v[1:2]
    g2, b2 = v[2:3], v[3:4]
    g3, b3 = v[4:5], v[5:6]
    cb1, cb2 = v[6:7], v[7:8]
    tchan = v[8:9]
    m_in = min_ref[...]
    m_col = mcol_ref[...]
    inv_count = 1.0 / count

    def gn(x, g, b, act, add_time, mask):
        # x is exactly zero at every position/channel outside the GN support
        # (zero spatial padding, zeroed garbage columns, zero padded channels),
        # so plain sums over the whole block are the exact per-channel sums.
        s = jnp.sum(x, axis=0, keepdims=True)                       # (1, Cp)
        s2 = jnp.sum(x * x, axis=0, keepdims=True)                  # (1, Cp)
        if cg1:                                   # one channel per group (dim<=32)
            mean = s * inv_count
            ex2 = s2 * inv_count
        else:                                     # tiny (1,Cp)@(Cp,Cp) group sums
            mean = jnp.dot(s, p_ref[...], preferred_element_type=jnp.float32)
            ex2 = jnp.dot(s2, p_ref[...], preferred_element_type=jnp.float32)
        inv = jax.lax.rsqrt(ex2 - mean * mean + eps)
        # Padded channel slots keep gamma = beta = 0, so they normalize to 0.
        y = (x - mean) * inv * g + b
        if act:
            y = jnp.where(y >= 0.0, y, slope * y)                   # LeakyReLU
        if add_time:
            y = y + tchan                          # time channel at slot C
        return y * mask                            # re-zero pad / garbage slots

    def conv(buf, base, tap0, cbias):
        # 9 shifted (rows, Cp) @ (Cp, Cp) MXU dots over the flat padded image.
        acc = jnp.zeros((Lo, cbias.shape[1]), jnp.float32)
        for kh in range(K):
            for kw in range(K):
                lhs = buf[pl.ds(base + kh * Wp + kw, Lo), :]
                acc = acc + jnp.dot(lhs, w_ref[tap0 + kh * K + kw],
                                    preferred_element_type=jnp.float32)
        return acc + cbias

    # Stage 1: GN1 + LeakyReLU (+ time channel) on the padded input image.
    x = x_ref[0].astype(jnp.float32)
    buf1[...] = gn(x, g1, b1, act=True, add_time=True, mask=m_in)

    # Conv1; zero the flat-row garbage columns before GN2 stats.
    h1 = conv(buf1, 0, 0, cb1) * m_col

    # Stage 2: GN2 + LeakyReLU (+ time), stored shifted (sublane-aligned start)
    # into conv2's zero-initialized padded buffer: the zeroed garbage columns
    # land exactly on conv2's left/right padding columns.
    buf2[...] = jnp.zeros_like(buf2)
    buf2[pl.ds(off2, Lo), :] = gn(h1, g2, b2, act=True, add_time=True, mask=m_col)

    # Conv2, then GN3 (no activation, no time channel).
    h2 = conv(buf2, lead, K * K, cb2) * m_col
    o_ref[0] = gn(h2, g3, b3, act=False, add_time=False,
                  mask=m_col).astype(o_ref.dtype)


# ----------------------------------------------------------------------------
# ODEfunc forward (NCHW in / NCHW out, matching the PyTorch module).
# ----------------------------------------------------------------------------
def odefunc_forward(t, x, params, *, eps=1e-5, slope=0.2):
    N, C, H, W = x.shape
    G = min(32, C)
    assert C % G == 0, "GroupNorm requires C divisible by num_groups"
    Cg = C // G
    K, pad = 3, 1                       # ODEfunc's ConcatConv2d config
    assert K == 2 * pad + 1             # same-size conv: Ho == H, Wo == W
    Wp = W + 2 * pad
    Hp = H + 2 * pad + 1                # +1 overhang row for flat-row tap reads
    Lp = Hp * Wp
    Lo = H * Wp                         # conv output rows in flat-row form
    Cp = _round_up(C + 1, 8)            # +1 slot carries the concat'ed time ch
    off = pad * Wp + pad                # frame offset of the conv output block
    lead = (-off) % 8                   # extra lead rows -> aligned scratch store
    dtype = x.dtype

    # Single layout change at entry: NCHW -> padded, channel-padded flat rows.
    xt = jnp.transpose(x, (0, 2, 3, 1))                              # (N,H,W,C)
    xp = jnp.pad(xt, ((0, 0), (pad, pad + 1), (pad, pad), (0, Cp - C)))
    xf = xp.reshape(N, Lp, Cp)

    # Tiny constant side inputs (masks, projector, packed vectors, tap weights).
    r, c = np.arange(Hp), np.arange(Wp)
    interior = ((r[:, None] >= pad) & (r[:, None] < pad + H)
                & (c[None, :] >= pad) & (c[None, :] < pad + W))
    m_in = jnp.asarray(interior.reshape(Lp, 1).astype(np.float32))
    m_col = jnp.asarray(np.tile(np.arange(Wp) < W, H).reshape(Lo, 1)
                        .astype(np.float32))

    cid = np.arange(Cp)
    same = (((cid[:, None] // Cg) == (cid[None, :] // Cg))
            & (cid[:, None] < C) & (cid[None, :] < C))
    proj = jnp.asarray(same.astype(np.float32) / float(H * W * Cg))   # (Cp, Cp)

    def padc(v):  # gamma/beta/bias padded with ZEROS beyond the real channels
        return jnp.pad(v.astype(jnp.float32), (0, Cp - C))

    tchan = jnp.zeros((Cp,), jnp.float32).at[C].set(jnp.asarray(t, jnp.float32))
    vecs = jnp.stack([padc(params["gn1_w"]), padc(params["gn1_b"]),
                      padc(params["gn2_w"]), padc(params["gn2_b"]),
                      padc(params["gn3_w"]), padc(params["gn3_b"]),
                      padc(params["conv1_b"]), padc(params["conv2_b"]),
                      tchan], axis=0)                                 # (9, Cp)

    def taps(w):  # PyTorch OIHW (C, C+1, K, K); input channel 0 is the time ch
        wt = jnp.transpose(w.astype(jnp.float32), (2, 3, 1, 0)).reshape(
            K * K, C + 1, C)
        full = jnp.zeros((K * K, Cp, Cp), jnp.float32)
        full = full.at[:, :C, :C].set(wt[:, 1:, :])                   # x channels
        full = full.at[:, C, :C].set(wt[:, 0, :])                     # time ch
        return full

    wts = jnp.concatenate([taps(params["conv1_w"]), taps(params["conv2_w"])], 0)

    # VMEM budget: double-buffered I/O blocks + two scratch images + temporaries.
    per_step = 4 * (3 * Lp * Cp + 8 * Lo * Cp + 2 * (Lp + lead) * Cp
                    + 2 * K * K * Cp * Cp + 16 * Cp + Lp + Lo)
    vmem_limit = int(min(64 * 2 ** 20, max(32 * 2 ** 20, 6 * per_step)))

    out = pl.pallas_call(
        functools.partial(_odefunc_kernel, K=K, Wp=Wp, Lo=Lo,
                          off2=off + lead, lead=lead, cg1=(Cg == 1),
                          count=float(H * W * Cg), eps=eps, slope=slope),
        out_shape=jax.ShapeDtypeStruct((N, Lo, Cp), dtype),
        grid_spec=pltpu.PrefetchScalarGridSpec(
            num_scalar_prefetch=0,
            grid=(N,),
            in_specs=[
                pl.BlockSpec((1, Lp, Cp), lambda n: (n, 0, 0)),
                pl.BlockSpec((Lp, 1), lambda n: (0, 0)),
                pl.BlockSpec((Lo, 1), lambda n: (0, 0)),
                pl.BlockSpec((9, Cp), lambda n: (0, 0)),
                pl.BlockSpec((Cp, Cp), lambda n: (0, 0)),
                pl.BlockSpec((2 * K * K, Cp, Cp), lambda n: (0, 0, 0)),
            ],
            out_specs=pl.BlockSpec((1, Lo, Cp), lambda n: (n, 0, 0)),
            scratch_shapes=[pltpu.VMEM((Lp, Cp), jnp.float32),
                            pltpu.VMEM((Lp + lead, Cp), jnp.float32)],
        ),
        compiler_params=pltpu.CompilerParams(
            dimension_semantics=("parallel",),
            vmem_limit_bytes=vmem_limit),
    )(xf, m_in, m_col, vecs, proj, wts)

    # Drop garbage columns / padded channels; back to NCHW.
    out = out.reshape(N, H, Wp, Cp)[:, :, :W, :C]
    return jnp.transpose(out, (0, 3, 1, 2))
    # TODO(synk): the module's self.nfe call counter is Python-side host state.


# ----------------------------------------------------------------------------
# Pure-JAX reference (mirrors the PyTorch module exactly).
# ----------------------------------------------------------------------------
def _ref_group_norm(x, gamma, beta, G, eps=1e-5):
    N, C, H, W = x.shape
    xg = x.reshape(N, G, -1)
    mu = xg.mean(-1, keepdims=True)
    var = xg.var(-1, keepdims=True)
    xn = ((xg - mu) / jnp.sqrt(var + eps)).reshape(N, C, H, W)
    return xn * gamma.reshape(1, C, 1, 1) + beta.reshape(1, C, 1, 1)


def _ref_leaky(x, s=0.2):
    return jnp.where(x >= 0, x, s * x)


def _ref_concat_conv(t, x, w, b):
    N, C, H, W = x.shape
    tt = jnp.full((N, 1, H, W), t, x.dtype)
    ttx = jnp.concatenate([tt, x], axis=1)
    y = jax.lax.conv_general_dilated(
        ttx, w, window_strides=(1, 1), padding=((1, 1), (1, 1)),
        dimension_numbers=("NCHW", "OIHW", "NCHW"))
    return y + b.reshape(1, -1, 1, 1)


def _ref_odefunc(t, x, p, *, G):
    h = _ref_leaky(_ref_group_norm(x, p["gn1_w"], p["gn1_b"], G))
    h = _ref_concat_conv(t, h, p["conv1_w"], p["conv1_b"])
    h = _ref_leaky(_ref_group_norm(h, p["gn2_w"], p["gn2_b"], G))
    h = _ref_concat_conv(t, h, p["conv2_w"], p["conv2_b"])
    return _ref_group_norm(h, p["gn3_w"], p["gn3_b"], G)


if __name__ == "__main__":
    N, dim, H, W = 2, 4, 16, 16
    K = 3
    G = min(32, dim)

    key = jax.random.PRNGKey(0)
    ks = jax.random.split(key, 11)
    fan_in = (dim + 1) * K * K
    bound = 1.0 / np.sqrt(fan_in)

    def gn_params(kw_, kb_):
        return (1.0 + 0.1 * jax.random.normal(kw_, (dim,), jnp.float32),
                0.1 * jax.random.normal(kb_, (dim,), jnp.float32))

    def conv_params(kw_, kb_):
        return (jax.random.uniform(kw_, (dim, dim + 1, K, K), jnp.float32,
                                   -bound, bound),
                jax.random.uniform(kb_, (dim,), jnp.float32, -bound, bound))

    g1w, g1b = gn_params(ks[0], ks[1])
    c1w, c1b = conv_params(ks[2], ks[3])
    g2w, g2b = gn_params(ks[4], ks[5])
    c2w, c2b = conv_params(ks[6], ks[7])
    g3w, g3b = gn_params(ks[8], ks[9])
    params = {"gn1_w": g1w, "gn1_b": g1b, "conv1_w": c1w, "conv1_b": c1b,
              "gn2_w": g2w, "gn2_b": g2b, "conv2_w": c2w, "conv2_b": c2b,
              "gn3_w": g3w, "gn3_b": g3b}

    x = jax.random.normal(ks[10], (N, dim, H, W), jnp.float32)
    t = jnp.float32(0.5)

    fwd = jax.jit(odefunc_forward)
    out = fwd(t, x, params)
    jax.block_until_ready(out)
    assert out.shape == (N, dim, H, W), out.shape

    ref = _ref_odefunc(t, x, params, G=G)
    np.testing.assert_allclose(np.asarray(out), np.asarray(ref),
                               rtol=1e-4, atol=1e-4)
    print("KERNEL_OK")
</pallas_src>

<mosaic_0001>
module attributes {stable_mosaic.version = 11 : i64} {
  func.func @_odefunc_kernel(%arg0: i32, %arg1: memref<1x342x8xf32, #tpu.memory_space<vmem>>, %arg2: memref<342x1xf32, #tpu.memory_space<vmem>>, %arg3: memref<288x1xf32, #tpu.memory_space<vmem>>, %arg4: memref<9x8xf32, #tpu.memory_space<vmem>>, %arg5: memref<8x8xf32, #tpu.memory_space<vmem>>, %arg6: memref<18x8x8xf32, #tpu.memory_space<vmem>>, %arg7: memref<1x288x8xf32, #tpu.memory_space<vmem>>, %arg8: memref<342x8xf32, #tpu.memory_space<vmem>>, %arg9: memref<347x8xf32, #tpu.memory_space<vmem>>) attributes {dimension_semantics = [#tpu.dimension_semantics<parallel>], iteration_bounds = array<i64: 2>, scalar_prefetch = 0 : i64, scratch_operands = 2 : i64, tpu.core_type = #tpu.core_type<tc>, window_params = [{transform_indices = @transform_0, window_bounds = array<i64: 1, 342, 8>}, {pipeline_mode = #tpu.pipeline_mode<synchronous>, transform_indices = @transform_1, window_bounds = array<i64: 342, 1>}, {pipeline_mode = #tpu.pipeline_mode<synchronous>, transform_indices = @transform_2, window_bounds = array<i64: 288, 1>}, {pipeline_mode = #tpu.pipeline_mode<synchronous>, transform_indices = @transform_3, window_bounds = array<i64: 9, 8>}, {pipeline_mode = #tpu.pipeline_mode<synchronous>, transform_indices = @transform_4, window_bounds = array<i64: 8, 8>}, {pipeline_mode = #tpu.pipeline_mode<synchronous>, transform_indices = @transform_5, window_bounds = array<i64: 18, 8, 8>}, {transform_indices = @transform_6, window_bounds = array<i64: 1, 288, 8>}]} {
    %c0 = arith.constant 0 : index
    %c0_0 = arith.constant 0 : index
    %0 = vector.load %arg4[%c0, %c0_0] : memref<9x8xf32, #tpu.memory_space<vmem>>, vector<9x8xf32>
    %1 = vector.extract_strided_slice %0 {offsets = [0, 0], sizes = [1, 8], strides = [1, 1]} : vector<9x8xf32> to vector<1x8xf32>
    %2 = vector.extract_strided_slice %0 {offsets = [1, 0], sizes = [1, 8], strides = [1, 1]} : vector<9x8xf32> to vector<1x8xf32>
    %3 = vector.extract_strided_slice %0 {offsets = [2, 0], sizes = [1, 8], strides = [1, 1]} : vector<9x8xf32> to vector<1x8xf32>
    %4 = vector.extract_strided_slice %0 {offsets = [3, 0], sizes = [1, 8], strides = [1, 1]} : vector<9x8xf32> to vector<1x8xf32>
    %5 = vector.extract_strided_slice %0 {offsets = [4, 0], sizes = [1, 8], strides = [1, 1]} : vector<9x8xf32> to vector<1x8xf32>
    %6 = vector.extract_strided_slice %0 {offsets = [5, 0], sizes = [1, 8], strides = [1, 1]} : vector<9x8xf32> to vector<1x8xf32>
    %7 = vector.extract_strided_slice %0 {offsets = [6, 0], sizes = [1, 8], strides = [1, 1]} : vector<9x8xf32> to vector<1x8xf32>
    %8 = vector.extract_strided_slice %0 {offsets = [7, 0], sizes = [1, 8], strides = [1, 1]} : vector<9x8xf32> to vector<1x8xf32>
    %9 = vector.extract_strided_slice %0 {offsets = [8, 0], sizes = [1, 8], strides = [1, 1]} : vector<9x8xf32> to vector<1x8xf32>
    %c0_1 = arith.constant 0 : index
    %c0_2 = arith.constant 0 : index
    %10 = vector.load %arg2[%c0_1, %c0_2] : memref<342x1xf32, #tpu.memory_space<vmem>>, vector<342x1xf32>
    %c0_3 = arith.constant 0 : index
    %c0_4 = arith.constant 0 : index
    %11 = vector.load %arg3[%c0_3, %c0_4] : memref<288x1xf32, #tpu.memory_space<vmem>>, vector<288x1xf32>
    %c0_5 = arith.constant 0 : index
    %c0_6 = arith.constant 0 : index
    %c0_7 = arith.constant 0 : index
    %12 = vector.load %arg1[%c0_5, %c0_6, %c0_7] : memref<1x342x8xf32, #tpu.memory_space<vmem>>, vector<1x342x8xf32>
    %13 = vector.shape_cast %12 : vector<1x342x8xf32> to vector<342x8xf32>
    %cst = arith.constant dense<0.000000e+00> : vector<8xf32>
    %14 = vector.multi_reduction <add>, %13, %cst [0] : vector<342x8xf32> to vector<8xf32>
    %15 = vector.shape_cast %14 : vector<8xf32> to vector<1x8xf32>
    %16 = arith.mulf %13, %13 : vector<342x8xf32>
    %cst_8 = arith.constant dense<0.000000e+00> : vector<8xf32>
    %17 = vector.multi_reduction <add>, %16, %cst_8 [0] : vector<342x8xf32> to vector<8xf32>
    %18 = vector.shape_cast %17 : vector<8xf32> to vector<1x8xf32>
    %cst_9 = arith.constant 3.906250e-03 : f32
    %19 = vector.broadcast %cst_9 : f32 to vector<1x8xf32>
    %20 = arith.mulf %15, %19 : vector<1x8xf32>
    %cst_10 = arith.constant 3.906250e-03 : f32
    %21 = vector.broadcast %cst_10 : f32 to vector<1x8xf32>
    %22 = arith.mulf %18, %21 : vector<1x8xf32>
    %23 = arith.mulf %20, %20 : vector<1x8xf32>
    %24 = arith.subf %22, %23 : vector<1x8xf32>
    %cst_11 = arith.constant 9.99999974E-6 : f32
    %25 = vector.broadcast %cst_11 : f32 to vector<1x8xf32>
    %26 = arith.addf %24, %25 : vector<1x8xf32>
    %27 = math.rsqrt %26 : vector<1x8xf32>
    %28 = vector.broadcast %20 : vector<1x8xf32> to vector<342x8xf32>
    %29 = arith.subf %13, %28 : vector<342x8xf32>
    %30 = vector.broadcast %27 : vector<1x8xf32> to vector<342x8xf32>
    %31 = arith.mulf %29, %30 : vector<342x8xf32>
    %32 = vector.broadcast %1 : vector<1x8xf32> to vector<342x8xf32>
    %33 = arith.mulf %31, %32 : vector<342x8xf32>
    %34 = vector.broadcast %2 : vector<1x8xf32> to vector<342x8xf32>
    %35 = arith.addf %33, %34 : vector<342x8xf32>
    %cst_12 = arith.constant 0.000000e+00 : f32
    %36 = vector.broadcast %cst_12 : f32 to vector<342x8xf32>
    %37 = arith.cmpf oge, %35, %36 : vector<342x8xf32>
    %cst_13 = arith.constant 2.000000e-01 : f32
    %38 = vector.broadcast %cst_13 : f32 to vector<342x8xf32>
    %39 = arith.mulf %38, %35 : vector<342x8xf32>
    %40 = arith.select %37, %35, %39 : vector<342x8xi1>, vector<342x8xf32>
    %41 = vector.broadcast %9 : vector<1x8xf32> to vector<342x8xf32>
    %42 = arith.addf %40, %41 : vector<342x8xf32>
    %43 = vector.broadcast %10 : vector<342x1xf32> to vector<342x8xf32>
    %44 = arith.mulf %42, %43 : vector<342x8xf32>
    %c0_14 = arith.constant 0 : index
    %c0_15 = arith.constant 0 : index
    %45 = vector.load %arg8[%c0_14, %c0_15] : memref<342x8xf32, #tpu.memory_space<vmem>>, vector<342x8xf32>
    tpu.vector_store %arg8[%c0_14, %c0_15], %44 {strides = array<i32>} : memref<342x8xf32, #tpu.memory_space<vmem>>, vector<342x8xf32>,
    %cst_16 = arith.constant 0.000000e+00 : f32
    %46 = vector.broadcast %cst_16 : f32 to vector<288x8xf32>
    %c0_17 = arith.constant 0 : index
    %c0_18 = arith.constant 0 : index
    %47 = vector.load %arg8[%c0_17, %c0_18] : memref<342x8xf32, #tpu.memory_space<vmem>>, vector<288x8xf32>
    %c0_19 = arith.constant 0 : index
    %c0_20 = arith.constant 0 : index
    %c0_21 = arith.constant 0 : index
    %48 = vector.load %arg6[%c0_19, %c0_20, %c0_21] : memref<18x8x8xf32, #tpu.memory_space<vmem>>, vector<1x8x8xf32>
    %49 = vector.shape_cast %48 : vector<1x8x8xf32> to vector<8x8xf32>
    %cst_22 = arith.constant dense<0.000000e+00> : vector<288x8xf32>
    %50 = tpu.matmul %47, %49, %cst_22 {dimension_numbers = #tpu.dot_dimension_numbers<[1], [0], [0], [1], [0, 0, 1, 1], [], []>} : vector<288x8xf32>, vector<8x8xf32>, vector<288x8xf32> -> vector<288x8xf32>
    %51 = arith.addf %46, %50 : vector<288x8xf32>
    %c1 = arith.constant 1 : index
    %c0_23 = arith.constant 0 : index
    %52 = vector.load %arg8[%c1, %c0_23] : memref<342x8xf32, #tpu.memory_space<vmem>>, vector<288x8xf32>
    %c1_24 = arith.constant 1 : index
    %c0_25 = arith.constant 0 : index
    %c0_26 = arith.constant 0 : index
    %53 = vector.load %arg6[%c1_24, %c0_25, %c0_26] : memref<18x8x8xf32, #tpu.memory_space<vmem>>, vector<1x8x8xf32>
    %54 = vector.shape_cast %53 : vector<1x8x8xf32> to vector<8x8xf32>
    %cst_27 = arith.constant dense<0.000000e+00> : vector<288x8xf32>
    %55 = tpu.matmul %52, %54, %cst_27 {dimension_numbers = #tpu.dot_dimension_numbers<[1], [0], [0], [1], [0, 0, 1, 1], [], []>} : vector<288x8xf32>, vector<8x8xf32>, vector<288x8xf32> -> vector<288x8xf32>
    %56 = arith.addf %51, %55 : vector<288x8xf32>
    %c2 = arith.constant 2 : index
    %c0_28 = arith.constant 0 : index
    %57 = vector.load %arg8[%c2, %c0_28] : memref<342x8xf32, #tpu.memory_space<vmem>>, vector<288x8xf32>
    %c2_29 = arith.constant 2 : index
    %c0_30 = arith.constant 0 : index
    %c0_31 = arith.constant 0 : index
    %58 = vector.load %arg6[%c2_29, %c0_30, %c0_31] : memref<18x8x8xf32, #tpu.memory_space<vmem>>, vector<1x8x8xf32>
    %59 = vector.shape_cast %58 : vector<1x8x8xf32> to vector<8x8xf32>
    %cst_32 = arith.constant dense<0.000000e+00> : vector<288x8xf32>
    %60 = tpu.matmul %57, %59, %cst_32 {dimension_numbers = #tpu.dot_dimension_numbers<[1], [0], [0], [1], [0, 0, 1, 1], [], []>} : vector<288x8xf32>, vector<8x8xf32>, vector<288x8xf32> -> vector<288x8xf32>
    %61 = arith.addf %56, %60 : vector<288x8xf32>
    %c18 = arith.constant 18 : index
    %c0_33 = arith.constant 0 : index
    %62 = vector.load %arg8[%c18, %c0_33] : memref<342x8xf32, #tpu.memory_space<vmem>>, vector<288x8xf32>
    %c3 = arith.constant 3 : index
    %c0_34 = arith.constant 0 : index
    %c0_35 = arith.constant 0 : index
    %63 = vector.load %arg6[%c3, %c0_34, %c0_35] : memref<18x8x8xf32, #tpu.memory_space<vmem>>, vector<1x8x8xf32>
    %64 = vector.shape_cast %63 : vector<1x8x8xf32> to vector<8x8xf32>
    %cst_36 = arith.constant dense<0.000000e+00> : vector<288x8xf32>
    %65 = tpu.matmul %62, %64, %cst_36 {dimension_numbers = #tpu.dot_dimension_numbers<[1], [0], [0], [1], [0, 0, 1, 1], [], []>} : vector<288x8xf32>, vector<8x8xf32>, vector<288x8xf32> -> vector<288x8xf32>
    %66 = arith.addf %61, %65 : vector<288x8xf32>
    %c19 = arith.constant 19 : index
    %c0_37 = arith.constant 0 : index
    %67 = vector.load %arg8[%c19, %c0_37] : memref<342x8xf32, #tpu.memory_space<vmem>>, vector<288x8xf32>
    %c4 = arith.constant 4 : index
    %c0_38 = arith.constant 0 : index
    %c0_39 = arith.constant 0 : index
    %68 = vector.load %arg6[%c4, %c0_38, %c0_39] : memref<18x8x8xf32, #tpu.memory_space<vmem>>, vector<1x8x8xf32>
    %69 = vector.shape_cast %68 : vector<1x8x8xf32> to vector<8x8xf32>
    %cst_40 = arith.constant dense<0.000000e+00> : vector<288x8xf32>
    %70 = tpu.matmul %67, %69, %cst_40 {dimension_numbers = #tpu.dot_dimension_numbers<[1], [0], [0], [1], [0, 0, 1, 1], [], []>} : vector<288x8xf32>, vector<8x8xf32>, vector<288x8xf32> -> vector<288x8xf32>
    %71 = arith.addf %66, %70 : vector<288x8xf32>
    %c20 = arith.constant 20 : index
    %c0_41 = arith.constant 0 : index
    %72 = vector.load %arg8[%c20, %c0_41] : memref<342x8xf32, #tpu.memory_space<vmem>>, vector<288x8xf32>
    %c5 = arith.constant 5 : index
    %c0_42 = arith.constant 0 : index
    %c0_43 = arith.constant 0 : index
    %73 = vector.load %arg6[%c5, %c0_42, %c0_43] : memref<18x8x8xf32, #tpu.memory_space<vmem>>, vector<1x8x8xf32>
    %74 = vector.shape_cast %73 : vector<1x8x8xf32> to vector<8x8xf32>
    %cst_44 = arith.constant dense<0.000000e+00> : vector<288x8xf32>
    %75 = tpu.matmul %72, %74, %cst_44 {dimension_numbers = #tpu.dot_dimension_numbers<[1], [0], [0], [1], [0, 0, 1, 1], [], []>} : vector<288x8xf32>, vector<8x8xf32>, vector<288x8xf32> -> vector<288x8xf32>
    %76 = arith.addf %71, %75 : vector<288x8xf32>
    %c36 = arith.constant 36 : index
    %c0_45 = arith.constant 0 : index
    %77 = vector.load %arg8[%c36, %c0_45] : memref<342x8xf32, #tpu.memory_space<vmem>>, vector<288x8xf32>
    %c6 = arith.constant 6 : index
    %c0_46 = arith.constant 0 : index
    %c0_47 = arith.constant 0 : index
    %78 = vector.load %arg6[%c6, %c0_46, %c0_47] : memref<18x8x8xf32, #tpu.memory_space<vmem>>, vector<1x8x8xf32>
    %79 = vector.shape_cast %78 : vector<1x8x8xf32> to vector<8x8xf32>
    %cst_48 = arith.constant dense<0.000000e+00> : vector<288x8xf32>
    %80 = tpu.matmul %77, %79, %cst_48 {dimension_numbers = #tpu.dot_dimension_numbers<[1], [0], [0], [1], [0, 0, 1, 1], [], []>} : vector<288x8xf32>, vector<8x8xf32>, vector<288x8xf32> -> vector<288x8xf32>
    %81 = arith.addf %76, %80 : vector<288x8xf32>
    %c37 = arith.constant 37 : index
    %c0_49 = arith.constant 0 : index
    %82 = vector.load %arg8[%c37, %c0_49] : memref<342x8xf32, #tpu.memory_space<vmem>>, vector<288x8xf32>
    %c7 = arith.constant 7 : index
    %c0_50 = arith.constant 0 : index
    %c0_51 = arith.constant 0 : index
    %83 = vector.load %arg6[%c7, %c0_50, %c0_51] : memref<18x8x8xf32, #tpu.memory_space<vmem>>, vector<1x8x8xf32>
    %84 = vector.shape_cast %83 : vector<1x8x8xf32> to vector<8x8xf32>
    %cst_52 = arith.constant dense<0.000000e+00> : vector<288x8xf32>
    %85 = tpu.matmul %82, %84, %cst_52 {dimension_numbers = #tpu.dot_dimension_numbers<[1], [0], [0], [1], [0, 0, 1, 1], [], []>} : vector<288x8xf32>, vector<8x8xf32>, vector<288x8xf32> -> vector<288x8xf32>
    %86 = arith.addf %81, %85 : vector<288x8xf32>
    %c38 = arith.constant 38 : index
    %c0_53 = arith.constant 0 : index
    %87 = vector.load %arg8[%c38, %c0_53] : memref<342x8xf32, #tpu.memory_space<vmem>>, vector<288x8xf32>
    %c8 = arith.constant 8 : index
    %c0_54 = arith.constant 0 : index
    %c0_55 = arith.constant 0 : index
    %88 = vector.load %arg6[%c8, %c0_54, %c0_55] : memref<18x8x8xf32, #tpu.memory_space<vmem>>, vector<1x8x8xf32>
    %89 = vector.shape_cast %88 : vector<1x8x8xf32> to vector<8x8xf32>
    %cst_56 = arith.constant dense<0.000000e+00> : vector<288x8xf32>
    %90 = tpu.matmul %87, %89, %cst_56 {dimension_numbers = #tpu.dot_dimension_numbers<[1], [0], [0], [1], [0, 0, 1, 1], [], []>} : vector<288x8xf32>, vector<8x8xf32>, vector<288x8xf32> -> vector<288x8xf32>
    %91 = arith.addf %86, %90 : vector<288x8xf32>
    %92 = vector.broadcast %7 : vector<1x8xf32> to vector<288x8xf32>
    %93 = arith.addf %91, %92 : vector<288x8xf32>
    %94 = vector.broadcast %11 : vector<288x1xf32> to vector<288x8xf32>
    %95 = arith.mulf %93, %94 : vector<288x8xf32>
    %cst_57 = arith.constant 0.000000e+00 : f32
    %96 = vector.broadcast %cst_57 : f32 to vector<347x8xf32>
    %c0_58 = arith.constant 0 : index
    %c0_59 = arith.constant 0 : index
    %97 = vector.load %arg9[%c0_58, %c0_59] : memref<347x8xf32, #tpu.memory_space<vmem>>, vector<347x8xf32>
    tpu.vector_store %arg9[%c0_58, %c0_59], %96 {strides = array<i32>} : memref<347x8xf32, #tpu.memory_space<vmem>>, vector<347x8xf32>,
    %cst_60 = arith.constant dense<0.000000e+00> : vector<8xf32>
    %98 = vector.multi_reduction <add>, %95, %cst_60 [0] : vector<288x8xf32> to vector<8xf32>
    %99 = vector.shape_cast %98 : vector<8xf32> to vector<1x8xf32>
    %100 = arith.mulf %95, %95 : vector<288x8xf32>
    %cst_61 = arith.constant dense<0.000000e+00> : vector<8xf32>
    %101 = vector.multi_reduction <add>, %100, %cst_61 [0] : vector<288x8xf32> to vector<8xf32>
    %102 = vector.shape_cast %101 : vector<8xf32> to vector<1x8xf32>
    %cst_62 = arith.constant 3.906250e-03 : f32
    %103 = vector.broadcast %cst_62 : f32 to vector<1x8xf32>
    %104 = arith.mulf %99, %103 : vector<1x8xf32>
    %cst_63 = arith.constant 3.906250e-03 : f32
    %105 = vector.broadcast %cst_63 : f32 to vector<1x8xf32>
    %106 = arith.mulf %102, %105 : vector<1x8xf32>
    %107 = arith.mulf %104, %104 : vector<1x8xf32>
    %108 = arith.subf %106, %107 : vector<1x8xf32>
    %cst_64 = arith.constant 9.99999974E-6 : f32
    %109 = vector.broadcast %cst_64 : f32 to vector<1x8xf32>
    %110 = arith.addf %108, %109 : vector<1x8xf32>
    %111 = math.rsqrt %110 : vector<1x8xf32>
    %112 = vector.broadcast %104 : vector<1x8xf32> to vector<288x8xf32>
    %113 = arith.subf %95, %112 : vector<288x8xf32>
    %114 = vector.broadcast %111 : vector<1x8xf32> to vector<288x8xf32>
    %115 = arith.mulf %113, %114 : vector<288x8xf32>
    %116 = vector.broadcast %3 : vector<1x8xf32> to vector<288x8xf32>
    %117 = arith.mulf %115, %116 : vector<288x8xf32>
    %118 = vector.broadcast %4 : vector<1x8xf32> to vector<288x8xf32>
    %119 = arith.addf %117, %118 : vector<288x8xf32>
    %cst_65 = arith.constant 0.000000e+00 : f32
    %120 = vector.broadcast %cst_65 : f32 to vector<288x8xf32>
    %121 = arith.cmpf oge, %119, %120 : vector<288x8xf32>
    %cst_66 = arith.constant 2.000000e-01 : f32
    %122 = vector.broadcast %cst_66 : f32 to vector<288x8xf32>
    %123 = arith.mulf %122, %119 : vector<288x8xf32>
    %124 = arith.select %121, %119, %123 : vector<288x8xi1>, vector<288x8xf32>
    %125 = vector.broadcast %9 : vector<1x8xf32> to vector<288x8xf32>
    %126 = arith.addf %124, %125 : vector<288x8xf32>
    %127 = vector.broadcast %11 : vector<288x1xf32> to vector<288x8xf32>
    %128 = arith.mulf %126, %127 : vector<288x8xf32>
    %c24 = arith.constant 24 : index
    %c0_67 = arith.constant 0 : index
    %129 = vector.load %arg9[%c24, %c0_67] : memref<347x8xf32, #tpu.memory_space<vmem>>, vector<288x8xf32>
    tpu.vector_store %arg9[%c24, %c0_67], %128 {strides = array<i32>} : memref<347x8xf32, #tpu.memory_space<vmem>>, vector<288x8xf32>,
    %cst_68 = arith.constant 0.000000e+00 : f32
    %130 = vector.broadcast %cst_68 : f32 to vector<288x8xf32>
    %c5_69 = arith.constant 5 : index
    %c0_70 = arith.constant 0 : index
    %131 = vector.load %arg9[%c5_69, %c0_70] : memref<347x8xf32, #tpu.memory_space<vmem>>, vector<288x8xf32>
    %c9 = arith.constant 9 : index
    %c0_71 = arith.constant 0 : index
    %c0_72 = arith.constant 0 : index
    %132 = vector.load %arg6[%c9, %c0_71, %c0_72] : memref<18x8x8xf32, #tpu.memory_space<vmem>>, vector<1x8x8xf32>
    %133 = vector.shape_cast %132 : vector<1x8x8xf32> to vector<8x8xf32>
    %cst_73 = arith.constant dense<0.000000e+00> : vector<288x8xf32>
    %134 = tpu.matmul %131, %133, %cst_73 {dimension_numbers = #tpu.dot_dimension_numbers<[1], [0], [0], [1], [0, 0, 1, 1], [], []>} : vector<288x8xf32>, vector<8x8xf32>, vector<288x8xf32> -> vector<288x8xf32>
    %135 = arith.addf %130, %134 : vector<288x8xf32>
    %c6_74 = arith.constant 6 : index
    %c0_75 = arith.constant 0 : index
    %136 = vector.load %arg9[%c6_74, %c0_75] : memref<347x8xf32, #tpu.memory_space<vmem>>, vector<288x8xf32>
    %c10 = arith.constant 10 : index
    %c0_76 = arith.constant 0 : index
    %c0_77 = arith.constant 0 : index
    %137 = vector.load %arg6[%c10, %c0_76, %c0_77] : memref<18x8x8xf32, #tpu.memory_space<vmem>>, vector<1x8x8xf32>
    %138 = vector.shape_cast %137 : vector<1x8x8xf32> to vector<8x8xf32>
    %cst_78 = arith.constant dense<0.000000e+00> : vector<288x8xf32>
    %139 = tpu.matmul %136, %138, %cst_78 {dimension_numbers = #tpu.dot_dimension_numbers<[1], [0], [0], [1], [0, 0, 1, 1], [], []>} : vector<288x8xf32>, vector<8x8xf32>, vector<288x8xf32> -> vector<288x8xf32>
    %140 = arith.addf %135, %139 : vector<288x8xf32>
    %c7_79 = arith.constant 7 : index
    %c0_80 = arith.constant 0 : index
    %141 = vector.load %arg9[%c7_79, %c0_80] : memref<347x8xf32, #tpu.memory_space<vmem>>, vector<288x8xf32>
    %c11 = arith.constant 11 : index
    %c0_81 = arith.constant 0 : index
    %c0_82 = arith.constant 0 : index
    %142 = vector.load %arg6[%c11, %c0_81, %c0_82] : memref<18x8x8xf32, #tpu.memory_space<vmem>>, vector<1x8x8xf32>
    %143 = vector.shape_cast %142 : vector<1x8x8xf32> to vector<8x8xf32>
    %cst_83 = arith.constant dense<0.000000e+00> : vector<288x8xf32>
    %144 = tpu.matmul %141, %143, %cst_83 {dimension_numbers = #tpu.dot_dimension_numbers<[1], [0], [0], [1], [0, 0, 1, 1], [], []>} : vector<288x8xf32>, vector<8x8xf32>, vector<288x8xf32> -> vector<288x8xf32>
    %145 = arith.addf %140, %144 : vector<288x8xf32>
    %c23 = arith.constant 23 : index
    %c0_84 = arith.constant 0 : index
    %146 = vector.load %arg9[%c23, %c0_84] : memref<347x8xf32, #tpu.memory_space<vmem>>, vector<288x8xf32>
    %c12 = arith.constant 12 : index
    %c0_85 = arith.constant 0 : index
    %c0_86 = arith.constant 0 : index
    %147 = vector.load %arg6[%c12, %c0_85, %c0_86] : memref<18x8x8xf32, #tpu.memory_space<vmem>>, vector<1x8x8xf32>
    %148 = vector.shape_cast %147 : vector<1x8x8xf32> to vector<8x8xf32>
    %cst_87 = arith.constant dense<0.000000e+00> : vector<288x8xf32>
    %149 = tpu.matmul %146, %148, %cst_87 {dimension_numbers = #tpu.dot_dimension_numbers<[1], [0], [0], [1], [0, 0, 1, 1], [], []>} : vector<288x8xf32>, vector<8x8xf32>, vector<288x8xf32> -> vector<288x8xf32>
    %150 = arith.addf %145, %149 : vector<288x8xf32>
    %c24_88 = arith.constant 24 : index
    %c0_89 = arith.constant 0 : index
    %151 = vector.load %arg9[%c24_88, %c0_89] : memref<347x8xf32, #tpu.memory_space<vmem>>, vector<288x8xf32>
    %c13 = arith.constant 13 : index
    %c0_90 = arith.constant 0 : index
    %c0_91 = arith.constant 0 : index
    %152 = vector.load %arg6[%c13, %c0_90, %c0_91] : memref<18x8x8xf32, #tpu.memory_space<vmem>>, vector<1x8x8xf32>
    %153 = vector.shape_cast %152 : vector<1x8x8xf32> to vector<8x8xf32>
    %cst_92 = arith.constant dense<0.000000e+00> : vector<288x8xf32>
    %154 = tpu.matmul %151, %153, %cst_92 {dimension_numbers = #tpu.dot_dimension_numbers<[1], [0], [0], [1], [0, 0, 1, 1], [], []>} : vector<288x8xf32>, vector<8x8xf32>, vector<288x8xf32> -> vector<288x8xf32>
    %155 = arith.addf %150, %154 : vector<288x8xf32>
    %c25 = arith.constant 25 : index
    %c0_93 = arith.constant 0 : index
    %156 = vector.load %arg9[%c25, %c0_93] : memref<347x8xf32, #tpu.memory_space<vmem>>, vector<288x8xf32>
    %c14 = arith.constant 14 : index
    %c0_94 = arith.constant 0 : index
    %c0_95 = arith.constant 0 : index
    %157 = vector.load %arg6[%c14, %c0_94, %c0_95] : memref<18x8x8xf32, #tpu.memory_space<vmem>>, vector<1x8x8xf32>
    %158 = vector.shape_cast %157 : vector<1x8x8xf32> to vector<8x8xf32>
    %cst_96 = arith.constant dense<0.000000e+00> : vector<288x8xf32>
    %159 = tpu.matmul %156, %158, %cst_96 {dimension_numbers = #tpu.dot_dimension_numbers<[1], [0], [0], [1], [0, 0, 1, 1], [], []>} : vector<288x8xf32>, vector<8x8xf32>, vector<288x8xf32> -> vector<288x8xf32>
    %160 = arith.addf %155, %159 : vector<288x8xf32>
    %c41 = arith.constant 41 : index
    %c0_97 = arith.constant 0 : index
    %161 = vector.load %arg9[%c41, %c0_97] : memref<347x8xf32, #tpu.memory_space<vmem>>, vector<288x8xf32>
    %c15 = arith.constant 15 : index
    %c0_98 = arith.constant 0 : index
    %c0_99 = arith.constant 0 : index
    %162 = vector.load %arg6[%c15, %c0_98, %c0_99] : memref<18x8x8xf32, #tpu.memory_space<vmem>>, vector<1x8x8xf32>
    %163 = vector.shape_cast %162 : vector<1x8x8xf32> to vector<8x8xf32>
    %cst_100 = arith.constant dense<0.000000e+00> : vector<288x8xf32>
    %164 = tpu.matmul %161, %163, %cst_100 {dimension_numbers = #tpu.dot_dimension_numbers<[1], [0], [0], [1], [0, 0, 1, 1], [], []>} : vector<288x8xf32>, vector<8x8xf32>, vector<288x8xf32> -> vector<288x8xf32>
    %165 = arith.addf %160, %164 : vector<288x8xf32>
    %c42 = arith.constant 42 : index
    %c0_101 = arith.constant 0 : index
    %166 = vector.load %arg9[%c42, %c0_101] : memref<347x8xf32, #tpu.memory_space<vmem>>, vector<288x8xf32>
    %c16 = arith.constant 16 : index
    %c0_102 = arith.constant 0 : index
    %c0_103 = arith.constant 0 : index
    %167 = vector.load %arg6[%c16, %c0_102, %c0_103] : memref<18x8x8xf32, #tpu.memory_space<vmem>>, vector<1x8x8xf32>
    %168 = vector.shape_cast %167 : vector<1x8x8xf32> to vector<8x8xf32>
    %cst_104 = arith.constant dense<0.000000e+00> : vector<288x8xf32>
    %169 = tpu.matmul %166, %168, %cst_104 {dimension_numbers = #tpu.dot_dimension_numbers<[1], [0], [0], [1], [0, 0, 1, 1], [], []>} : vector<288x8xf32>, vector<8x8xf32>, vector<288x8xf32> -> vector<288x8xf32>
    %170 = arith.addf %165, %169 : vector<288x8xf32>
    %c43 = arith.constant 43 : index
    %c0_105 = arith.constant 0 : index
    %171 = vector.load %arg9[%c43, %c0_105] : memref<347x8xf32, #tpu.memory_space<vmem>>, vector<288x8xf32>
    %c17 = arith.constant 17 : index
    %c0_106 = arith.constant 0 : index
    %c0_107 = arith.constant 0 : index
    %172 = vector.load %arg6[%c17, %c0_106, %c0_107] : memref<18x8x8xf32, #tpu.memory_space<vmem>>, vector<1x8x8xf32>
    %173 = vector.shape_cast %172 : vector<1x8x8xf32> to vector<8x8xf32>
    %cst_108 = arith.constant dense<0.000000e+00> : vector<288x8xf32>
    %174 = tpu.matmul %171, %173, %cst_108 {dimension_numbers = #tpu.dot_dimension_numbers<[1], [0], [0], [1], [0, 0, 1, 1], [], []>} : vector<288x8xf32>, vector<8x8xf32>, vector<288x8xf32> -> vector<288x8xf32>
    %175 = arith.addf %170, %174 : vector<288x8xf32>
    %176 = vector.broadcast %8 : vector<1x8xf32> to vector<288x8xf32>
    %177 = arith.addf %175, %176 : vector<288x8xf32>
    %178 = vector.broadcast %11 : vector<288x1xf32> to vector<288x8xf32>
    %179 = arith.mulf %177, %178 : vector<288x8xf32>
    %cst_109 = arith.constant dense<0.000000e+00> : vector<8xf32>
    %180 = vector.multi_reduction <add>, %179, %cst_109 [0] : vector<288x8xf32> to vector<8xf32>
    %181 = vector.shape_cast %180 : vector<8xf32> to vector<1x8xf32>
    %182 = arith.mulf %179, %179 : vector<288x8xf32>
    %cst_110 = arith.constant dense<0.000000e+00> : vector<8xf32>
    %183 = vector.multi_reduction <add>, %182, %cst_110 [0] : vector<288x8xf32> to vector<8xf32>
    %184 = vector.shape_cast %183 : vector<8xf32> to vector<1x8xf32>
    %cst_111 = arith.constant 3.906250e-03 : f32
    %185 = vector.broadcast %cst_111 : f32 to vector<1x8xf32>
    %186 = arith.mulf %181, %185 : vector<1x8xf32>
    %cst_112 = arith.constant 3.906250e-03 : f32
    %187 = vector.broadcast %cst_112 : f32 to vector<1x8xf32>
    %188 = arith.mulf %184, %187 : vector<1x8xf32>
    %189 = arith.mulf %186, %186 : vector<1x8xf32>
    %190 = arith.subf %188, %189 : vector<1x8xf32>
    %cst_113 = arith.constant 9.99999974E-6 : f32
    %191 = vector.broadcast %cst_113 : f32 to vector<1x8xf32>
    %192 = arith.addf %190, %191 : vector<1x8xf32>
    %193 = math.rsqrt %192 : vector<1x8xf32>
    %194 = vector.broadcast %186 : vector<1x8xf32> to vector<288x8xf32>
    %195 = arith.subf %179, %194 : vector<288x8xf32>
    %196 = vector.broadcast %193 : vector<1x8xf32> to vector<288x8xf32>
    %197 = arith.mulf %195, %196 : vector<288x8xf32>
    %198 = vector.broadcast %5 : vector<1x8xf32> to vector<288x8xf32>
    %199 = arith.mulf %197, %198 : vector<288x8xf32>
    %200 = vector.broadcast %6 : vector<1x8xf32> to vector<288x8xf32>
    %201 = arith.addf %199, %200 : vector<288x8xf32>
    %202 = vector.broadcast %11 : vector<288x1xf32> to vector<288x8xf32>
    %203 = arith.mulf %201, %202 : vector<288x8xf32>
    %c0_114 = arith.constant 0 : index
    %c0_115 = arith.constant 0 : index
    %c0_116 = arith.constant 0 : index
    %204 = vector.load %arg7[%c0_114, %c0_115, %c0_116] : memref<1x288x8xf32, #tpu.memory_space<vmem>>, vector<1x288x8xf32>
    %205 = vector.shape_cast %204 : vector<1x288x8xf32> to vector<288x8xf32>
    %206 = vector.shape_cast %203 : vector<288x8xf32> to vector<1x288x8xf32>
    tpu.vector_store %arg7[%c0_114, %c0_115, %c0_116], %206 {strides = array<i32>} : memref<1x288x8xf32, #tpu.memory_space<vmem>>, vector<1x288x8xf32>,
    return
  }
  func.func @transform_0(%arg0: i32) -> (i32, i32, i32) {
    %c0_i32 = arith.constant 0 : i32
    %c0_i32_0 = arith.constant 0 : i32
    %c0_i32_1 = arith.constant 0 : i32
    return %arg0, %c0_i32, %c0_i32_0 : i32, i32, i32
  }
  func.func @transform_1(%arg0: i32) -> (i32, i32) {
    %c0_i32 = arith.constant 0 : i32
    %c0_i32_0 = arith.constant 0 : i32
    %c0_i32_1 = arith.constant 0 : i32
    return %c0_i32, %c0_i32_0 : i32, i32
  }
  func.func @transform_2(%arg0: i32) -> (i32, i32) {
    %c0_i32 = arith.constant 0 : i32
    %c0_i32_0 = arith.constant 0 : i32
    %c0_i32_1 = arith.constant 0 : i32
    return %c0_i32, %c0_i32_0 : i32, i32
  }
  func.func @transform_3(%arg0: i32) -> (i32, i32) {
    %c0_i32 = arith.constant 0 : i32
    %c0_i32_0 = arith.constant 0 : i32
    %c0_i32_1 = arith.constant 0 : i32
    return %c0_i32, %c0_i32_0 : i32, i32
  }
  func.func @transform_4(%arg0: i32) -> (i32, i32) {
    %c0_i32 = arith.constant 0 : i32
    %c0_i32_0 = arith.constant 0 : i32
    %c0_i32_1 = arith.constant 0 : i32
    return %c0_i32, %c0_i32_0 : i32, i32
  }
  func.func @transform_5(%arg0: i32) -> (i32, i32, i32) {
    %c0_i32 = arith.constant 0 : i32
    %c0_i32_0 = arith.constant 0 : i32
    %c0_i32_1 = arith.constant 0 : i32
    %c0_i32_2 = arith.constant 0 : i32
    return %c0_i32, %c0_i32_0, %c0_i32_1 : i32, i32, i32
  }
  func.func @transform_6(%arg0: i32) -> (i32, i32, i32) {
    %c0_i32 = arith.constant 0 : i32
    %c0_i32_0 = arith.constant 0 : i32
    %c0_i32_1 = arith.constant 0 : i32
    return %arg0, %c0_i32, %c0_i32_0 : i32, i32, i32
  }
}

</mosaic_0001>

<llo_original>
// kernel: odefunc_forward.1
$region0: #{odefunc_forward.1}
  #allocation0 [shape = 'u32[]', space=smem, size = 0x4, offset = 0x4, fixed_abs, tag = 'smem constant byte address 0x4 - core index']
  #allocation1 [shape = 'u32[144,128]{1,0:T(1,128)}', space=vmem, size = 0x12000, scoped, tag = 'internal scratch']
  #allocation2 [shape = 'f32[342,8]{1,0:T(8,128)}', space=vmem, size = 0x2b000, scoped, tag = 'scratch operand']
  #allocation3 [shape = 'f32[347,8]{1,0:T(8,128)}', space=vmem, size = 0x2c000, scoped, tag = 'scratch operand']
  %s0 = inlined_call_operand.vmem [shape: f32[2,342,8], index: 0, kind: input, shape index: {}]
  %s1 = inlined_call_operand.vmem [shape: f32[342,1], index: 1, kind: input, shape index: {}]
  %s2 = inlined_call_operand.vmem [shape: f32[288,1], index: 2, kind: input, shape index: {}]
  %s3 = inlined_call_operand.vmem [shape: f32[9,8], index: 3, kind: input, shape index: {}]
  %s4 = inlined_call_operand.vmem [shape: f32[8,8], index: 4, kind: input, shape index: {}]
  %s5 = inlined_call_operand.vmem [shape: f32[18,8,8], index: 5, kind: input, shape index: {}]
  %s6 = inlined_call_operand.vmem [shape: f32[2,288,8], index: 6, kind: output, shape index: {}]
  %s7 = sld [smem:[#allocation0]]
  $region57: #{odefunc_forward.1} parent=0
    _
  %s9 = ssub.s32 1, %s7
  %s10 = scalar_select 0, %s9, %s7
  loop: start=0, step=1, limit=4
  $region2: #{odefunc_forward.1} parent=0 // loop_pre_header
    _
  $region3: #{odefunc_forward.1} parent=0 // loop_header
    %s12 = sphi 0, %s16
    %p13 = scmp.ge.s32.totalorder %s12, 4
    %s22 = sphi 0, %s24
    %s25 = sphi 0, %s22
    %s26 = sphi 0, %s25
    %s42 = sphi 0, %s26
    %s46 = sphi 0, %s46
    %s48 = sphi 0, %s46
    %s49 = sphi 0, %s48
    %s63 = sphi 0, %s49
    %s67 = sphi 0, %s67
    %s69 = sphi 0, %s67
    %s70 = sphi 0, %s69
    %s84 = sphi 0, %s70
    %s88 = sphi 0, %s88
    %s90 = sphi 0, %s88
    %s91 = sphi 0, %s90
    %s105 = sphi 0, %s91
    %s109 = sphi 0, %s109
    %s111 = sphi 0, %s109
    %s112 = sphi 0, %s111
    %s126 = sphi 0, %s112
    %s130 = sphi 0, %s130
    %s132 = sphi 0, %s130
    %s133 = sphi 0, %s132
    %s147 = sphi 0, %s133
    %s153 = sphi 0, %s155
    %s156 = sphi 0, %s153
    %s157 = sphi 0, %s156
    %s173 = sphi 0, %s157
  $region4: #{odefunc_forward.1} parent=0 // loop_header_branch
    %15 = sbr.rel (%p13) target = $region8
  $region5: #{odefunc_forward.1} parent=0 // loop_body
    %s17 = ssub.s32 %s12, 1
    %s18 = ssub.s32 %s12, 2
    %s19 = sadd.s32 %s12, 1
    %s20 = ssub.s32 %s12, %s19
    %p21 = scmp.eq.s32.totalorder %s20, 0
    %s23 = sadd.s32 %s22, 1
    %s24 = scalar_select %p21, %s22, %s23
    %p27 = pneg %p21
    %p28 = scmp.eq.s32.totalorder %s12, 1
    %p29 = por %p27, %p28
    %p30 = scmp.ne.s32.totalorder %s22, %s25
    %p31 = scmp.eq.s32.totalorder %s12, 0
    %p32 = por %p30, %p31
    %p33 = scmp.ne.s32.totalorder %s22, %s25
    %p34 = scmp.eq.s32.totalorder %s17, 1
    %p35 = por %p33, %p34
    %p36 = scmp.ne.s32.totalorder %s25, %s26
    %p37 = scmp.eq.s32.totalorder %s17, 0
    %p38 = por %p36, %p37
    %p39 = scmp.ne.s32.totalorder %s25, %s26
    %p40 = scmp.eq.s32.totalorder %s18, 1
    %p41 = por %p39, %p40
    %p43 = scmp.ne.s32.totalorder %s26, %s42
    %p44 = scmp.eq.s32.totalorder %s18, 0
    %p45 = por %p43, %p44
    %s47 = sadd.s32 %s46, 1
    %p50 = scmp.eq.s32.totalorder %s12, 1
    %p51 = scmp.ne.s32.totalorder %s46, %s48
    %p52 = scmp.eq.s32.totalorder %s12, 0
    %p53 = por %p51, %p52
    %p54 = scmp.ne.s32.totalorder %s46, %s48
    %p55 = scmp.eq.s32.totalorder %s17, 1
    %p56 = por %p54, %p55
    %p57 = scmp.ne.s32.totalorder %s48, %s49
    %p58 = scmp.eq.s32.totalorder %s17, 0
    %p59 = por %p57, %p58
    %p60 = scmp.ne.s32.totalorder %s48, %s49
    %p61 = scmp.eq.s32.totalorder %s18, 1
    %p62 = por %p60, %p61
    %p64 = scmp.ne.s32.totalorder %s49, %s63
    %p65 = scmp.eq.s32.totalorder %s18, 0
    %p66 = por %p64, %p65
    %s68 = sadd.s32 %s67, 1
    %p71 = scmp.eq.s32.totalorder %s12, 1
    %p72 = scmp.ne.s32.totalorder %s67, %s69
    %p73 = scmp.eq.s32.totalorder %s12, 0
    %p74 = por %p72, %p73
    %p75 = scmp.ne.s32.totalorder %s67, %s69
    %p76 = scmp.eq.s32.totalorder %s17, 1
    %p77 = por %p75, %p76
    %p78 = scmp.ne.s32.totalorder %s69, %s70
    %p79 = scmp.eq.s32.totalorder %s17, 0
    %p80 = por %p78, %p79
    %p81 = scmp.ne.s32.totalorder %s69, %s70
    %p82 = scmp.eq.s32.totalorder %s18, 1
    %p83 = por %p81, %p82
    %p85 = scmp.ne.s32.totalorder %s70, %s84
    %p86 = scmp.eq.s32.totalorder %s18, 0
    %p87 = por %p85, %p86
    %s89 = sadd.s32 %s88, 1
    %p92 = scmp.eq.s32.totalorder %s12, 1
    %p93 = scmp.ne.s32.totalorder %s88, %s90
    %p94 = scmp.eq.s32.totalorder %s12, 0
    %p95 = por %p93, %p94
    %p96 = scmp.ne.s32.totalorder %s88, %s90
    %p97 = scmp.eq.s32.totalorder %s17, 1
    %p98 = por %p96, %p97
    %p99 = scmp.ne.s32.totalorder %s90, %s91
    %p100 = scmp.eq.s32.totalorder %s17, 0
    %p101 = por %p99, %p100
    %p102 = scmp.ne.s32.totalorder %s90, %s91
    %p103 = scmp.eq.s32.totalorder %s18, 1
    %p104 = por %p102, %p103
    %p106 = scmp.ne.s32.totalorder %s91, %s105
    %p107 = scmp.eq.s32.totalorder %s18, 0
    %p108 = por %p106, %p107
    %s110 = sadd.s32 %s109, 1
    %p113 = scmp.eq.s32.totalorder %s12, 1
    %p114 = scmp.ne.s32.totalorder %s109, %s111
    %p115 = scmp.eq.s32.totalorder %s12, 0
    %p116 = por %p114, %p115
    %p117 = scmp.ne.s32.totalorder %s109, %s111
    %p118 = scmp.eq.s32.totalorder %s17, 1
    %p119 = por %p117, %p118
    %p120 = scmp.ne.s32.totalorder %s111, %s112
    %p121 = scmp.eq.s32.totalorder %s17, 0
    %p122 = por %p120, %p121
    %p123 = scmp.ne.s32.totalorder %s111, %s112
    %p124 = scmp.eq.s32.totalorder %s18, 1
    %p125 = por %p123, %p124
    %p127 = scmp.ne.s32.totalorder %s112, %s126
    %p128 = scmp.eq.s32.totalorder %s18, 0
    %p129 = por %p127, %p128
    %s131 = sadd.s32 %s130, 1
    %p134 = scmp.eq.s32.totalorder %s12, 1
    %p135 = scmp.ne.s32.totalorder %s130, %s132
    %p136 = scmp.eq.s32.totalorder %s12, 0
    %p137 = por %p135, %p136
    %p138 = scmp.ne.s32.totalorder %s130, %s132
    %p139 = scmp.eq.s32.totalorder %s17, 1
    %p140 = por %p138, %p139
    %p141 = scmp.ne.s32.totalorder %s132, %s133
    %p142 = scmp.eq.s32.totalorder %s17, 0
    %p143 = por %p141, %p142
    %p144 = scmp.ne.s32.totalorder %s132, %s133
    %p145 = scmp.eq.s32.totalorder %s18, 1
    %p146 = por %p144, %p145
    %p148 = scmp.ne.s32.totalorder %s133, %s147
    %p149 = scmp.eq.s32.totalorder %s18, 0
    %p150 = por %p148, %p149
    %s151 = ssub.s32 %s12, %s19
    %p152 = scmp.eq.s32.totalorder %s151, 0
    %s154 = sadd.s32 %s153, 1
    %s155 = scalar_select %p152, %s153, %s154
    %p158 = pneg %p152
    %p159 = scmp.eq.s32.totalorder %s12, 1
    %p160 = por %p158, %p159
    %p161 = scmp.ne.s32.totalorder %s153, %s156
    %p162 = scmp.eq.s32.totalorder %s12, 0
    %p163 = por %p161, %p162
    %p164 = scmp.ne.s32.totalorder %s153, %s156
    %p165 = scmp.eq.s32.totalorder %s17, 1
    %p166 = por %p164, %p165
    %p167 = scmp.ne.s32.totalorder %s156, %s157
    %p168 = scmp.eq.s32.totalorder %s17, 0
    %p169 = por %p167, %p168
    %p170 = scmp.ne.s32.totalorder %s156, %s157
    %p171 = scmp.eq.s32.totalorder %s18, 1
    %p172 = por %p170, %p171
    %p174 = scmp.ne.s32.totalorder %s157, %s173
    %p175 = scmp.eq.s32.totalorder %s18, 0
    %p176 = por %p174, %p175
    %p177 = scmp.le.s32.totalorder 1, %s12
    %p178 = scmp.lt.s32.totalorder %s12, 3
    %p179 = pnand %p177, %p178
    %p180 = pneg %p179
    // Predicated region
    $region9: #{odefunc_forward.1} parent=5 // pred_check
      _
    $region10: #{odefunc_forward.1} parent=5 // pred_check_branch
      %182 = sbr.rel (%p179) target = $region12
    $region11: #{odefunc_forward.1} parent=5 // pred_region
      %s183 = ssub.s32 %s12, 1
      // Predicated region
      $region13: #{odefunc_forward.1} parent=11 // pred_check
        %p184 = pneg %p59
      $region14: #{odefunc_forward.1} parent=11 // pred_check_branch
        %186 = sbr.rel (%p184) target = $region16
      $region15: #{odefunc_forward.1} parent=11 // pred_region
        _
      $region16: #{odefunc_forward.1} parent=11 // pred_fallthru
        _
      // Predicated region
      $region17: #{odefunc_forward.1} parent=11 // pred_check
        %p187 = pneg %p80
      $region18: #{odefunc_forward.1} parent=11 // pred_check_branch
        %189 = sbr.rel (%p187) target = $region20
      $region19: #{odefunc_forward.1} parent=11 // pred_region
        _
      $region20: #{odefunc_forward.1} parent=11 // pred_fallthru
        _
      // Predicated region
      $region21: #{odefunc_forward.1} parent=11 // pred_check
        %p190 = pneg %p101
      $region22: #{odefunc_forward.1} parent=11 // pred_check_branch
        %192 = sbr.rel (%p190) target = $region24
      $region23: #{odefunc_forward.1} parent=11 // pred_region
        _
      $region24: #{odefunc_forward.1} parent=11 // pred_fallthru
        _
      // Predicated region
      $region25: #{odefunc_forward.1} parent=11 // pred_check
        %p193 = pneg %p122
      $region26: #{odefunc_forward.1} parent=11 // pred_check_branch
        %195 = sbr.rel (%p193) target = $region28
      $region27: #{odefunc_forward.1} parent=11 // pred_region
        _
      $region28: #{odefunc_forward.1} parent=11 // pred_fallthru
        _
      // Predicated region
      $region29: #{odefunc_forward.1} parent=11 // pred_check
        %p196 = pneg %p143
      $region30: #{odefunc_forward.1} parent=11 // pred_check_branch
        %198 = sbr.rel (%p196) target = $region32
      $region31: #{odefunc_forward.1} parent=11 // pred_region
        _
      $region32: #{odefunc_forward.1} parent=11 // pred_fallthru
        _
    $region12: #{odefunc_forward.1} parent=5 // pred_fallthru
      _
    %p199 = scmp.lt.s32.totalorder %s12, 2
    // Predicated region
    $region33: #{odefunc_forward.1} parent=5 // pred_check
      %p200 = pneg %p199
    $region34: #{odefunc_forward.1} parent=5 // pred_check_branch
      %202 = sbr.rel (%p200) target = $region36
    $region35: #{odefunc_forward.1} parent=5 // pred_region
      // Predicated region
      $region37: #{odefunc_forward.1} parent=35 // pred_check
        %p203 = pneg %p32
      $region38: #{odefunc_forward.1} parent=35 // pred_check_branch
        %205 = sbr.rel (%p203) target = $region40
      $region39: #{odefunc_forward.1} parent=35 // pred_region
        %p206 = scmp.lt.s32.totalorder %s12, 1
        %s207 = scalar_select %p206, %s12, 1
        %s208 = smul.addr %s207, 43
        %s209 = smul.addr %s208, 8
        %s210 = scalar_lea.vmem %s0, %s209
      $region40: #{odefunc_forward.1} parent=35 // pred_fallthru
        _
    $region36: #{odefunc_forward.1} parent=5 // pred_fallthru
      _
    %p211 = scmp.le.s32.totalorder 1, %s12
    %p212 = scmp.lt.s32.totalorder %s12, 3
    %p213 = pnand %p211, %p212
    %p214 = pneg %p213
    // Predicated region
    $region41: #{odefunc_forward.1} parent=5 // pred_check
      _
    $region42: #{odefunc_forward.1} parent=5 // pred_check_branch
      %216 = sbr.rel (%p213) target = $region44
    $region43: #{odefunc_forward.1} parent=5 // pred_region
      %s217 = ssub.s32 %s12, 1
      %p218 = scmp.lt.s32.totalorder %s17, 1
      %s219 = scalar_select %p218, %s17, 1
      %s220 = smul.addr %s219, 43
      %s221 = smul.addr %s220, 8
      %s222 = scalar_lea.vmem %s0, %s221
      %p223 = pneg %p38
      %p224 = pneg %p35
      %p225 = pneg %p59
      %p226 = pneg %p56
      %p227 = pneg %p80
      %p228 = pneg %p77
      %p229 = pneg %p101
      %p230 = pneg %p98
      %p231 = pneg %p122
      %p232 = pneg %p119
      %p233 = pneg %p143
      %p234 = pneg %p140
      %p235 = pneg %p169
      %p236 = pneg %p166
      %p237 = scmp.lt.s32.totalorder %s17, 1
      %s238 = scalar_select %p237, %s17, 1
      %s239 = smul.addr %s238, 36
      %s240 = smul.addr %s239, 8
      %s241 = scalar_lea.vmem %s6, %s240
      %p242 = scmp.lt.s32.totalorder %s17, 1
      %s243 = scalar_select %p242, %s17, 1
      %s244 = smul.addr %s243, 43
      %s245 = smul.addr %s244, 8
      %s246 = scalar_lea.vmem %s0, %s245
      %p247 = scmp.lt.s32.totalorder %s17, 1
      %s248 = scalar_select %p247, %s17, 1
      %s249 = smul.addr %s248, 36
      %s250 = smul.addr %s249, 8
      %s251 = scalar_lea.vmem %s6, %s250
      %v252 = vld [vmem:[%s3] sm:$0xff]
      %v253 = vld [vmem:[%s3 + $0x8] sm:$0x1]
      %v254 = vld [vmem:[%s1] sm:$0xff]
      %v255 = vld [vmem:[%s1 + $0x8] sm:$0xff]
      %v256 = vld [vmem:[%s1 + $0x10] sm:$0xff]
      %v257 = vld [vmem:[%s1 + $0x18] sm:$0xff]
      %v258 = vld [vmem:[%s1 + $0x20] sm:$0xff]
      %v259 = vld [vmem:[%s1 + $0x28] sm:$0xff]
      %v260 = vld [vmem:[%s1 + $0x30] sm:$0xff]
      %v261 = vld [vmem:[%s1 + $0x38] sm:$0xff]
      %v262 = vld [vmem:[%s1 + $0x40] sm:$0xff]
      %v263 = vld [vmem:[%s1 + $0x48] sm:$0xff]
      %v264 = vld [vmem:[%s1 + $0x50] sm:$0xff]
      %v265 = vld [vmem:[%s1 + $0x58] sm:$0xff]
      %v266 = vld [vmem:[%s1 + $0x60] sm:$0xff]
      %v267 = vld [vmem:[%s1 + $0x68] sm:$0xff]
      %v268 = vld [vmem:[%s1 + $0x70] sm:$0xff]
      %v269 = vld [vmem:[%s1 + $0x78] sm:$0xff]
      %v270 = vld [vmem:[%s1 + $0x80] sm:$0xff]
      %v271 = vld [vmem:[%s1 + $0x88] sm:$0xff]
      %v272 = vld [vmem:[%s1 + $0x90] sm:$0xff]
      %v273 = vld [vmem:[%s1 + $0x98] sm:$0xff]
      %v274 = vld [vmem:[%s1 + $0xa0] sm:$0xff]
      %v275 = vld [vmem:[%s1 + $0xa8] sm:$0xff]
      %v276 = vld [vmem:[%s1 + $0xb0] sm:$0xff]
      %v277 = vld [vmem:[%s1 + $0xb8] sm:$0xff]
      %v278 = vld [vmem:[%s1 + $0xc0] sm:$0xff]
      %v279 = vld [vmem:[%s1 + $0xc8] sm:$0xff]
      %v280 = vld [vmem:[%s1 + $0xd0] sm:$0xff]
      %v281 = vld [vmem:[%s1 + $0xd8] sm:$0xff]
      %v282 = vld [vmem:[%s1 + $0xe0] sm:$0xff]
      %v283 = vld [vmem:[%s1 + $0xe8] sm:$0xff]
      %v284 = vld [vmem:[%s1 + $0xf0] sm:$0xff]
      %v285 = vld [vmem:[%s1 + $0xf8] sm:$0xff]
      %v286 = vld [vmem:[%s1 + $0x100] sm:$0xff]
      %v287 = vld [vmem:[%s1 + $0x108] sm:$0xff]
      %v288 = vld [vmem:[%s1 + $0x110] sm:$0xff]
      %v289 = vld [vmem:[%s1 + $0x118] sm:$0xff]
      %v290 = vld [vmem:[%s1 + $0x120] sm:$0xff]
      %v291 = vld [vmem:[%s1 + $0x128] sm:$0xff]
      %v292 = vld [vmem:[%s1 + $0x130] sm:$0xff]
      %v293 = vld [vmem:[%s1 + $0x138] sm:$0xff]
      %v294 = vld [vmem:[%s1 + $0x140] sm:$0xff]
      %v295 = vld [vmem:[%s1 + $0x148] sm:$0xff]
      %v296 = vld [vmem:[%s1 + $0x150] sm:$0x3f]
      %v297 = vld [vmem:[%s2] sm:$0xff]
      %v298 = vld [vmem:[%s2 + $0x8] sm:$0xff]
      %v299 = vld [vmem:[%s2 + $0x10] sm:$0xff]
      %v300 = vld [vmem:[%s2 + $0x18] sm:$0xff]
      %v301 = vld [vmem:[%s2 + $0x20] sm:$0xff]
      %v302 = vld [vmem:[%s2 + $0x28] sm:$0xff]
      %v303 = vld [vmem:[%s2 + $0x30] sm:$0xff]
      %v304 = vld [vmem:[%s2 + $0x38] sm:$0xff]
      %v305 = vld [vmem:[%s2 + $0x40] sm:$0xff]
      %v306 = vld [vmem:[%s2 + $0x48] sm:$0xff]
      %v307 = vld [vmem:[%s2 + $0x50] sm:$0xff]
      %v308 = vld [vmem:[%s2 + $0x58] sm:$0xff]
      %v309 = vld [vmem:[%s2 + $0x60] sm:$0xff]
      %v310 = vld [vmem:[%s2 + $0x68] sm:$0xff]
      %v311 = vld [vmem:[%s2 + $0x70] sm:$0xff]
      %v312 = vld [vmem:[%s2 + $0x78] sm:$0xff]
      %v313 = vld [vmem:[%s2 + $0x80] sm:$0xff]
      %v314 = vld [vmem:[%s2 + $0x88] sm:$0xff]
      %v315 = vld [vmem:[%s2 + $0x90] sm:$0xff]
      %v316 = vld [vmem:[%s2 + $0x98] sm:$0xff]
      %v317 = vld [vmem:[%s2 + $0xa0] sm:$0xff]
      %v318 = vld [vmem:[%s2 + $0xa8] sm:$0xff]
      %v319 = vld [vmem:[%s2 + $0xb0] sm:$0xff]
      %v320 = vld [vmem:[%s2 + $0xb8] sm:$0xff]
      %v321 = vld [vmem:[%s2 + $0xc0] sm:$0xff]
      %v322 = vld [vmem:[%s2 + $0xc8] sm:$0xff]
      %v323 = vld [vmem:[%s2 + $0xd0] sm:$0xff]
      %v324 = vld [vmem:[%s2 + $0xd8] sm:$0xff]
      %v325 = vld [vmem:[%s2 + $0xe0] sm:$0xff]
      %v326 = vld [vmem:[%s2 + $0xe8] sm:$0xff]
      %v327 = vld [vmem:[%s2 + $0xf0] sm:$0xff]
      %v328 = vld [vmem:[%s2 + $0xf8] sm:$0xff]
      %v329 = vld [vmem:[%s2 + $0x100] sm:$0xff]
      %v330 = vld [vmem:[%s2 + $0x108] sm:$0xff]
      %v331 = vld [vmem:[%s2 + $0x110] sm:$0xff]
      %v332 = vld [vmem:[%s2 + $0x118] sm:$0xff]
      %v333 = vld [vmem:[%s246] sm:$0xff]
      %v334 = vld [vmem:[%s246 + $0x8] sm:$0xff]
      %v335 = vld [vmem:[%s246 + $0x10] sm:$0xff]
      %v336 = vld [vmem:[%s246 + $0x18] sm:$0xff]
      %v337 = vld [vmem:[%s246 + $0x20] sm:$0xff]
      %v338 = vld [vmem:[%s246 + $0x28] sm:$0xff]
      %v339 = vld [vmem:[%s246 + $0x30] sm:$0xff]
      %v340 = vld [vmem:[%s246 + $0x38] sm:$0xff]
      %v341 = vld [vmem:[%s246 + $0x40] sm:$0xff]
      %v342 = vld [vmem:[%s246 + $0x48] sm:$0xff]
      %v343 = vld [vmem:[%s246 + $0x50] sm:$0xff]
      %v344 = vld [vmem:[%s246 + $0x58] sm:$0xff]
      %v345 = vld [vmem:[%s246 + $0x60] sm:$0xff]
      %v346 = vld [vmem:[%s246 + $0x68] sm:$0xff]
      %v347 = vld [vmem:[%s246 + $0x70] sm:$0xff]
      %v348 = vld [vmem:[%s246 + $0x78] sm:$0xff]
      %v349 = vld [vmem:[%s246 + $0x80] sm:$0xff]
      %v350 = vld [vmem:[%s246 + $0x88] sm:$0xff]
      %v351 = vld [vmem:[%s246 + $0x90] sm:$0xff]
      %v352 = vld [vmem:[%s246 + $0x98] sm:$0xff]
      %v353 = vld [vmem:[%s246 + $0xa0] sm:$0xff]
      %v354 = vld [vmem:[%s246 + $0xa8] sm:$0xff]
      %v355 = vld [vmem:[%s246 + $0xb0] sm:$0xff]
      %v356 = vld [vmem:[%s246 + $0xb8] sm:$0xff]
      %v357 = vld [vmem:[%s246 + $0xc0] sm:$0xff]
      %v358 = vld [vmem:[%s246 + $0xc8] sm:$0xff]
      %v359 = vld [vmem:[%s246 + $0xd0] sm:$0xff]
      %v360 = vld [vmem:[%s246 + $0xd8] sm:$0xff]
      %v361 = vld [vmem:[%s246 + $0xe0] sm:$0xff]
      %v362 = vld [vmem:[%s246 + $0xe8] sm:$0xff]
      %v363 = vld [vmem:[%s246 + $0xf0] sm:$0xff]
      %v364 = vld [vmem:[%s246 + $0xf8] sm:$0xff]
      %v365 = vld [vmem:[%s246 + $0x100] sm:$0xff]
      %v366 = vld [vmem:[%s246 + $0x108] sm:$0xff]
      %v367 = vld [vmem:[%s246 + $0x110] sm:$0xff]
      %v368 = vld [vmem:[%s246 + $0x118] sm:$0xff]
      %v369 = vld [vmem:[%s246 + $0x120] sm:$0xff]
      %v370 = vld [vmem:[%s246 + $0x128] sm:$0xff]
      %v371 = vld [vmem:[%s246 + $0x130] sm:$0xff]
      %v372 = vld [vmem:[%s246 + $0x138] sm:$0xff]
      %v373 = vld [vmem:[%s246 + $0x140] sm:$0xff]
      %v374 = vld [vmem:[%s246 + $0x148] sm:$0xff]
      %v375 = vld [vmem:[%s246 + $0x150] sm:$0x3f]
      %vm376 = vcmask 64512
      %v377 = vsel %vm376, %v333, 0.0
      %v378 = vsel %vm376, %v334, 0.0
      %v379 = vadd.f32 %v377, %v378
      %v380 = vsel %vm376, %v335, 0.0
      %v381 = vadd.f32 %v379, %v380
      %v382 = vsel %vm376, %v336, 0.0
      %v383 = vadd.f32 %v381, %v382
      %v384 = vsel %vm376, %v337, 0.0
      %v385 = vadd.f32 %v383, %v384
      %v386 = vsel %vm376, %v338, 0.0
      %v387 = vadd.f32 %v385, %v386
      %v388 = vsel %vm376, %v339, 0.0
      %v389 = vadd.f32 %v387, %v388
      %v390 = vsel %vm376, %v340, 0.0
      %v391 = vadd.f32 %v389, %v390
      %v392 = vsel %vm376, %v341, 0.0
      %v393 = vadd.f32 %v391, %v392
      %v394 = vsel %vm376, %v342, 0.0
      %v395 = vadd.f32 %v393, %v394
      %v396 = vsel %vm376, %v343, 0.0
      %v397 = vadd.f32 %v395, %v396
      %v398 = vsel %vm376, %v344, 0.0
      %v399 = vadd.f32 %v397, %v398
      %v400 = vsel %vm376, %v345, 0.0
      %v401 = vadd.f32 %v399, %v400
      %v402 = vsel %vm376, %v346, 0.0
      %v403 = vadd.f32 %v401, %v402
      %v404 = vsel %vm376, %v347, 0.0
      %v405 = vadd.f32 %v403, %v404
      %v406 = vsel %vm376, %v348, 0.0
      %v407 = vadd.f32 %v405, %v406
      %v408 = vsel %vm376, %v349, 0.0
      %v409 = vadd.f32 %v407, %v408
      %v410 = vsel %vm376, %v350, 0.0
      %v411 = vadd.f32 %v409, %v410
      %v412 = vsel %vm376, %v351, 0.0
      %v413 = vadd.f32 %v411, %v412
      %v414 = vsel %vm376, %v352, 0.0
      %v415 = vadd.f32 %v413, %v414
      %v416 = vsel %vm376, %v353, 0.0
      %v417 = vadd.f32 %v415, %v416
      %v418 = vsel %vm376, %v354, 0.0
      %v419 = vadd.f32 %v417, %v418
      %v420 = vsel %vm376, %v355, 0.0
      %v421 = vadd.f32 %v419, %v420
      %v422 = vsel %vm376, %v356, 0.0
      %v423 = vadd.f32 %v421, %v422
      %v424 = vsel %vm376, %v357, 0.0
      %v425 = vadd.f32 %v423, %v424
      %v426 = vsel %vm376, %v358, 0.0
      %v427 = vadd.f32 %v425, %v426
      %v428 = vsel %vm376, %v359, 0.0
      %v429 = vadd.f32 %v427, %v428
      %v430 = vsel %vm376, %v360, 0.0
      %v431 = vadd.f32 %v429, %v430
      %v432 = vsel %vm376, %v361, 0.0
      %v433 = vadd.f32 %v431, %v432
      %v434 = vsel %vm376, %v362, 0.0
      %v435 = vadd.f32 %v433, %v434
      %v436 = vsel %vm376, %v363, 0.0
      %v437 = vadd.f32 %v435, %v436
      %v438 = vsel %vm376, %v364, 0.0
      %v439 = vadd.f32 %v437, %v438
      %v440 = vsel %vm376, %v365, 0.0
      %v441 = vadd.f32 %v439, %v440
      %v442 = vsel %vm376, %v366, 0.0
      %v443 = vadd.f32 %v441, %v442
      %v444 = vsel %vm376, %v367, 0.0
      %v445 = vadd.f32 %v443, %v444
      %v446 = vsel %vm376, %v368, 0.0
      %v447 = vadd.f32 %v445, %v446
      %v448 = vsel %vm376, %v369, 0.0
      %v449 = vadd.f32 %v447, %v448
      %v450 = vsel %vm376, %v370, 0.0
      %v451 = vadd.f32 %v449, %v450
      %v452 = vsel %vm376, %v371, 0.0
      %v453 = vadd.f32 %v451, %v452
      %v454 = vsel %vm376, %v372, 0.0
      %v455 = vadd.f32 %v453, %v454
      %v456 = vsel %vm376, %v373, 0.0
      %v457 = vadd.f32 %v455, %v456
      %v458 = vsel %vm376, %v374, 0.0
      %v459 = vadd.f32 %v457, %v458
      %vm460 = vcmask 62464
      %v461 = vsel %vm460, %v375, 0.0
      %v462 = vadd.f32 %v459, %v461
      %v463 = vrot.slane %v462, 4
      %v464 = vadd.f32 %v462, %v463
      %v465 = vrot.slane %v464, 2
      %v466 = vadd.f32 %v464, %v465
      %v467 = vrot.slane %v466, 1
      %v468 = vadd.f32 %v466, %v467
      %v469 = vmul.f32 %v333, %v333
      %v470 = vmul.f32 %v334, %v334
      %v471 = vmul.f32 %v335, %v335
      %v472 = vmul.f32 %v336, %v336
      %v473 = vmul.f32 %v337, %v337
      %v474 = vmul.f32 %v338, %v338
      %v475 = vmul.f32 %v339, %v339
      %v476 = vmul.f32 %v340, %v340
      %v477 = vmul.f32 %v341, %v341
      %v478 = vmul.f32 %v342, %v342
      %v479 = vmul.f32 %v343, %v343
      %v480 = vmul.f32 %v344, %v344
      %v481 = vmul.f32 %v345, %v345
      %v482 = vmul.f32 %v346, %v346
      %v483 = vmul.f32 %v347, %v347
      %v484 = vmul.f32 %v348, %v348
      %v485 = vmul.f32 %v349, %v349
      %v486 = vmul.f32 %v350, %v350
      %v487 = vmul.f32 %v351, %v351
      %v488 = vmul.f32 %v352, %v352
      %v489 = vmul.f32 %v353, %v353
      %v490 = vmul.f32 %v354, %v354
      %v491 = vmul.f32 %v355, %v355
      %v492 = vmul.f32 %v356, %v356
      %v493 = vmul.f32 %v357, %v357
      %v494 = vmul.f32 %v358, %v358
      %v495 = vmul.f32 %v359, %v359
      %v496 = vmul.f32 %v360, %v360
      %v497 = vmul.f32 %v361, %v361
      %v498 = vmul.f32 %v362, %v362
      %v499 = vmul.f32 %v363, %v363
      %v500 = vmul.f32 %v364, %v364
      %v501 = vmul.f32 %v365, %v365
      %v502 = vmul.f32 %v366, %v366
      %v503 = vmul.f32 %v367, %v367
      %v504 = vmul.f32 %v368, %v368
      %v505 = vmul.f32 %v369, %v369
      %v506 = vmul.f32 %v370, %v370
      %v507 = vmul.f32 %v371, %v371
      %v508 = vmul.f32 %v372, %v372
      %v509 = vmul.f32 %v373, %v373
      %v510 = vmul.f32 %v374, %v374
      %v511 = vmul.f32 %v375, %v375
      %v512 = vsel %vm376, %v469, 0.0
      %v513 = vsel %vm376, %v470, 0.0
      %v514 = vadd.f32 %v512, %v513
      %v515 = vsel %vm376, %v471, 0.0
      %v516 = vadd.f32 %v514, %v515
      %v517 = vsel %vm376, %v472, 0.0
      %v518 = vadd.f32 %v516, %v517
      %v519 = vsel %vm376, %v473, 0.0
      %v520 = vadd.f32 %v518, %v519
      %v521 = vsel %vm376, %v474, 0.0
      %v522 = vadd.f32 %v520, %v521
      %v523 = vsel %vm376, %v475, 0.0
      %v524 = vadd.f32 %v522, %v523
      %v525 = vsel %vm376, %v476, 0.0
      %v526 = vadd.f32 %v524, %v525
      %v527 = vsel %vm376, %v477, 0.0
      %v528 = vadd.f32 %v526, %v527
      %v529 = vsel %vm376, %v478, 0.0
      %v530 = vadd.f32 %v528, %v529
      %v531 = vsel %vm376, %v479, 0.0
      %v532 = vadd.f32 %v530, %v531
      %v533 = vsel %vm376, %v480, 0.0
      %v534 = vadd.f32 %v532, %v533
      %v535 = vsel %vm376, %v481, 0.0
      %v536 = vadd.f32 %v534, %v535
      %v537 = vsel %vm376, %v482, 0.0
      %v538 = vadd.f32 %v536, %v537
      %v539 = vsel %vm376, %v483, 0.0
      %v540 = vadd.f32 %v538, %v539
      %v541 = vsel %vm376, %v484, 0.0
      %v542 = vadd.f32 %v540, %v541
      %v543 = vsel %vm376, %v485, 0.0
      %v544 = vadd.f32 %v542, %v543
      %v545 = vsel %vm376, %v486, 0.0
      %v546 = vadd.f32 %v544, %v545
      %v547 = vsel %vm376, %v487, 0.0
      %v548 = vadd.f32 %v546, %v547
      %v549 = vsel %vm376, %v488, 0.0
      %v550 = vadd.f32 %v548, %v549
      %v551 = vsel %vm376, %v489, 0.0
      %v552 = vadd.f32 %v550, %v551
      %v553 = vsel %vm376, %v490, 0.0
      %v554 = vadd.f32 %v552, %v553
      %v555 = vsel %vm376, %v491, 0.0
      %v556 = vadd.f32 %v554, %v555
      %v557 = vsel %vm376, %v492, 0.0
      %v558 = vadd.f32 %v556, %v557
      %v559 = vsel %vm376, %v493, 0.0
      %v560 = vadd.f32 %v558, %v559
      %v561 = vsel %vm376, %v494, 0.0
      %v562 = vadd.f32 %v560, %v561
      %v563 = vsel %vm376, %v495, 0.0
      %v564 = vadd.f32 %v562, %v563
      %v565 = vsel %vm376, %v496, 0.0
      %v566 = vadd.f32 %v564, %v565
      %v567 = vsel %vm376, %v497, 0.0
      %v568 = vadd.f32 %v566, %v567
      %v569 = vsel %vm376, %v498, 0.0
      %v570 = vadd.f32 %v568, %v569
      %v571 = vsel %vm376, %v499, 0.0
      %v572 = vadd.f32 %v570, %v571
      %v573 = vsel %vm376, %v500, 0.0
      %v574 = vadd.f32 %v572, %v573
      %v575 = vsel %vm376, %v501, 0.0
      %v576 = vadd.f32 %v574, %v575
      %v577 = vsel %vm376, %v502, 0.0
      %v578 = vadd.f32 %v576, %v577
      %v579 = vsel %vm376, %v503, 0.0
      %v580 = vadd.f32 %v578, %v579
      %v581 = vsel %vm376, %v504, 0.0
      %v582 = vadd.f32 %v580, %v581
      %v583 = vsel %vm376, %v505, 0.0
      %v584 = vadd.f32 %v582, %v583
      %v585 = vsel %vm376, %v506, 0.0
      %v586 = vadd.f32 %v584, %v585
      %v587 = vsel %vm376, %v507, 0.0
      %v588 = vadd.f32 %v586, %v587
      %v589 = vsel %vm376, %v508, 0.0
      %v590 = vadd.f32 %v588, %v589
      %v591 = vsel %vm376, %v509, 0.0
      %v592 = vadd.f32 %v590, %v591
      %v593 = vsel %vm376, %v510, 0.0
      %v594 = vadd.f32 %v592, %v593
      %v595 = vsel %vm460, %v511, 0.0
      %v596 = vadd.f32 %v594, %v595
      %v597 = vrot.slane %v596, 4
      %v598 = vadd.f32 %v596, %v597
      %v599 = vrot.slane %v598, 2
      %v600 = vadd.f32 %v598, %v599
      %v601 = vrot.slane %v600, 1
      %v602 = vadd.f32 %v600, %v601
      %v603 = vmul.f32 %v468, 0.00390625
      %v604 = vmul.f32 %v602, 0.00390625
      %v605 = vmul.f32 %v603, %v603
      %v606 = vsub.f32 %v604, %v605
      %v607 = vadd.f32 %v606, 1e-05
      %v608 = vrsqrt.pop %v607
      %v609 = vsub.f32 %v333, %v603
      %v610 = vsub.f32 %v334, %v603
      %v611 = vsub.f32 %v335, %v603
      %v612 = vsub.f32 %v336, %v603
      %v613 = vsub.f32 %v337, %v603
      %v614 = vsub.f32 %v338, %v603
      %v615 = vsub.f32 %v339, %v603
      %v616 = vsub.f32 %v340, %v603
      %v617 = vsub.f32 %v341, %v603
      %v618 = vsub.f32 %v342, %v603
      %v619 = vsub.f32 %v343, %v603
      %v620 = vsub.f32 %v344, %v603
      %v621 = vsub.f32 %v345, %v603
      %v622 = vsub.f32 %v346, %v603
      %v623 = vsub.f32 %v347, %v603
      %v624 = vsub.f32 %v348, %v603
      %v625 = vsub.f32 %v349, %v603
      %v626 = vsub.f32 %v350, %v603
      %v627 = vsub.f32 %v351, %v603
      %v628 = vsub.f32 %v352, %v603
      %v629 = vsub.f32 %v353, %v603
      %v630 = vsub.f32 %v354, %v603
      %v631 = vsub.f32 %v355, %v603
      %v632 = vsub.f32 %v356, %v603
      %v633 = vsub.f32 %v357, %v603
      %v634 = vsub.f32 %v358, %v603
      %v635 = vsub.f32 %v359, %v603
      %v636 = vsub.f32 %v360, %v603
      %v637 = vsub.f32 %v361, %v603
      %v638 = vsub.f32 %v362, %v603
      %v639 = vsub.f32 %v363, %v603
      %v640 = vsub.f32 %v364, %v603
      %v641 = vsub.f32 %v365, %v603
      %v642 = vsub.f32 %v366, %v603
      %v643 = vsub.f32 %v367, %v603
      %v644 = vsub.f32 %v368, %v603
      %v645 = vsub.f32 %v369, %v603
      %v646 = vsub.f32 %v370, %v603
      %v647 = vsub.f32 %v371, %v603
      %v648 = vsub.f32 %v372, %v603
      %v649 = vsub.f32 %v373, %v603
      %v650 = vsub.f32 %v374, %v603
      %v651 = vsub.f32 %v375, %v603
      %v652 = vmul.f32 %v609, %v608
      %v653 = vmul.f32 %v610, %v608
      %v654 = vmul.f32 %v611, %v608
      %v655 = vmul.f32 %v612, %v608
      %v656 = vmul.f32 %v613, %v608
      %v657 = vmul.f32 %v614, %v608
      %v658 = vmul.f32 %v615, %v608
      %v659 = vmul.f32 %v616, %v608
      %v660 = vmul.f32 %v617, %v608
      %v661 = vmul.f32 %v618, %v608
      %v662 = vmul.f32 %v619, %v608
      %v663 = vmul.f32 %v620, %v608
      %v664 = vmul.f32 %v621, %v608
      %v665 = vmul.f32 %v622, %v608
      %v666 = vmul.f32 %v623, %v608
      %v667 = vmul.f32 %v624, %v608
      %v668 = vmul.f32 %v625, %v608
      %v669 = vmul.f32 %v626, %v608
      %v670 = vmul.f32 %v627, %v608
      %v671 = vmul.f32 %v628, %v608
      %v672 = vmul.f32 %v629, %v608
      %v673 = vmul.f32 %v630, %v608
      %v674 = vmul.f32 %v631, %v608
      %v675 = vmul.f32 %v632, %v608
      %v676 = vmul.f32 %v633, %v608
      %v677 = vmul.f32 %v634, %v608
      %v678 = vmul.f32 %v635, %v608
      %v679 = vmul.f32 %v636, %v608
      %v680 = vmul.f32 %v637, %v608
      %v681 = vmul.f32 %v638, %v608
      %v682 = vmul.f32 %v639, %v608
      %v683 = vmul.f32 %v640, %v608
      %v684 = vmul.f32 %v641, %v608
      %v685 = vmul.f32 %v642, %v608
      %v686 = vmul.f32 %v643, %v608
      %v687 = vmul.f32 %v644, %v608
      %v688 = vmul.f32 %v645, %v608
      %v689 = vmul.f32 %v646, %v608
      %v690 = vmul.f32 %v647, %v608
      %v691 = vmul.f32 %v648, %v608
      %v692 = vmul.f32 %v649, %v608
      %v693 = vmul.f32 %v650, %v608
      %v694 = vmul.f32 %v651, %v608
      %v695 = vlaneseq
      %v696 = vshrl.u32 %v695, 7
      %v697 = vsub.s32 0, %v696
      %v698 = vrot.slane %v252, %v697
      %v699 = vmul.f32 %v652, %v698
      %v700 = vmul.f32 %v653, %v698
      %v701 = vmul.f32 %v654, %v698
      %v702 = vmul.f32 %v655, %v698
      %v703 = vmul.f32 %v656, %v698
      %v704 = vmul.f32 %v657, %v698
      %v705 = vmul.f32 %v658, %v698
      %v706 = vmul.f32 %v659, %v698
      %v707 = vmul.f32 %v660, %v698
      %v708 = vmul.f32 %v661, %v698
      %v709 = vmul.f32 %v662, %v698
      %v710 = vmul.f32 %v663, %v698
      %v711 = vmul.f32 %v664, %v698
      %v712 = vmul.f32 %v665, %v698
      %v713 = vmul.f32 %v666, %v698
      %v714 = vmul.f32 %v667, %v698
      %v715 = vmul.f32 %v668, %v698
      %v716 = vmul.f32 %v669, %v698
      %v717 = vmul.f32 %v670, %v698
      %v718 = vmul.f32 %v671, %v698
      %v719 = vmul.f32 %v672, %v698
      %v720 = vmul.f32 %v673, %v698
      %v721 = vmul.f32 %v674, %v698
      %v722 = vmul.f32 %v675, %v698
      %v723 = vmul.f32 %v676, %v698
      %v724 = vmul.f32 %v677, %v698
      %v725 = vmul.f32 %v678, %v698
      %v726 = vmul.f32 %v679, %v698
      %v727 = vmul.f32 %v680, %v698
      %v728 = vmul.f32 %v681, %v698
      %v729 = vmul.f32 %v682, %v698
      %v730 = vmul.f32 %v683, %v698
      %v731 = vmul.f32 %v684, %v698
      %v732 = vmul.f32 %v685, %v698
      %v733 = vmul.f32 %v686, %v698
      %v734 = vmul.f32 %v687, %v698
      %v735 = vmul.f32 %v688, %v698
      %v736 = vmul.f32 %v689, %v698
      %v737 = vmul.f32 %v690, %v698
      %v738 = vmul.f32 %v691, %v698
      %v739 = vmul.f32 %v692, %v698
      %v740 = vmul.f32 %v693, %v698
      %v741 = vmul.f32 %v694, %v698
      %v742 = vlaneseq
      %v743 = vshrl.u32 %v742, 7
      %v744 = vsub.s32 1, %v743
      %v745 = vrot.slane %v252, %v744
      %v746 = vadd.f32 %v699, %v745
      %v747 = vadd.f32 %v700, %v745
      %v748 = vadd.f32 %v701, %v745
      %v749 = vadd.f32 %v702, %v745
      %v750 = vadd.f32 %v703, %v745
      %v751 = vadd.f32 %v704, %v745
      %v752 = vadd.f32 %v705, %v745
      %v753 = vadd.f32 %v706, %v745
      %v754 = vadd.f32 %v707, %v745
      %v755 = vadd.f32 %v708, %v745
      %v756 = vadd.f32 %v709, %v745
      %v757 = vadd.f32 %v710, %v745
      %v758 = vadd.f32 %v711, %v745
      %v759 = vadd.f32 %v712, %v745
      %v760 = vadd.f32 %v713, %v745
      %v761 = vadd.f32 %v714, %v745
      %v762 = vadd.f32 %v715, %v745
      %v763 = vadd.f32 %v716, %v745
      %v764 = vadd.f32 %v717, %v745
      %v765 = vadd.f32 %v718, %v745
      %v766 = vadd.f32 %v719, %v745
      %v767 = vadd.f32 %v720, %v745
      %v768 = vadd.f32 %v721, %v745
      %v769 = vadd.f32 %v722, %v745
      %v770 = vadd.f32 %v723, %v745
      %v771 = vadd.f32 %v724, %v745
      %v772 = vadd.f32 %v725, %v745
      %v773 = vadd.f32 %v726, %v745
      %v774 = vadd.f32 %v727, %v745
      %v775 = vadd.f32 %v728, %v745
      %v776 = vadd.f32 %v729, %v745
      %v777 = vadd.f32 %v730, %v745
      %v778 = vadd.f32 %v731, %v745
      %v779 = vadd.f32 %v732, %v745
      %v780 = vadd.f32 %v733, %v745
      %v781 = vadd.f32 %v734, %v745
      %v782 = vadd.f32 %v735, %v745
      %v783 = vadd.f32 %v736, %v745
      %v784 = vadd.f32 %v737, %v745
      %v785 = vadd.f32 %v738, %v745
      %v786 = vadd.f32 %v739, %v745
      %v787 = vadd.f32 %v740, %v745
      %v788 = vadd.f32 %v741, %v745
      %vm789 = vcmp.ge.f32.partialorder %v746, 0.0
      %vm790 = vcmp.ge.f32.partialorder %v747, 0.0
      %vm791 = vcmp.ge.f32.partialorder %v748, 0.0
      %vm792 = vcmp.ge.f32.partialorder %v749, 0.0
      %vm793 = vcmp.ge.f32.partialorder %v750, 0.0
      %vm794 = vcmp.ge.f32.partialorder %v751, 0.0
      %vm795 = vcmp.ge.f32.partialorder %v752, 0.0
      %vm796 = vcmp.ge.f32.partialorder %v753, 0.0
      %vm797 = vcmp.ge.f32.partialorder %v754, 0.0
      %vm798 = vcmp.ge.f32.partialorder %v755, 0.0
      %vm799 = vcmp.ge.f32.partialorder %v756, 0.0
      %vm800 = vcmp.ge.f32.partialorder %v757, 0.0
      %vm801 = vcmp.ge.f32.partialorder %v758, 0.0
      %vm802 = vcmp.ge.f32.partialorder %v759, 0.0
      %vm803 = vcmp.ge.f32.partialorder %v760, 0.0
      %vm804 = vcmp.ge.f32.partialorder %v761, 0.0
      %vm805 = vcmp.ge.f32.partialorder %v762, 0.0
      %vm806 = vcmp.ge.f32.partialorder %v763, 0.0
      %vm807 = vcmp.ge.f32.partialorder %v764, 0.0
      %vm808 = vcmp.ge.f32.partialorder %v765, 0.0
      %vm809 = vcmp.ge.f32.partialorder %v766, 0.0
      %vm810 = vcmp.ge.f32.partialorder %v767, 0.0
      %vm811 = vcmp.ge.f32.partialorder %v768, 0.0
      %vm812 = vcmp.ge.f32.partialorder %v769, 0.0
      %vm813 = vcmp.ge.f32.partialorder %v770, 0.0
      %vm814 = vcmp.ge.f32.partialorder %v771, 0.0
      %vm815 = vcmp.ge.f32.partialorder %v772, 0.0
      %vm816 = vcmp.ge.f32.partialorder %v773, 0.0
      %vm817 = vcmp.ge.f32.partialorder %v774, 0.0
      %vm818 = vcmp.ge.f32.partialorder %v775, 0.0
      %vm819 = vcmp.ge.f32.partialorder %v776, 0.0
      %vm820 = vcmp.ge.f32.partialorder %v777, 0.0
      %vm821 = vcmp.ge.f32.partialorder %v778, 0.0
      %vm822 = vcmp.ge.f32.partialorder %v779, 0.0
      %vm823 = vcmp.ge.f32.partialorder %v780, 0.0
      %vm824 = vcmp.ge.f32.partialorder %v781, 0.0
      %vm825 = vcmp.ge.f32.partialorder %v782, 0.0
      %vm826 = vcmp.ge.f32.partialorder %v783, 0.0
      %vm827 = vcmp.ge.f32.partialorder %v784, 0.0
      %vm828 = vcmp.ge.f32.partialorder %v785, 0.0
      %vm829 = vcmp.ge.f32.partialorder %v786, 0.0
      %vm830 = vcmp.ge.f32.partialorder %v787, 0.0
      %vm831 = vcmp.ge.f32.partialorder %v788, 0.0
      %v832 = vmul.f32 %v746, 0.2
      %v833 = vmul.f32 %v747, 0.2
      %v834 = vmul.f32 %v748, 0.2
      %v835 = vmul.f32 %v749, 0.2
      %v836 = vmul.f32 %v750, 0.2
      %v837 = vmul.f32 %v751, 0.2
      %v838 = vmul.f32 %v752, 0.2
      %v839 = vmul.f32 %v753, 0.2
      %v840 = vmul.f32 %v754, 0.2
      %v841 = vmul.f32 %v755, 0.2
      %v842 = vmul.f32 %v756, 0.2
      %v843 = vmul.f32 %v757, 0.2
      %v844 = vmul.f32 %v758, 0.2
      %v845 = vmul.f32 %v759, 0.2
      %v846 = vmul.f32 %v760, 0.2
      %v847 = vmul.f32 %v761, 0.2
      %v848 = vmul.f32 %v762, 0.2
      %v849 = vmul.f32 %v763, 0.2
      %v850 = vmul.f32 %v764, 0.2
      %v851 = vmul.f32 %v765, 0.2
      %v852 = vmul.f32 %v766, 0.2
      %v853 = vmul.f32 %v767, 0.2
      %v854 = vmul.f32 %v768, 0.2
      %v855 = vmul.f32 %v769, 0.2
      %v856 = vmul.f32 %v770, 0.2
      %v857 = vmul.f32 %v771, 0.2
      %v858 = vmul.f32 %v772, 0.2
      %v859 = vmul.f32 %v773, 0.2
      %v860 = vmul.f32 %v774, 0.2
      %v861 = vmul.f32 %v775, 0.2
      %v862 = vmul.f32 %v776, 0.2
      %v863 = vmul.f32 %v777, 0.2
      %v864 = vmul.f32 %v778, 0.2
      %v865 = vmul.f32 %v779, 0.2
      %v866 = vmul.f32 %v780, 0.2
      %v867 = vmul.f32 %v781, 0.2
      %v868 = vmul.f32 %v782, 0.2
      %v869 = vmul.f32 %v783, 0.2
      %v870 = vmul.f32 %v784, 0.2
      %v871 = vmul.f32 %v785, 0.2
      %v872 = vmul.f32 %v786, 0.2
      %v873 = vmul.f32 %v787, 0.2
      %v874 = vmul.f32 %v788, 0.2
      %v875 = vsel %vm789, %v746, %v832
      %v876 = vsel %vm790, %v747, %v833
      %v877 = vsel %vm791, %v748, %v834
      %v878 = vsel %vm792, %v749, %v835
      %v879 = vsel %vm793, %v750, %v836
      %v880 = vsel %vm794, %v751, %v837
      %v881 = vsel %vm795, %v752, %v838
      %v882 = vsel %vm796, %v753, %v839
      %v883 = vsel %vm797, %v754, %v840
      %v884 = vsel %vm798, %v755, %v841
      %v885 = vsel %vm799, %v756, %v842
      %v886 = vsel %vm800, %v757, %v843
      %v887 = vsel %vm801, %v758, %v844
      %v888 = vsel %vm802, %v759, %v845
      %v889 = vsel %vm803, %v760, %v846
      %v890 = vsel %vm804, %v761, %v847
      %v891 = vsel %vm805, %v762, %v848
      %v892 = vsel %vm806, %v763, %v849
      %v893 = vsel %vm807, %v764, %v850
      %v894 = vsel %vm808, %v765, %v851
      %v895 = vsel %vm809, %v766, %v852
      %v896 = vsel %vm810, %v767, %v853
      %v897 = vsel %vm811, %v768, %v854
      %v898 = vsel %vm812, %v769, %v855
      %v899 = vsel %vm813, %v770, %v856
      %v900 = vsel %vm814, %v771, %v857
      %v901 = vsel %vm815, %v772, %v858
      %v902 = vsel %vm816, %v773, %v859
      %v903 = vsel %vm817, %v774, %v860
      %v904 = vsel %vm818, %v775, %v861
      %v905 = vsel %vm819, %v776, %v862
      %v906 = vsel %vm820, %v777, %v863
      %v907 = vsel %vm821, %v778, %v864
      %v908 = vsel %vm822, %v779, %v865
      %v909 = vsel %vm823, %v780, %v866
      %v910 = vsel %vm824, %v781, %v867
      %v911 = vsel %vm825, %v782, %v868
      %v912 = vsel %vm826, %v783, %v869
      %v913 = vsel %vm827, %v784, %v870
      %v914 = vsel %vm828, %v785, %v871
      %v915 = vsel %vm829, %v786, %v872
      %v916 = vsel %vm830, %v787, %v873
      %v917 = vsel %vm831, %v788, %v874
      %v918 = vlaneseq
      %v919 = vshrl.u32 %v918, 7
      %v920 = vsub.s32 0, %v919
      %v921 = vrot.slane %v253, %v920
      %v922 = vadd.f32 %v875, %v921
      %v923 = vadd.f32 %v876, %v921
      %v924 = vadd.f32 %v877, %v921
      %v925 = vadd.f32 %v878, %v921
      %v926 = vadd.f32 %v879, %v921
      %v927 = vadd.f32 %v880, %v921
      %v928 = vadd.f32 %v881, %v921
      %v929 = vadd.f32 %v882, %v921
      %v930 = vadd.f32 %v883, %v921
      %v931 = vadd.f32 %v884, %v921
      %v932 = vadd.f32 %v885, %v921
      %v933 = vadd.f32 %v886, %v921
      %v934 = vadd.f32 %v887, %v921
      %v935 = vadd.f32 %v888, %v921
      %v936 = vadd.f32 %v889, %v921
      %v937 = vadd.f32 %v890, %v921
      %v938 = vadd.f32 %v891, %v921
      %v939 = vadd.f32 %v892, %v921
      %v940 = vadd.f32 %v893, %v921
      %v941 = vadd.f32 %v894, %v921
      %v942 = vadd.f32 %v895, %v921
      %v943 = vadd.f32 %v896, %v921
      %v944 = vadd.f32 %v897, %v921
      %v945 = vadd.f32 %v898, %v921
      %v946 = vadd.f32 %v899, %v921
      %v947 = vadd.f32 %v900, %v921
      %v948 = vadd.f32 %v901, %v921
      %v949 = vadd.f32 %v902, %v921
      %v950 = vadd.f32 %v903, %v921
      %v951 = vadd.f32 %v904, %v921
      %v952 = vadd.f32 %v905, %v921
      %v953 = vadd.f32 %v906, %v921
      %v954 = vadd.f32 %v907, %v921
      %v955 = vadd.f32 %v908, %v921
      %v956 = vadd.f32 %v909, %v921
      %v957 = vadd.f32 %v910, %v921
      %v958 = vadd.f32 %v911, %v921
      %v959 = vadd.f32 %v912, %v921
      %v960 = vadd.f32 %v913, %v921
      %v961 = vadd.f32 %v914, %v921
      %v962 = vadd.f32 %v915, %v921
      %v963 = vadd.f32 %v916, %v921
      %v964 = vadd.f32 %v917, %v921
      %966 = vset.pattern.permute.xlu0 0
      %967 = vperm.xlu0 %966, %v254
      %v968 = vpop.permute.xlu0 %967
      %971 = vset.pattern.permute.xlu0 0
      %972 = vperm.xlu0 %971, %v255
      %v973 = vpop.permute.xlu0 %972
      %976 = vset.pattern.permute.xlu0 0
      %977 = vperm.xlu0 %976, %v256
      %v978 = vpop.permute.xlu0 %977
      %981 = vset.pattern.permute.xlu0 0
      %982 = vperm.xlu0 %981, %v257
      %v983 = vpop.permute.xlu0 %982
      %986 = vset.pattern.permute.xlu0 0
      %987 = vperm.xlu0 %986, %v258
      %v988 = vpop.permute.xlu0 %987
      %991 = vset.pattern.permute.xlu0 0
      %992 = vperm.xlu0 %991, %v259
      %v993 = vpop.permute.xlu0 %992
      %996 = vset.pattern.permute.xlu0 0
      %997 = vperm.xlu0 %996, %v260
      %v998 = vpop.permute.xlu0 %997
      %1001 = vset.pattern.permute.xlu0 0
      %1002 = vperm.xlu0 %1001, %v261
      %v1003 = vpop.permute.xlu0 %1002
      %1006 = vset.pattern.permute.xlu0 0
      %1007 = vperm.xlu0 %1006, %v262
      %v1008 = vpop.permute.xlu0 %1007
      %1011 = vset.pattern.permute.xlu0 0
      %1012 = vperm.xlu0 %1011, %v263
      %v1013 = vpop.permute.xlu0 %1012
      %1016 = vset.pattern.permute.xlu0 0
      %1017 = vperm.xlu0 %1016, %v264
      %v1018 = vpop.permute.xlu0 %1017
      %1021 = vset.pattern.permute.xlu0 0
      %1022 = vperm.xlu0 %1021, %v265
      %v1023 = vpop.permute.xlu0 %1022
      %1026 = vset.pattern.permute.xlu0 0
      %1027 = vperm.xlu0 %1026, %v266
      %v1028 = vpop.permute.xlu0 %1027
      %1031 = vset.pattern.permute.xlu0 0
      %1032 = vperm.xlu0 %1031, %v267
      %v1033 = vpop.permute.xlu0 %1032
      %1036 = vset.pattern.permute.xlu0 0
      %1037 = vperm.xlu0 %1036, %v268
      %v1038 = vpop.permute.xlu0 %1037
      %1041 = vset.pattern.permute.xlu0 0
      %1042 = vperm.xlu0 %1041, %v269
      %v1043 = vpop.permute.xlu0 %1042
      %1046 = vset.pattern.permute.xlu0 0
      %1047 = vperm.xlu0 %1046, %v270
      %v1048 = vpop.permute.xlu0 %1047
      %1051 = vset.pattern.permute.xlu0 0
      %1052 = vperm.xlu0 %1051, %v271
      %v1053 = vpop.permute.xlu0 %1052
      %1056 = vset.pattern.permute.xlu0 0
      %1057 = vperm.xlu0 %1056, %v272
      %v1058 = vpop.permute.xlu0 %1057
      %1061 = vset.pattern.permute.xlu0 0
      %1062 = vperm.xlu0 %1061, %v273
      %v1063 = vpop.permute.xlu0 %1062
      %1066 = vset.pattern.permute.xlu0 0
      %1067 = vperm.xlu0 %1066, %v274
      %v1068 = vpop.permute.xlu0 %1067
      %1071 = vset.pattern.permute.xlu0 0
      %1072 = vperm.xlu0 %1071, %v275
      %v1073 = vpop.permute.xlu0 %1072
      %1076 = vset.pattern.permute.xlu0 0
      %1077 = vperm.xlu0 %1076, %v276
      %v1078 = vpop.permute.xlu0 %1077
      %1081 = vset.pattern.permute.xlu0 0
      %1082 = vperm.xlu0 %1081, %v277
      %v1083 = vpop.permute.xlu0 %1082
      %1086 = vset.pattern.permute.xlu0 0
      %1087 = vperm.xlu0 %1086, %v278
      %v1088 = vpop.permute.xlu0 %1087
      %1091 = vset.pattern.permute.xlu0 0
      %1092 = vperm.xlu0 %1091, %v279
      %v1093 = vpop.permute.xlu0 %1092
      %1096 = vset.pattern.permute.xlu0 0
      %1097 = vperm.xlu0 %1096, %v280
      %v1098 = vpop.permute.xlu0 %1097
      %1101 = vset.pattern.permute.xlu0 0
      %1102 = vperm.xlu0 %1101, %v281
      %v1103 = vpop.permute.xlu0 %1102
      %1106 = vset.pattern.permute.xlu0 0
      %1107 = vperm.xlu0 %1106, %v282
      %v1108 = vpop.permute.xlu0 %1107
      %1111 = vset.pattern.permute.xlu0 0
      %1112 = vperm.xlu0 %1111, %v283
      %v1113 = vpop.permute.xlu0 %1112
      %1116 = vset.pattern.permute.xlu0 0
      %1117 = vperm.xlu0 %1116, %v284
      %v1118 = vpop.permute.xlu0 %1117
      %1121 = vset.pattern.permute.xlu0 0
      %1122 = vperm.xlu0 %1121, %v285
      %v1123 = vpop.permute.xlu0 %1122
      %1126 = vset.pattern.permute.xlu0 0
      %1127 = vperm.xlu0 %1126, %v286
      %v1128 = vpop.permute.xlu0 %1127
      %1131 = vset.pattern.permute.xlu0 0
      %1132 = vperm.xlu0 %1131, %v287
      %v1133 = vpop.permute.xlu0 %1132
      %1136 = vset.pattern.permute.xlu0 0
      %1137 = vperm.xlu0 %1136, %v288
      %v1138 = vpop.permute.xlu0 %1137
      %1141 = vset.pattern.permute.xlu0 0
      %1142 = vperm.xlu0 %1141, %v289
      %v1143 = vpop.permute.xlu0 %1142
      %1146 = vset.pattern.permute.xlu0 0
      %1147 = vperm.xlu0 %1146, %v290
      %v1148 = vpop.permute.xlu0 %1147
      %1151 = vset.pattern.permute.xlu0 0
      %1152 = vperm.xlu0 %1151, %v291
      %v1153 = vpop.permute.xlu0 %1152
      %1156 = vset.pattern.permute.xlu0 0
      %1157 = vperm.xlu0 %1156, %v292
      %v1158 = vpop.permute.xlu0 %1157
      %1161 = vset.pattern.permute.xlu0 0
      %1162 = vperm.xlu0 %1161, %v293
      %v1163 = vpop.permute.xlu0 %1162
      %1166 = vset.pattern.permute.xlu0 0
      %1167 = vperm.xlu0 %1166, %v294
      %v1168 = vpop.permute.xlu0 %1167
      %1171 = vset.pattern.permute.xlu0 0
      %1172 = vperm.xlu0 %1171, %v295
      %v1173 = vpop.permute.xlu0 %1172
      %1176 = vset.pattern.permute.xlu0 0
      %1177 = vperm.xlu0 %1176, %v296
      %v1178 = vpop.permute.xlu0 %1177
      %v1180 = vmul.f32 %v922, %v968
      %v1181 = vmul.f32 %v923, %v973
      %v1182 = vmul.f32 %v924, %v978
      %v1183 = vmul.f32 %v925, %v983
      %v1184 = vmul.f32 %v926, %v988
      %v1185 = vmul.f32 %v927, %v993
      %v1186 = vmul.f32 %v928, %v998
      %v1187 = vmul.f32 %v929, %v1003
      %v1188 = vmul.f32 %v930, %v1008
      %v1189 = vmul.f32 %v931, %v1013
      %v1190 = vmul.f32 %v932, %v1018
      %v1191 = vmul.f32 %v933, %v1023
      %v1192 = vmul.f32 %v934, %v1028
      %v1193 = vmul.f32 %v935, %v1033
      %v1194 = vmul.f32 %v936, %v1038
      %v1195 = vmul.f32 %v937, %v1043
      %v1196 = vmul.f32 %v938, %v1048
      %v1197 = vmul.f32 %v939, %v1053
      %v1198 = vmul.f32 %v940, %v1058
      %v1199 = vmul.f32 %v941, %v1063
      %v1200 = vmul.f32 %v942, %v1068
      %v1201 = vmul.f32 %v943, %v1073
      %v1202 = vmul.f32 %v944, %v1078
      %v1203 = vmul.f32 %v945, %v1083
      %v1204 = vmul.f32 %v946, %v1088
      %v1205 = vmul.f32 %v947, %v1093
      %v1206 = vmul.f32 %v948, %v1098
      %v1207 = vmul.f32 %v949, %v1103
      %v1208 = vmul.f32 %v950, %v1108
      %v1209 = vmul.f32 %v951, %v1113
      %v1210 = vmul.f32 %v952, %v1118
      %v1211 = vmul.f32 %v953, %v1123
      %v1212 = vmul.f32 %v954, %v1128
      %v1213 = vmul.f32 %v955, %v1133
      %v1214 = vmul.f32 %v956, %v1138
      %v1215 = vmul.f32 %v957, %v1143
      %v1216 = vmul.f32 %v958, %v1148
      %v1217 = vmul.f32 %v959, %v1153
      %v1218 = vmul.f32 %v960, %v1158
      %v1219 = vmul.f32 %v961, %v1163
      %v1220 = vmul.f32 %v962, %v1168
      %v1221 = vmul.f32 %v963, %v1173
      %v1222 = vmul.f32 %v964, %v1178
      %1223 = vst.msk [vmem:[#allocation2] sm:$0xff] %vm376, %v1180
      %1224 = vst.msk [vmem:[#allocation2 + $0x8] sm:$0xff] %vm376, %v1181
      %1225 = vst.msk [vmem:[#allocation2 + $0x10] sm:$0xff] %vm376, %v1182
      %1226 = vst.msk [vmem:[#allocation2 + $0x18] sm:$0xff] %vm376, %v1183
      %1227 = vst.msk [vmem:[#allocation2 + $0x20] sm:$0xff] %vm376, %v1184
      %1228 = vst.msk [vmem:[#allocation2 + $0x28] sm:$0xff] %vm376, %v1185
      %1229 = vst.msk [vmem:[#allocation2 + $0x30] sm:$0xff] %vm376, %v1186
      %1230 = vst.msk [vmem:[#allocation2 + $0x38] sm:$0xff] %vm376, %v1187
      %1231 = vst.msk [vmem:[#allocation2 + $0x40] sm:$0xff] %vm376, %v1188
      %1232 = vst.msk [vmem:[#allocation2 + $0x48] sm:$0xff] %vm376, %v1189
      %1233 = vst.msk [vmem:[#allocation2 + $0x50] sm:$0xff] %vm376, %v1190
      %1234 = vst.msk [vmem:[#allocation2 + $0x58] sm:$0xff] %vm376, %v1191
      %1235 = vst.msk [vmem:[#allocation2 + $0x60] sm:$0xff] %vm376, %v1192
      %1236 = vst.msk [vmem:[#allocation2 + $0x68] sm:$0xff] %vm376, %v1193
      %1237 = vst.msk [vmem:[#allocation2 + $0x70] sm:$0xff] %vm376, %v1194
      %1238 = vst.msk [vmem:[#allocation2 + $0x78] sm:$0xff] %vm376, %v1195
      %1239 = vst.msk [vmem:[#allocation2 + $0x80] sm:$0xff] %vm376, %v1196
      %1240 = vst.msk [vmem:[#allocation2 + $0x88] sm:$0xff] %vm376, %v1197
      %1241 = vst.msk [vmem:[#allocation2 + $0x90] sm:$0xff] %vm376, %v1198
      %1242 = vst.msk [vmem:[#allocation2 + $0x98] sm:$0xff] %vm376, %v1199
      %1243 = vst.msk [vmem:[#allocation2 + $0xa0] sm:$0xff] %vm376, %v1200
      %1244 = vst.msk [vmem:[#allocation2 + $0xa8] sm:$0xff] %vm376, %v1201
      %1245 = vst.msk [vmem:[#allocation2 + $0xb0] sm:$0xff] %vm376, %v1202
      %1246 = vst.msk [vmem:[#allocation2 + $0xb8] sm:$0xff] %vm376, %v1203
      %1247 = vst.msk [vmem:[#allocation2 + $0xc0] sm:$0xff] %vm376, %v1204
      %1248 = vst.msk [vmem:[#allocation2 + $0xc8] sm:$0xff] %vm376, %v1205
      %1249 = vst.msk [vmem:[#allocation2 + $0xd0] sm:$0xff] %vm376, %v1206
      %1250 = vst.msk [vmem:[#allocation2 + $0xd8] sm:$0xff] %vm376, %v1207
      %1251 = vst.msk [vmem:[#allocation2 + $0xe0] sm:$0xff] %vm376, %v1208
      %1252 = vst.msk [vmem:[#allocation2 + $0xe8] sm:$0xff] %vm376, %v1209
      %1253 = vst.msk [vmem:[#allocation2 + $0xf0] sm:$0xff] %vm376, %v1210
      %1254 = vst.msk [vmem:[#allocation2 + $0xf8] sm:$0xff] %vm376, %v1211
      %1255 = vst.msk [vmem:[#allocation2 + $0x100] sm:$0xff] %vm376, %v1212
      %1256 = vst.msk [vmem:[#allocation2 + $0x108] sm:$0xff] %vm376, %v1213
      %1257 = vst.msk [vmem:[#allocation2 + $0x110] sm:$0xff] %vm376, %v1214
      %1258 = vst.msk [vmem:[#allocation2 + $0x118] sm:$0xff] %vm376, %v1215
      %1259 = vst.msk [vmem:[#allocation2 + $0x120] sm:$0xff] %vm376, %v1216
      %1260 = vst.msk [vmem:[#allocation2 + $0x128] sm:$0xff] %vm376, %v1217
      %1261 = vst.msk [vmem:[#allocation2 + $0x130] sm:$0xff] %vm376, %v1218
      %1262 = vst.msk [vmem:[#allocation2 + $0x138] sm:$0xff] %vm376, %v1219
      %1263 = vst.msk [vmem:[#allocation2 + $0x140] sm:$0xff] %vm376, %v1220
      %1264 = vst.msk [vmem:[#allocation2 + $0x148] sm:$0xff] %vm376, %v1221
      %1265 = vst.msk [vmem:[#allocation2 + $0x150] sm:$0x3f] %vm460, %v1222
      %v1266 = vld [vmem:[#allocation2] sm:$0xff]
      %v1267 = vld [vmem:[#allocation2 + $0x8] sm:$0xff]
      %v1268 = vld [vmem:[#allocation2 + $0x10] sm:$0xff]
      %v1269 = vld [vmem:[#allocation2 + $0x18] sm:$0xff]
      %v1270 = vld [vmem:[#allocation2 + $0x20] sm:$0xff]
      %v1271 = vld [vmem:[#allocation2 + $0x28] sm:$0xff]
      %v1272 = vld [vmem:[#allocation2 + $0x30] sm:$0xff]
      %v1273 = vld [vmem:[#allocation2 + $0x38] sm:$0xff]
      %v1274 = vld [vmem:[#allocation2 + $0x40] sm:$0xff]
      %v1275 = vld [vmem:[#allocation2 + $0x48] sm:$0xff]
      %v1276 = vld [vmem:[#allocation2 + $0x50] sm:$0xff]
      %v1277 = vld [vmem:[#allocation2 + $0x58] sm:$0xff]
      %v1278 = vld [vmem:[#allocation2 + $0x60] sm:$0xff]
      %v1279 = vld [vmem:[#allocation2 + $0x68] sm:$0xff]
      %v1280 = vld [vmem:[#allocation2 + $0x70] sm:$0xff]
      %v1281 = vld [vmem:[#allocation2 + $0x78] sm:$0xff]
      %v1282 = vld [vmem:[#allocation2 + $0x80] sm:$0xff]
      %v1283 = vld [vmem:[#allocation2 + $0x88] sm:$0xff]
      %v1284 = vld [vmem:[#allocation2 + $0x90] sm:$0xff]
      %v1285 = vld [vmem:[#allocation2 + $0x98] sm:$0xff]
      %v1286 = vld [vmem:[#allocation2 + $0xa0] sm:$0xff]
      %v1287 = vld [vmem:[#allocation2 + $0xa8] sm:$0xff]
      %v1288 = vld [vmem:[#allocation2 + $0xb0] sm:$0xff]
      %v1289 = vld [vmem:[#allocation2 + $0xb8] sm:$0xff]
      %v1290 = vld [vmem:[#allocation2 + $0xc0] sm:$0xff]
      %v1291 = vld [vmem:[#allocation2 + $0xc8] sm:$0xff]
      %v1292 = vld [vmem:[#allocation2 + $0xd0] sm:$0xff]
      %v1293 = vld [vmem:[#allocation2 + $0xd8] sm:$0xff]
      %v1294 = vld [vmem:[#allocation2 + $0xe0] sm:$0xff]
      %v1295 = vld [vmem:[#allocation2 + $0xe8] sm:$0xff]
      %v1296 = vld [vmem:[#allocation2 + $0xf0] sm:$0xff]
      %v1297 = vld [vmem:[#allocation2 + $0xf8] sm:$0xff]
      %v1298 = vld [vmem:[#allocation2 + $0x100] sm:$0xff]
      %v1299 = vld [vmem:[#allocation2 + $0x108] sm:$0xff]
      %v1300 = vld [vmem:[#allocation2 + $0x110] sm:$0xff]
      %v1301 = vld [vmem:[#allocation2 + $0x118] sm:$0xff]
      %v1302 = vld [vmem:[%s5] sm:$0xff]
      %v1303 = vld [vmem:[#allocation2 + $0x1] sm:$0xff]
      %v1304 = vld [vmem:[#allocation2 + $0x9] sm:$0xff]
      %v1305 = vld [vmem:[#allocation2 + $0x11] sm:$0xff]
      %v1306 = vld [vmem:[#allocation2 + $0x19] sm:$0xff]
      %v1307 = vld [vmem:[#allocation2 + $0x21] sm:$0xff]
      %v1308 = vld [vmem:[#allocation2 + $0x29] sm:$0xff]
      %v1309 = vld [vmem:[#allocation2 + $0x31] sm:$0xff]
      %v1310 = vld [vmem:[#allocation2 + $0x39] sm:$0xff]
      %v1311 = vld [vmem:[#allocation2 + $0x41] sm:$0xff]
      %v1312 = vld [vmem:[#allocation2 + $0x49] sm:$0xff]
      %v1313 = vld [vmem:[#allocation2 + $0x51] sm:$0xff]
      %v1314 = vld [vmem:[#allocation2 + $0x59] sm:$0xff]
      %v1315 = vld [vmem:[#allocation2 + $0x61] sm:$0xff]
      %v1316 = vld [vmem:[#allocation2 + $0x69] sm:$0xff]
      %v1317 = vld [vmem:[#allocation2 + $0x71] sm:$0xff]
      %v1318 = vld [vmem:[#allocation2 + $0x79] sm:$0xff]
      %v1319 = vld [vmem:[#allocation2 + $0x81] sm:$0xff]
      %v1320 = vld [vmem:[#allocation2 + $0x89] sm:$0xff]
      %v1321 = vld [vmem:[#allocation2 + $0x91] sm:$0xff]
      %v1322 = vld [vmem:[#allocation2 + $0x99] sm:$0xff]
      %v1323 = vld [vmem:[#allocation2 + $0xa1] sm:$0xff]
      %v1324 = vld [vmem:[#allocation2 + $0xa9] sm:$0xff]
      %v1325 = vld [vmem:[#allocation2 + $0xb1] sm:$0xff]
      %v1326 = vld [vmem:[#allocation2 + $0xb9] sm:$0xff]
      %v1327 = vld [vmem:[#allocation2 + $0xc1] sm:$0xff]
      %v1328 = vld [vmem:[#allocation2 + $0xc9] sm:$0xff]
      %v1329 = vld [vmem:[#allocation2 + $0xd1] sm:$0xff]
      %v1330 = vld [vmem:[#allocation2 + $0xd9] sm:$0xff]
      %v1331 = vld [vmem:[#allocation2 + $0xe1] sm:$0xff]
      %v1332 = vld [vmem:[#allocation2 + $0xe9] sm:$0xff]
      %v1333 = vld [vmem:[#allocation2 + $0xf1] sm:$0xff]
      %v1334 = vld [vmem:[#allocation2 + $0xf9] sm:$0xff]
      %v1335 = vld [vmem:[#allocation2 + $0x101] sm:$0xff]
      %v1336 = vld [vmem:[#allocation2 + $0x109] sm:$0xff]
      %v1337 = vld [vmem:[#allocation2 + $0x111] sm:$0xff]
      %v1338 = vld [vmem:[#allocation2 + $0x119] sm:$0xff]
      %s1339 = scalar_lea.vmem %s5, 8
      %v1340 = vld [vmem:[%s1339] sm:$0xff]
      %v1342 = vsel %vm376, %v1303, 0
      %v1345 = vsel %vm376, %v1304, 0
      %v1348 = vsel %vm376, %v1305, 0
      %v1351 = vsel %vm376, %v1306, 0
      %v1354 = vsel %vm376, %v1307, 0
      %v1357 = vsel %vm376, %v1308, 0
      %v1360 = vsel %vm376, %v1309, 0
      %v1363 = vsel %vm376, %v1310, 0
      %v1366 = vsel %vm376, %v1311, 0
      %v1369 = vsel %vm376, %v1312, 0
      %v1372 = vsel %vm376, %v1313, 0
      %v1375 = vsel %vm376, %v1314, 0
      %v1378 = vsel %vm376, %v1315, 0
      %v1381 = vsel %vm376, %v1316, 0
      %v1384 = vsel %vm376, %v1317, 0
      %v1387 = vsel %vm376, %v1318, 0
      %v1390 = vsel %vm376, %v1319, 0
      %v1393 = vsel %vm376, %v1320, 0
      %v1396 = vsel %vm376, %v1321, 0
      %v1399 = vsel %vm376, %v1322, 0
      %v1402 = vsel %vm376, %v1323, 0
      %v1405 = vsel %vm376, %v1324, 0
      %v1408 = vsel %vm376, %v1325, 0
      %v1411 = vsel %vm376, %v1326, 0
      %v1414 = vsel %vm376, %v1327, 0
      %v1417 = vsel %vm376, %v1328, 0
      %v1420 = vsel %vm376, %v1329, 0
      %v1423 = vsel %vm376, %v1330, 0
      %v1426 = vsel %vm376, %v1331, 0
      %v1429 = vsel %vm376, %v1332, 0
      %v1432 = vsel %vm376, %v1333, 0
      %v1435 = vsel %vm376, %v1334, 0
      %v1438 = vsel %vm376, %v1335, 0
      %v1441 = vsel %vm376, %v1336, 0
      %v1444 = vsel %vm376, %v1337, 0
      %v1447 = vsel %vm376, %v1338, 0
      %1449 = vmatprep.subr.mxu0 0.0
      %1450 = vmatpush1.msra.mxu0 %v1340
      %1451 = vmatprep.subr.mxu0 0.0
      %1452 = vmatpush1.msra.mxu0 0.0
      %1453 = vmatprep.subr.mxu0 0.0
      %1454 = vmatpush1.msra.mxu0 0.0
      %1455 = vmatprep.subr.mxu0 0.0
      %1456 = vmatpush1.msra.mxu0 0.0
      %1457 = vmatprep.subr.mxu0 0.0
      %1458 = vmatpush1.msra.mxu0 0.0
      %1459 = vmatprep.subr.mxu0 0.0
      %1460 = vmatpush1.msra.mxu0 0.0
      %1461 = vmatprep.subr.mxu0 0.0
      %1462 = vmatpush1.msra.mxu0 0.0
      %1463 = vmatprep.subr.mxu0 0.0
      %1464 = vmatpush1.msra.mxu0 0.0
      %1465 = vmatprep.subr.mxu0 0.0
      %1466 = vmatpush1.msra.mxu0 0.0
      %1467 = vmatprep.subr.mxu0 0.0
      %1468 = vmatpush1.msra.mxu0 0.0
      %1469 = vmatprep.subr.mxu0 0.0
      %1470 = vmatpush1.msra.mxu0 0.0
      %1471 = vmatprep.subr.mxu0 0.0
      %1472 = vmatpush1.msra.mxu0 0.0
      %1473 = vmatprep.subr.mxu0 0.0
      %1474 = vmatpush1.msra.mxu0 0.0
      %1475 = vmatprep.subr.mxu0 0.0
      %1476 = vmatpush1.msra.mxu0 0.0
      %1477 = vmatprep.subr.mxu0 0.0
      %1478 = vmatpush1.msra.mxu0 0.0
      %1479 = vmatprep.subr.mxu0 0.0
      %1480 = vmatpush1.msra.mxu0 0.0
      %1481 = vmatprep.subr.mxu0 0.0
      %1482 = vmatpush1.msra.mxu0 0.0
      %1483 = vmatprep.subr.mxu0 0.0
      %1484 = vmatpush1.msra.mxu0 0.0
      %1485 = vmatprep.subr.mxu0 0.0
      %1486 = vmatpush1.msra.mxu0 0.0
      %1487 = vmatprep.subr.mxu0 0.0
      %1488 = vmatpush1.msra.mxu0 0.0
      %1489 = vmatprep.subr.mxu0 0.0
      %1490 = vmatpush1.msra.mxu0 0.0
      %1491 = vmatprep.subr.mxu0 0.0
      %1492 = vmatpush1.msra.mxu0 0.0
      %1493 = vmatprep.subr.mxu0 0.0
      %1494 = vmatpush1.msra.mxu0 0.0
      %1495 = vmatprep.subr.mxu0 0.0
      %1496 = vmatpush1.msra.mxu0 0.0
      %1497 = vmatprep.subr.mxu0 0.0
      %1498 = vmatpush1.msra.mxu0 0.0
      %1499 = vmatprep.subr.mxu0 0.0
      %1500 = vmatpush1.msra.mxu0 0.0
      %1501 = vmatprep.subr.mxu0 0.0
      %1502 = vmatpush1.msra.mxu0 0.0
      %1503 = vmatprep.subr.mxu0 0.0
      %1504 = vmatpush1.msra.mxu0 0.0
      %1505 = vmatprep.subr.mxu0 0.0
      %1506 = vmatpush1.msra.mxu0 0.0
      %1507 = vmatprep.subr.mxu0 0.0
      %1508 = vmatpush1.msra.mxu0 0.0
      %1509 = vmatprep.subr.mxu0 0.0
      %1510 = vmatpush1.msra.mxu0 0.0
      %1511 = vmatprep.subr.mxu0 0.0
      %1512 = vmatpush1.msra.mxu0 0.0
      %1513 = vmatprep.mubr.f32.mxu0 0.0
      %1514 = vmatmul.mubr.f32.gmra.mrb[0].mxu0 %v1342
      %v1515 = vpop.f32.mrb[0].mxu0
      %v1516 = vadd.f32 0.0, %v1515
      %v1517 = vpop.f32.mrb[0].mxu0
      %1518 = vmatprep.mubr.f32.mxu0 0.0
      %1519 = vmatmul.mubr.f32.gmra.mrb[0].mxu0 %v1345
      %v1520 = vpop.f32.mrb[0].mxu0
      %v1521 = vadd.f32 0.0, %v1520
      %v1522 = vpop.f32.mrb[0].mxu0
      %1523 = vmatprep.mubr.f32.mxu0 0.0
      %1524 = vmatmul.mubr.f32.gmra.mrb[0].mxu0 %v1348
      %v1525 = vpop.f32.mrb[0].mxu0
      %v1526 = vadd.f32 0.0, %v1525
      %v1527 = vpop.f32.mrb[0].mxu0
      %1528 = vmatprep.mubr.f32.mxu0 0.0
      %1529 = vmatmul.mubr.f32.gmra.mrb[0].mxu0 %v1351
      %v1530 = vpop.f32.mrb[0].mxu0
      %v1531 = vadd.f32 0.0, %v1530
      %v1532 = vpop.f32.mrb[0].mxu0
      %1533 = vmatprep.mubr.f32.mxu0 0.0
      %1534 = vmatmul.mubr.f32.gmra.mrb[0].mxu0 %v1354
      %v1535 = vpop.f32.mrb[0].mxu0
      %v1536 = vadd.f32 0.0, %v1535
      %v1537 = vpop.f32.mrb[0].mxu0
      %1538 = vmatprep.mubr.f32.mxu0 0.0
      %1539 = vmatmul.mubr.f32.gmra.mrb[0].mxu0 %v1357
      %v1540 = vpop.f32.mrb[0].mxu0
      %v1541 = vadd.f32 0.0, %v1540
      %v1542 = vpop.f32.mrb[0].mxu0
      %1543 = vmatprep.mubr.f32.mxu0 0.0
      %1544 = vmatmul.mubr.f32.gmra.mrb[0].mxu0 %v1360
      %v1545 = vpop.f32.mrb[0].mxu0
      %v1546 = vadd.f32 0.0, %v1545
      %v1547 = vpop.f32.mrb[0].mxu0
      %1548 = vmatprep.mubr.f32.mxu0 0.0
      %1549 = vmatmul.mubr.f32.gmra.mrb[0].mxu0 %v1363
      %v1550 = vpop.f32.mrb[0].mxu0
      %v1551 = vadd.f32 0.0, %v1550
      %v1552 = vpop.f32.mrb[0].mxu0
      %1553 = vmatprep.mubr.f32.mxu0 0.0
      %1554 = vmatmul.mubr.f32.gmra.mrb[0].mxu0 %v1366
      %v1555 = vpop.f32.mrb[0].mxu0
      %v1556 = vadd.f32 0.0, %v1555
      %v1557 = vpop.f32.mrb[0].mxu0
      %1558 = vmatprep.mubr.f32.mxu0 0.0
      %1559 = vmatmul.mubr.f32.gmra.mrb[0].mxu0 %v1369
      %v1560 = vpop.f32.mrb[0].mxu0
      %v1561 = vadd.f32 0.0, %v1560
      %v1562 = vpop.f32.mrb[0].mxu0
      %1563 = vmatprep.mubr.f32.mxu0 0.0
      %1564 = vmatmul.mubr.f32.gmra.mrb[0].mxu0 %v1372
      %v1565 = vpop.f32.mrb[0].mxu0
      %v1566 = vadd.f32 0.0, %v1565
      %v1567 = vpop.f32.mrb[0].mxu0
      %1568 = vmatprep.mubr.f32.mxu0 0.0
      %1569 = vmatmul.mubr.f32.gmra.mrb[0].mxu0 %v1375
      %v1570 = vpop.f32.mrb[0].mxu0
      %v1571 = vadd.f32 0.0, %v1570
      %v1572 = vpop.f32.mrb[0].mxu0
      %1573 = vmatprep.mubr.f32.mxu0 0.0
      %1574 = vmatmul.mubr.f32.gmra.mrb[0].mxu0 %v1378
      %v1575 = vpop.f32.mrb[0].mxu0
      %v1576 = vadd.f32 0.0, %v1575
      %v1577 = vpop.f32.mrb[0].mxu0
      %1578 = vmatprep.mubr.f32.mxu0 0.0
      %1579 = vmatmul.mubr.f32.gmra.mrb[0].mxu0 %v1381
      %v1580 = vpop.f32.mrb[0].mxu0
      %v1581 = vadd.f32 0.0, %v1580
      %v1582 = vpop.f32.mrb[0].mxu0
      %1583 = vmatprep.mubr.f32.mxu0 0.0
      %1584 = vmatmul.mubr.f32.gmra.mrb[0].mxu0 %v1384
      %v1585 = vpop.f32.mrb[0].mxu0
      %v1586 = vadd.f32 0.0, %v1585
      %v1587 = vpop.f32.mrb[0].mxu0
      %1588 = vmatprep.mubr.f32.mxu0 0.0
      %1589 = vmatmul.mubr.f32.gmra.mrb[0].mxu0 %v1387
      %v1590 = vpop.f32.mrb[0].mxu0
      %v1591 = vadd.f32 0.0, %v1590
      %v1592 = vpop.f32.mrb[0].mxu0
      %1593 = vmatprep.mubr.f32.mxu0 0.0
      %1594 = vmatmul.mubr.f32.gmra.mrb[0].mxu0 %v1390
      %v1595 = vpop.f32.mrb[0].mxu0
      %v1596 = vadd.f32 0.0, %v1595
      %v1597 = vpop.f32.mrb[0].mxu0
      %1598 = vmatprep.mubr.f32.mxu0 0.0
      %1599 = vmatmul.mubr.f32.gmra.mrb[0].mxu0 %v1393
      %v1600 = vpop.f32.mrb[0].mxu0
      %v1601 = vadd.f32 0.0, %v1600
      %v1602 = vpop.f32.mrb[0].mxu0
      %1603 = vmatprep.mubr.f32.mxu0 0.0
      %1604 = vmatmul.mubr.f32.gmra.mrb[0].mxu0 %v1396
      %v1605 = vpop.f32.mrb[0].mxu0
      %v1606 = vadd.f32 0.0, %v1605
      %v1607 = vpop.f32.mrb[0].mxu0
      %1608 = vmatprep.mubr.f32.mxu0 0.0
      %1609 = vmatmul.mubr.f32.gmra.mrb[0].mxu0 %v1399
      %v1610 = vpop.f32.mrb[0].mxu0
      %v1611 = vadd.f32 0.0, %v1610
      %v1612 = vpop.f32.mrb[0].mxu0
      %1613 = vmatprep.mubr.f32.mxu0 0.0
      %1614 = vmatmul.mubr.f32.gmra.mrb[0].mxu0 %v1402
      %v1615 = vpop.f32.mrb[0].mxu0
      %v1616 = vadd.f32 0.0, %v1615
      %v1617 = vpop.f32.mrb[0].mxu0
      %1618 = vmatprep.mubr.f32.mxu0 0.0
      %1619 = vmatmul.mubr.f32.gmra.mrb[0].mxu0 %v1405
      %v1620 = vpop.f32.mrb[0].mxu0
      %v1621 = vadd.f32 0.0, %v1620
      %v1622 = vpop.f32.mrb[0].mxu0
      %1623 = vmatprep.mubr.f32.mxu0 0.0
      %1624 = vmatmul.mubr.f32.gmra.mrb[0].mxu0 %v1408
      %v1625 = vpop.f32.mrb[0].mxu0
      %v1626 = vadd.f32 0.0, %v1625
      %v1627 = vpop.f32.mrb[0].mxu0
      %1628 = vmatprep.mubr.f32.mxu0 0.0
      %1629 = vmatmul.mubr.f32.gmra.mrb[0].mxu0 %v1411
      %v1630 = vpop.f32.mrb[0].mxu0
      %v1631 = vadd.f32 0.0, %v1630
      %v1632 = vpop.f32.mrb[0].mxu0
      %1633 = vmatprep.mubr.f32.mxu0 0.0
      %1634 = vmatmul.mubr.f32.gmra.mrb[0].mxu0 %v1414
      %v1635 = vpop.f32.mrb[0].mxu0
      %v1636 = vadd.f32 0.0, %v1635
      %v1637 = vpop.f32.mrb[0].mxu0
      %1638 = vmatprep.mubr.f32.mxu0 0.0
      %1639 = vmatmul.mubr.f32.gmra.mrb[0].mxu0 %v1417
      %v1640 = vpop.f32.mrb[0].mxu0
      %v1641 = vadd.f32 0.0, %v1640
      %v1642 = vpop.f32.mrb[0].mxu0
      %1643 = vmatprep.mubr.f32.mxu0 0.0
      %1644 = vmatmul.mubr.f32.gmra.mrb[0].mxu0 %v1420
      %v1645 = vpop.f32.mrb[0].mxu0
      %v1646 = vadd.f32 0.0, %v1645
      %v1647 = vpop.f32.mrb[0].mxu0
      %1648 = vmatprep.mubr.f32.mxu0 0.0
      %1649 = vmatmul.mubr.f32.gmra.mrb[0].mxu0 %v1423
      %v1650 = vpop.f32.mrb[0].mxu0
      %v1651 = vadd.f32 0.0, %v1650
      %v1652 = vpop.f32.mrb[0].mxu0
      %1653 = vmatprep.mubr.f32.mxu0 0.0
      %1654 = vmatmul.mubr.f32.gmra.mrb[0].mxu0 %v1426
      %v1655 = vpop.f32.mrb[0].mxu0
      %v1656 = vadd.f32 0.0, %v1655
      %v1657 = vpop.f32.mrb[0].mxu0
      %1658 = vmatprep.mubr.f32.mxu0 0.0
      %1659 = vmatmul.mubr.f32.gmra.mrb[0].mxu0 %v1429
      %v1660 = vpop.f32.mrb[0].mxu0
      %v1661 = vadd.f32 0.0, %v1660
      %v1662 = vpop.f32.mrb[0].mxu0
      %1663 = vmatprep.mubr.f32.mxu0 0.0
      %1664 = vmatmul.mubr.f32.gmra.mrb[0].mxu0 %v1432
      %v1665 = vpop.f32.mrb[0].mxu0
      %v1666 = vadd.f32 0.0, %v1665
      %v1667 = vpop.f32.mrb[0].mxu0
      %1668 = vmatprep.mubr.f32.mxu0 0.0
      %1669 = vmatmul.mubr.f32.gmra.mrb[0].mxu0 %v1435
      %v1670 = vpop.f32.mrb[0].mxu0
      %v1671 = vadd.f32 0.0, %v1670
      %v1672 = vpop.f32.mrb[0].mxu0
      %1673 = vmatprep.mubr.f32.mxu0 0.0
      %1674 = vmatmul.mubr.f32.gmra.mrb[0].mxu0 %v1438
      %v1675 = vpop.f32.mrb[0].mxu0
      %v1676 = vadd.f32 0.0, %v1675
      %v1677 = vpop.f32.mrb[0].mxu0
      %1678 = vmatprep.mubr.f32.mxu0 0.0
      %1679 = vmatmul.mubr.f32.gmra.mrb[0].mxu0 %v1441
      %v1680 = vpop.f32.mrb[0].mxu0
      %v1681 = vadd.f32 0.0, %v1680
      %v1682 = vpop.f32.mrb[0].mxu0
      %1683 = vmatprep.mubr.f32.mxu0 0.0
      %1684 = vmatmul.mubr.f32.gmra.mrb[0].mxu0 %v1444
      %v1685 = vpop.f32.mrb[0].mxu0
      %v1686 = vadd.f32 0.0, %v1685
      %v1687 = vpop.f32.mrb[0].mxu0
      %1688 = vmatprep.mubr.f32.mxu0 0.0
      %1689 = vmatmul.mubr.f32.gmra.mrb[0].mxu0 %v1447
      %v1690 = vpop.f32.mrb[0].mxu0
      %v1691 = vadd.f32 0.0, %v1690
      %v1692 = vpop.f32.mrb[0].mxu0
      %1693 = vdwg.mxu0
      %v1695 = vsel %vm376, %v1266, 0
      %v1698 = vsel %vm376, %v1267, 0
      %v1701 = vsel %vm376, %v1268, 0
      %v1704 = vsel %vm376, %v1269, 0
      %v1707 = vsel %vm376, %v1270, 0
      %v1710 = vsel %vm376, %v1271, 0
      %v1713 = vsel %vm376, %v1272, 0
      %v1716 = vsel %vm376, %v1273, 0
      %v1719 = vsel %vm376, %v1274, 0
      %v1722 = vsel %vm376, %v1275, 0
      %v1725 = vsel %vm376, %v1276, 0
      %v1728 = vsel %vm376, %v1277, 0
      %v1731 = vsel %vm376, %v1278, 0
      %v1734 = vsel %vm376, %v1279, 0
      %v1737 = vsel %vm376, %v1280, 0
      %v1740 = vsel %vm376, %v1281, 0
      %v1743 = vsel %vm376, %v1282, 0
      %v1746 = vsel %vm376, %v1283, 0
      %v1749 = vsel %vm376, %v1284, 0
      %v1752 = vsel %vm376, %v1285, 0
      %v1755 = vsel %vm376, %v1286, 0
      %v1758 = vsel %vm376, %v1287, 0
      %v1761 = vsel %vm376, %v1288, 0
      %v1764 = vsel %vm376, %v1289, 0
      %v1767 = vsel %vm376, %v1290, 0
      %v1770 = vsel %vm376, %v1291, 0
      %v1773 = vsel %vm376, %v1292, 0
      %v1776 = vsel %vm376, %v1293, 0
      %v1779 = vsel %vm376, %v1294, 0
      %v1782 = vsel %vm376, %v1295, 0
      %v1785 = vsel %vm376, %v1296, 0
      %v1788 = vsel %vm376, %v1297, 0
      %v1791 = vsel %vm376, %v1298, 0
      %v1794 = vsel %vm376, %v1299, 0
      %v1797 = vsel %vm376, %v1300, 0
      %v1800 = vsel %vm376, %v1301, 0
      %1802 = vmatprep.subr.mxu0 0.0
      %1803 = vmatpush1.msra.mxu0 %v1302
      %1804 = vmatprep.subr.mxu0 0.0
      %1805 = vmatpush1.msra.mxu0 0.0
      %1806 = vmatprep.subr.mxu0 0.0
      %1807 = vmatpush1.msra.mxu0 0.0
      %1808 = vmatprep.subr.mxu0 0.0
      %1809 = vmatpush1.msra.mxu0 0.0
      %1810 = vmatprep.subr.mxu0 0.0
      %1811 = vmatpush1.msra.mxu0 0.0
      %1812 = vmatprep.subr.mxu0 0.0
      %1813 = vmatpush1.msra.mxu0 0.0
      %1814 = vmatprep.subr.mxu0 0.0
      %1815 = vmatpush1.msra.mxu0 0.0
      %1816 = vmatprep.subr.mxu0 0.0
      %1817 = vmatpush1.msra.mxu0 0.0
      %1818 = vmatprep.subr.mxu0 0.0
      %1819 = vmatpush1.msra.mxu0 0.0
      %1820 = vmatprep.subr.mxu0 0.0
      %1821 = vmatpush1.msra.mxu0 0.0
      %1822 = vmatprep.subr.mxu0 0.0
      %1823 = vmatpush1.msra.mxu0 0.0
      %1824 = vmatprep.subr.mxu0 0.0
      %1825 = vmatpush1.msra.mxu0 0.0
      %1826 = vmatprep.subr.mxu0 0.0
      %1827 = vmatpush1.msra.mxu0 0.0
      %1828 = vmatprep.subr.mxu0 0.0
      %1829 = vmatpush1.msra.mxu0 0.0
      %1830 = vmatprep.subr.mxu0 0.0
      %1831 = vmatpush1.msra.mxu0 0.0
      %1832 = vmatprep.subr.mxu0 0.0
      %1833 = vmatpush1.msra.mxu0 0.0
      %1834 = vmatprep.subr.mxu0 0.0
      %1835 = vmatpush1.msra.mxu0 0.0
      %1836 = vmatprep.subr.mxu0 0.0
      %1837 = vmatpush1.msra.mxu0 0.0
      %1838 = vmatprep.subr.mxu0 0.0
      %1839 = vmatpush1.msra.mxu0 0.0
      %1840 = vmatprep.subr.mxu0 0.0
      %1841 = vmatpush1.msra.mxu0 0.0
      %1842 = vmatprep.subr.mxu0 0.0
      %1843 = vmatpush1.msra.mxu0 0.0
      %1844 = vmatprep.subr.mxu0 0.0
      %1845 = vmatpush1.msra.mxu0 0.0
      %1846 = vmatprep.subr.mxu0 0.0
      %1847 = vmatpush1.msra.mxu0 0.0
      %1848 = vmatprep.subr.mxu0 0.0
      %1849 = vmatpush1.msra.mxu0 0.0
      %1850 = vmatprep.subr.mxu0 0.0
      %1851 = vmatpush1.msra.mxu0 0.0
      %1852 = vmatprep.subr.mxu0 0.0
      %1853 = vmatpush1.msra.mxu0 0.0
      %1854 = vmatprep.subr.mxu0 0.0
      %1855 = vmatpush1.msra.mxu0 0.0
      %1856 = vmatprep.subr.mxu0 0.0
      %1857 = vmatpush1.msra.mxu0 0.0
      %1858 = vmatprep.subr.mxu0 0.0
      %1859 = vmatpush1.msra.mxu0 0.0
      %1860 = vmatprep.subr.mxu0 0.0
      %1861 = vmatpush1.msra.mxu0 0.0
      %1862 = vmatprep.subr.mxu0 0.0
      %1863 = vmatpush1.msra.mxu0 0.0
      %1864 = vmatprep.subr.mxu0 0.0
      %1865 = vmatpush1.msra.mxu0 0.0
      %1866 = vmatprep.mubr.f32.mxu0 0.0
      %1867 = vmatmul.mubr.f32.gmra.mrb[0].mxu0 %v1695
      %v1868 = vpop.f32.mrb[0].mxu0
      %v1869 = vadd.f32 %v1516, %v1868
      %v1870 = vpop.f32.mrb[0].mxu0
      %1871 = vmatprep.mubr.f32.mxu0 0.0
      %1872 = vmatmul.mubr.f32.gmra.mrb[0].mxu0 %v1698
      %v1873 = vpop.f32.mrb[0].mxu0
      %v1874 = vadd.f32 %v1521, %v1873
      %v1875 = vpop.f32.mrb[0].mxu0
      %1876 = vmatprep.mubr.f32.mxu0 0.0
      %1877 = vmatmul.mubr.f32.gmra.mrb[0].mxu0 %v1701
      %v1878 = vpop.f32.mrb[0].mxu0
      %v1879 = vadd.f32 %v1526, %v1878
      %v1880 = vpop.f32.mrb[0].mxu0
      %1881 = vmatprep.mubr.f32.mxu0 0.0
      %1882 = vmatmul.mubr.f32.gmra.mrb[0].mxu0 %v1704
      %v1883 = vpop.f32.mrb[0].mxu0
      %v1884 = vadd.f32 %v1531, %v1883
      %v1885 = vpop.f32.mrb[0].mxu0
      %1886 = vmatprep.mubr.f32.mxu0 0.0
      %1887 = vmatmul.mubr.f32.gmra.mrb[0].mxu0 %v1707
      %v1888 = vpop.f32.mrb[0].mxu0
      %v1889 = vadd.f32 %v1536, %v1888
      %v1890 = vpop.f32.mrb[0].mxu0
      %1891 = vmatprep.mubr.f32.mxu0 0.0
      %1892 = vmatmul.mubr.f32.gmra.mrb[0].mxu0 %v1710
      %v1893 = vpop.f32.mrb[0].mxu0
      %v1894 = vadd.f32 %v1541, %v1893
      %v1895 = vpop.f32.mrb[0].mxu0
      %1896 = vmatprep.mubr.f32.mxu0 0.0
      %1897 = vmatmul.mubr.f32.gmra.mrb[0].mxu0 %v1713
      %v1898 = vpop.f32.mrb[0].mxu0
      %v1899 = vadd.f32 %v1546, %v1898
      %v1900 = vpop.f32.mrb[0].mxu0
      %1901 = vmatprep.mubr.f32.mxu0 0.0
      %1902 = vmatmul.mubr.f32.gmra.mrb[0].mxu0 %v1716
      %v1903 = vpop.f32.mrb[0].mxu0
      %v1904 = vadd.f32 %v1551, %v1903
      %v1905 = vpop.f32.mrb[0].mxu0
      %1906 = vmatprep.mubr.f32.mxu0 0.0
      %1907 = vmatmul.mubr.f32.gmra.mrb[0].mxu0 %v1719
      %v1908 = vpop.f32.mrb[0].mxu0
      %v1909 = vadd.f32 %v1556, %v1908
      %v1910 = vpop.f32.mrb[0].mxu0
      %1911 = vmatprep.mubr.f32.mxu0 0.0
      %1912 = vmatmul.mubr.f32.gmra.mrb[0].mxu0 %v1722
      %v1913 = vpop.f32.mrb[0].mxu0
      %v1914 = vadd.f32 %v1561, %v1913
      %v1915 = vpop.f32.mrb[0].mxu0
      %1916 = vmatprep.mubr.f32.mxu0 0.0
      %1917 = vmatmul.mubr.f32.gmra.mrb[0].mxu0 %v1725
      %v1918 = vpop.f32.mrb[0].mxu0
      %v1919 = vadd.f32 %v1566, %v1918
      %v1920 = vpop.f32.mrb[0].mxu0
      %1921 = vmatprep.mubr.f32.mxu0 0.0
      %1922 = vmatmul.mubr.f32.gmra.mrb[0].mxu0 %v1728
      %v1923 = vpop.f32.mrb[0].mxu0
      %v1924 = vadd.f32 %v1571, %v1923
      %v1925 = vpop.f32.mrb[0].mxu0
      %1926 = vmatprep.mubr.f32.mxu0 0.0
      %1927 = vmatmul.mubr.f32.gmra.mrb[0].mxu0 %v1731
      %v1928 = vpop.f32.mrb[0].mxu0
      %v1929 = vadd.f32 %v1576, %v1928
      %v1930 = vpop.f32.mrb[0].mxu0
      %1931 = vmatprep.mubr.f32.mxu0 0.0
      %1932 = vmatmul.mubr.f32.gmra.mrb[0].mxu0 %v1734
      %v1933 = vpop.f32.mrb[0].mxu0
      %v1934 = vadd.f32 %v1581, %v1933
      %v1935 = vpop.f32.mrb[0].mxu0
      %1936 = vmatprep.mubr.f32.mxu0 0.0
      %1937 = vmatmul.mubr.f32.gmra.mrb[0].mxu0 %v1737
      %v1938 = vpop.f32.mrb[0].mxu0
      %v1939 = vadd.f32 %v1586, %v1938
      %v1940 = vpop.f32.mrb[0].mxu0
      %1941 = vmatprep.mubr.f32.mxu0 0.0
      %1942 = vmatmul.mubr.f32.gmra.mrb[0].mxu0 %v1740
      %v1943 = vpop.f32.mrb[0].mxu0
      %v1944 = vadd.f32 %v1591, %v1943
      %v1945 = vpop.f32.mrb[0].mxu0
      %1946 = vmatprep.mubr.f32.mxu0 0.0
      %1947 = vmatmul.mubr.f32.gmra.mrb[0].mxu0 %v1743
      %v1948 = vpop.f32.mrb[0].mxu0
      %v1949 = vadd.f32 %v1596, %v1948
      %v1950 = vpop.f32.mrb[0].mxu0
      %1951 = vmatprep.mubr.f32.mxu0 0.0
      %1952 = vmatmul.mubr.f32.gmra.mrb[0].mxu0 %v1746
      %v1953 = vpop.f32.mrb[0].mxu0
      %v1954 = vadd.f32 %v1601, %v1953
      %v1955 = vpop.f32.mrb[0].mxu0
      %1956 = vmatprep.mubr.f32.mxu0 0.0
      %1957 = vmatmul.mubr.f32.gmra.mrb[0].mxu0 %v1749
      %v1958 = vpop.f32.mrb[0].mxu0
      %v1959 = vadd.f32 %v1606, %v1958
      %v1960 = vpop.f32.mrb[0].mxu0
      %1961 = vmatprep.mubr.f32.mxu0 0.0
      %1962 = vmatmul.mubr.f32.gmra.mrb[0].mxu0 %v1752
      %v1963 = vpop.f32.mrb[0].mxu0
      %v1964 = vadd.f32 %v1611, %v1963
      %v1965 = vpop.f32.mrb[0].mxu0
      %1966 = vmatprep.mubr.f32.mxu0 0.0
      %1967 = vmatmul.mubr.f32.gmra.mrb[0].mxu0 %v1755
      %v1968 = vpop.f32.mrb[0].mxu0
      %v1969 = vadd.f32 %v1616, %v1968
      %v1970 = vpop.f32.mrb[0].mxu0
      %1971 = vmatprep.mubr.f32.mxu0 0.0
      %1972 = vmatmul.mubr.f32.gmra.mrb[0].mxu0 %v1758
      %v1973 = vpop.f32.mrb[0].mxu0
      %v1974 = vadd.f32 %v1621, %v1973
      %v1975 = vpop.f32.mrb[0].mxu0
      %1976 = vmatprep.mubr.f32.mxu0 0.0
      %1977 = vmatmul.mubr.f32.gmra.mrb[0].mxu0 %v1761
      %v1978 = vpop.f32.mrb[0].mxu0
      %v1979 = vadd.f32 %v1626, %v1978
      %v1980 = vpop.f32.mrb[0].mxu0
      %1981 = vmatprep.mubr.f32.mxu0 0.0
      %1982 = vmatmul.mubr.f32.gmra.mrb[0].mxu0 %v1764
      %v1983 = vpop.f32.mrb[0].mxu0
      %v1984 = vadd.f32 %v1631, %v1983
      %v1985 = vpop.f32.mrb[0].mxu0
      %1986 = vmatprep.mubr.f32.mxu0 0.0
      %1987 = vmatmul.mubr.f32.gmra.mrb[0].mxu0 %v1767
      %v1988 = vpop.f32.mrb[0].mxu0
      %v1989 = vadd.f32 %v1636, %v1988
      %v1990 = vpop.f32.mrb[0].mxu0
      %1991 = vmatprep.mubr.f32.mxu0 0.0
      %1992 = vmatmul.mubr.f32.gmra.mrb[0].mxu0 %v1770
      %v1993 = vpop.f32.mrb[0].mxu0
      %v1994 = vadd.f32 %v1641, %v1993
      %v1995 = vpop.f32.mrb[0].mxu0
      %1996 = vmatprep.mubr.f32.mxu0 0.0
      %1997 = vmatmul.mubr.f32.gmra.mrb[0].mxu0 %v1773
      %v1998 = vpop.f32.mrb[0].mxu0
      %v1999 = vadd.f32 %v1646, %v1998
      %v2000 = vpop.f32.mrb[0].mxu0
      %2001 = vmatprep.mubr.f32.mxu0 0.0
      %2002 = vmatmul.mubr.f32.gmra.mrb[0].mxu0 %v1776
      %v2003 = vpop.f32.mrb[0].mxu0
      %v2004 = vadd.f32 %v1651, %v2003
      %v2005 = vpop.f32.mrb[0].mxu0
      %2006 = vmatprep.mubr.f32.mxu0 0.0
      %2007 = vmatmul.mubr.f32.gmra.mrb[0].mxu0 %v1779
      %v2008 = vpop.f32.mrb[0].mxu0
      %v2009 = vadd.f32 %v1656, %v2008
      %v2010 = vpop.f32.mrb[0].mxu0
      %2011 = vmatprep.mubr.f32.mxu0 0.0
      %2012 = vmatmul.mubr.f32.gmra.mrb[0].mxu0 %v1782
      %v2013 = vpop.f32.mrb[0].mxu0
      %v2014 = vadd.f32 %v1661, %v2013
      %v2015 = vpop.f32.mrb[0].mxu0
      %2016 = vmatprep.mubr.f32.mxu0 0.0
      %2017 = vmatmul.mubr.f32.gmra.mrb[0].mxu0 %v1785
      %v2018 = vpop.f32.mrb[0].mxu0
      %v2019 = vadd.f32 %v1666, %v2018
      %v2020 = vpop.f32.mrb[0].mxu0
      %2021 = vmatprep.mubr.f32.mxu0 0.0
      %2022 = vmatmul.mubr.f32.gmra.mrb[0].mxu0 %v1788
      %v2023 = vpop.f32.mrb[0].mxu0
      %v2024 = vadd.f32 %v1671, %v2023
      %v2025 = vpop.f32.mrb[0].mxu0
      %2026 = vmatprep.mubr.f32.mxu0 0.0
      %2027 = vmatmul.mubr.f32.gmra.mrb[0].mxu0 %v1791
      %v2028 = vpop.f32.mrb[0].mxu0
      %v2029 = vadd.f32 %v1676, %v2028
      %v2030 = vpop.f32.mrb[0].mxu0
      %2031 = vmatprep.mubr.f32.mxu0 0.0
      %2032 = vmatmul.mubr.f32.gmra.mrb[0].mxu0 %v1794
      %v2033 = vpop.f32.mrb[0].mxu0
      %v2034 = vadd.f32 %v1681, %v2033
      %v2035 = vpop.f32.mrb[0].mxu0
      %2036 = vmatprep.mubr.f32.mxu0 0.0
      %2037 = vmatmul.mubr.f32.gmra.mrb[0].mxu0 %v1797
      %v2038 = vpop.f32.mrb[0].mxu0
      %v2039 = vadd.f32 %v1686, %v2038
      %v2040 = vpop.f32.mrb[0].mxu0
      %2041 = vmatprep.mubr.f32.mxu0 0.0
      %2042 = vmatmul.mubr.f32.gmra.mrb[0].mxu0 %v1800
      %v2043 = vpop.f32.mrb[0].mxu0
      %v2044 = vadd.f32 %v1691, %v2043
      %v2045 = vpop.f32.mrb[0].mxu0
      %2046 = vdwg.mxu0
      %v2047 = vld [vmem:[#allocation2 + $0x2] sm:$0xff]
      %v2048 = vld [vmem:[#allocation2 + $0xa] sm:$0xff]
      %v2049 = vld [vmem:[#allocation2 + $0x12] sm:$0xff]
      %v2050 = vld [vmem:[#allocation2 + $0x1a] sm:$0xff]
      %v2051 = vld [vmem:[#allocation2 + $0x22] sm:$0xff]
      %v2052 = vld [vmem:[#allocation2 + $0x2a] sm:$0xff]
      %v2053 = vld [vmem:[#allocation2 + $0x32] sm:$0xff]
      %v2054 = vld [vmem:[#allocation2 + $0x3a] sm:$0xff]
      %v2055 = vld [vmem:[#allocation2 + $0x42] sm:$0xff]
      %v2056 = vld [vmem:[#allocation2 + $0x4a] sm:$0xff]
      %v2057 = vld [vmem:[#allocation2 + $0x52] sm:$0xff]
      %v2058 = vld [vmem:[#allocation2 + $0x5a] sm:$0xff]
      %v2059 = vld [vmem:[#allocation2 + $0x62] sm:$0xff]
      %v2060 = vld [vmem:[#allocation2 + $0x6a] sm:$0xff]
      %v2061 = vld [vmem:[#allocation2 + $0x72] sm:$0xff]
      %v2062 = vld [vmem:[#allocation2 + $0x7a] sm:$0xff]
      %v2063 = vld [vmem:[#allocation2 + $0x82] sm:$0xff]
      %v2064 = vld [vmem:[#allocation2 + $0x8a] sm:$0xff]
      %v2065 = vld [vmem:[#allocation2 + $0x92] sm:$0xff]
      %v2066 = vld [vmem:[#allocation2 + $0x9a] sm:$0xff]
      %v2067 = vld [vmem:[#allocation2 + $0xa2] sm:$0xff]
      %v2068 = vld [vmem:[#allocation2 + $0xaa] sm:$0xff]
      %v2069 = vld [vmem:[#allocation2 + $0xb2] sm:$0xff]
      %v2070 = vld [vmem:[#allocation2 + $0xba] sm:$0xff]
      %v2071 = vld [vmem:[#allocation2 + $0xc2] sm:$0xff]
      %v2072 = vld [vmem:[#allocation2 + $0xca] sm:$0xff]
      %v2073 = vld [vmem:[#allocation2 + $0xd2] sm:$0xff]
      %v2074 = vld [vmem:[#allocation2 + $0xda] sm:$0xff]
      %v2075 = vld [vmem:[#allocation2 + $0xe2] sm:$0xff]
      %v2076 = vld [vmem:[#allocation2 + $0xea] sm:$0xff]
      %v2077 = vld [vmem:[#allocation2 + $0xf2] sm:$0xff]
      %v2078 = vld [vmem:[#allocation2 + $0xfa] sm:$0xff]
      %v2079 = vld [vmem:[#allocation2 + $0x102] sm:$0xff]
      %v2080 = vld [vmem:[#allocation2 + $0x10a] sm:$0xff]
      %v2081 = vld [vmem:[#allocation2 + $0x112] sm:$0xff]
      %v2082 = vld [vmem:[#allocation2 + $0x11a] sm:$0xff]
      %s2083 = scalar_lea.vmem %s5, 16
      %v2084 = vld [vmem:[%s2083] sm:$0xff]
      %v2086 = vsel %vm376, %v2047, 0
      %v2089 = vsel %vm376, %v2048, 0
      %v2092 = vsel %vm376, %v2049, 0
      %v2095 = vsel %vm376, %v2050, 0
      %v2098 = vsel %vm376, %v2051, 0
      %v2101 = vsel %vm376, %v2052, 0
      %v2104 = vsel %vm376, %v2053, 0
      %v2107 = vsel %vm376, %v2054, 0
      %v2110 = vsel %vm376, %v2055, 0
      %v2113 = vsel %vm376, %v2056, 0
      %v2116 = vsel %vm376, %v2057, 0
      %v2119 = vsel %vm376, %v2058, 0
      %v2122 = vsel %vm376, %v2059, 0
      %v2125 = vsel %vm376, %v2060, 0
      %v2128 = vsel %vm376, %v2061, 0
      %v2131 = vsel %vm376, %v2062, 0
      %v2134 = vsel %vm376, %v2063, 0
      %v2137 = vsel %vm376, %v2064, 0
      %v2140 = vsel %vm376, %v2065, 0
      %v2143 = vsel %vm376, %v2066, 0
      %v2146 = vsel %vm376, %v2067, 0
      %v2149 = vsel %vm376, %v2068, 0
      %v2152 = vsel %vm376, %v2069, 0
      %v2155 = vsel %vm376, %v2070, 0
      %v2158 = vsel %vm376, %v2071, 0
      %v2161 = vsel %vm376, %v2072, 0
      %v2164 = vsel %vm376, %v2073, 0
      %v2167 = vsel %vm376, %v2074, 0
      %v2170 = vsel %vm376, %v2075, 0
      %v2173 = vsel %vm376, %v2076, 0
      %v2176 = vsel %vm376, %v2077, 0
      %v2179 = vsel %vm376, %v2078, 0
      %v2182 = vsel %vm376, %v2079, 0
      %v2185 = vsel %vm376, %v2080, 0
      %v2188 = vsel %vm376, %v2081, 0
      %v2191 = vsel %vm376, %v2082, 0
      %2193 = vmatprep.subr.mxu0 0.0
      %2194 = vmatpush1.msra.mxu0 %v2084
      %2195 = vmatprep.subr.mxu0 0.0
      %2196 = vmatpush1.msra.mxu0 0.0
      %2197 = vmatprep.subr.mxu0 0.0
      %2198 = vmatpush1.msra.mxu0 0.0
      %2199 = vmatprep.subr.mxu0 0.0
      %2200 = vmatpush1.msra.mxu0 0.0
      %2201 = vmatprep.subr.mxu0 0.0
      %2202 = vmatpush1.msra.mxu0 0.0
      %2203 = vmatprep.subr.mxu0 0.0
      %2204 = vmatpush1.msra.mxu0 0.0
      %2205 = vmatprep.subr.mxu0 0.0
      %2206 = vmatpush1.msra.mxu0 0.0
      %2207 = vmatprep.subr.mxu0 0.0
      %2208 = vmatpush1.msra.mxu0 0.0
      %2209 = vmatprep.subr.mxu0 0.0
      %2210 = vmatpush1.msra.mxu0 0.0
      %2211 = vmatprep.subr.mxu0 0.0
      %2212 = vmatpush1.msra.mxu0 0.0
      %2213 = vmatprep.subr.mxu0 0.0
      %2214 = vmatpush1.msra.mxu0 0.0
      %2215 = vmatprep.subr.mxu0 0.0
      %2216 = vmatpush1.msra.mxu0 0.0
      %2217 = vmatprep.subr.mxu0 0.0
      %2218 = vmatpush1.msra.mxu0 0.0
      %2219 = vmatprep.subr.mxu0 0.0
      %2220 = vmatpush1.msra.mxu0 0.0
      %2221 = vmatprep.subr.mxu0 0.0
      %2222 = vmatpush1.msra.mxu0 0.0
      %2223 = vmatprep.subr.mxu0 0.0
      %2224 = vmatpush1.msra.mxu0 0.0
      %2225 = vmatprep.subr.mxu0 0.0
      %2226 = vmatpush1.msra.mxu0 0.0
      %2227 = vmatprep.subr.mxu0 0.0
      %2228 = vmatpush1.msra.mxu0 0.0
      %2229 = vmatprep.subr.mxu0 0.0
      %2230 = vmatpush1.msra.mxu0 0.0
      %2231 = vmatprep.subr.mxu0 0.0
      %2232 = vmatpush1.msra.mxu0 0.0
      %2233 = vmatprep.subr.mxu0 0.0
      %2234 = vmatpush1.msra.mxu0 0.0
      %2235 = vmatprep.subr.mxu0 0.0
      %2236 = vmatpush1.msra.mxu0 0.0
      %2237 = vmatprep.subr.mxu0 0.0
      %2238 = vmatpush1.msra.mxu0 0.0
      %2239 = vmatprep.subr.mxu0 0.0
      %2240 = vmatpush1.msra.mxu0 0.0
      %2241 = vmatprep.subr.mxu0 0.0
      %2242 = vmatpush1.msra.mxu0 0.0
      %2243 = vmatprep.subr.mxu0 0.0
      %2244 = vmatpush1.msra.mxu0 0.0
      %2245 = vmatprep.subr.mxu0 0.0
      %2246 = vmatpush1.msra.mxu0 0.0
      %2247 = vmatprep.subr.mxu0 0.0
      %2248 = vmatpush1.msra.mxu0 0.0
      %2249 = vmatprep.subr.mxu0 0.0
      %2250 = vmatpush1.msra.mxu0 0.0
      %2251 = vmatprep.subr.mxu0 0.0
      %2252 = vmatpush1.msra.mxu0 0.0
      %2253 = vmatprep.subr.mxu0 0.0
      %2254 = vmatpush1.msra.mxu0 0.0
      %2255 = vmatprep.subr.mxu0 0.0
      %2256 = vmatpush1.msra.mxu0 0.0
      %2257 = vmatprep.mubr.f32.mxu0 0.0
      %2258 = vmatmul.mubr.f32.gmra.mrb[0].mxu0 %v2086
      %v2259 = vpop.f32.mrb[0].mxu0
      %v2260 = vadd.f32 0.0, %v2259
      %v2261 = vpop.f32.mrb[0].mxu0
      %2262 = vmatprep.mubr.f32.mxu0 0.0
      %2263 = vmatmul.mubr.f32.gmra.mrb[0].mxu0 %v2089
      %v2264 = vpop.f32.mrb[0].mxu0
      %v2265 = vadd.f32 0.0, %v2264
      %v2266 = vpop.f32.mrb[0].mxu0
      %2267 = vmatprep.mubr.f32.mxu0 0.0
      %2268 = vmatmul.mubr.f32.gmra.mrb[0].mxu0 %v2092
      %v2269 = vpop.f32.mrb[0].mxu0
      %v2270 = vadd.f32 0.0, %v2269
      %v2271 = vpop.f32.mrb[0].mxu0
      %2272 = vmatprep.mubr.f32.mxu0 0.0
      %2273 = vmatmul.mubr.f32.gmra.mrb[0].mxu0 %v2095
      %v2274 = vpop.f32.mrb[0].mxu0
      %v2275 = vadd.f32 0.0, %v2274
      %v2276 = vpop.f32.mrb[0].mxu0
      %2277 = vmatprep.mubr.f32.mxu0 0.0
      %2278 = vmatmul.mubr.f32.gmra.mrb[0].mxu0 %v2098
      %v2279 = vpop.f32.mrb[0].mxu0
      %v2280 = vadd.f32 0.0, %v2279
      %v2281 = vpop.f32.mrb[0].mxu0
      %2282 = vmatprep.mubr.f32.mxu0 0.0
      %2283 = vmatmul.mubr.f32.gmra.mrb[0].mxu0 %v2101
      %v2284 = vpop.f32.mrb[0].mxu0
      %v2285 = vadd.f32 0.0, %v2284
      %v2286 = vpop.f32.mrb[0].mxu0
      %2287 = vmatprep.mubr.f32.mxu0 0.0
      %2288 = vmatmul.mubr.f32.gmra.mrb[0].mxu0 %v2104
      %v2289 = vpop.f32.mrb[0].mxu0
      %v2290 = vadd.f32 0.0, %v2289
      %v2291 = vpop.f32.mrb[0].mxu0
      %2292 = vmatprep.mubr.f32.mxu0 0.0
      %2293 = vmatmul.mubr.f32.gmra.mrb[0].mxu0 %v2107
      %v2294 = vpop.f32.mrb[0].mxu0
      %v2295 = vadd.f32 0.0, %v2294
      %v2296 = vpop.f32.mrb[0].mxu0
      %2297 = vmatprep.mubr.f32.mxu0 0.0
      %2298 = vmatmul.mubr.f32.gmra.mrb[0].mxu0 %v2110
      %v2299 = vpop.f32.mrb[0].mxu0
      %v2300 = vadd.f32 0.0, %v2299
      %v2301 = vpop.f32.mrb[0].mxu0
      %2302 = vmatprep.mubr.f32.mxu0 0.0
      %2303 = vmatmul.mubr.f32.gmra.mrb[0].mxu0 %v2113
      %v2304 = vpop.f32.mrb[0].mxu0
      %v2305 = vadd.f32 0.0, %v2304
      %v2306 = vpop.f32.mrb[0].mxu0
      %2307 = vmatprep.mubr.f32.mxu0 0.0
      %2308 = vmatmul.mubr.f32.gmra.mrb[0].mxu0 %v2116
      %v2309 = vpop.f32.mrb[0].mxu0
      %v2310 = vadd.f32 0.0, %v2309
      %v2311 = vpop.f32.mrb[0].mxu0
      %2312 = vmatprep.mubr.f32.mxu0 0.0
      %2313 = vmatmul.mubr.f32.gmra.mrb[0].mxu0 %v2119
      %v2314 = vpop.f32.mrb[0].mxu0
      %v2315 = vadd.f32 0.0, %v2314
      %v2316 = vpop.f32.mrb[0].mxu0
      %2317 = vmatprep.mubr.f32.mxu0 0.0
      %2318 = vmatmul.mubr.f32.gmra.mrb[0].mxu0 %v2122
      %v2319 = vpop.f32.mrb[0].mxu0
      %v2320 = vadd.f32 0.0, %v2319
      %v2321 = vpop.f32.mrb[0].mxu0
      %2322 = vmatprep.mubr.f32.mxu0 0.0
      %2323 = vmatmul.mubr.f32.gmra.mrb[0].mxu0 %v2125
      %v2324 = vpop.f32.mrb[0].mxu0
      %v2325 = vadd.f32 0.0, %v2324
      %v2326 = vpop.f32.mrb[0].mxu0
      %2327 = vmatprep.mubr.f32.mxu0 0.0
      %2328 = vmatmul.mubr.f32.gmra.mrb[0].mxu0 %v2128
      %v2329 = vpop.f32.mrb[0].mxu0
      %v2330 = vadd.f32 0.0, %v2329
      %v2331 = vpop.f32.mrb[0].mxu0
      %2332 = vmatprep.mubr.f32.mxu0 0.0
      %2333 = vmatmul.mubr.f32.gmra.mrb[0].mxu0 %v2131
      %v2334 = vpop.f32.mrb[0].mxu0
      %v2335 = vadd.f32 0.0, %v2334
      %v2336 = vpop.f32.mrb[0].mxu0
      %2337 = vmatprep.mubr.f32.mxu0 0.0
      %2338 = vmatmul.mubr.f32.gmra.mrb[0].mxu0 %v2134
      %v2339 = vpop.f32.mrb[0].mxu0
      %v2340 = vadd.f32 0.0, %v2339
      %v2341 = vpop.f32.mrb[0].mxu0
      %2342 = vmatprep.mubr.f32.mxu0 0.0
      %2343 = vmatmul.mubr.f32.gmra.mrb[0].mxu0 %v2137
      %v2344 = vpop.f32.mrb[0].mxu0
      %v2345 = vadd.f32 0.0, %v2344
      %v2346 = vpop.f32.mrb[0].mxu0
      %2347 = vmatprep.mubr.f32.mxu0 0.0
      %2348 = vmatmul.mubr.f32.gmra.mrb[0].mxu0 %v2140
      %v2349 = vpop.f32.mrb[0].mxu0
      %v2350 = vadd.f32 0.0, %v2349
      %v2351 = vpop.f32.mrb[0].mxu0
      %2352 = vmatprep.mubr.f32.mxu0 0.0
      %2353 = vmatmul.mubr.f32.gmra.mrb[0].mxu0 %v2143
      %v2354 = vpop.f32.mrb[0].mxu0
      %v2355 = vadd.f32 0.0, %v2354
      %v2356 = vpop.f32.mrb[0].mxu0
      %2357 = vmatprep.mubr.f32.mxu0 0.0
      %2358 = vmatmul.mubr.f32.gmra.mrb[0].mxu0 %v2146
      %v2359 = vpop.f32.mrb[0].mxu0
      %v2360 = vadd.f32 0.0, %v2359
      %v2361 = vpop.f32.mrb[0].mxu0
      %2362 = vmatprep.mubr.f32.mxu0 0.0
      %2363 = vmatmul.mubr.f32.gmra.mrb[0].mxu0 %v2149
      %v2364 = vpop.f32.mrb[0].mxu0
      %v2365 = vadd.f32 0.0, %v2364
      %v2366 = vpop.f32.mrb[0].mxu0
      %2367 = vmatprep.mubr.f32.mxu0 0.0
      %2368 = vmatmul.mubr.f32.gmra.mrb[0].mxu0 %v2152
      %v2369 = vpop.f32.mrb[0].mxu0
      %v2370 = vadd.f32 0.0, %v2369
      %v2371 = vpop.f32.mrb[0].mxu0
      %2372 = vmatprep.mubr.f32.mxu0 0.0
      %2373 = vmatmul.mubr.f32.gmra.mrb[0].mxu0 %v2155
      %v2374 = vpop.f32.mrb[0].mxu0
      %v2375 = vadd.f32 0.0, %v2374
      %v2376 = vpop.f32.mrb[0].mxu0
      %2377 = vmatprep.mubr.f32.mxu0 0.0
      %2378 = vmatmul.mubr.f32.gmra.mrb[0].mxu0 %v2158
      %v2379 = vpop.f32.mrb[0].mxu0
      %v2380 = vadd.f32 0.0, %v2379
      %v2381 = vpop.f32.mrb[0].mxu0
      %2382 = vmatprep.mubr.f32.mxu0 0.0
      %2383 = vmatmul.mubr.f32.gmra.mrb[0].mxu0 %v2161
      %v2384 = vpop.f32.mrb[0].mxu0
      %v2385 = vadd.f32 0.0, %v2384
      %v2386 = vpop.f32.mrb[0].mxu0
      %2387 = vmatprep.mubr.f32.mxu0 0.0
      %2388 = vmatmul.mubr.f32.gmra.mrb[0].mxu0 %v2164
      %v2389 = vpop.f32.mrb[0].mxu0
      %v2390 = vadd.f32 0.0, %v2389
      %v2391 = vpop.f32.mrb[0].mxu0
      %2392 = vmatprep.mubr.f32.mxu0 0.0
      %2393 = vmatmul.mubr.f32.gmra.mrb[0].mxu0 %v2167
      %v2394 = vpop.f32.mrb[0].mxu0
      %v2395 = vadd.f32 0.0, %v2394
      %v2396 = vpop.f32.mrb[0].mxu0
      %2397 = vmatprep.mubr.f32.mxu0 0.0
      %2398 = vmatmul.mubr.f32.gmra.mrb[0].mxu0 %v2170
      %v2399 = vpop.f32.mrb[0].mxu0
      %v2400 = vadd.f32 0.0, %v2399
      %v2401 = vpop.f32.mrb[0].mxu0
      %2402 = vmatprep.mubr.f32.mxu0 0.0
      %2403 = vmatmul.mubr.f32.gmra.mrb[0].mxu0 %v2173
      %v2404 = vpop.f32.mrb[0].mxu0
      %v2405 = vadd.f32 0.0, %v2404
      %v2406 = vpop.f32.mrb[0].mxu0
      %2407 = vmatprep.mubr.f32.mxu0 0.0
      %2408 = vmatmul.mubr.f32.gmra.mrb[0].mxu0 %v2176
      %v2409 = vpop.f32.mrb[0].mxu0
      %v2410 = vadd.f32 0.0, %v2409
      %v2411 = vpop.f32.mrb[0].mxu0
      %2412 = vmatprep.mubr.f32.mxu0 0.0
      %2413 = vmatmul.mubr.f32.gmra.mrb[0].mxu0 %v2179
      %v2414 = vpop.f32.mrb[0].mxu0
      %v2415 = vadd.f32 0.0, %v2414
      %v2416 = vpop.f32.mrb[0].mxu0
      %2417 = vmatprep.mubr.f32.mxu0 0.0
      %2418 = vmatmul.mubr.f32.gmra.mrb[0].mxu0 %v2182
      %v2419 = vpop.f32.mrb[0].mxu0
      %v2420 = vadd.f32 0.0, %v2419
      %v2421 = vpop.f32.mrb[0].mxu0
      %2422 = vmatprep.mubr.f32.mxu0 0.0
      %2423 = vmatmul.mubr.f32.gmra.mrb[0].mxu0 %v2185
      %v2424 = vpop.f32.mrb[0].mxu0
      %v2425 = vadd.f32 0.0, %v2424
      %v2426 = vpop.f32.mrb[0].mxu0
      %2427 = vmatprep.mubr.f32.mxu0 0.0
      %2428 = vmatmul.mubr.f32.gmra.mrb[0].mxu0 %v2188
      %v2429 = vpop.f32.mrb[0].mxu0
      %v2430 = vadd.f32 0.0, %v2429
      %v2431 = vpop.f32.mrb[0].mxu0
      %2432 = vmatprep.mubr.f32.mxu0 0.0
      %2433 = vmatmul.mubr.f32.gmra.mrb[0].mxu0 %v2191
      %v2434 = vpop.f32.mrb[0].mxu0
      %v2435 = vadd.f32 0.0, %v2434
      %v2436 = vpop.f32.mrb[0].mxu0
      %2437 = vdwg.mxu0
      %v2438 = vadd.f32 %v1869, %v2260
      %v2439 = vadd.f32 %v1874, %v2265
      %v2440 = vadd.f32 %v1879, %v2270
      %v2441 = vadd.f32 %v1884, %v2275
      %v2442 = vadd.f32 %v1889, %v2280
      %v2443 = vadd.f32 %v1894, %v2285
      %v2444 = vadd.f32 %v1899, %v2290
      %v2445 = vadd.f32 %v1904, %v2295
      %v2446 = vadd.f32 %v1909, %v2300
      %v2447 = vadd.f32 %v1914, %v2305
      %v2448 = vadd.f32 %v1919, %v2310
      %v2449 = vadd.f32 %v1924, %v2315
      %v2450 = vadd.f32 %v1929, %v2320
      %v2451 = vadd.f32 %v1934, %v2325
      %v2452 = vadd.f32 %v1939, %v2330
      %v2453 = vadd.f32 %v1944, %v2335
      %v2454 = vadd.f32 %v1949, %v2340
      %v2455 = vadd.f32 %v1954, %v2345
      %v2456 = vadd.f32 %v1959, %v2350
      %v2457 = vadd.f32 %v1964, %v2355
      %v2458 = vadd.f32 %v1969, %v2360
      %v2459 = vadd.f32 %v1974, %v2365
      %v2460 = vadd.f32 %v1979, %v2370
      %v2461 = vadd.f32 %v1984, %v2375
      %v2462 = vadd.f32 %v1989, %v2380
      %v2463 = vadd.f32 %v1994, %v2385
      %v2464 = vadd.f32 %v1999, %v2390
      %v2465 = vadd.f32 %v2004, %v2395
      %v2466 = vadd.f32 %v2009, %v2400
      %v2467 = vadd.f32 %v2014, %v2405
      %v2468 = vadd.f32 %v2019, %v2410
      %v2469 = vadd.f32 %v2024, %v2415
      %v2470 = vadd.f32 %v2029, %v2420
      %v2471 = vadd.f32 %v2034, %v2425
      %v2472 = vadd.f32 %v2039, %v2430
      %v2473 = vadd.f32 %v2044, %v2435
      %v2474 = vld [vmem:[#allocation2 + $0x12] sm:$0xff]
      %v2475 = vld [vmem:[#allocation2 + $0x1a] sm:$0xff]
      %v2476 = vld [vmem:[#allocation2 + $0x22] sm:$0xff]
      %v2477 = vld [vmem:[#allocation2 + $0x2a] sm:$0xff]
      %v2478 = vld [vmem:[#allocation2 + $0x32] sm:$0xff]
      %v2479 = vld [vmem:[#allocation2 + $0x3a] sm:$0xff]
      %v2480 = vld [vmem:[#allocation2 + $0x42] sm:$0xff]
      %v2481 = vld [vmem:[#allocation2 + $0x4a] sm:$0xff]
      %v2482 = vld [vmem:[#allocation2 + $0x52] sm:$0xff]
      %v2483 = vld [vmem:[#allocation2 + $0x5a] sm:$0xff]
      %v2484 = vld [vmem:[#allocation2 + $0x62] sm:$0xff]
      %v2485 = vld [vmem:[#allocation2 + $0x6a] sm:$0xff]
      %v2486 = vld [vmem:[#allocation2 + $0x72] sm:$0xff]
      %v2487 = vld [vmem:[#allocation2 + $0x7a] sm:$0xff]
      %v2488 = vld [vmem:[#allocation2 + $0x82] sm:$0xff]
      %v2489 = vld [vmem:[#allocation2 + $0x8a] sm:$0xff]
      %v2490 = vld [vmem:[#allocation2 + $0x92] sm:$0xff]
      %v2491 = vld [vmem:[#allocation2 + $0x9a] sm:$0xff]
      %v2492 = vld [vmem:[#allocation2 + $0xa2] sm:$0xff]
      %v2493 = vld [vmem:[#allocation2 + $0xaa] sm:$0xff]
      %v2494 = vld [vmem:[#allocation2 + $0xb2] sm:$0xff]
      %v2495 = vld [vmem:[#allocation2 + $0xba] sm:$0xff]
      %v2496 = vld [vmem:[#allocation2 + $0xc2] sm:$0xff]
      %v2497 = vld [vmem:[#allocation2 + $0xca] sm:$0xff]
      %v2498 = vld [vmem:[#allocation2 + $0xd2] sm:$0xff]
      %v2499 = vld [vmem:[#allocation2 + $0xda] sm:$0xff]
      %v2500 = vld [vmem:[#allocation2 + $0xe2] sm:$0xff]
      %v2501 = vld [vmem:[#allocation2 + $0xea] sm:$0xff]
      %v2502 = vld [vmem:[#allocation2 + $0xf2] sm:$0xff]
      %v2503 = vld [vmem:[#allocation2 + $0xfa] sm:$0xff]
      %v2504 = vld [vmem:[#allocation2 + $0x102] sm:$0xff]
      %v2505 = vld [vmem:[#allocation2 + $0x10a] sm:$0xff]
      %v2506 = vld [vmem:[#allocation2 + $0x112] sm:$0xff]
      %v2507 = vld [vmem:[#allocation2 + $0x11a] sm:$0xff]
      %v2508 = vld [vmem:[#allocation2 + $0x122] sm:$0xff]
      %v2509 = vld [vmem:[#allocation2 + $0x12a] sm:$0xff]
      %s2510 = scalar_lea.vmem %s5, 24
      %v2511 = vld [vmem:[%s2510] sm:$0xff]
      %v2513 = vsel %vm376, %v2474, 0
      %v2516 = vsel %vm376, %v2475, 0
      %v2519 = vsel %vm376, %v2476, 0
      %v2522 = vsel %vm376, %v2477, 0
      %v2525 = vsel %vm376, %v2478, 0
      %v2528 = vsel %vm376, %v2479, 0
      %v2531 = vsel %vm376, %v2480, 0
      %v2534 = vsel %vm376, %v2481, 0
      %v2537 = vsel %vm376, %v2482, 0
      %v2540 = vsel %vm376, %v2483, 0
      %v2543 = vsel %vm376, %v2484, 0
      %v2546 = vsel %vm376, %v2485, 0
      %v2549 = vsel %vm376, %v2486, 0
      %v2552 = vsel %vm376, %v2487, 0
      %v2555 = vsel %vm376, %v2488, 0
      %v2558 = vsel %vm376, %v2489, 0
      %v2561 = vsel %vm376, %v2490, 0
      %v2564 = vsel %vm376, %v2491, 0
      %v2567 = vsel %vm376, %v2492, 0
      %v2570 = vsel %vm376, %v2493, 0
      %v2573 = vsel %vm376, %v2494, 0
      %v2576 = vsel %vm376, %v2495, 0
      %v2579 = vsel %vm376, %v2496, 0
      %v2582 = vsel %vm376, %v2497, 0
      %v2585 = vsel %vm376, %v2498, 0
      %v2588 = vsel %vm376, %v2499, 0
      %v2591 = vsel %vm376, %v2500, 0
      %v2594 = vsel %vm376, %v2501, 0
      %v2597 = vsel %vm376, %v2502, 0
      %v2600 = vsel %vm376, %v2503, 0
      %v2603 = vsel %vm376, %v2504, 0
      %v2606 = vsel %vm376, %v2505, 0
      %v2609 = vsel %vm376, %v2506, 0
      %v2612 = vsel %vm376, %v2507, 0
      %v2615 = vsel %vm376, %v2508, 0
      %v2618 = vsel %vm376, %v2509, 0
      %2620 = vmatprep.subr.mxu0 0.0
      %2621 = vmatpush1.msra.mxu0 %v2511
      %2622 = vmatprep.subr.mxu0 0.0
      %2623 = vmatpush1.msra.mxu0 0.0
      %2624 = vmatprep.subr.mxu0 0.0
      %2625 = vmatpush1.msra.mxu0 0.0
      %2626 = vmatprep.subr.mxu0 0.0
      %2627 = vmatpush1.msra.mxu0 0.0
      %2628 = vmatprep.subr.mxu0 0.0
      %2629 = vmatpush1.msra.mxu0 0.0
      %2630 = vmatprep.subr.mxu0 0.0
      %2631 = vmatpush1.msra.mxu0 0.0
      %2632 = vmatprep.subr.mxu0 0.0
      %2633 = vmatpush1.msra.mxu0 0.0
      %2634 = vmatprep.subr.mxu0 0.0
      %2635 = vmatpush1.msra.mxu0 0.0
      %2636 = vmatprep.subr.mxu0 0.0
      %2637 = vmatpush1.msra.mxu0 0.0
      %2638 = vmatprep.subr.mxu0 0.0
      %2639 = vmatpush1.msra.mxu0 0.0
      %2640 = vmatprep.subr.mxu0 0.0
      %2641 = vmatpush1.msra.mxu0 0.0
      %2642 = vmatprep.subr.mxu0 0.0
      %2643 = vmatpush1.msra.mxu0 0.0
      %2644 = vmatprep.subr.mxu0 0.0
      %2645 = vmatpush1.msra.mxu0 0.0
      %2646 = vmatprep.subr.mxu0 0.0
      %2647 = vmatpush1.msra.mxu0 0.0
      %2648 = vmatprep.subr.mxu0 0.0
      %2649 = vmatpush1.msra.mxu0 0.0
      %2650 = vmatprep.subr.mxu0 0.0
      %2651 = vmatpush1.msra.mxu0 0.0
      %2652 = vmatprep.subr.mxu0 0.0
      %2653 = vmatpush1.msra.mxu0 0.0
      %2654 = vmatprep.subr.mxu0 0.0
      %2655 = vmatpush1.msra.mxu0 0.0
      %2656 = vmatprep.subr.mxu0 0.0
      %2657 = vmatpush1.msra.mxu0 0.0
      %2658 = vmatprep.subr.mxu0 0.0
      %2659 = vmatpush1.msra.mxu0 0.0
      %2660 = vmatprep.subr.mxu0 0.0
      %2661 = vmatpush1.msra.mxu0 0.0
      %2662 = vmatprep.subr.mxu0 0.0
      %2663 = vmatpush1.msra.mxu0 0.0
      %2664 = vmatprep.subr.mxu0 0.0
      %2665 = vmatpush1.msra.mxu0 0.0
      %2666 = vmatprep.subr.mxu0 0.0
      %2667 = vmatpush1.msra.mxu0 0.0
      %2668 = vmatprep.subr.mxu0 0.0
      %2669 = vmatpush1.msra.mxu0 0.0
      %2670 = vmatprep.subr.mxu0 0.0
      %2671 = vmatpush1.msra.mxu0 0.0
      %2672 = vmatprep.subr.mxu0 0.0
      %2673 = vmatpush1.msra.mxu0 0.0
      %2674 = vmatprep.subr.mxu0 0.0
      %2675 = vmatpush1.msra.mxu0 0.0
      %2676 = vmatprep.subr.mxu0 0.0
      %2677 = vmatpush1.msra.mxu0 0.0
      %2678 = vmatprep.subr.mxu0 0.0
      %2679 = vmatpush1.msra.mxu0 0.0
      %2680 = vmatprep.subr.mxu0 0.0
      %2681 = vmatpush1.msra.mxu0 0.0
      %2682 = vmatprep.subr.mxu0 0.0
      %2683 = vmatpush1.msra.mxu0 0.0
      %2684 = vmatprep.mubr.f32.mxu0 0.0
      %2685 = vmatmul.mubr.f32.gmra.mrb[0].mxu0 %v2513
      %v2686 = vpop.f32.mrb[0].mxu0
      %v2687 = vadd.f32 0.0, %v2686
      %v2688 = vpop.f32.mrb[0].mxu0
      %2689 = vmatprep.mubr.f32.mxu0 0.0
      %2690 = vmatmul.mubr.f32.gmra.mrb[0].mxu0 %v2516
      %v2691 = vpop.f32.mrb[0].mxu0
      %v2692 = vadd.f32 0.0, %v2691
      %v2693 = vpop.f32.mrb[0].mxu0
      %2694 = vmatprep.mubr.f32.mxu0 0.0
      %2695 = vmatmul.mubr.f32.gmra.mrb[0].mxu0 %v2519
      %v2696 = vpop.f32.mrb[0].mxu0
      %v2697 = vadd.f32 0.0, %v2696
      %v2698 = vpop.f32.mrb[0].mxu0
      %2699 = vmatprep.mubr.f32.mxu0 0.0
      %2700 = vmatmul.mubr.f32.gmra.mrb[0].mxu0 %v2522
      %v2701 = vpop.f32.mrb[0].mxu0
      %v2702 = vadd.f32 0.0, %v2701
      %v2703 = vpop.f32.mrb[0].mxu0
      %2704 = vmatprep.mubr.f32.mxu0 0.0
      %2705 = vmatmul.mubr.f32.gmra.mrb[0].mxu0 %v2525
      %v2706 = vpop.f32.mrb[0].mxu0
      %v2707 = vadd.f32 0.0, %v2706
      %v2708 = vpop.f32.mrb[0].mxu0
      %2709 = vmatprep.mubr.f32.mxu0 0.0
      %2710 = vmatmul.mubr.f32.gmra.mrb[0].mxu0 %v2528
      %v2711 = vpop.f32.mrb[0].mxu0
      %v2712 = vadd.f32 0.0, %v2711
      %v2713 = vpop.f32.mrb[0].mxu0
      %2714 = vmatprep.mubr.f32.mxu0 0.0
      %2715 = vmatmul.mubr.f32.gmra.mrb[0].mxu0 %v2531
      %v2716 = vpop.f32.mrb[0].mxu0
      %v2717 = vadd.f32 0.0, %v2716
      %v2718 = vpop.f32.mrb[0].mxu0
      %2719 = vmatprep.mubr.f32.mxu0 0.0
      %2720 = vmatmul.mubr.f32.gmra.mrb[0].mxu0 %v2534
      %v2721 = vpop.f32.mrb[0].mxu0
      %v2722 = vadd.f32 0.0, %v2721
      %v2723 = vpop.f32.mrb[0].mxu0
      %2724 = vmatprep.mubr.f32.mxu0 0.0
      %2725 = vmatmul.mubr.f32.gmra.mrb[0].mxu0 %v2537
      %v2726 = vpop.f32.mrb[0].mxu0
      %v2727 = vadd.f32 0.0, %v2726
      %v2728 = vpop.f32.mrb[0].mxu0
      %2729 = vmatprep.mubr.f32.mxu0 0.0
      %2730 = vmatmul.mubr.f32.gmra.mrb[0].mxu0 %v2540
      %v2731 = vpop.f32.mrb[0].mxu0
      %v2732 = vadd.f32 0.0, %v2731
      %v2733 = vpop.f32.mrb[0].mxu0
      %2734 = vmatprep.mubr.f32.mxu0 0.0
      %2735 = vmatmul.mubr.f32.gmra.mrb[0].mxu0 %v2543
      %v2736 = vpop.f32.mrb[0].mxu0
      %v2737 = vadd.f32 0.0, %v2736
      %v2738 = vpop.f32.mrb[0].mxu0
      %2739 = vmatprep.mubr.f32.mxu0 0.0
      %2740 = vmatmul.mubr.f32.gmra.mrb[0].mxu0 %v2546
      %v2741 = vpop.f32.mrb[0].mxu0
      %v2742 = vadd.f32 0.0, %v2741
      %v2743 = vpop.f32.mrb[0].mxu0
      %2744 = vmatprep.mubr.f32.mxu0 0.0
      %2745 = vmatmul.mubr.f32.gmra.mrb[0].mxu0 %v2549
      %v2746 = vpop.f32.mrb[0].mxu0
      %v2747 = vadd.f32 0.0, %v2746
      %v2748 = vpop.f32.mrb[0].mxu0
      %2749 = vmatprep.mubr.f32.mxu0 0.0
      %2750 = vmatmul.mubr.f32.gmra.mrb[0].mxu0 %v2552
      %v2751 = vpop.f32.mrb[0].mxu0
      %v2752 = vadd.f32 0.0, %v2751
      %v2753 = vpop.f32.mrb[0].mxu0
      %2754 = vmatprep.mubr.f32.mxu0 0.0
      %2755 = vmatmul.mubr.f32.gmra.mrb[0].mxu0 %v2555
      %v2756 = vpop.f32.mrb[0].mxu0
      %v2757 = vadd.f32 0.0, %v2756
      %v2758 = vpop.f32.mrb[0].mxu0
      %2759 = vmatprep.mubr.f32.mxu0 0.0
      %2760 = vmatmul.mubr.f32.gmra.mrb[0].mxu0 %v2558
      %v2761 = vpop.f32.mrb[0].mxu0
      %v2762 = vadd.f32 0.0, %v2761
      %v2763 = vpop.f32.mrb[0].mxu0
      %2764 = vmatprep.mubr.f32.mxu0 0.0
      %2765 = vmatmul.mubr.f32.gmra.mrb[0].mxu0 %v2561
      %v2766 = vpop.f32.mrb[0].mxu0
      %v2767 = vadd.f32 0.0, %v2766
      %v2768 = vpop.f32.mrb[0].mxu0
      %2769 = vmatprep.mubr.f32.mxu0 0.0
      %2770 = vmatmul.mubr.f32.gmra.mrb[0].mxu0 %v2564
      %v2771 = vpop.f32.mrb[0].mxu0
      %v2772 = vadd.f32 0.0, %v2771
      %v2773 = vpop.f32.mrb[0].mxu0
      %2774 = vmatprep.mubr.f32.mxu0 0.0
      %2775 = vmatmul.mubr.f32.gmra.mrb[0].mxu0 %v2567
      %v2776 = vpop.f32.mrb[0].mxu0
      %v2777 = vadd.f32 0.0, %v2776
      %v2778 = vpop.f32.mrb[0].mxu0
      %2779 = vmatprep.mubr.f32.mxu0 0.0
      %2780 = vmatmul.mubr.f32.gmra.mrb[0].mxu0 %v2570
      %v2781 = vpop.f32.mrb[0].mxu0
      %v2782 = vadd.f32 0.0, %v2781
      %v2783 = vpop.f32.mrb[0].mxu0
      %2784 = vmatprep.mubr.f32.mxu0 0.0
      %2785 = vmatmul.mubr.f32.gmra.mrb[0].mxu0 %v2573
      %v2786 = vpop.f32.mrb[0].mxu0
      %v2787 = vadd.f32 0.0, %v2786
      %v2788 = vpop.f32.mrb[0].mxu0
      %2789 = vmatprep.mubr.f32.mxu0 0.0
      %2790 = vmatmul.mubr.f32.gmra.mrb[0].mxu0 %v2576
      %v2791 = vpop.f32.mrb[0].mxu0
      %v2792 = vadd.f32 0.0, %v2791
      %v2793 = vpop.f32.mrb[0].mxu0
      %2794 = vmatprep.mubr.f32.mxu0 0.0
      %2795 = vmatmul.mubr.f32.gmra.mrb[0].mxu0 %v2579
      %v2796 = vpop.f32.mrb[0].mxu0
      %v2797 = vadd.f32 0.0, %v2796
      %v2798 = vpop.f32.mrb[0].mxu0
      %2799 = vmatprep.mubr.f32.mxu0 0.0
      %2800 = vmatmul.mubr.f32.gmra.mrb[0].mxu0 %v2582
      %v2801 = vpop.f32.mrb[0].mxu0
      %v2802 = vadd.f32 0.0, %v2801
      %v2803 = vpop.f32.mrb[0].mxu0
      %2804 = vmatprep.mubr.f32.mxu0 0.0
      %2805 = vmatmul.mubr.f32.gmra.mrb[0].mxu0 %v2585
      %v2806 = vpop.f32.mrb[0].mxu0
      %v2807 = vadd.f32 0.0, %v2806
      %v2808 = vpop.f32.mrb[0].mxu0
      %2809 = vmatprep.mubr.f32.mxu0 0.0
      %2810 = vmatmul.mubr.f32.gmra.mrb[0].mxu0 %v2588
      %v2811 = vpop.f32.mrb[0].mxu0
      %v2812 = vadd.f32 0.0, %v2811
      %v2813 = vpop.f32.mrb[0].mxu0
      %2814 = vmatprep.mubr.f32.mxu0 0.0
      %2815 = vmatmul.mubr.f32.gmra.mrb[0].mxu0 %v2591
      %v2816 = vpop.f32.mrb[0].mxu0
      %v2817 = vadd.f32 0.0, %v2816
      %v2818 = vpop.f32.mrb[0].mxu0
      %2819 = vmatprep.mubr.f32.mxu0 0.0
      %2820 = vmatmul.mubr.f32.gmra.mrb[0].mxu0 %v2594
      %v2821 = vpop.f32.mrb[0].mxu0
      %v2822 = vadd.f32 0.0, %v2821
      %v2823 = vpop.f32.mrb[0].mxu0
      %2824 = vmatprep.mubr.f32.mxu0 0.0
      %2825 = vmatmul.mubr.f32.gmra.mrb[0].mxu0 %v2597
      %v2826 = vpop.f32.mrb[0].mxu0
      %v2827 = vadd.f32 0.0, %v2826
      %v2828 = vpop.f32.mrb[0].mxu0
      %2829 = vmatprep.mubr.f32.mxu0 0.0
      %2830 = vmatmul.mubr.f32.gmra.mrb[0].mxu0 %v2600
      %v2831 = vpop.f32.mrb[0].mxu0
      %v2832 = vadd.f32 0.0, %v2831
      %v2833 = vpop.f32.mrb[0].mxu0
      %2834 = vmatprep.mubr.f32.mxu0 0.0
      %2835 = vmatmul.mubr.f32.gmra.mrb[0].mxu0 %v2603
      %v2836 = vpop.f32.mrb[0].mxu0
      %v2837 = vadd.f32 0.0, %v2836
      %v2838 = vpop.f32.mrb[0].mxu0
      %2839 = vmatprep.mubr.f32.mxu0 0.0
      %2840 = vmatmul.mubr.f32.gmra.mrb[0].mxu0 %v2606
      %v2841 = vpop.f32.mrb[0].mxu0
      %v2842 = vadd.f32 0.0, %v2841
      %v2843 = vpop.f32.mrb[0].mxu0
      %2844 = vmatprep.mubr.f32.mxu0 0.0
      %2845 = vmatmul.mubr.f32.gmra.mrb[0].mxu0 %v2609
      %v2846 = vpop.f32.mrb[0].mxu0
      %v2847 = vadd.f32 0.0, %v2846
      %v2848 = vpop.f32.mrb[0].mxu0
      %2849 = vmatprep.mubr.f32.mxu0 0.0
      %2850 = vmatmul.mubr.f32.gmra.mrb[0].mxu0 %v2612
      %v2851 = vpop.f32.mrb[0].mxu0
      %v2852 = vadd.f32 0.0, %v2851
      %v2853 = vpop.f32.mrb[0].mxu0
      %2854 = vmatprep.mubr.f32.mxu0 0.0
      %2855 = vmatmul.mubr.f32.gmra.mrb[0].mxu0 %v2615
      %v2856 = vpop.f32.mrb[0].mxu0
      %v2857 = vadd.f32 0.0, %v2856
      %v2858 = vpop.f32.mrb[0].mxu0
      %2859 = vmatprep.mubr.f32.mxu0 0.0
      %2860 = vmatmul.mubr.f32.gmra.mrb[0].mxu0 %v2618
      %v2861 = vpop.f32.mrb[0].mxu0
      %v2862 = vadd.f32 0.0, %v2861
      %v2863 = vpop.f32.mrb[0].mxu0
      %2864 = vdwg.mxu0
      %v2865 = vadd.f32 %v2438, %v2687
      %v2866 = vadd.f32 %v2439, %v2692
      %v2867 = vadd.f32 %v2440, %v2697
      %v2868 = vadd.f32 %v2441, %v2702
      %v2869 = vadd.f32 %v2442, %v2707
      %v2870 = vadd.f32 %v2443, %v2712
      %v2871 = vadd.f32 %v2444, %v2717
      %v2872 = vadd.f32 %v2445, %v2722
      %v2873 = vadd.f32 %v2446, %v2727
      %v2874 = vadd.f32 %v2447, %v2732
      %v2875 = vadd.f32 %v2448, %v2737
      %v2876 = vadd.f32 %v2449, %v2742
      %v2877 = vadd.f32 %v2450, %v2747
      %v2878 = vadd.f32 %v2451, %v2752
      %v2879 = vadd.f32 %v2452, %v2757
      %v2880 = vadd.f32 %v2453, %v2762
      %v2881 = vadd.f32 %v2454, %v2767
      %v2882 = vadd.f32 %v2455, %v2772
      %v2883 = vadd.f32 %v2456, %v2777
      %v2884 = vadd.f32 %v2457, %v2782
      %v2885 = vadd.f32 %v2458, %v2787
      %v2886 = vadd.f32 %v2459, %v2792
      %v2887 = vadd.f32 %v2460, %v2797
      %v2888 = vadd.f32 %v2461, %v2802
      %v2889 = vadd.f32 %v2462, %v2807
      %v2890 = vadd.f32 %v2463, %v2812
      %v2891 = vadd.f32 %v2464, %v2817
      %v2892 = vadd.f32 %v2465, %v2822
      %v2893 = vadd.f32 %v2466, %v2827
      %v2894 = vadd.f32 %v2467, %v2832
      %v2895 = vadd.f32 %v2468, %v2837
      %v2896 = vadd.f32 %v2469, %v2842
      %v2897 = vadd.f32 %v2470, %v2847
      %v2898 = vadd.f32 %v2471, %v2852
      %v2899 = vadd.f32 %v2472, %v2857
      %v2900 = vadd.f32 %v2473, %v2862
      %v2901 = vld [vmem:[#allocation2 + $0x13] sm:$0xff]
      %v2902 = vld [vmem:[#allocation2 + $0x1b] sm:$0xff]
      %v2903 = vld [vmem:[#allocation2 + $0x23] sm:$0xff]
      %v2904 = vld [vmem:[#allocation2 + $0x2b] sm:$0xff]
      %v2905 = vld [vmem:[#allocation2 + $0x33] sm:$0xff]
      %v2906 = vld [vmem:[#allocation2 + $0x3b] sm:$0xff]
      %v2907 = vld [vmem:[#allocation2 + $0x43] sm:$0xff]
      %v2908 = vld [vmem:[#allocation2 + $0x4b] sm:$0xff]
      %v2909 = vld [vmem:[#allocation2 + $0x53] sm:$0xff]
      %v2910 = vld [vmem:[#allocation2 + $0x5b] sm:$0xff]
      %v2911 = vld [vmem:[#allocation2 + $0x63] sm:$0xff]
      %v2912 = vld [vmem:[#allocation2 + $0x6b] sm:$0xff]
      %v2913 = vld [vmem:[#allocation2 + $0x73] sm:$0xff]
      %v2914 = vld [vmem:[#allocation2 + $0x7b] sm:$0xff]
      %v2915 = vld [vmem:[#allocation2 + $0x83] sm:$0xff]
      %v2916 = vld [vmem:[#allocation2 + $0x8b] sm:$0xff]
      %v2917 = vld [vmem:[#allocation2 + $0x93] sm:$0xff]
      %v2918 = vld [vmem:[#allocation2 + $0x9b] sm:$0xff]
      %v2919 = vld [vmem:[#allocation2 + $0xa3] sm:$0xff]
      %v2920 = vld [vmem:[#allocation2 + $0xab] sm:$0xff]
      %v2921 = vld [vmem:[#allocation2 + $0xb3] sm:$0xff]
      %v2922 = vld [vmem:[#allocation2 + $0xbb] sm:$0xff]
      %v2923 = vld [vmem:[#allocation2 + $0xc3] sm:$0xff]
      %v2924 = vld [vmem:[#allocation2 + $0xcb] sm:$0xff]
      %v2925 = vld [vmem:[#allocation2 + $0xd3] sm:$0xff]
      %v2926 = vld [vmem:[#allocation2 + $0xdb] sm:$0xff]
      %v2927 = vld [vmem:[#allocation2 + $0xe3] sm:$0xff]
      %v2928 = vld [vmem:[#allocation2 + $0xeb] sm:$0xff]
      %v2929 = vld [vmem:[#allocation2 + $0xf3] sm:$0xff]
      %v2930 = vld [vmem:[#allocation2 + $0xfb] sm:$0xff]
      %v2931 = vld [vmem:[#allocation2 + $0x103] sm:$0xff]
      %v2932 = vld [vmem:[#allocation2 + $0x10b] sm:$0xff]
      %v2933 = vld [vmem:[#allocation2 + $0x113] sm:$0xff]
      %v2934 = vld [vmem:[#allocation2 + $0x11b] sm:$0xff]
      %v2935 = vld [vmem:[#allocation2 + $0x123] sm:$0xff]
      %v2936 = vld [vmem:[#allocation2 + $0x12b] sm:$0xff]
      %s2937 = scalar_lea.vmem %s5, 32
      %v2938 = vld [vmem:[%s2937] sm:$0xff]
      %v2940 = vsel %vm376, %v2901, 0
      %v2943 = vsel %vm376, %v2902, 0
      %v2946 = vsel %vm376, %v2903, 0
      %v2949 = vsel %vm376, %v2904, 0
      %v2952 = vsel %vm376, %v2905, 0
      %v2955 = vsel %vm376, %v2906, 0
      %v2958 = vsel %vm376, %v2907, 0
      %v2961 = vsel %vm376, %v2908, 0
      %v2964 = vsel %vm376, %v2909, 0
      %v2967 = vsel %vm376, %v2910, 0
      %v2970 = vsel %vm376, %v2911, 0
      %v2973 = vsel %vm376, %v2912, 0
      %v2976 = vsel %vm376, %v2913, 0
      %v2979 = vsel %vm376, %v2914, 0
      %v2982 = vsel %vm376, %v2915, 0
      %v2985 = vsel %vm376, %v2916, 0
      %v2988 = vsel %vm376, %v2917, 0
      %v2991 = vsel %vm376, %v2918, 0
      %v2994 = vsel %vm376, %v2919, 0
      %v2997 = vsel %vm376, %v2920, 0
      %v3000 = vsel %vm376, %v2921, 0
      %v3003 = vsel %vm376, %v2922, 0
      %v3006 = vsel %vm376, %v2923, 0
      %v3009 = vsel %vm376, %v2924, 0
      %v3012 = vsel %vm376, %v2925, 0
      %v3015 = vsel %vm376, %v2926, 0
      %v3018 = vsel %vm376, %v2927, 0
      %v3021 = vsel %vm376, %v2928, 0
      %v3024 = vsel %vm376, %v2929, 0
      %v3027 = vsel %vm376, %v2930, 0
      %v3030 = vsel %vm376, %v2931, 0
      %v3033 = vsel %vm376, %v2932, 0
      %v3036 = vsel %vm376, %v2933, 0
      %v3039 = vsel %vm376, %v2934, 0
      %v3042 = vsel %vm376, %v2935, 0
      %v3045 = vsel %vm376, %v2936, 0
      %3047 = vmatprep.subr.mxu0 0.0
      %3048 = vmatpush1.msra.mxu0 %v2938
      %3049 = vmatprep.subr.mxu0 0.0
      %3050 = vmatpush1.msra.mxu0 0.0
      %3051 = vmatprep.subr.mxu0 0.0
      %3052 = vmatpush1.msra.mxu0 0.0
      %3053 = vmatprep.subr.mxu0 0.0
      %3054 = vmatpush1.msra.mxu0 0.0
      %3055 = vmatprep.subr.mxu0 0.0
      %3056 = vmatpush1.msra.mxu0 0.0
      %3057 = vmatprep.subr.mxu0 0.0
      %3058 = vmatpush1.msra.mxu0 0.0
      %3059 = vmatprep.subr.mxu0 0.0
      %3060 = vmatpush1.msra.mxu0 0.0
      %3061 = vmatprep.subr.mxu0 0.0
      %3062 = vmatpush1.msra.mxu0 0.0
      %3063 = vmatprep.subr.mxu0 0.0
      %3064 = vmatpush1.msra.mxu0 0.0
      %3065 = vmatprep.subr.mxu0 0.0
      %3066 = vmatpush1.msra.mxu0 0.0
      %3067 = vmatprep.subr.mxu0 0.0
      %3068 = vmatpush1.msra.mxu0 0.0
      %3069 = vmatprep.subr.mxu0 0.0
      %3070 = vmatpush1.msra.mxu0 0.0
      %3071 = vmatprep.subr.mxu0 0.0
      %3072 = vmatpush1.msra.mxu0 0.0
      %3073 = vmatprep.subr.mxu0 0.0
      %3074 = vmatpush1.msra.mxu0 0.0
      %3075 = vmatprep.subr.mxu0 0.0
      %3076 = vmatpush1.msra.mxu0 0.0
      %3077 = vmatprep.subr.mxu0 0.0
      %3078 = vmatpush1.msra.mxu0 0.0
      %3079 = vmatprep.subr.mxu0 0.0
      %3080 = vmatpush1.msra.mxu0 0.0
      %3081 = vmatprep.subr.mxu0 0.0
      %3082 = vmatpush1.msra.mxu0 0.0
      %3083 = vmatprep.subr.mxu0 0.0
      %3084 = vmatpush1.msra.mxu0 0.0
      %3085 = vmatprep.subr.mxu0 0.0
      %3086 = vmatpush1.msra.mxu0 0.0
      %3087 = vmatprep.subr.mxu0 0.0
      %3088 = vmatpush1.msra.mxu0 0.0
      %3089 = vmatprep.subr.mxu0 0.0
      %3090 = vmatpush1.msra.mxu0 0.0
      %3091 = vmatprep.subr.mxu0 0.0
      %3092 = vmatpush1.msra.mxu0 0.0
      %3093 = vmatprep.subr.mxu0 0.0
      %3094 = vmatpush1.msra.mxu0 0.0
      %3095 = vmatprep.subr.mxu0 0.0
      %3096 = vmatpush1.msra.mxu0 0.0
      %3097 = vmatprep.subr.mxu0 0.0
      %3098 = vmatpush1.msra.mxu0 0.0
      %3099 = vmatprep.subr.mxu0 0.0
      %3100 = vmatpush1.msra.mxu0 0.0
      %3101 = vmatprep.subr.mxu0 0.0
      %3102 = vmatpush1.msra.mxu0 0.0
      %3103 = vmatprep.subr.mxu0 0.0
      %3104 = vmatpush1.msra.mxu0 0.0
      %3105 = vmatprep.subr.mxu0 0.0
      %3106 = vmatpush1.msra.mxu0 0.0
      %3107 = vmatprep.subr.mxu0 0.0
      %3108 = vmatpush1.msra.mxu0 0.0
      %3109 = vmatprep.subr.mxu0 0.0
      %3110 = vmatpush1.msra.mxu0 0.0
      %3111 = vmatprep.mubr.f32.mxu0 0.0
      %3112 = vmatmul.mubr.f32.gmra.mrb[0].mxu0 %v2940
      %v3113 = vpop.f32.mrb[0].mxu0
      %v3114 = vadd.f32 0.0, %v3113
      %v3115 = vpop.f32.mrb[0].mxu0
      %3116 = vmatprep.mubr.f32.mxu0 0.0
      %3117 = vmatmul.mubr.f32.gmra.mrb[0].mxu0 %v2943
      %v3118 = vpop.f32.mrb[0].mxu0
      %v3119 = vadd.f32 0.0, %v3118
      %v3120 = vpop.f32.mrb[0].mxu0
      %3121 = vmatprep.mubr.f32.mxu0 0.0
      %3122 = vmatmul.mubr.f32.gmra.mrb[0].mxu0 %v2946
      %v3123 = vpop.f32.mrb[0].mxu0
      %v3124 = vadd.f32 0.0, %v3123
      %v3125 = vpop.f32.mrb[0].mxu0
      %3126 = vmatprep.mubr.f32.mxu0 0.0
      %3127 = vmatmul.mubr.f32.gmra.mrb[0].mxu0 %v2949
      %v3128 = vpop.f32.mrb[0].mxu0
      %v3129 = vadd.f32 0.0, %v3128
      %v3130 = vpop.f32.mrb[0].mxu0
      %3131 = vmatprep.mubr.f32.mxu0 0.0
      %3132 = vmatmul.mubr.f32.gmra.mrb[0].mxu0 %v2952
      %v3133 = vpop.f32.mrb[0].mxu0
      %v3134 = vadd.f32 0.0, %v3133
      %v3135 = vpop.f32.mrb[0].mxu0
      %3136 = vmatprep.mubr.f32.mxu0 0.0
      %3137 = vmatmul.mubr.f32.gmra.mrb[0].mxu0 %v2955
      %v3138 = vpop.f32.mrb[0].mxu0
      %v3139 = vadd.f32 0.0, %v3138
      %v3140 = vpop.f32.mrb[0].mxu0
      %3141 = vmatprep.mubr.f32.mxu0 0.0
      %3142 = vmatmul.mubr.f32.gmra.mrb[0].mxu0 %v2958
      %v3143 = vpop.f32.mrb[0].mxu0
      %v3144 = vadd.f32 0.0, %v3143
      %v3145 = vpop.f32.mrb[0].mxu0
      %3146 = vmatprep.mubr.f32.mxu0 0.0
      %3147 = vmatmul.mubr.f32.gmra.mrb[0].mxu0 %v2961
      %v3148 = vpop.f32.mrb[0].mxu0
      %v3149 = vadd.f32 0.0, %v3148
      %v3150 = vpop.f32.mrb[0].mxu0
      %3151 = vmatprep.mubr.f32.mxu0 0.0
      %3152 = vmatmul.mubr.f32.gmra.mrb[0].mxu0 %v2964
      %v3153 = vpop.f32.mrb[0].mxu0
      %v3154 = vadd.f32 0.0, %v3153
      %v3155 = vpop.f32.mrb[0].mxu0
      %3156 = vmatprep.mubr.f32.mxu0 0.0
      %3157 = vmatmul.mubr.f32.gmra.mrb[0].mxu0 %v2967
      %v3158 = vpop.f32.mrb[0].mxu0
      %v3159 = vadd.f32 0.0, %v3158
      %v3160 = vpop.f32.mrb[0].mxu0
      %3161 = vmatprep.mubr.f32.mxu0 0.0
      %3162 = vmatmul.mubr.f32.gmra.mrb[0].mxu0 %v2970
      %v3163 = vpop.f32.mrb[0].mxu0
      %v3164 = vadd.f32 0.0, %v3163
      %v3165 = vpop.f32.mrb[0].mxu0
      %3166 = vmatprep.mubr.f32.mxu0 0.0
      %3167 = vmatmul.mubr.f32.gmra.mrb[0].mxu0 %v2973
      %v3168 = vpop.f32.mrb[0].mxu0
      %v3169 = vadd.f32 0.0, %v3168
      %v3170 = vpop.f32.mrb[0].mxu0
      %3171 = vmatprep.mubr.f32.mxu0 0.0
      %3172 = vmatmul.mubr.f32.gmra.mrb[0].mxu0 %v2976
      %v3173 = vpop.f32.mrb[0].mxu0
      %v3174 = vadd.f32 0.0, %v3173
      %v3175 = vpop.f32.mrb[0].mxu0
      %3176 = vmatprep.mubr.f32.mxu0 0.0
      %3177 = vmatmul.mubr.f32.gmra.mrb[0].mxu0 %v2979
      %v3178 = vpop.f32.mrb[0].mxu0
      %v3179 = vadd.f32 0.0, %v3178
      %v3180 = vpop.f32.mrb[0].mxu0
      %3181 = vmatprep.mubr.f32.mxu0 0.0
      %3182 = vmatmul.mubr.f32.gmra.mrb[0].mxu0 %v2982
      %v3183 = vpop.f32.mrb[0].mxu0
      %v3184 = vadd.f32 0.0, %v3183
      %v3185 = vpop.f32.mrb[0].mxu0
      %3186 = vmatprep.mubr.f32.mxu0 0.0
      %3187 = vmatmul.mubr.f32.gmra.mrb[0].mxu0 %v2985
      %v3188 = vpop.f32.mrb[0].mxu0
      %v3189 = vadd.f32 0.0, %v3188
      %v3190 = vpop.f32.mrb[0].mxu0
      %3191 = vmatprep.mubr.f32.mxu0 0.0
      %3192 = vmatmul.mubr.f32.gmra.mrb[0].mxu0 %v2988
      %v3193 = vpop.f32.mrb[0].mxu0
      %v3194 = vadd.f32 0.0, %v3193
      %v3195 = vpop.f32.mrb[0].mxu0
      %3196 = vmatprep.mubr.f32.mxu0 0.0
      %3197 = vmatmul.mubr.f32.gmra.mrb[0].mxu0 %v2991
      %v3198 = vpop.f32.mrb[0].mxu0
      %v3199 = vadd.f32 0.0, %v3198
      %v3200 = vpop.f32.mrb[0].mxu0
      %3201 = vmatprep.mubr.f32.mxu0 0.0
      %3202 = vmatmul.mubr.f32.gmra.mrb[0].mxu0 %v2994
      %v3203 = vpop.f32.mrb[0].mxu0
      %v3204 = vadd.f32 0.0, %v3203
      %v3205 = vpop.f32.mrb[0].mxu0
      %3206 = vmatprep.mubr.f32.mxu0 0.0
      %3207 = vmatmul.mubr.f32.gmra.mrb[0].mxu0 %v2997
      %v3208 = vpop.f32.mrb[0].mxu0
      %v3209 = vadd.f32 0.0, %v3208
      %v3210 = vpop.f32.mrb[0].mxu0
      %3211 = vmatprep.mubr.f32.mxu0 0.0
      %3212 = vmatmul.mubr.f32.gmra.mrb[0].mxu0 %v3000
      %v3213 = vpop.f32.mrb[0].mxu0
      %v3214 = vadd.f32 0.0, %v3213
      %v3215 = vpop.f32.mrb[0].mxu0
      %3216 = vmatprep.mubr.f32.mxu0 0.0
      %3217 = vmatmul.mubr.f32.gmra.mrb[0].mxu0 %v3003
      %v3218 = vpop.f32.mrb[0].mxu0
      %v3219 = vadd.f32 0.0, %v3218
      %v3220 = vpop.f32.mrb[0].mxu0
      %3221 = vmatprep.mubr.f32.mxu0 0.0
      %3222 = vmatmul.mubr.f32.gmra.mrb[0].mxu0 %v3006
      %v3223 = vpop.f32.mrb[0].mxu0
      %v3224 = vadd.f32 0.0, %v3223
      %v3225 = vpop.f32.mrb[0].mxu0
      %3226 = vmatprep.mubr.f32.mxu0 0.0
      %3227 = vmatmul.mubr.f32.gmra.mrb[0].mxu0 %v3009
      %v3228 = vpop.f32.mrb[0].mxu0
      %v3229 = vadd.f32 0.0, %v3228
      %v3230 = vpop.f32.mrb[0].mxu0
      %3231 = vmatprep.mubr.f32.mxu0 0.0
      %3232 = vmatmul.mubr.f32.gmra.mrb[0].mxu0 %v3012
      %v3233 = vpop.f32.mrb[0].mxu0
      %v3234 = vadd.f32 0.0, %v3233
      %v3235 = vpop.f32.mrb[0].mxu0
      %3236 = vmatprep.mubr.f32.mxu0 0.0
      %3237 = vmatmul.mubr.f32.gmra.mrb[0].mxu0 %v3015
      %v3238 = vpop.f32.mrb[0].mxu0
      %v3239 = vadd.f32 0.0, %v3238
      %v3240 = vpop.f32.mrb[0].mxu0
      %3241 = vmatprep.mubr.f32.mxu0 0.0
      %3242 = vmatmul.mubr.f32.gmra.mrb[0].mxu0 %v3018
      %v3243 = vpop.f32.mrb[0].mxu0
      %v3244 = vadd.f32 0.0, %v3243
      %v3245 = vpop.f32.mrb[0].mxu0
      %3246 = vmatprep.mubr.f32.mxu0 0.0
      %3247 = vmatmul.mubr.f32.gmra.mrb[0].mxu0 %v3021
      %v3248 = vpop.f32.mrb[0].mxu0
      %v3249 = vadd.f32 0.0, %v3248
      %v3250 = vpop.f32.mrb[0].mxu0
      %3251 = vmatprep.mubr.f32.mxu0 0.0
      %3252 = vmatmul.mubr.f32.gmra.mrb[0].mxu0 %v3024
      %v3253 = vpop.f32.mrb[0].mxu0
      %v3254 = vadd.f32 0.0, %v3253
      %v3255 = vpop.f32.mrb[0].mxu0
      %3256 = vmatprep.mubr.f32.mxu0 0.0
      %3257 = vmatmul.mubr.f32.gmra.mrb[0].mxu0 %v3027
      %v3258 = vpop.f32.mrb[0].mxu0
      %v3259 = vadd.f32 0.0, %v3258
      %v3260 = vpop.f32.mrb[0].mxu0
      %3261 = vmatprep.mubr.f32.mxu0 0.0
      %3262 = vmatmul.mubr.f32.gmra.mrb[0].mxu0 %v3030
      %v3263 = vpop.f32.mrb[0].mxu0
      %v3264 = vadd.f32 0.0, %v3263
      %v3265 = vpop.f32.mrb[0].mxu0
      %3266 = vmatprep.mubr.f32.mxu0 0.0
      %3267 = vmatmul.mubr.f32.gmra.mrb[0].mxu0 %v3033
      %v3268 = vpop.f32.mrb[0].mxu0
      %v3269 = vadd.f32 0.0, %v3268
      %v3270 = vpop.f32.mrb[0].mxu0
      %3271 = vmatprep.mubr.f32.mxu0 0.0
      %3272 = vmatmul.mubr.f32.gmra.mrb[0].mxu0 %v3036
      %v3273 = vpop.f32.mrb[0].mxu0
      %v3274 = vadd.f32 0.0, %v3273
      %v3275 = vpop.f32.mrb[0].mxu0
      %3276 = vmatprep.mubr.f32.mxu0 0.0
      %3277 = vmatmul.mubr.f32.gmra.mrb[0].mxu0 %v3039
      %v3278 = vpop.f32.mrb[0].mxu0
      %v3279 = vadd.f32 0.0, %v3278
      %v3280 = vpop.f32.mrb[0].mxu0
      %3281 = vmatprep.mubr.f32.mxu0 0.0
      %3282 = vmatmul.mubr.f32.gmra.mrb[0].mxu0 %v3042
      %v3283 = vpop.f32.mrb[0].mxu0
      %v3284 = vadd.f32 0.0, %v3283
      %v3285 = vpop.f32.mrb[0].mxu0
      %3286 = vmatprep.mubr.f32.mxu0 0.0
      %3287 = vmatmul.mubr.f32.gmra.mrb[0].mxu0 %v3045
      %v3288 = vpop.f32.mrb[0].mxu0
      %v3289 = vadd.f32 0.0, %v3288
      %v3290 = vpop.f32.mrb[0].mxu0
      %3291 = vdwg.mxu0
      %v3292 = vadd.f32 %v2865, %v3114
      %v3293 = vadd.f32 %v2866, %v3119
      %v3294 = vadd.f32 %v2867, %v3124
      %v3295 = vadd.f32 %v2868, %v3129
      %v3296 = vadd.f32 %v2869, %v3134
      %v3297 = vadd.f32 %v2870, %v3139
      %v3298 = vadd.f32 %v2871, %v3144
      %v3299 = vadd.f32 %v2872, %v3149
      %v3300 = vadd.f32 %v2873, %v3154
      %v3301 = vadd.f32 %v2874, %v3159
      %v3302 = vadd.f32 %v2875, %v3164
      %v3303 = vadd.f32 %v2876, %v3169
      %v3304 = vadd.f32 %v2877, %v3174
      %v3305 = vadd.f32 %v2878, %v3179
      %v3306 = vadd.f32 %v2879, %v3184
      %v3307 = vadd.f32 %v2880, %v3189
      %v3308 = vadd.f32 %v2881, %v3194
      %v3309 = vadd.f32 %v2882, %v3199
      %v3310 = vadd.f32 %v2883, %v3204
      %v3311 = vadd.f32 %v2884, %v3209
      %v3312 = vadd.f32 %v2885, %v3214
      %v3313 = vadd.f32 %v2886, %v3219
      %v3314 = vadd.f32 %v2887, %v3224
      %v3315 = vadd.f32 %v2888, %v3229
      %v3316 = vadd.f32 %v2889, %v3234
      %v3317 = vadd.f32 %v2890, %v3239
      %v3318 = vadd.f32 %v2891, %v3244
      %v3319 = vadd.f32 %v2892, %v3249
      %v3320 = vadd.f32 %v2893, %v3254
      %v3321 = vadd.f32 %v2894, %v3259
      %v3322 = vadd.f32 %v2895, %v3264
      %v3323 = vadd.f32 %v2896, %v3269
      %v3324 = vadd.f32 %v2897, %v3274
      %v3325 = vadd.f32 %v2898, %v3279
      %v3326 = vadd.f32 %v2899, %v3284
      %v3327 = vadd.f32 %v2900, %v3289
      %v3328 = vld [vmem:[#allocation2 + $0x14] sm:$0xff]
      %v3329 = vld [vmem:[#allocation2 + $0x1c] sm:$0xff]
      %v3330 = vld [vmem:[#allocation2 + $0x24] sm:$0xff]
      %v3331 = vld [vmem:[#allocation2 + $0x2c] sm:$0xff]
      %v3332 = vld [vmem:[#allocation2 + $0x34] sm:$0xff]
      %v3333 = vld [vmem:[#allocation2 + $0x3c] sm:$0xff]
      %v3334 = vld [vmem:[#allocation2 + $0x44] sm:$0xff]
      %v3335 = vld [vmem:[#allocation2 + $0x4c] sm:$0xff]
      %v3336 = vld [vmem:[#allocation2 + $0x54] sm:$0xff]
      %v3337 = vld [vmem:[#allocation2 + $0x5c] sm:$0xff]
      %v3338 = vld [vmem:[#allocation2 + $0x64] sm:$0xff]
      %v3339 = vld [vmem:[#allocation2 + $0x6c] sm:$0xff]
      %v3340 = vld [vmem:[#allocation2 + $0x74] sm:$0xff]
      %v3341 = vld [vmem:[#allocation2 + $0x7c] sm:$0xff]
      %v3342 = vld [vmem:[#allocation2 + $0x84] sm:$0xff]
      %v3343 = vld [vmem:[#allocation2 + $0x8c] sm:$0xff]
      %v3344 = vld [vmem:[#allocation2 + $0x94] sm:$0xff]
      %v3345 = vld [vmem:[#allocation2 + $0x9c] sm:$0xff]
      %v3346 = vld [vmem:[#allocation2 + $0xa4] sm:$0xff]
      %v3347 = vld [vmem:[#allocation2 + $0xac] sm:$0xff]
      %v3348 = vld [vmem:[#allocation2 + $0xb4] sm:$0xff]
      %v3349 = vld [vmem:[#allocation2 + $0xbc] sm:$0xff]
      %v3350 = vld [vmem:[#allocation2 + $0xc4] sm:$0xff]
      %v3351 = vld [vmem:[#allocation2 + $0xcc] sm:$0xff]
      %v3352 = vld [vmem:[#allocation2 + $0xd4] sm:$0xff]
      %v3353 = vld [vmem:[#allocation2 + $0xdc] sm:$0xff]
      %v3354 = vld [vmem:[#allocation2 + $0xe4] sm:$0xff]
      %v3355 = vld [vmem:[#allocation2 + $0xec] sm:$0xff]
      %v3356 = vld [vmem:[#allocation2 + $0xf4] sm:$0xff]
      %v3357 = vld [vmem:[#allocation2 + $0xfc] sm:$0xff]
      %v3358 = vld [vmem:[#allocation2 + $0x104] sm:$0xff]
      %v3359 = vld [vmem:[#allocation2 + $0x10c] sm:$0xff]
      %v3360 = vld [vmem:[#allocation2 + $0x114] sm:$0xff]
      %v3361 = vld [vmem:[#allocation2 + $0x11c] sm:$0xff]
      %v3362 = vld [vmem:[#allocation2 + $0x124] sm:$0xff]
      %v3363 = vld [vmem:[#allocation2 + $0x12c] sm:$0xff]
      %s3364 = scalar_lea.vmem %s5, 40
      %v3365 = vld [vmem:[%s3364] sm:$0xff]
      %v3367 = vsel %vm376, %v3328, 0
      %v3370 = vsel %vm376, %v3329, 0
      %v3373 = vsel %vm376, %v3330, 0
      %v3376 = vsel %vm376, %v3331, 0
      %v3379 = vsel %vm376, %v3332, 0
      %v3382 = vsel %vm376, %v3333, 0
      %v3385 = vsel %vm376, %v3334, 0
      %v3388 = vsel %vm376, %v3335, 0
      %v3391 = vsel %vm376, %v3336, 0
      %v3394 = vsel %vm376, %v3337, 0
      %v3397 = vsel %vm376, %v3338, 0
      %v3400 = vsel %vm376, %v3339, 0
      %v3403 = vsel %vm376, %v3340, 0
      %v3406 = vsel %vm376, %v3341, 0
      %v3409 = vsel %vm376, %v3342, 0
      %v3412 = vsel %vm376, %v3343, 0
      %v3415 = vsel %vm376, %v3344, 0
      %v3418 = vsel %vm376, %v3345, 0
      %v3421 = vsel %vm376, %v3346, 0
      %v3424 = vsel %vm376, %v3347, 0
      %v3427 = vsel %vm376, %v3348, 0
      %v3430 = vsel %vm376, %v3349, 0
      %v3433 = vsel %vm376, %v3350, 0
      %v3436 = vsel %vm376, %v3351, 0
      %v3439 = vsel %vm376, %v3352, 0
      %v3442 = vsel %vm376, %v3353, 0
      %v3445 = vsel %vm376, %v3354, 0
      %v3448 = vsel %vm376, %v3355, 0
      %v3451 = vsel %vm376, %v3356, 0
      %v3454 = vsel %vm376, %v3357, 0
      %v3457 = vsel %vm376, %v3358, 0
      %v3460 = vsel %vm376, %v3359, 0
      %v3463 = vsel %vm376, %v3360, 0
      %v3466 = vsel %vm376, %v3361, 0
      %v3469 = vsel %vm376, %v3362, 0
      %v3472 = vsel %vm376, %v3363, 0
      %3474 = vmatprep.subr.mxu0 0.0
      %3475 = vmatpush1.msra.mxu0 %v3365
      %3476 = vmatprep.subr.mxu0 0.0
      %3477 = vmatpush1.msra.mxu0 0.0
      %3478 = vmatprep.subr.mxu0 0.0
      %3479 = vmatpush1.msra.mxu0 0.0
      %3480 = vmatprep.subr.mxu0 0.0
      %3481 = vmatpush1.msra.mxu0 0.0
      %3482 = vmatprep.subr.mxu0 0.0
      %3483 = vmatpush1.msra.mxu0 0.0
      %3484 = vmatprep.subr.mxu0 0.0
      %3485 = vmatpush1.msra.mxu0 0.0
      %3486 = vmatprep.subr.mxu0 0.0
      %3487 = vmatpush1.msra.mxu0 0.0
      %3488 = vmatprep.subr.mxu0 0.0
      %3489 = vmatpush1.msra.mxu0 0.0
      %3490 = vmatprep.subr.mxu0 0.0
      %3491 = vmatpush1.msra.mxu0 0.0
      %3492 = vmatprep.subr.mxu0 0.0
      %3493 = vmatpush1.msra.mxu0 0.0
      %3494 = vmatprep.subr.mxu0 0.0
      %3495 = vmatpush1.msra.mxu0 0.0
      %3496 = vmatprep.subr.mxu0 0.0
      %3497 = vmatpush1.msra.mxu0 0.0
      %3498 = vmatprep.subr.mxu0 0.0
      %3499 = vmatpush1.msra.mxu0 0.0
      %3500 = vmatprep.subr.mxu0 0.0
      %3501 = vmatpush1.msra.mxu0 0.0
      %3502 = vmatprep.subr.mxu0 0.0
      %3503 = vmatpush1.msra.mxu0 0.0
      %3504 = vmatprep.subr.mxu0 0.0
      %3505 = vmatpush1.msra.mxu0 0.0
      %3506 = vmatprep.subr.mxu0 0.0
      %3507 = vmatpush1.msra.mxu0 0.0
      %3508 = vmatprep.subr.mxu0 0.0
      %3509 = vmatpush1.msra.mxu0 0.0
      %3510 = vmatprep.subr.mxu0 0.0
      %3511 = vmatpush1.msra.mxu0 0.0
      %3512 = vmatprep.subr.mxu0 0.0
      %3513 = vmatpush1.msra.mxu0 0.0
      %3514 = vmatprep.subr.mxu0 0.0
      %3515 = vmatpush1.msra.mxu0 0.0
      %3516 = vmatprep.subr.mxu0 0.0
      %3517 = vmatpush1.msra.mxu0 0.0
      %3518 = vmatprep.subr.mxu0 0.0
      %3519 = vmatpush1.msra.mxu0 0.0
      %3520 = vmatprep.subr.mxu0 0.0
      %3521 = vmatpush1.msra.mxu0 0.0
      %3522 = vmatprep.subr.mxu0 0.0
      %3523 = vmatpush1.msra.mxu0 0.0
      %3524 = vmatprep.subr.mxu0 0.0
      %3525 = vmatpush1.msra.mxu0 0.0
      %3526 = vmatprep.subr.mxu0 0.0
      %3527 = vmatpush1.msra.mxu0 0.0
      %3528 = vmatprep.subr.mxu0 0.0
      %3529 = vmatpush1.msra.mxu0 0.0
      %3530 = vmatprep.subr.mxu0 0.0
      %3531 = vmatpush1.msra.mxu0 0.0
      %3532 = vmatprep.subr.mxu0 0.0
      %3533 = vmatpush1.msra.mxu0 0.0
      %3534 = vmatprep.subr.mxu0 0.0
      %3535 = vmatpush1.msra.mxu0 0.0
      %3536 = vmatprep.subr.mxu0 0.0
      %3537 = vmatpush1.msra.mxu0 0.0
      %3538 = vmatprep.mubr.f32.mxu0 0.0
      %3539 = vmatmul.mubr.f32.gmra.mrb[0].mxu0 %v3367
      %v3540 = vpop.f32.mrb[0].mxu0
      %v3541 = vadd.f32 0.0, %v3540
      %v3542 = vpop.f32.mrb[0].mxu0
      %3543 = vmatprep.mubr.f32.mxu0 0.0
      %3544 = vmatmul.mubr.f32.gmra.mrb[0].mxu0 %v3370
      %v3545 = vpop.f32.mrb[0].mxu0
      %v3546 = vadd.f32 0.0, %v3545
      %v3547 = vpop.f32.mrb[0].mxu0
      %3548 = vmatprep.mubr.f32.mxu0 0.0
      %3549 = vmatmul.mubr.f32.gmra.mrb[0].mxu0 %v3373
      %v3550 = vpop.f32.mrb[0].mxu0
      %v3551 = vadd.f32 0.0, %v3550
      %v3552 = vpop.f32.mrb[0].mxu0
      %3553 = vmatprep.mubr.f32.mxu0 0.0
      %3554 = vmatmul.mubr.f32.gmra.mrb[0].mxu0 %v3376
      %v3555 = vpop.f32.mrb[0].mxu0
      %v3556 = vadd.f32 0.0, %v3555
      %v3557 = vpop.f32.mrb[0].mxu0
      %3558 = vmatprep.mubr.f32.mxu0 0.0
      %3559 = vmatmul.mubr.f32.gmra.mrb[0].mxu0 %v3379
      %v3560 = vpop.f32.mrb[0].mxu0
      %v3561 = vadd.f32 0.0, %v3560
      %v3562 = vpop.f32.mrb[0].mxu0
      %3563 = vmatprep.mubr.f32.mxu0 0.0
      %3564 = vmatmul.mubr.f32.gmra.mrb[0].mxu0 %v3382
      %v3565 = vpop.f32.mrb[0].mxu0
      %v3566 = vadd.f32 0.0, %v3565
      %v3567 = vpop.f32.mrb[0].mxu0
      %3568 = vmatprep.mubr.f32.mxu0 0.0
      %3569 = vmatmul.mubr.f32.gmra.mrb[0].mxu0 %v3385
      %v3570 = vpop.f32.mrb[0].mxu0
      %v3571 = vadd.f32 0.0, %v3570
      %v3572 = vpop.f32.mrb[0].mxu0
      %3573 = vmatprep.mubr.f32.mxu0 0.0
      %3574 = vmatmul.mubr.f32.gmra.mrb[0].mxu0 %v3388
      %v3575 = vpop.f32.mrb[0].mxu0
      %v3576 = vadd.f32 0.0, %v3575
      %v3577 = vpop.f32.mrb[0].mxu0
      %3578 = vmatprep.mubr.f32.mxu0 0.0
      %3579 = vmatmul.mubr.f32.gmra.mrb[0].mxu0 %v3391
      %v3580 = vpop.f32.mrb[0].mxu0
      %v3581 = vadd.f32 0.0, %v3580
      %v3582 = vpop.f32.mrb[0].mxu0
      %3583 = vmatprep.mubr.f32.mxu0 0.0
      %3584 = vmatmul.mubr.f32.gmra.mrb[0].mxu0 %v3394
      %v3585 = vpop.f32.mrb[0].mxu0
      %v3586 = vadd.f32 0.0, %v3585
      %v3587 = vpop.f32.mrb[0].mxu0
      %3588 = vmatprep.mubr.f32.mxu0 0.0
      %3589 = vmatmul.mubr.f32.gmra.mrb[0].mxu0 %v3397
      %v3590 = vpop.f32.mrb[0].mxu0
      %v3591 = vadd.f32 0.0, %v3590
      %v3592 = vpop.f32.mrb[0].mxu0
      %3593 = vmatprep.mubr.f32.mxu0 0.0
      %3594 = vmatmul.mubr.f32.gmra.mrb[0].mxu0 %v3400
      %v3595 = vpop.f32.mrb[0].mxu0
      %v3596 = vadd.f32 0.0, %v3595
      %v3597 = vpop.f32.mrb[0].mxu0
      %3598 = vmatprep.mubr.f32.mxu0 0.0
      %3599 = vmatmul.mubr.f32.gmra.mrb[0].mxu0 %v3403
      %v3600 = vpop.f32.mrb[0].mxu0
      %v3601 = vadd.f32 0.0, %v3600
      %v3602 = vpop.f32.mrb[0].mxu0
      %3603 = vmatprep.mubr.f32.mxu0 0.0
      %3604 = vmatmul.mubr.f32.gmra.mrb[0].mxu0 %v3406
      %v3605 = vpop.f32.mrb[0].mxu0
      %v3606 = vadd.f32 0.0, %v3605
      %v3607 = vpop.f32.mrb[0].mxu0
      %3608 = vmatprep.mubr.f32.mxu0 0.0
      %3609 = vmatmul.mubr.f32.gmra.mrb[0].mxu0 %v3409
      %v3610 = vpop.f32.mrb[0].mxu0
      %v3611 = vadd.f32 0.0, %v3610
      %v3612 = vpop.f32.mrb[0].mxu0
      %3613 = vmatprep.mubr.f32.mxu0 0.0
      %3614 = vmatmul.mubr.f32.gmra.mrb[0].mxu0 %v3412
      %v3615 = vpop.f32.mrb[0].mxu0
      %v3616 = vadd.f32 0.0, %v3615
      %v3617 = vpop.f32.mrb[0].mxu0
      %3618 = vmatprep.mubr.f32.mxu0 0.0
      %3619 = vmatmul.mubr.f32.gmra.mrb[0].mxu0 %v3415
      %v3620 = vpop.f32.mrb[0].mxu0
      %v3621 = vadd.f32 0.0, %v3620
      %v3622 = vpop.f32.mrb[0].mxu0
      %3623 = vmatprep.mubr.f32.mxu0 0.0
      %3624 = vmatmul.mubr.f32.gmra.mrb[0].mxu0 %v3418
      %v3625 = vpop.f32.mrb[0].mxu0
      %v3626 = vadd.f32 0.0, %v3625
      %v3627 = vpop.f32.mrb[0].mxu0
      %3628 = vmatprep.mubr.f32.mxu0 0.0
      %3629 = vmatmul.mubr.f32.gmra.mrb[0].mxu0 %v3421
      %v3630 = vpop.f32.mrb[0].mxu0
      %v3631 = vadd.f32 0.0, %v3630
      %v3632 = vpop.f32.mrb[0].mxu0
      %3633 = vmatprep.mubr.f32.mxu0 0.0
      %3634 = vmatmul.mubr.f32.gmra.mrb[0].mxu0 %v3424
      %v3635 = vpop.f32.mrb[0].mxu0
      %v3636 = vadd.f32 0.0, %v3635
      %v3637 = vpop.f32.mrb[0].mxu0
      %3638 = vmatprep.mubr.f32.mxu0 0.0
      %3639 = vmatmul.mubr.f32.gmra.mrb[0].mxu0 %v3427
      %v3640 = vpop.f32.mrb[0].mxu0
      %v3641 = vadd.f32 0.0, %v3640
      %v3642 = vpop.f32.mrb[0].mxu0
      %3643 = vmatprep.mubr.f32.mxu0 0.0
      %3644 = vmatmul.mubr.f32.gmra.mrb[0].mxu0 %v3430
      %v3645 = vpop.f32.mrb[0].mxu0
      %v3646 = vadd.f32 0.0, %v3645
      %v3647 = vpop.f32.mrb[0].mxu0
      %3648 = vmatprep.mubr.f32.mxu0 0.0
      %3649 = vmatmul.mubr.f32.gmra.mrb[0].mxu0 %v3433
      %v3650 = vpop.f32.mrb[0].mxu0
      %v3651 = vadd.f32 0.0, %v3650
      %v3652 = vpop.f32.mrb[0].mxu0
      %3653 = vmatprep.mubr.f32.mxu0 0.0
      %3654 = vmatmul.mubr.f32.gmra.mrb[0].mxu0 %v3436
      %v3655 = vpop.f32.mrb[0].mxu0
      %v3656 = vadd.f32 0.0, %v3655
      %v3657 = vpop.f32.mrb[0].mxu0
      %3658 = vmatprep.mubr.f32.mxu0 0.0
      %3659 = vmatmul.mubr.f32.gmra.mrb[0].mxu0 %v3439
      %v3660 = vpop.f32.mrb[0].mxu0
      %v3661 = vadd.f32 0.0, %v3660
      %v3662 = vpop.f32.mrb[0].mxu0
      %3663 = vmatprep.mubr.f32.mxu0 0.0
      %3664 = vmatmul.mubr.f32.gmra.mrb[0].mxu0 %v3442
      %v3665 = vpop.f32.mrb[0].mxu0
      %v3666 = vadd.f32 0.0, %v3665
      %v3667 = vpop.f32.mrb[0].mxu0
      %3668 = vmatprep.mubr.f32.mxu0 0.0
      %3669 = vmatmul.mubr.f32.gmra.mrb[0].mxu0 %v3445
      %v3670 = vpop.f32.mrb[0].mxu0
      %v3671 = vadd.f32 0.0, %v3670
      %v3672 = vpop.f32.mrb[0].mxu0
      %3673 = vmatprep.mubr.f32.mxu0 0.0
      %3674 = vmatmul.mubr.f32.gmra.mrb[0].mxu0 %v3448
      %v3675 = vpop.f32.mrb[0].mxu0
      %v3676 = vadd.f32 0.0, %v3675
      %v3677 = vpop.f32.mrb[0].mxu0
      %3678 = vmatprep.mubr.f32.mxu0 0.0
      %3679 = vmatmul.mubr.f32.gmra.mrb[0].mxu0 %v3451
      %v3680 = vpop.f32.mrb[0].mxu0
      %v3681 = vadd.f32 0.0, %v3680
      %v3682 = vpop.f32.mrb[0].mxu0
      %3683 = vmatprep.mubr.f32.mxu0 0.0
      %3684 = vmatmul.mubr.f32.gmra.mrb[0].mxu0 %v3454
      %v3685 = vpop.f32.mrb[0].mxu0
      %v3686 = vadd.f32 0.0, %v3685
      %v3687 = vpop.f32.mrb[0].mxu0
      %3688 = vmatprep.mubr.f32.mxu0 0.0
      %3689 = vmatmul.mubr.f32.gmra.mrb[0].mxu0 %v3457
      %v3690 = vpop.f32.mrb[0].mxu0
      %v3691 = vadd.f32 0.0, %v3690
      %v3692 = vpop.f32.mrb[0].mxu0
      %3693 = vmatprep.mubr.f32.mxu0 0.0
      %3694 = vmatmul.mubr.f32.gmra.mrb[0].mxu0 %v3460
      %v3695 = vpop.f32.mrb[0].mxu0
      %v3696 = vadd.f32 0.0, %v3695
      %v3697 = vpop.f32.mrb[0].mxu0
      %3698 = vmatprep.mubr.f32.mxu0 0.0
      %3699 = vmatmul.mubr.f32.gmra.mrb[0].mxu0 %v3463
      %v3700 = vpop.f32.mrb[0].mxu0
      %v3701 = vadd.f32 0.0, %v3700
      %v3702 = vpop.f32.mrb[0].mxu0
      %3703 = vmatprep.mubr.f32.mxu0 0.0
      %3704 = vmatmul.mubr.f32.gmra.mrb[0].mxu0 %v3466
      %v3705 = vpop.f32.mrb[0].mxu0
      %v3706 = vadd.f32 0.0, %v3705
      %v3707 = vpop.f32.mrb[0].mxu0
      %3708 = vmatprep.mubr.f32.mxu0 0.0
      %3709 = vmatmul.mubr.f32.gmra.mrb[0].mxu0 %v3469
      %v3710 = vpop.f32.mrb[0].mxu0
      %v3711 = vadd.f32 0.0, %v3710
      %v3712 = vpop.f32.mrb[0].mxu0
      %3713 = vmatprep.mubr.f32.mxu0 0.0
      %3714 = vmatmul.mubr.f32.gmra.mrb[0].mxu0 %v3472
      %v3715 = vpop.f32.mrb[0].mxu0
      %v3716 = vadd.f32 0.0, %v3715
      %v3717 = vpop.f32.mrb[0].mxu0
      %3718 = vdwg.mxu0
      %v3719 = vadd.f32 %v3292, %v3541
      %v3720 = vadd.f32 %v3293, %v3546
      %v3721 = vadd.f32 %v3294, %v3551
      %v3722 = vadd.f32 %v3295, %v3556
      %v3723 = vadd.f32 %v3296, %v3561
      %v3724 = vadd.f32 %v3297, %v3566
      %v3725 = vadd.f32 %v3298, %v3571
      %v3726 = vadd.f32 %v3299, %v3576
      %v3727 = vadd.f32 %v3300, %v3581
      %v3728 = vadd.f32 %v3301, %v3586
      %v3729 = vadd.f32 %v3302, %v3591
      %v3730 = vadd.f32 %v3303, %v3596
      %v3731 = vadd.f32 %v3304, %v3601
      %v3732 = vadd.f32 %v3305, %v3606
      %v3733 = vadd.f32 %v3306, %v3611
      %v3734 = vadd.f32 %v3307, %v3616
      %v3735 = vadd.f32 %v3308, %v3621
      %v3736 = vadd.f32 %v3309, %v3626
      %v3737 = vadd.f32 %v3310, %v3631
      %v3738 = vadd.f32 %v3311, %v3636
      %v3739 = vadd.f32 %v3312, %v3641
      %v3740 = vadd.f32 %v3313, %v3646
      %v3741 = vadd.f32 %v3314, %v3651
      %v3742 = vadd.f32 %v3315, %v3656
      %v3743 = vadd.f32 %v3316, %v3661
      %v3744 = vadd.f32 %v3317, %v3666
      %v3745 = vadd.f32 %v3318, %v3671
      %v3746 = vadd.f32 %v3319, %v3676
      %v3747 = vadd.f32 %v3320, %v3681
      %v3748 = vadd.f32 %v3321, %v3686
      %v3749 = vadd.f32 %v3322, %v3691
      %v3750 = vadd.f32 %v3323, %v3696
      %v3751 = vadd.f32 %v3324, %v3701
      %v3752 = vadd.f32 %v3325, %v3706
      %v3753 = vadd.f32 %v3326, %v3711
      %v3754 = vadd.f32 %v3327, %v3716
      %v3755 = vld [vmem:[#allocation2 + $0x24] sm:$0xff]
      %v3756 = vld [vmem:[#allocation2 + $0x2c] sm:$0xff]
      %v3757 = vld [vmem:[#allocation2 + $0x34] sm:$0xff]
      %v3758 = vld [vmem:[#allocation2 + $0x3c] sm:$0xff]
      %v3759 = vld [vmem:[#allocation2 + $0x44] sm:$0xff]
      %v3760 = vld [vmem:[#allocation2 + $0x4c] sm:$0xff]
      %v3761 = vld [vmem:[#allocation2 + $0x54] sm:$0xff]
      %v3762 = vld [vmem:[#allocation2 + $0x5c] sm:$0xff]
      %v3763 = vld [vmem:[#allocation2 + $0x64] sm:$0xff]
      %v3764 = vld [vmem:[#allocation2 + $0x6c] sm:$0xff]
      %v3765 = vld [vmem:[#allocation2 + $0x74] sm:$0xff]
      %v3766 = vld [vmem:[#allocation2 + $0x7c] sm:$0xff]
      %v3767 = vld [vmem:[#allocation2 + $0x84] sm:$0xff]
      %v3768 = vld [vmem:[#allocation2 + $0x8c] sm:$0xff]
      %v3769 = vld [vmem:[#allocation2 + $0x94] sm:$0xff]
      %v3770 = vld [vmem:[#allocation2 + $0x9c] sm:$0xff]
      %v3771 = vld [vmem:[#allocation2 + $0xa4] sm:$0xff]
      %v3772 = vld [vmem:[#allocation2 + $0xac] sm:$0xff]
      %v3773 = vld [vmem:[#allocation2 + $0xb4] sm:$0xff]
      %v3774 = vld [vmem:[#allocation2 + $0xbc] sm:$0xff]
      %v3775 = vld [vmem:[#allocation2 + $0xc4] sm:$0xff]
      %v3776 = vld [vmem:[#allocation2 + $0xcc] sm:$0xff]
      %v3777 = vld [vmem:[#allocation2 + $0xd4] sm:$0xff]
      %v3778 = vld [vmem:[#allocation2 + $0xdc] sm:$0xff]
      %v3779 = vld [vmem:[#allocation2 + $0xe4] sm:$0xff]
      %v3780 = vld [vmem:[#allocation2 + $0xec] sm:$0xff]
      %v3781 = vld [vmem:[#allocation2 + $0xf4] sm:$0xff]
      %v3782 = vld [vmem:[#allocation2 + $0xfc] sm:$0xff]
      %v3783 = vld [vmem:[#allocation2 + $0x104] sm:$0xff]
      %v3784 = vld [vmem:[#allocation2 + $0x10c] sm:$0xff]
      %v3785 = vld [vmem:[#allocation2 + $0x114] sm:$0xff]
      %v3786 = vld [vmem:[#allocation2 + $0x11c] sm:$0xff]
      %v3787 = vld [vmem:[#allocation2 + $0x124] sm:$0xff]
      %v3788 = vld [vmem:[#allocation2 + $0x12c] sm:$0xff]
      %v3789 = vld [vmem:[#allocation2 + $0x134] sm:$0xff]
      %v3790 = vld [vmem:[#allocation2 + $0x13c] sm:$0xff]
      %s3791 = scalar_lea.vmem %s5, 48
      %v3792 = vld [vmem:[%s3791] sm:$0xff]
      %v3794 = vsel %vm376, %v3755, 0
      %v3797 = vsel %vm376, %v3756, 0
      %v3800 = vsel %vm376, %v3757, 0
      %v3803 = vsel %vm376, %v3758, 0
      %v3806 = vsel %vm376, %v3759, 0
      %v3809 = vsel %vm376, %v3760, 0
      %v3812 = vsel %vm376, %v3761, 0
      %v3815 = vsel %vm376, %v3762, 0
      %v3818 = vsel %vm376, %v3763, 0
      %v3821 = vsel %vm376, %v3764, 0
      %v3824 = vsel %vm376, %v3765, 0
      %v3827 = vsel %vm376, %v3766, 0
      %v3830 = vsel %vm376, %v3767, 0
      %v3833 = vsel %vm376, %v3768, 0
      %v3836 = vsel %vm376, %v3769, 0
      %v3839 = vsel %vm376, %v3770, 0
      %v3842 = vsel %vm376, %v3771, 0
      %v3845 = vsel %vm376, %v3772, 0
      %v3848 = vsel %vm376, %v3773, 0
      %v3851 = vsel %vm376, %v3774, 0
      %v3854 = vsel %vm376, %v3775, 0
      %v3857 = vsel %vm376, %v3776, 0
      %v3860 = vsel %vm376, %v3777, 0
      %v3863 = vsel %vm376, %v3778, 0
      %v3866 = vsel %vm376, %v3779, 0
      %v3869 = vsel %vm376, %v3780, 0
      %v3872 = vsel %vm376, %v3781, 0
      %v3875 = vsel %vm376, %v3782, 0
      %v3878 = vsel %vm376, %v3783, 0
      %v3881 = vsel %vm376, %v3784, 0
      %v3884 = vsel %vm376, %v3785, 0
      %v3887 = vsel %vm376, %v3786, 0
      %v3890 = vsel %vm376, %v3787, 0
      %v3893 = vsel %vm376, %v3788, 0
      %v3896 = vsel %vm376, %v3789, 0
      %v3899 = vsel %vm376, %v3790, 0
      %3901 = vmatprep.subr.mxu0 0.0
      %3902 = vmatpush1.msra.mxu0 %v3792
      %3903 = vmatprep.subr.mxu0 0.0
      %3904 = vmatpush1.msra.mxu0 0.0
      %3905 = vmatprep.subr.mxu0 0.0
      %3906 = vmatpush1.msra.mxu0 0.0
      %3907 = vmatprep.subr.mxu0 0.0
      %3908 = vmatpush1.msra.mxu0 0.0
      %3909 = vmatprep.subr.mxu0 0.0
      %3910 = vmatpush1.msra.mxu0 0.0
      %3911 = vmatprep.subr.mxu0 0.0
      %3912 = vmatpush1.msra.mxu0 0.0
      %3913 = vmatprep.subr.mxu0 0.0
      %3914 = vmatpush1.msra.mxu0 0.0
      %3915 = vmatprep.subr.mxu0 0.0
      %3916 = vmatpush1.msra.mxu0 0.0
      %3917 = vmatprep.subr.mxu0 0.0
      %3918 = vmatpush1.msra.mxu0 0.0
      %3919 = vmatprep.subr.mxu0 0.0
      %3920 = vmatpush1.msra.mxu0 0.0
      %3921 = vmatprep.subr.mxu0 0.0
      %3922 = vmatpush1.msra.mxu0 0.0
      %3923 = vmatprep.subr.mxu0 0.0
      %3924 = vmatpush1.msra.mxu0 0.0
      %3925 = vmatprep.subr.mxu0 0.0
      %3926 = vmatpush1.msra.mxu0 0.0
      %3927 = vmatprep.subr.mxu0 0.0
      %3928 = vmatpush1.msra.mxu0 0.0
      %3929 = vmatprep.subr.mxu0 0.0
      %3930 = vmatpush1.msra.mxu0 0.0
      %3931 = vmatprep.subr.mxu0 0.0
      %3932 = vmatpush1.msra.mxu0 0.0
      %3933 = vmatprep.subr.mxu0 0.0
      %3934 = vmatpush1.msra.mxu0 0.0
      %3935 = vmatprep.subr.mxu0 0.0
      %3936 = vmatpush1.msra.mxu0 0.0
      %3937 = vmatprep.subr.mxu0 0.0
      %3938 = vmatpush1.msra.mxu0 0.0
      %3939 = vmatprep.subr.mxu0 0.0
      %3940 = vmatpush1.msra.mxu0 0.0
      %3941 = vmatprep.subr.mxu0 0.0
      %3942 = vmatpush1.msra.mxu0 0.0
      %3943 = vmatprep.subr.mxu0 0.0
      %3944 = vmatpush1.msra.mxu0 0.0
      %3945 = vmatprep.subr.mxu0 0.0
      %3946 = vmatpush1.msra.mxu0 0.0
      %3947 = vmatprep.subr.mxu0 0.0
      %3948 = vmatpush1.msra.mxu0 0.0
      %3949 = vmatprep.subr.mxu0 0.0
      %3950 = vmatpush1.msra.mxu0 0.0
      %3951 = vmatprep.subr.mxu0 0.0
      %3952 = vmatpush1.msra.mxu0 0.0
      %3953 = vmatprep.subr.mxu0 0.0
      %3954 = vmatpush1.msra.mxu0 0.0
      %3955 = vmatprep.subr.mxu0 0.0
      %3956 = vmatpush1.msra.mxu0 0.0
      %3957 = vmatprep.subr.mxu0 0.0
      %3958 = vmatpush1.msra.mxu0 0.0
      %3959 = vmatprep.subr.mxu0 0.0
      %3960 = vmatpush1.msra.mxu0 0.0
      %3961 = vmatprep.subr.mxu0 0.0
      %3962 = vmatpush1.msra.mxu0 0.0
      %3963 = vmatprep.subr.mxu0 0.0
      %3964 = vmatpush1.msra.mxu0 0.0
      %3965 = vmatprep.mubr.f32.mxu0 0.0
      %3966 = vmatmul.mubr.f32.gmra.mrb[0].mxu0 %v3794
      %v3967 = vpop.f32.mrb[0].mxu0
      %v3968 = vadd.f32 0.0, %v3967
      %v3969 = vpop.f32.mrb[0].mxu0
      %3970 = vmatprep.mubr.f32.mxu0 0.0
      %3971 = vmatmul.mubr.f32.gmra.mrb[0].mxu0 %v3797
      %v3972 = vpop.f32.mrb[0].mxu0
      %v3973 = vadd.f32 0.0, %v3972
      %v3974 = vpop.f32.mrb[0].mxu0
      %3975 = vmatprep.mubr.f32.mxu0 0.0
      %3976 = vmatmul.mubr.f32.gmra.mrb[0].mxu0 %v3800
      %v3977 = vpop.f32.mrb[0].mxu0
      %v3978 = vadd.f32 0.0, %v3977
      %v3979 = vpop.f32.mrb[0].mxu0
      %3980 = vmatprep.mubr.f32.mxu0 0.0
      %3981 = vmatmul.mubr.f32.gmra.mrb[0].mxu0 %v3803
      %v3982 = vpop.f32.mrb[0].mxu0
      %v3983 = vadd.f32 0.0, %v3982
      %v3984 = vpop.f32.mrb[0].mxu0
      %3985 = vmatprep.mubr.f32.mxu0 0.0
      %3986 = vmatmul.mubr.f32.gmra.mrb[0].mxu0 %v3806
      %v3987 = vpop.f32.mrb[0].mxu0
      %v3988 = vadd.f32 0.0, %v3987
      %v3989 = vpop.f32.mrb[0].mxu0
      %3990 = vmatprep.mubr.f32.mxu0 0.0
      %3991 = vmatmul.mubr.f32.gmra.mrb[0].mxu0 %v3809
      %v3992 = vpop.f32.mrb[0].mxu0
      %v3993 = vadd.f32 0.0, %v3992
      %v3994 = vpop.f32.mrb[0].mxu0
      %3995 = vmatprep.mubr.f32.mxu0 0.0
      %3996 = vmatmul.mubr.f32.gmra.mrb[0].mxu0 %v3812
      %v3997 = vpop.f32.mrb[0].mxu0
      %v3998 = vadd.f32 0.0, %v3997
      %v3999 = vpop.f32.mrb[0].mxu0
      %4000 = vmatprep.mubr.f32.mxu0 0.0
      %4001 = vmatmul.mubr.f32.gmra.mrb[0].mxu0 %v3815
      %v4002 = vpop.f32.mrb[0].mxu0
      %v4003 = vadd.f32 0.0, %v4002
      %v4004 = vpop.f32.mrb[0].mxu0
      %4005 = vmatprep.mubr.f32.mxu0 0.0
      %4006 = vmatmul.mubr.f32.gmra.mrb[0].mxu0 %v3818
      %v4007 = vpop.f32.mrb[0].mxu0
      %v4008 = vadd.f32 0.0, %v4007
      %v4009 = vpop.f32.mrb[0].mxu0
      %4010 = vmatprep.mubr.f32.mxu0 0.0
      %4011 = vmatmul.mubr.f32.gmra.mrb[0].mxu0 %v3821
      %v4012 = vpop.f32.mrb[0].mxu0
      %v4013 = vadd.f32 0.0, %v4012
      %v4014 = vpop.f32.mrb[0].mxu0
      %4015 = vmatprep.mubr.f32.mxu0 0.0
      %4016 = vmatmul.mubr.f32.gmra.mrb[0].mxu0 %v3824
      %v4017 = vpop.f32.mrb[0].mxu0
      %v4018 = vadd.f32 0.0, %v4017
      %v4019 = vpop.f32.mrb[0].mxu0
      %4020 = vmatprep.mubr.f32.mxu0 0.0
      %4021 = vmatmul.mubr.f32.gmra.mrb[0].mxu0 %v3827
      %v4022 = vpop.f32.mrb[0].mxu0
      %v4023 = vadd.f32 0.0, %v4022
      %v4024 = vpop.f32.mrb[0].mxu0
      %4025 = vmatprep.mubr.f32.mxu0 0.0
      %4026 = vmatmul.mubr.f32.gmra.mrb[0].mxu0 %v3830
      %v4027 = vpop.f32.mrb[0].mxu0
      %v4028 = vadd.f32 0.0, %v4027
      %v4029 = vpop.f32.mrb[0].mxu0
      %4030 = vmatprep.mubr.f32.mxu0 0.0
      %4031 = vmatmul.mubr.f32.gmra.mrb[0].mxu0 %v3833
      %v4032 = vpop.f32.mrb[0].mxu0
      %v4033 = vadd.f32 0.0, %v4032
      %v4034 = vpop.f32.mrb[0].mxu0
      %4035 = vmatprep.mubr.f32.mxu0 0.0
      %4036 = vmatmul.mubr.f32.gmra.mrb[0].mxu0 %v3836
      %v4037 = vpop.f32.mrb[0].mxu0
      %v4038 = vadd.f32 0.0, %v4037
      %v4039 = vpop.f32.mrb[0].mxu0
      %4040 = vmatprep.mubr.f32.mxu0 0.0
      %4041 = vmatmul.mubr.f32.gmra.mrb[0].mxu0 %v3839
      %v4042 = vpop.f32.mrb[0].mxu0
      %v4043 = vadd.f32 0.0, %v4042
      %v4044 = vpop.f32.mrb[0].mxu0
      %4045 = vmatprep.mubr.f32.mxu0 0.0
      %4046 = vmatmul.mubr.f32.gmra.mrb[0].mxu0 %v3842
      %v4047 = vpop.f32.mrb[0].mxu0
      %v4048 = vadd.f32 0.0, %v4047
      %v4049 = vpop.f32.mrb[0].mxu0
      %4050 = vmatprep.mubr.f32.mxu0 0.0
      %4051 = vmatmul.mubr.f32.gmra.mrb[0].mxu0 %v3845
      %v4052 = vpop.f32.mrb[0].mxu0
      %v4053 = vadd.f32 0.0, %v4052
      %v4054 = vpop.f32.mrb[0].mxu0
      %4055 = vmatprep.mubr.f32.mxu0 0.0
      %4056 = vmatmul.mubr.f32.gmra.mrb[0].mxu0 %v3848
      %v4057 = vpop.f32.mrb[0].mxu0
      %v4058 = vadd.f32 0.0, %v4057
      %v4059 = vpop.f32.mrb[0].mxu0
      %4060 = vmatprep.mubr.f32.mxu0 0.0
      %4061 = vmatmul.mubr.f32.gmra.mrb[0].mxu0 %v3851
      %v4062 = vpop.f32.mrb[0].mxu0
      %v4063 = vadd.f32 0.0, %v4062
      %v4064 = vpop.f32.mrb[0].mxu0
      %4065 = vmatprep.mubr.f32.mxu0 0.0
      %4066 = vmatmul.mubr.f32.gmra.mrb[0].mxu0 %v3854
      %v4067 = vpop.f32.mrb[0].mxu0
      %v4068 = vadd.f32 0.0, %v4067
      %v4069 = vpop.f32.mrb[0].mxu0
      %4070 = vmatprep.mubr.f32.mxu0 0.0
      %4071 = vmatmul.mubr.f32.gmra.mrb[0].mxu0 %v3857
      %v4072 = vpop.f32.mrb[0].mxu0
      %v4073 = vadd.f32 0.0, %v4072
      %v4074 = vpop.f32.mrb[0].mxu0
      %4075 = vmatprep.mubr.f32.mxu0 0.0
      %4076 = vmatmul.mubr.f32.gmra.mrb[0].mxu0 %v3860
      %v4077 = vpop.f32.mrb[0].mxu0
      %v4078 = vadd.f32 0.0, %v4077
      %v4079 = vpop.f32.mrb[0].mxu0
      %4080 = vmatprep.mubr.f32.mxu0 0.0
      %4081 = vmatmul.mubr.f32.gmra.mrb[0].mxu0 %v3863
      %v4082 = vpop.f32.mrb[0].mxu0
      %v4083 = vadd.f32 0.0, %v4082
      %v4084 = vpop.f32.mrb[0].mxu0
      %4085 = vmatprep.mubr.f32.mxu0 0.0
      %4086 = vmatmul.mubr.f32.gmra.mrb[0].mxu0 %v3866
      %v4087 = vpop.f32.mrb[0].mxu0
      %v4088 = vadd.f32 0.0, %v4087
      %v4089 = vpop.f32.mrb[0].mxu0
      %4090 = vmatprep.mubr.f32.mxu0 0.0
      %4091 = vmatmul.mubr.f32.gmra.mrb[0].mxu0 %v3869
      %v4092 = vpop.f32.mrb[0].mxu0
      %v4093 = vadd.f32 0.0, %v4092
      %v4094 = vpop.f32.mrb[0].mxu0
      %4095 = vmatprep.mubr.f32.mxu0 0.0
      %4096 = vmatmul.mubr.f32.gmra.mrb[0].mxu0 %v3872
      %v4097 = vpop.f32.mrb[0].mxu0
      %v4098 = vadd.f32 0.0, %v4097
      %v4099 = vpop.f32.mrb[0].mxu0
      %4100 = vmatprep.mubr.f32.mxu0 0.0
      %4101 = vmatmul.mubr.f32.gmra.mrb[0].mxu0 %v3875
      %v4102 = vpop.f32.mrb[0].mxu0
      %v4103 = vadd.f32 0.0, %v4102
      %v4104 = vpop.f32.mrb[0].mxu0
      %4105 = vmatprep.mubr.f32.mxu0 0.0
      %4106 = vmatmul.mubr.f32.gmra.mrb[0].mxu0 %v3878
      %v4107 = vpop.f32.mrb[0].mxu0
      %v4108 = vadd.f32 0.0, %v4107
      %v4109 = vpop.f32.mrb[0].mxu0
      %4110 = vmatprep.mubr.f32.mxu0 0.0
      %4111 = vmatmul.mubr.f32.gmra.mrb[0].mxu0 %v3881
      %v4112 = vpop.f32.mrb[0].mxu0
      %v4113 = vadd.f32 0.0, %v4112
      %v4114 = vpop.f32.mrb[0].mxu0
      %4115 = vmatprep.mubr.f32.mxu0 0.0
      %4116 = vmatmul.mubr.f32.gmra.mrb[0].mxu0 %v3884
      %v4117 = vpop.f32.mrb[0].mxu0
      %v4118 = vadd.f32 0.0, %v4117
      %v4119 = vpop.f32.mrb[0].mxu0
      %4120 = vmatprep.mubr.f32.mxu0 0.0
      %4121 = vmatmul.mubr.f32.gmra.mrb[0].mxu0 %v3887
      %v4122 = vpop.f32.mrb[0].mxu0
      %v4123 = vadd.f32 0.0, %v4122
      %v4124 = vpop.f32.mrb[0].mxu0
      %4125 = vmatprep.mubr.f32.mxu0 0.0
      %4126 = vmatmul.mubr.f32.gmra.mrb[0].mxu0 %v3890
      %v4127 = vpop.f32.mrb[0].mxu0
      %v4128 = vadd.f32 0.0, %v4127
      %v4129 = vpop.f32.mrb[0].mxu0
      %4130 = vmatprep.mubr.f32.mxu0 0.0
      %4131 = vmatmul.mubr.f32.gmra.mrb[0].mxu0 %v3893
      %v4132 = vpop.f32.mrb[0].mxu0
      %v4133 = vadd.f32 0.0, %v4132
      %v4134 = vpop.f32.mrb[0].mxu0
      %4135 = vmatprep.mubr.f32.mxu0 0.0
      %4136 = vmatmul.mubr.f32.gmra.mrb[0].mxu0 %v3896
      %v4137 = vpop.f32.mrb[0].mxu0
      %v4138 = vadd.f32 0.0, %v4137
      %v4139 = vpop.f32.mrb[0].mxu0
      %4140 = vmatprep.mubr.f32.mxu0 0.0
      %4141 = vmatmul.mubr.f32.gmra.mrb[0].mxu0 %v3899
      %v4142 = vpop.f32.mrb[0].mxu0
      %v4143 = vadd.f32 0.0, %v4142
      %v4144 = vpop.f32.mrb[0].mxu0
      %4145 = vdwg.mxu0
      %v4146 = vadd.f32 %v3719, %v3968
      %v4147 = vadd.f32 %v3720, %v3973
      %v4148 = vadd.f32 %v3721, %v3978
      %v4149 = vadd.f32 %v3722, %v3983
      %v4150 = vadd.f32 %v3723, %v3988
      %v4151 = vadd.f32 %v3724, %v3993
      %v4152 = vadd.f32 %v3725, %v3998
      %v4153 = vadd.f32 %v3726, %v4003
      %v4154 = vadd.f32 %v3727, %v4008
      %v4155 = vadd.f32 %v3728, %v4013
      %v4156 = vadd.f32 %v3729, %v4018
      %v4157 = vadd.f32 %v3730, %v4023
      %v4158 = vadd.f32 %v3731, %v4028
      %v4159 = vadd.f32 %v3732, %v4033
      %v4160 = vadd.f32 %v3733, %v4038
      %v4161 = vadd.f32 %v3734, %v4043
      %v4162 = vadd.f32 %v3735, %v4048
      %v4163 = vadd.f32 %v3736, %v4053
      %v4164 = vadd.f32 %v3737, %v4058
      %v4165 = vadd.f32 %v3738, %v4063
      %v4166 = vadd.f32 %v3739, %v4068
      %v4167 = vadd.f32 %v3740, %v4073
      %v4168 = vadd.f32 %v3741, %v4078
      %v4169 = vadd.f32 %v3742, %v4083
      %v4170 = vadd.f32 %v3743, %v4088
      %v4171 = vadd.f32 %v3744, %v4093
      %v4172 = vadd.f32 %v3745, %v4098
      %v4173 = vadd.f32 %v3746, %v4103
      %v4174 = vadd.f32 %v3747, %v4108
      %v4175 = vadd.f32 %v3748, %v4113
      %v4176 = vadd.f32 %v3749, %v4118
      %v4177 = vadd.f32 %v3750, %v4123
      %v4178 = vadd.f32 %v3751, %v4128
      %v4179 = vadd.f32 %v3752, %v4133
      %v4180 = vadd.f32 %v3753, %v4138
      %v4181 = vadd.f32 %v3754, %v4143
      %v4182 = vld [vmem:[#allocation2 + $0x25] sm:$0xff]
      %v4183 = vld [vmem:[#allocation2 + $0x2d] sm:$0xff]
      %v4184 = vld [vmem:[#allocation2 + $0x35] sm:$0xff]
      %v4185 = vld [vmem:[#allocation2 + $0x3d] sm:$0xff]
      %v4186 = vld [vmem:[#allocation2 + $0x45] sm:$0xff]
      %v4187 = vld [vmem:[#allocation2 + $0x4d] sm:$0xff]
      %v4188 = vld [vmem:[#allocation2 + $0x55] sm:$0xff]
      %v4189 = vld [vmem:[#allocation2 + $0x5d] sm:$0xff]
      %v4190 = vld [vmem:[#allocation2 + $0x65] sm:$0xff]
      %v4191 = vld [vmem:[#allocation2 + $0x6d] sm:$0xff]
      %v4192 = vld [vmem:[#allocation2 + $0x75] sm:$0xff]
      %v4193 = vld [vmem:[#allocation2 + $0x7d] sm:$0xff]
      %v4194 = vld [vmem:[#allocation2 + $0x85] sm:$0xff]
      %v4195 = vld [vmem:[#allocation2 + $0x8d] sm:$0xff]
      %v4196 = vld [vmem:[#allocation2 + $0x95] sm:$0xff]
      %v4197 = vld [vmem:[#allocation2 + $0x9d] sm:$0xff]
      %v4198 = vld [vmem:[#allocation2 + $0xa5] sm:$0xff]
      %v4199 = vld [vmem:[#allocation2 + $0xad] sm:$0xff]
      %v4200 = vld [vmem:[#allocation2 + $0xb5] sm:$0xff]
      %v4201 = vld [vmem:[#allocation2 + $0xbd] sm:$0xff]
      %v4202 = vld [vmem:[#allocation2 + $0xc5] sm:$0xff]
      %v4203 = vld [vmem:[#allocation2 + $0xcd] sm:$0xff]
      %v4204 = vld [vmem:[#allocation2 + $0xd5] sm:$0xff]
      %v4205 = vld [vmem:[#allocation2 + $0xdd] sm:$0xff]
      %v4206 = vld [vmem:[#allocation2 + $0xe5] sm:$0xff]
      %v4207 = vld [vmem:[#allocation2 + $0xed] sm:$0xff]
      %v4208 = vld [vmem:[#allocation2 + $0xf5] sm:$0xff]
      %v4209 = vld [vmem:[#allocation2 + $0xfd] sm:$0xff]
      %v4210 = vld [vmem:[#allocation2 + $0x105] sm:$0xff]
      %v4211 = vld [vmem:[#allocation2 + $0x10d] sm:$0xff]
      %v4212 = vld [vmem:[#allocation2 + $0x115] sm:$0xff]
      %v4213 = vld [vmem:[#allocation2 + $0x11d] sm:$0xff]
      %v4214 = vld [vmem:[#allocation2 + $0x125] sm:$0xff]
      %v4215 = vld [vmem:[#allocation2 + $0x12d] sm:$0xff]
      %v4216 = vld [vmem:[#allocation2 + $0x135] sm:$0xff]
      %v4217 = vld [vmem:[#allocation2 + $0x13d] sm:$0xff]
      %s4218 = scalar_lea.vmem %s5, 56
      %v4219 = vld [vmem:[%s4218] sm:$0xff]
      %v4221 = vsel %vm376, %v4182, 0
      %v4224 = vsel %vm376, %v4183, 0
      %v4227 = vsel %vm376, %v4184, 0
      %v4230 = vsel %vm376, %v4185, 0
      %v4233 = vsel %vm376, %v4186, 0
      %v4236 = vsel %vm376, %v4187, 0
      %v4239 = vsel %vm376, %v4188, 0
      %v4242 = vsel %vm376, %v4189, 0
      %v4245 = vsel %vm376, %v4190, 0
      %v4248 = vsel %vm376, %v4191, 0
      %v4251 = vsel %vm376, %v4192, 0
      %v4254 = vsel %vm376, %v4193, 0
      %v4257 = vsel %vm376, %v4194, 0
      %v4260 = vsel %vm376, %v4195, 0
      %v4263 = vsel %vm376, %v4196, 0
      %v4266 = vsel %vm376, %v4197, 0
      %v4269 = vsel %vm376, %v4198, 0
      %v4272 = vsel %vm376, %v4199, 0
      %v4275 = vsel %vm376, %v4200, 0
      %v4278 = vsel %vm376, %v4201, 0
      %v4281 = vsel %vm376, %v4202, 0
      %v4284 = vsel %vm376, %v4203, 0
      %v4287 = vsel %vm376, %v4204, 0
      %v4290 = vsel %vm376, %v4205, 0
      %v4293 = vsel %vm376, %v4206, 0
      %v4296 = vsel %vm376, %v4207, 0
      %v4299 = vsel %vm376, %v4208, 0
      %v4302 = vsel %vm376, %v4209, 0
      %v4305 = vsel %vm376, %v4210, 0
      %v4308 = vsel %vm376, %v4211, 0
      %v4311 = vsel %vm376, %v4212, 0
      %v4314 = vsel %vm376, %v4213, 0
      %v4317 = vsel %vm376, %v4214, 0
      %v4320 = vsel %vm376, %v4215, 0
      %v4323 = vsel %vm376, %v4216, 0
      %v4326 = vsel %vm376, %v4217, 0
      %4328 = vmatprep.subr.mxu0 0.0
      %4329 = vmatpush1.msra.mxu0 %v4219
      %4330 = vmatprep.subr.mxu0 0.0
      %4331 = vmatpush1.msra.mxu0 0.0
      %4332 = vmatprep.subr.mxu0 0.0
      %4333 = vmatpush1.msra.mxu0 0.0
      %4334 = vmatprep.subr.mxu0 0.0
      %4335 = vmatpush1.msra.mxu0 0.0
      %4336 = vmatprep.subr.mxu0 0.0
      %4337 = vmatpush1.msra.mxu0 0.0
      %4338 = vmatprep.subr.mxu0 0.0
      %4339 = vmatpush1.msra.mxu0 0.0
      %4340 = vmatprep.subr.mxu0 0.0
      %4341 = vmatpush1.msra.mxu0 0.0
      %4342 = vmatprep.subr.mxu0 0.0
      %4343 = vmatpush1.msra.mxu0 0.0
      %4344 = vmatprep.subr.mxu0 0.0
      %4345 = vmatpush1.msra.mxu0 0.0
      %4346 = vmatprep.subr.mxu0 0.0
      %4347 = vmatpush1.msra.mxu0 0.0
      %4348 = vmatprep.subr.mxu0 0.0
      %4349 = vmatpush1.msra.mxu0 0.0
      %4350 = vmatprep.subr.mxu0 0.0
      %4351 = vmatpush1.msra.mxu0 0.0
      %4352 = vmatprep.subr.mxu0 0.0
      %4353 = vmatpush1.msra.mxu0 0.0
      %4354 = vmatprep.subr.mxu0 0.0
      %4355 = vmatpush1.msra.mxu0 0.0
      %4356 = vmatprep.subr.mxu0 0.0
      %4357 = vmatpush1.msra.mxu0 0.0
      %4358 = vmatprep.subr.mxu0 0.0
      %4359 = vmatpush1.msra.mxu0 0.0
      %4360 = vmatprep.subr.mxu0 0.0
      %4361 = vmatpush1.msra.mxu0 0.0
      %4362 = vmatprep.subr.mxu0 0.0
      %4363 = vmatpush1.msra.mxu0 0.0
      %4364 = vmatprep.subr.mxu0 0.0
      %4365 = vmatpush1.msra.mxu0 0.0
      %4366 = vmatprep.subr.mxu0 0.0
      %4367 = vmatpush1.msra.mxu0 0.0
      %4368 = vmatprep.subr.mxu0 0.0
      %4369 = vmatpush1.msra.mxu0 0.0
      %4370 = vmatprep.subr.mxu0 0.0
      %4371 = vmatpush1.msra.mxu0 0.0
      %4372 = vmatprep.subr.mxu0 0.0
      %4373 = vmatpush1.msra.mxu0 0.0
      %4374 = vmatprep.subr.mxu0 0.0
      %4375 = vmatpush1.msra.mxu0 0.0
      %4376 = vmatprep.subr.mxu0 0.0
      %4377 = vmatpush1.msra.mxu0 0.0
      %4378 = vmatprep.subr.mxu0 0.0
      %4379 = vmatpush1.msra.mxu0 0.0
      %4380 = vmatprep.subr.mxu0 0.0
      %4381 = vmatpush1.msra.mxu0 0.0
      %4382 = vmatprep.subr.mxu0 0.0
      %4383 = vmatpush1.msra.mxu0 0.0
      %4384 = vmatprep.subr.mxu0 0.0
      %4385 = vmatpush1.msra.mxu0 0.0
      %4386 = vmatprep.subr.mxu0 0.0
      %4387 = vmatpush1.msra.mxu0 0.0
      %4388 = vmatprep.subr.mxu0 0.0
      %4389 = vmatpush1.msra.mxu0 0.0
      %4390 = vmatprep.subr.mxu0 0.0
      %4391 = vmatpush1.msra.mxu0 0.0
      %4392 = vmatprep.mubr.f32.mxu0 0.0
      %4393 = vmatmul.mubr.f32.gmra.mrb[0].mxu0 %v4221
      %v4394 = vpop.f32.mrb[0].mxu0
      %v4395 = vadd.f32 0.0, %v4394
      %v4396 = vpop.f32.mrb[0].mxu0
      %4397 = vmatprep.mubr.f32.mxu0 0.0
      %4398 = vmatmul.mubr.f32.gmra.mrb[0].mxu0 %v4224
      %v4399 = vpop.f32.mrb[0].mxu0
      %v4400 = vadd.f32 0.0, %v4399
      %v4401 = vpop.f32.mrb[0].mxu0
      %4402 = vmatprep.mubr.f32.mxu0 0.0
      %4403 = vmatmul.mubr.f32.gmra.mrb[0].mxu0 %v4227
      %v4404 = vpop.f32.mrb[0].mxu0
      %v4405 = vadd.f32 0.0, %v4404
      %v4406 = vpop.f32.mrb[0].mxu0
      %4407 = vmatprep.mubr.f32.mxu0 0.0
      %4408 = vmatmul.mubr.f32.gmra.mrb[0].mxu0 %v4230
      %v4409 = vpop.f32.mrb[0].mxu0
      %v4410 = vadd.f32 0.0, %v4409
      %v4411 = vpop.f32.mrb[0].mxu0
      %4412 = vmatprep.mubr.f32.mxu0 0.0
      %4413 = vmatmul.mubr.f32.gmra.mrb[0].mxu0 %v4233
      %v4414 = vpop.f32.mrb[0].mxu0
      %v4415 = vadd.f32 0.0, %v4414
      %v4416 = vpop.f32.mrb[0].mxu0
      %4417 = vmatprep.mubr.f32.mxu0 0.0
      %4418 = vmatmul.mubr.f32.gmra.mrb[0].mxu0 %v4236
      %v4419 = vpop.f32.mrb[0].mxu0
      %v4420 = vadd.f32 0.0, %v4419
      %v4421 = vpop.f32.mrb[0].mxu0
      %4422 = vmatprep.mubr.f32.mxu0 0.0
      %4423 = vmatmul.mubr.f32.gmra.mrb[0].mxu0 %v4239
      %v4424 = vpop.f32.mrb[0].mxu0
      %v4425 = vadd.f32 0.0, %v4424
      %v4426 = vpop.f32.mrb[0].mxu0
      %4427 = vmatprep.mubr.f32.mxu0 0.0
      %4428 = vmatmul.mubr.f32.gmra.mrb[0].mxu0 %v4242
      %v4429 = vpop.f32.mrb[0].mxu0
      %v4430 = vadd.f32 0.0, %v4429
      %v4431 = vpop.f32.mrb[0].mxu0
      %4432 = vmatprep.mubr.f32.mxu0 0.0
      %4433 = vmatmul.mubr.f32.gmra.mrb[0].mxu0 %v4245
      %v4434 = vpop.f32.mrb[0].mxu0
      %v4435 = vadd.f32 0.0, %v4434
      %v4436 = vpop.f32.mrb[0].mxu0
      %4437 = vmatprep.mubr.f32.mxu0 0.0
      %4438 = vmatmul.mubr.f32.gmra.mrb[0].mxu0 %v4248
      %v4439 = vpop.f32.mrb[0].mxu0
      %v4440 = vadd.f32 0.0, %v4439
      %v4441 = vpop.f32.mrb[0].mxu0
      %4442 = vmatprep.mubr.f32.mxu0 0.0
      %4443 = vmatmul.mubr.f32.gmra.mrb[0].mxu0 %v4251
      %v4444 = vpop.f32.mrb[0].mxu0
      %v4445 = vadd.f32 0.0, %v4444
      %v4446 = vpop.f32.mrb[0].mxu0
      %4447 = vmatprep.mubr.f32.mxu0 0.0
      %4448 = vmatmul.mubr.f32.gmra.mrb[0].mxu0 %v4254
      %v4449 = vpop.f32.mrb[0].mxu0
      %v4450 = vadd.f32 0.0, %v4449
      %v4451 = vpop.f32.mrb[0].mxu0
      %4452 = vmatprep.mubr.f32.mxu0 0.0
      %4453 = vmatmul.mubr.f32.gmra.mrb[0].mxu0 %v4257
      %v4454 = vpop.f32.mrb[0].mxu0
      %v4455 = vadd.f32 0.0, %v4454
      %v4456 = vpop.f32.mrb[0].mxu0
      %4457 = vmatprep.mubr.f32.mxu0 0.0
      %4458 = vmatmul.mubr.f32.gmra.mrb[0].mxu0 %v4260
      %v4459 = vpop.f32.mrb[0].mxu0
      %v4460 = vadd.f32 0.0, %v4459
      %v4461 = vpop.f32.mrb[0].mxu0
      %4462 = vmatprep.mubr.f32.mxu0 0.0
      %4463 = vmatmul.mubr.f32.gmra.mrb[0].mxu0 %v4263
      %v4464 = vpop.f32.mrb[0].mxu0
      %v4465 = vadd.f32 0.0, %v4464
      %v4466 = vpop.f32.mrb[0].mxu0
      %4467 = vmatprep.mubr.f32.mxu0 0.0
      %4468 = vmatmul.mubr.f32.gmra.mrb[0].mxu0 %v4266
      %v4469 = vpop.f32.mrb[0].mxu0
      %v4470 = vadd.f32 0.0, %v4469
      %v4471 = vpop.f32.mrb[0].mxu0
      %4472 = vmatprep.mubr.f32.mxu0 0.0
      %4473 = vmatmul.mubr.f32.gmra.mrb[0].mxu0 %v4269
      %v4474 = vpop.f32.mrb[0].mxu0
      %v4475 = vadd.f32 0.0, %v4474
      %v4476 = vpop.f32.mrb[0].mxu0
      %4477 = vmatprep.mubr.f32.mxu0 0.0
      %4478 = vmatmul.mubr.f32.gmra.mrb[0].mxu0 %v4272
      %v4479 = vpop.f32.mrb[0].mxu0
      %v4480 = vadd.f32 0.0, %v4479
      %v4481 = vpop.f32.mrb[0].mxu0
      %4482 = vmatprep.mubr.f32.mxu0 0.0
      %4483 = vmatmul.mubr.f32.gmra.mrb[0].mxu0 %v4275
      %v4484 = vpop.f32.mrb[0].mxu0
      %v4485 = vadd.f32 0.0, %v4484
      %v4486 = vpop.f32.mrb[0].mxu0
      %4487 = vmatprep.mubr.f32.mxu0 0.0
      %4488 = vmatmul.mubr.f32.gmra.mrb[0].mxu0 %v4278
      %v4489 = vpop.f32.mrb[0].mxu0
      %v4490 = vadd.f32 0.0, %v4489
      %v4491 = vpop.f32.mrb[0].mxu0
      %4492 = vmatprep.mubr.f32.mxu0 0.0
      %4493 = vmatmul.mubr.f32.gmra.mrb[0].mxu0 %v4281
      %v4494 = vpop.f32.mrb[0].mxu0
      %v4495 = vadd.f32 0.0, %v4494
      %v4496 = vpop.f32.mrb[0].mxu0
      %4497 = vmatprep.mubr.f32.mxu0 0.0
      %4498 = vmatmul.mubr.f32.gmra.mrb[0].mxu0 %v4284
      %v4499 = vpop.f32.mrb[0].mxu0
      %v4500 = vadd.f32 0.0, %v4499
      %v4501 = vpop.f32.mrb[0].mxu0
      %4502 = vmatprep.mubr.f32.mxu0 0.0
      %4503 = vmatmul.mubr.f32.gmra.mrb[0].mxu0 %v4287
      %v4504 = vpop.f32.mrb[0].mxu0
      %v4505 = vadd.f32 0.0, %v4504
      %v4506 = vpop.f32.mrb[0].mxu0
      %4507 = vmatprep.mubr.f32.mxu0 0.0
      %4508 = vmatmul.mubr.f32.gmra.mrb[0].mxu0 %v4290
      %v4509 = vpop.f32.mrb[0].mxu0
      %v4510 = vadd.f32 0.0, %v4509
      %v4511 = vpop.f32.mrb[0].mxu0
      %4512 = vmatprep.mubr.f32.mxu0 0.0
      %4513 = vmatmul.mubr.f32.gmra.mrb[0].mxu0 %v4293
      %v4514 = vpop.f32.mrb[0].mxu0
      %v4515 = vadd.f32 0.0, %v4514
      %v4516 = vpop.f32.mrb[0].mxu0
      %4517 = vmatprep.mubr.f32.mxu0 0.0
      %4518 = vmatmul.mubr.f32.gmra.mrb[0].mxu0 %v4296
      %v4519 = vpop.f32.mrb[0].mxu0
      %v4520 = vadd.f32 0.0, %v4519
      %v4521 = vpop.f32.mrb[0].mxu0
      %4522 = vmatprep.mubr.f32.mxu0 0.0
      %4523 = vmatmul.mubr.f32.gmra.mrb[0].mxu0 %v4299
      %v4524 = vpop.f32.mrb[0].mxu0
      %v4525 = vadd.f32 0.0, %v4524
      %v4526 = vpop.f32.mrb[0].mxu0
      %4527 = vmatprep.mubr.f32.mxu0 0.0
      %4528 = vmatmul.mubr.f32.gmra.mrb[0].mxu0 %v4302
      %v4529 = vpop.f32.mrb[0].mxu0
      %v4530 = vadd.f32 0.0, %v4529
      %v4531 = vpop.f32.mrb[0].mxu0
      %4532 = vmatprep.mubr.f32.mxu0 0.0
      %4533 = vmatmul.mubr.f32.gmra.mrb[0].mxu0 %v4305
      %v4534 = vpop.f32.mrb[0].mxu0
      %v4535 = vadd.f32 0.0, %v4534
      %v4536 = vpop.f32.mrb[0].mxu0
      %4537 = vmatprep.mubr.f32.mxu0 0.0
      %4538 = vmatmul.mubr.f32.gmra.mrb[0].mxu0 %v4308
      %v4539 = vpop.f32.mrb[0].mxu0
      %v4540 = vadd.f32 0.0, %v4539
      %v4541 = vpop.f32.mrb[0].mxu0
      %4542 = vmatprep.mubr.f32.mxu0 0.0
      %4543 = vmatmul.mubr.f32.gmra.mrb[0].mxu0 %v4311
      %v4544 = vpop.f32.mrb[0].mxu0
      %v4545 = vadd.f32 0.0, %v4544
      %v4546 = vpop.f32.mrb[0].mxu0
      %4547 = vmatprep.mubr.f32.mxu0 0.0
      %4548 = vmatmul.mubr.f32.gmra.mrb[0].mxu0 %v4314
      %v4549 = vpop.f32.mrb[0].mxu0
      %v4550 = vadd.f32 0.0, %v4549
      %v4551 = vpop.f32.mrb[0].mxu0
      %4552 = vmatprep.mubr.f32.mxu0 0.0
      %4553 = vmatmul.mubr.f32.gmra.mrb[0].mxu0 %v4317
      %v4554 = vpop.f32.mrb[0].mxu0
      %v4555 = vadd.f32 0.0, %v4554
      %v4556 = vpop.f32.mrb[0].mxu0
      %4557 = vmatprep.mubr.f32.mxu0 0.0
      %4558 = vmatmul.mubr.f32.gmra.mrb[0].mxu0 %v4320
      %v4559 = vpop.f32.mrb[0].mxu0
      %v4560 = vadd.f32 0.0, %v4559
      %v4561 = vpop.f32.mrb[0].mxu0
      %4562 = vmatprep.mubr.f32.mxu0 0.0
      %4563 = vmatmul.mubr.f32.gmra.mrb[0].mxu0 %v4323
      %v4564 = vpop.f32.mrb[0].mxu0
      %v4565 = vadd.f32 0.0, %v4564
      %v4566 = vpop.f32.mrb[0].mxu0
      %4567 = vmatprep.mubr.f32.mxu0 0.0
      %4568 = vmatmul.mubr.f32.gmra.mrb[0].mxu0 %v4326
      %v4569 = vpop.f32.mrb[0].mxu0
      %v4570 = vadd.f32 0.0, %v4569
      %v4571 = vpop.f32.mrb[0].mxu0
      %4572 = vdwg.mxu0
      %v4573 = vadd.f32 %v4146, %v4395
      %v4574 = vadd.f32 %v4147, %v4400
      %v4575 = vadd.f32 %v4148, %v4405
      %v4576 = vadd.f32 %v4149, %v4410
      %v4577 = vadd.f32 %v4150, %v4415
      %v4578 = vadd.f32 %v4151, %v4420
      %v4579 = vadd.f32 %v4152, %v4425
      %v4580 = vadd.f32 %v4153, %v4430
      %v4581 = vadd.f32 %v4154, %v4435
      %v4582 = vadd.f32 %v4155, %v4440
      %v4583 = vadd.f32 %v4156, %v4445
      %v4584 = vadd.f32 %v4157, %v4450
      %v4585 = vadd.f32 %v4158, %v4455
      %v4586 = vadd.f32 %v4159, %v4460
      %v4587 = vadd.f32 %v4160, %v4465
      %v4588 = vadd.f32 %v4161, %v4470
      %v4589 = vadd.f32 %v4162, %v4475
      %v4590 = vadd.f32 %v4163, %v4480
      %v4591 = vadd.f32 %v4164, %v4485
      %v4592 = vadd.f32 %v4165, %v4490
      %v4593 = vadd.f32 %v4166, %v4495
      %v4594 = vadd.f32 %v4167, %v4500
      %v4595 = vadd.f32 %v4168, %v4505
      %v4596 = vadd.f32 %v4169, %v4510
      %v4597 = vadd.f32 %v4170, %v4515
      %v4598 = vadd.f32 %v4171, %v4520
      %v4599 = vadd.f32 %v4172, %v4525
      %v4600 = vadd.f32 %v4173, %v4530
      %v4601 = vadd.f32 %v4174, %v4535
      %v4602 = vadd.f32 %v4175, %v4540
      %v4603 = vadd.f32 %v4176, %v4545
      %v4604 = vadd.f32 %v4177, %v4550
      %v4605 = vadd.f32 %v4178, %v4555
      %v4606 = vadd.f32 %v4179, %v4560
      %v4607 = vadd.f32 %v4180, %v4565
      %v4608 = vadd.f32 %v4181, %v4570
      %v4609 = vld [vmem:[#allocation2 + $0x26] sm:$0xff]
      %v4610 = vld [vmem:[#allocation2 + $0x2e] sm:$0xff]
      %v4611 = vld [vmem:[#allocation2 + $0x36] sm:$0xff]
      %v4612 = vld [vmem:[#allocation2 + $0x3e] sm:$0xff]
      %v4613 = vld [vmem:[#allocation2 + $0x46] sm:$0xff]
      %v4614 = vld [vmem:[#allocation2 + $0x4e] sm:$0xff]
      %v4615 = vld [vmem:[#allocation2 + $0x56] sm:$0xff]
      %v4616 = vld [vmem:[#allocation2 + $0x5e] sm:$0xff]
      %v4617 = vld [vmem:[#allocation2 + $0x66] sm:$0xff]
      %v4618 = vld [vmem:[#allocation2 + $0x6e] sm:$0xff]
      %v4619 = vld [vmem:[#allocation2 + $0x76] sm:$0xff]
      %v4620 = vld [vmem:[#allocation2 + $0x7e] sm:$0xff]
      %v4621 = vld [vmem:[#allocation2 + $0x86] sm:$0xff]
      %v4622 = vld [vmem:[#allocation2 + $0x8e] sm:$0xff]
      %v4623 = vld [vmem:[#allocation2 + $0x96] sm:$0xff]
      %v4624 = vld [vmem:[#allocation2 + $0x9e] sm:$0xff]
      %v4625 = vld [vmem:[#allocation2 + $0xa6] sm:$0xff]
      %v4626 = vld [vmem:[#allocation2 + $0xae] sm:$0xff]
      %v4627 = vld [vmem:[#allocation2 + $0xb6] sm:$0xff]
      %v4628 = vld [vmem:[#allocation2 + $0xbe] sm:$0xff]
      %v4629 = vld [vmem:[#allocation2 + $0xc6] sm:$0xff]
      %v4630 = vld [vmem:[#allocation2 + $0xce] sm:$0xff]
      %v4631 = vld [vmem:[#allocation2 + $0xd6] sm:$0xff]
      %v4632 = vld [vmem:[#allocation2 + $0xde] sm:$0xff]
      %v4633 = vld [vmem:[#allocation2 + $0xe6] sm:$0xff]
      %v4634 = vld [vmem:[#allocation2 + $0xee] sm:$0xff]
      %v4635 = vld [vmem:[#allocation2 + $0xf6] sm:$0xff]
      %v4636 = vld [vmem:[#allocation2 + $0xfe] sm:$0xff]
      %v4637 = vld [vmem:[#allocation2 + $0x106] sm:$0xff]
      %v4638 = vld [vmem:[#allocation2 + $0x10e] sm:$0xff]
      %v4639 = vld [vmem:[#allocation2 + $0x116] sm:$0xff]
      %v4640 = vld [vmem:[#allocation2 + $0x11e] sm:$0xff]
      %v4641 = vld [vmem:[#allocation2 + $0x126] sm:$0xff]
      %v4642 = vld [vmem:[#allocation2 + $0x12e] sm:$0xff]
      %v4643 = vld [vmem:[#allocation2 + $0x136] sm:$0xff]
      %v4644 = vld [vmem:[#allocation2 + $0x13e] sm:$0xff]
      %s4645 = scalar_lea.vmem %s5, 64
      %v4646 = vld [vmem:[%s4645] sm:$0xff]
      %v4648 = vsel %vm376, %v4609, 0
      %v4651 = vsel %vm376, %v4610, 0
      %v4654 = vsel %vm376, %v4611, 0
      %v4657 = vsel %vm376, %v4612, 0
      %v4660 = vsel %vm376, %v4613, 0
      %v4663 = vsel %vm376, %v4614, 0
      %v4666 = vsel %vm376, %v4615, 0
      %v4669 = vsel %vm376, %v4616, 0
      %v4672 = vsel %vm376, %v4617, 0
      %v4675 = vsel %vm376, %v4618, 0
      %v4678 = vsel %vm376, %v4619, 0
      %v4681 = vsel %vm376, %v4620, 0
      %v4684 = vsel %vm376, %v4621, 0
      %v4687 = vsel %vm376, %v4622, 0
      %v4690 = vsel %vm376, %v4623, 0
      %v4693 = vsel %vm376, %v4624, 0
      %v4696 = vsel %vm376, %v4625, 0
      %v4699 = vsel %vm376, %v4626, 0
      %v4702 = vsel %vm376, %v4627, 0
      %v4705 = vsel %vm376, %v4628, 0
      %v4708 = vsel %vm376, %v4629, 0
      %v4711 = vsel %vm376, %v4630, 0
      %v4714 = vsel %vm376, %v4631, 0
      %v4717 = vsel %vm376, %v4632, 0
      %v4720 = vsel %vm376, %v4633, 0
      %v4723 = vsel %vm376, %v4634, 0
      %v4726 = vsel %vm376, %v4635, 0
      %v4729 = vsel %vm376, %v4636, 0
      %v4732 = vsel %vm376, %v4637, 0
      %v4735 = vsel %vm376, %v4638, 0
      %v4738 = vsel %vm376, %v4639, 0
      %v4741 = vsel %vm376, %v4640, 0
      %v4744 = vsel %vm376, %v4641, 0
      %v4747 = vsel %vm376, %v4642, 0
      %v4750 = vsel %vm376, %v4643, 0
      %v4753 = vsel %vm376, %v4644, 0
      %4755 = vmatprep.subr.mxu0 0.0
      %4756 = vmatpush1.msra.mxu0 %v4646
      %4757 = vmatprep.subr.mxu0 0.0
      %4758 = vmatpush1.msra.mxu0 0.0
      %4759 = vmatprep.subr.mxu0 0.0
      %4760 = vmatpush1.msra.mxu0 0.0
      %4761 = vmatprep.subr.mxu0 0.0
      %4762 = vmatpush1.msra.mxu0 0.0
      %4763 = vmatprep.subr.mxu0 0.0
      %4764 = vmatpush1.msra.mxu0 0.0
      %4765 = vmatprep.subr.mxu0 0.0
      %4766 = vmatpush1.msra.mxu0 0.0
      %4767 = vmatprep.subr.mxu0 0.0
      %4768 = vmatpush1.msra.mxu0 0.0
      %4769 = vmatprep.subr.mxu0 0.0
      %4770 = vmatpush1.msra.mxu0 0.0
      %4771 = vmatprep.subr.mxu0 0.0
      %4772 = vmatpush1.msra.mxu0 0.0
      %4773 = vmatprep.subr.mxu0 0.0
      %4774 = vmatpush1.msra.mxu0 0.0
      %4775 = vmatprep.subr.mxu0 0.0
      %4776 = vmatpush1.msra.mxu0 0.0
      %4777 = vmatprep.subr.mxu0 0.0
      %4778 = vmatpush1.msra.mxu0 0.0
      %4779 = vmatprep.subr.mxu0 0.0
      %4780 = vmatpush1.msra.mxu0 0.0
      %4781 = vmatprep.subr.mxu0 0.0
      %4782 = vmatpush1.msra.mxu0 0.0
      %4783 = vmatprep.subr.mxu0 0.0
      %4784 = vmatpush1.msra.mxu0 0.0
      %4785 = vmatprep.subr.mxu0 0.0
      %4786 = vmatpush1.msra.mxu0 0.0
      %4787 = vmatprep.subr.mxu0 0.0
      %4788 = vmatpush1.msra.mxu0 0.0
      %4789 = vmatprep.subr.mxu0 0.0
      %4790 = vmatpush1.msra.mxu0 0.0
      %4791 = vmatprep.subr.mxu0 0.0
      %4792 = vmatpush1.msra.mxu0 0.0
      %4793 = vmatprep.subr.mxu0 0.0
      %4794 = vmatpush1.msra.mxu0 0.0
      %4795 = vmatprep.subr.mxu0 0.0
      %4796 = vmatpush1.msra.mxu0 0.0
      %4797 = vmatprep.subr.mxu0 0.0
      %4798 = vmatpush1.msra.mxu0 0.0
      %4799 = vmatprep.subr.mxu0 0.0
      %4800 = vmatpush1.msra.mxu0 0.0
      %4801 = vmatprep.subr.mxu0 0.0
      %4802 = vmatpush1.msra.mxu0 0.0
      %4803 = vmatprep.subr.mxu0 0.0
      %4804 = vmatpush1.msra.mxu0 0.0
      %4805 = vmatprep.subr.mxu0 0.0
      %4806 = vmatpush1.msra.mxu0 0.0
      %4807 = vmatprep.subr.mxu0 0.0
      %4808 = vmatpush1.msra.mxu0 0.0
      %4809 = vmatprep.subr.mxu0 0.0
      %4810 = vmatpush1.msra.mxu0 0.0
      %4811 = vmatprep.subr.mxu0 0.0
      %4812 = vmatpush1.msra.mxu0 0.0
      %4813 = vmatprep.subr.mxu0 0.0
      %4814 = vmatpush1.msra.mxu0 0.0
      %4815 = vmatprep.subr.mxu0 0.0
      %4816 = vmatpush1.msra.mxu0 0.0
      %4817 = vmatprep.subr.mxu0 0.0
      %4818 = vmatpush1.msra.mxu0 0.0
      %4819 = vmatprep.mubr.f32.mxu0 0.0
      %4820 = vmatmul.mubr.f32.gmra.mrb[0].mxu0 %v4648
      %v4821 = vpop.f32.mrb[0].mxu0
      %v4822 = vadd.f32 0.0, %v4821
      %v4823 = vpop.f32.mrb[0].mxu0
      %4824 = vmatprep.mubr.f32.mxu0 0.0
      %4825 = vmatmul.mubr.f32.gmra.mrb[0].mxu0 %v4651
      %v4826 = vpop.f32.mrb[0].mxu0
      %v4827 = vadd.f32 0.0, %v4826
      %v4828 = vpop.f32.mrb[0].mxu0
      %4829 = vmatprep.mubr.f32.mxu0 0.0
      %4830 = vmatmul.mubr.f32.gmra.mrb[0].mxu0 %v4654
      %v4831 = vpop.f32.mrb[0].mxu0
      %v4832 = vadd.f32 0.0, %v4831
      %v4833 = vpop.f32.mrb[0].mxu0
      %4834 = vmatprep.mubr.f32.mxu0 0.0
      %4835 = vmatmul.mubr.f32.gmra.mrb[0].mxu0 %v4657
      %v4836 = vpop.f32.mrb[0].mxu0
      %v4837 = vadd.f32 0.0, %v4836
      %v4838 = vpop.f32.mrb[0].mxu0
      %4839 = vmatprep.mubr.f32.mxu0 0.0
      %4840 = vmatmul.mubr.f32.gmra.mrb[0].mxu0 %v4660
      %v4841 = vpop.f32.mrb[0].mxu0
      %v4842 = vadd.f32 0.0, %v4841
      %v4843 = vpop.f32.mrb[0].mxu0
      %4844 = vmatprep.mubr.f32.mxu0 0.0
      %4845 = vmatmul.mubr.f32.gmra.mrb[0].mxu0 %v4663
      %v4846 = vpop.f32.mrb[0].mxu0
      %v4847 = vadd.f32 0.0, %v4846
      %v4848 = vpop.f32.mrb[0].mxu0
      %4849 = vmatprep.mubr.f32.mxu0 0.0
      %4850 = vmatmul.mubr.f32.gmra.mrb[0].mxu0 %v4666
      %v4851 = vpop.f32.mrb[0].mxu0
      %v4852 = vadd.f32 0.0, %v4851
      %v4853 = vpop.f32.mrb[0].mxu0
      %4854 = vmatprep.mubr.f32.mxu0 0.0
      %4855 = vmatmul.mubr.f32.gmra.mrb[0].mxu0 %v4669
      %v4856 = vpop.f32.mrb[0].mxu0
      %v4857 = vadd.f32 0.0, %v4856
      %v4858 = vpop.f32.mrb[0].mxu0
      %4859 = vmatprep.mubr.f32.mxu0 0.0
      %4860 = vmatmul.mubr.f32.gmra.mrb[0].mxu0 %v4672
      %v4861 = vpop.f32.mrb[0].mxu0
      %v4862 = vadd.f32 0.0, %v4861
      %v4863 = vpop.f32.mrb[0].mxu0
      %4864 = vmatprep.mubr.f32.mxu0 0.0
      %4865 = vmatmul.mubr.f32.gmra.mrb[0].mxu0 %v4675
      %v4866 = vpop.f32.mrb[0].mxu0
      %v4867 = vadd.f32 0.0, %v4866
      %v4868 = vpop.f32.mrb[0].mxu0
      %4869 = vmatprep.mubr.f32.mxu0 0.0
      %4870 = vmatmul.mubr.f32.gmra.mrb[0].mxu0 %v4678
      %v4871 = vpop.f32.mrb[0].mxu0
      %v4872 = vadd.f32 0.0, %v4871
      %v4873 = vpop.f32.mrb[0].mxu0
      %4874 = vmatprep.mubr.f32.mxu0 0.0
      %4875 = vmatmul.mubr.f32.gmra.mrb[0].mxu0 %v4681
      %v4876 = vpop.f32.mrb[0].mxu0
      %v4877 = vadd.f32 0.0, %v4876
      %v4878 = vpop.f32.mrb[0].mxu0
      %4879 = vmatprep.mubr.f32.mxu0 0.0
      %4880 = vmatmul.mubr.f32.gmra.mrb[0].mxu0 %v4684
      %v4881 = vpop.f32.mrb[0].mxu0
      %v4882 = vadd.f32 0.0, %v4881
      %v4883 = vpop.f32.mrb[0].mxu0
      %4884 = vmatprep.mubr.f32.mxu0 0.0
      %4885 = vmatmul.mubr.f32.gmra.mrb[0].mxu0 %v4687
      %v4886 = vpop.f32.mrb[0].mxu0
      %v4887 = vadd.f32 0.0, %v4886
      %v4888 = vpop.f32.mrb[0].mxu0
      %4889 = vmatprep.mubr.f32.mxu0 0.0
      %4890 = vmatmul.mubr.f32.gmra.mrb[0].mxu0 %v4690
      %v4891 = vpop.f32.mrb[0].mxu0
      %v4892 = vadd.f32 0.0, %v4891
      %v4893 = vpop.f32.mrb[0].mxu0
      %4894 = vmatprep.mubr.f32.mxu0 0.0
      %4895 = vmatmul.mubr.f32.gmra.mrb[0].mxu0 %v4693
      %v4896 = vpop.f32.mrb[0].mxu0
      %v4897 = vadd.f32 0.0, %v4896
      %v4898 = vpop.f32.mrb[0].mxu0
      %4899 = vmatprep.mubr.f32.mxu0 0.0
      %4900 = vmatmul.mubr.f32.gmra.mrb[0].mxu0 %v4696
      %v4901 = vpop.f32.mrb[0].mxu0
      %v4902 = vadd.f32 0.0, %v4901
      %v4903 = vpop.f32.mrb[0].mxu0
      %4904 = vmatprep.mubr.f32.mxu0 0.0
      %4905 = vmatmul.mubr.f32.gmra.mrb[0].mxu0 %v4699
      %v4906 = vpop.f32.mrb[0].mxu0
      %v4907 = vadd.f32 0.0, %v4906
      %v4908 = vpop.f32.mrb[0].mxu0
      %4909 = vmatprep.mubr.f32.mxu0 0.0
      %4910 = vmatmul.mubr.f32.gmra.mrb[0].mxu0 %v4702
      %v4911 = vpop.f32.mrb[0].mxu0
      %v4912 = vadd.f32 0.0, %v4911
      %v4913 = vpop.f32.mrb[0].mxu0
      %4914 = vmatprep.mubr.f32.mxu0 0.0
      %4915 = vmatmul.mubr.f32.gmra.mrb[0].mxu0 %v4705
      %v4916 = vpop.f32.mrb[0].mxu0
      %v4917 = vadd.f32 0.0, %v4916
      %v4918 = vpop.f32.mrb[0].mxu0
      %4919 = vmatprep.mubr.f32.mxu0 0.0
      %4920 = vmatmul.mubr.f32.gmra.mrb[0].mxu0 %v4708
      %v4921 = vpop.f32.mrb[0].mxu0
      %v4922 = vadd.f32 0.0, %v4921
      %v4923 = vpop.f32.mrb[0].mxu0
      %4924 = vmatprep.mubr.f32.mxu0 0.0
      %4925 = vmatmul.mubr.f32.gmra.mrb[0].mxu0 %v4711
      %v4926 = vpop.f32.mrb[0].mxu0
      %v4927 = vadd.f32 0.0, %v4926
      %v4928 = vpop.f32.mrb[0].mxu0
      %4929 = vmatprep.mubr.f32.mxu0 0.0
      %4930 = vmatmul.mubr.f32.gmra.mrb[0].mxu0 %v4714
      %v4931 = vpop.f32.mrb[0].mxu0
      %v4932 = vadd.f32 0.0, %v4931
      %v4933 = vpop.f32.mrb[0].mxu0
      %4934 = vmatprep.mubr.f32.mxu0 0.0
      %4935 = vmatmul.mubr.f32.gmra.mrb[0].mxu0 %v4717
      %v4936 = vpop.f32.mrb[0].mxu0
      %v4937 = vadd.f32 0.0, %v4936
      %v4938 = vpop.f32.mrb[0].mxu0
      %4939 = vmatprep.mubr.f32.mxu0 0.0
      %4940 = vmatmul.mubr.f32.gmra.mrb[0].mxu0 %v4720
      %v4941 = vpop.f32.mrb[0].mxu0
      %v4942 = vadd.f32 0.0, %v4941
      %v4943 = vpop.f32.mrb[0].mxu0
      %4944 = vmatprep.mubr.f32.mxu0 0.0
      %4945 = vmatmul.mubr.f32.gmra.mrb[0].mxu0 %v4723
      %v4946 = vpop.f32.mrb[0].mxu0
      %v4947 = vadd.f32 0.0, %v4946
      %v4948 = vpop.f32.mrb[0].mxu0
      %4949 = vmatprep.mubr.f32.mxu0 0.0
      %4950 = vmatmul.mubr.f32.gmra.mrb[0].mxu0 %v4726
      %v4951 = vpop.f32.mrb[0].mxu0
      %v4952 = vadd.f32 0.0, %v4951
      %v4953 = vpop.f32.mrb[0].mxu0
      %4954 = vmatprep.mubr.f32.mxu0 0.0
      %4955 = vmatmul.mubr.f32.gmra.mrb[0].mxu0 %v4729
      %v4956 = vpop.f32.mrb[0].mxu0
      %v4957 = vadd.f32 0.0, %v4956
      %v4958 = vpop.f32.mrb[0].mxu0
      %4959 = vmatprep.mubr.f32.mxu0 0.0
      %4960 = vmatmul.mubr.f32.gmra.mrb[0].mxu0 %v4732
      %v4961 = vpop.f32.mrb[0].mxu0
      %v4962 = vadd.f32 0.0, %v4961
      %v4963 = vpop.f32.mrb[0].mxu0
      %4964 = vmatprep.mubr.f32.mxu0 0.0
      %4965 = vmatmul.mubr.f32.gmra.mrb[0].mxu0 %v4735
      %v4966 = vpop.f32.mrb[0].mxu0
      %v4967 = vadd.f32 0.0, %v4966
      %v4968 = vpop.f32.mrb[0].mxu0
      %4969 = vmatprep.mubr.f32.mxu0 0.0
      %4970 = vmatmul.mubr.f32.gmra.mrb[0].mxu0 %v4738
      %v4971 = vpop.f32.mrb[0].mxu0
      %v4972 = vadd.f32 0.0, %v4971
      %v4973 = vpop.f32.mrb[0].mxu0
      %4974 = vmatprep.mubr.f32.mxu0 0.0
      %4975 = vmatmul.mubr.f32.gmra.mrb[0].mxu0 %v4741
      %v4976 = vpop.f32.mrb[0].mxu0
      %v4977 = vadd.f32 0.0, %v4976
      %v4978 = vpop.f32.mrb[0].mxu0
      %4979 = vmatprep.mubr.f32.mxu0 0.0
      %4980 = vmatmul.mubr.f32.gmra.mrb[0].mxu0 %v4744
      %v4981 = vpop.f32.mrb[0].mxu0
      %v4982 = vadd.f32 0.0, %v4981
      %v4983 = vpop.f32.mrb[0].mxu0
      %4984 = vmatprep.mubr.f32.mxu0 0.0
      %4985 = vmatmul.mubr.f32.gmra.mrb[0].mxu0 %v4747
      %v4986 = vpop.f32.mrb[0].mxu0
      %v4987 = vadd.f32 0.0, %v4986
      %v4988 = vpop.f32.mrb[0].mxu0
      %4989 = vmatprep.mubr.f32.mxu0 0.0
      %4990 = vmatmul.mubr.f32.gmra.mrb[0].mxu0 %v4750
      %v4991 = vpop.f32.mrb[0].mxu0
      %v4992 = vadd.f32 0.0, %v4991
      %v4993 = vpop.f32.mrb[0].mxu0
      %4994 = vmatprep.mubr.f32.mxu0 0.0
      %4995 = vmatmul.mubr.f32.gmra.mrb[0].mxu0 %v4753
      %v4996 = vpop.f32.mrb[0].mxu0
      %v4997 = vadd.f32 0.0, %v4996
      %v4998 = vpop.f32.mrb[0].mxu0
      %4999 = vdwg.mxu0
      %v5000 = vadd.f32 %v4573, %v4822
      %v5001 = vadd.f32 %v4574, %v4827
      %v5002 = vadd.f32 %v4575, %v4832
      %v5003 = vadd.f32 %v4576, %v4837
      %v5004 = vadd.f32 %v4577, %v4842
      %v5005 = vadd.f32 %v4578, %v4847
      %v5006 = vadd.f32 %v4579, %v4852
      %v5007 = vadd.f32 %v4580, %v4857
      %v5008 = vadd.f32 %v4581, %v4862
      %v5009 = vadd.f32 %v4582, %v4867
      %v5010 = vadd.f32 %v4583, %v4872
      %v5011 = vadd.f32 %v4584, %v4877
      %v5012 = vadd.f32 %v4585, %v4882
      %v5013 = vadd.f32 %v4586, %v4887
      %v5014 = vadd.f32 %v4587, %v4892
      %v5015 = vadd.f32 %v4588, %v4897
      %v5016 = vadd.f32 %v4589, %v4902
      %v5017 = vadd.f32 %v4590, %v4907
      %v5018 = vadd.f32 %v4591, %v4912
      %v5019 = vadd.f32 %v4592, %v4917
      %v5020 = vadd.f32 %v4593, %v4922
      %v5021 = vadd.f32 %v4594, %v4927
      %v5022 = vadd.f32 %v4595, %v4932
      %v5023 = vadd.f32 %v4596, %v4937
      %v5024 = vadd.f32 %v4597, %v4942
      %v5025 = vadd.f32 %v4598, %v4947
      %v5026 = vadd.f32 %v4599, %v4952
      %v5027 = vadd.f32 %v4600, %v4957
      %v5028 = vadd.f32 %v4601, %v4962
      %v5029 = vadd.f32 %v4602, %v4967
      %v5030 = vadd.f32 %v4603, %v4972
      %v5031 = vadd.f32 %v4604, %v4977
      %v5032 = vadd.f32 %v4605, %v4982
      %v5033 = vadd.f32 %v4606, %v4987
      %v5034 = vadd.f32 %v4607, %v4992
      %v5035 = vadd.f32 %v4608, %v4997
      %v5036 = vlaneseq
      %v5037 = vshrl.u32 %v5036, 7
      %v5038 = vsub.s32 6, %v5037
      %v5039 = vrot.slane %v252, %v5038
      %v5040 = vadd.f32 %v5000, %v5039
      %v5041 = vadd.f32 %v5001, %v5039
      %v5042 = vadd.f32 %v5002, %v5039
      %v5043 = vadd.f32 %v5003, %v5039
      %v5044 = vadd.f32 %v5004, %v5039
      %v5045 = vadd.f32 %v5005, %v5039
      %v5046 = vadd.f32 %v5006, %v5039
      %v5047 = vadd.f32 %v5007, %v5039
      %v5048 = vadd.f32 %v5008, %v5039
      %v5049 = vadd.f32 %v5009, %v5039
      %v5050 = vadd.f32 %v5010, %v5039
      %v5051 = vadd.f32 %v5011, %v5039
      %v5052 = vadd.f32 %v5012, %v5039
      %v5053 = vadd.f32 %v5013, %v5039
      %v5054 = vadd.f32 %v5014, %v5039
      %v5055 = vadd.f32 %v5015, %v5039
      %v5056 = vadd.f32 %v5016, %v5039
      %v5057 = vadd.f32 %v5017, %v5039
      %v5058 = vadd.f32 %v5018, %v5039
      %v5059 = vadd.f32 %v5019, %v5039
      %v5060 = vadd.f32 %v5020, %v5039
      %v5061 = vadd.f32 %v5021, %v5039
      %v5062 = vadd.f32 %v5022, %v5039
      %v5063 = vadd.f32 %v5023, %v5039
      %v5064 = vadd.f32 %v5024, %v5039
      %v5065 = vadd.f32 %v5025, %v5039
      %v5066 = vadd.f32 %v5026, %v5039
      %v5067 = vadd.f32 %v5027, %v5039
      %v5068 = vadd.f32 %v5028, %v5039
      %v5069 = vadd.f32 %v5029, %v5039
      %v5070 = vadd.f32 %v5030, %v5039
      %v5071 = vadd.f32 %v5031, %v5039
      %v5072 = vadd.f32 %v5032, %v5039
      %v5073 = vadd.f32 %v5033, %v5039
      %v5074 = vadd.f32 %v5034, %v5039
      %v5075 = vadd.f32 %v5035, %v5039
      %5077 = vset.pattern.permute.xlu0 0
      %5078 = vperm.xlu0 %5077, %v297
      %v5079 = vpop.permute.xlu0 %5078
      %5082 = vset.pattern.permute.xlu0 0
      %5083 = vperm.xlu0 %5082, %v298
      %v5084 = vpop.permute.xlu0 %5083
      %5087 = vset.pattern.permute.xlu0 0
      %5088 = vperm.xlu0 %5087, %v299
      %v5089 = vpop.permute.xlu0 %5088
      %5092 = vset.pattern.permute.xlu0 0
      %5093 = vperm.xlu0 %5092, %v300
      %v5094 = vpop.permute.xlu0 %5093
      %5097 = vset.pattern.permute.xlu0 0
      %5098 = vperm.xlu0 %5097, %v301
      %v5099 = vpop.permute.xlu0 %5098
      %5102 = vset.pattern.permute.xlu0 0
      %5103 = vperm.xlu0 %5102, %v302
      %v5104 = vpop.permute.xlu0 %5103
      %5107 = vset.pattern.permute.xlu0 0
      %5108 = vperm.xlu0 %5107, %v303
      %v5109 = vpop.permute.xlu0 %5108
      %5112 = vset.pattern.permute.xlu0 0
      %5113 = vperm.xlu0 %5112, %v304
      %v5114 = vpop.permute.xlu0 %5113
      %5117 = vset.pattern.permute.xlu0 0
      %5118 = vperm.xlu0 %5117, %v305
      %v5119 = vpop.permute.xlu0 %5118
      %5122 = vset.pattern.permute.xlu0 0
      %5123 = vperm.xlu0 %5122, %v306
      %v5124 = vpop.permute.xlu0 %5123
      %5127 = vset.pattern.permute.xlu0 0
      %5128 = vperm.xlu0 %5127, %v307
      %v5129 = vpop.permute.xlu0 %5128
      %5132 = vset.pattern.permute.xlu0 0
      %5133 = vperm.xlu0 %5132, %v308
      %v5134 = vpop.permute.xlu0 %5133
      %5137 = vset.pattern.permute.xlu0 0
      %5138 = vperm.xlu0 %5137, %v309
      %v5139 = vpop.permute.xlu0 %5138
      %5142 = vset.pattern.permute.xlu0 0
      %5143 = vperm.xlu0 %5142, %v310
      %v5144 = vpop.permute.xlu0 %5143
      %5147 = vset.pattern.permute.xlu0 0
      %5148 = vperm.xlu0 %5147, %v311
      %v5149 = vpop.permute.xlu0 %5148
      %5152 = vset.pattern.permute.xlu0 0
      %5153 = vperm.xlu0 %5152, %v312
      %v5154 = vpop.permute.xlu0 %5153
      %5157 = vset.pattern.permute.xlu0 0
      %5158 = vperm.xlu0 %5157, %v313
      %v5159 = vpop.permute.xlu0 %5158
      %5162 = vset.pattern.permute.xlu0 0
      %5163 = vperm.xlu0 %5162, %v314
      %v5164 = vpop.permute.xlu0 %5163
      %5167 = vset.pattern.permute.xlu0 0
      %5168 = vperm.xlu0 %5167, %v315
      %v5169 = vpop.permute.xlu0 %5168
      %5172 = vset.pattern.permute.xlu0 0
      %5173 = vperm.xlu0 %5172, %v316
      %v5174 = vpop.permute.xlu0 %5173
      %5177 = vset.pattern.permute.xlu0 0
      %5178 = vperm.xlu0 %5177, %v317
      %v5179 = vpop.permute.xlu0 %5178
      %5182 = vset.pattern.permute.xlu0 0
      %5183 = vperm.xlu0 %5182, %v318
      %v5184 = vpop.permute.xlu0 %5183
      %5187 = vset.pattern.permute.xlu0 0
      %5188 = vperm.xlu0 %5187, %v319
      %v5189 = vpop.permute.xlu0 %5188
      %5192 = vset.pattern.permute.xlu0 0
      %5193 = vperm.xlu0 %5192, %v320
      %v5194 = vpop.permute.xlu0 %5193
      %5197 = vset.pattern.permute.xlu0 0
      %5198 = vperm.xlu0 %5197, %v321
      %v5199 = vpop.permute.xlu0 %5198
      %5202 = vset.pattern.permute.xlu0 0
      %5203 = vperm.xlu0 %5202, %v322
      %v5204 = vpop.permute.xlu0 %5203
      %5207 = vset.pattern.permute.xlu0 0
      %5208 = vperm.xlu0 %5207, %v323
      %v5209 = vpop.permute.xlu0 %5208
      %5212 = vset.pattern.permute.xlu0 0
      %5213 = vperm.xlu0 %5212, %v324
      %v5214 = vpop.permute.xlu0 %5213
      %5217 = vset.pattern.permute.xlu0 0
      %5218 = vperm.xlu0 %5217, %v325
      %v5219 = vpop.permute.xlu0 %5218
      %5222 = vset.pattern.permute.xlu0 0
      %5223 = vperm.xlu0 %5222, %v326
      %v5224 = vpop.permute.xlu0 %5223
      %5227 = vset.pattern.permute.xlu0 0
      %5228 = vperm.xlu0 %5227, %v327
      %v5229 = vpop.permute.xlu0 %5228
      %5232 = vset.pattern.permute.xlu0 0
      %5233 = vperm.xlu0 %5232, %v328
      %v5234 = vpop.permute.xlu0 %5233
      %5237 = vset.pattern.permute.xlu0 0
      %5238 = vperm.xlu0 %5237, %v329
      %v5239 = vpop.permute.xlu0 %5238
      %5242 = vset.pattern.permute.xlu0 0
      %5243 = vperm.xlu0 %5242, %v330
      %v5244 = vpop.permute.xlu0 %5243
      %5247 = vset.pattern.permute.xlu0 0
      %5248 = vperm.xlu0 %5247, %v331
      %v5249 = vpop.permute.xlu0 %5248
      %5252 = vset.pattern.permute.xlu0 0
      %5253 = vperm.xlu0 %5252, %v332
      %v5254 = vpop.permute.xlu0 %5253
      %v5256 = vmul.f32 %v5040, %v5079
      %v5257 = vmul.f32 %v5041, %v5084
      %v5258 = vmul.f32 %v5042, %v5089
      %v5259 = vmul.f32 %v5043, %v5094
      %v5260 = vmul.f32 %v5044, %v5099
      %v5261 = vmul.f32 %v5045, %v5104
      %v5262 = vmul.f32 %v5046, %v5109
      %v5263 = vmul.f32 %v5047, %v5114
      %v5264 = vmul.f32 %v5048, %v5119
      %v5265 = vmul.f32 %v5049, %v5124
      %v5266 = vmul.f32 %v5050, %v5129
      %v5267 = vmul.f32 %v5051, %v5134
      %v5268 = vmul.f32 %v5052, %v5139
      %v5269 = vmul.f32 %v5053, %v5144
      %v5270 = vmul.f32 %v5054, %v5149
      %v5271 = vmul.f32 %v5055, %v5154
      %v5272 = vmul.f32 %v5056, %v5159
      %v5273 = vmul.f32 %v5057, %v5164
      %v5274 = vmul.f32 %v5058, %v5169
      %v5275 = vmul.f32 %v5059, %v5174
      %v5276 = vmul.f32 %v5060, %v5179
      %v5277 = vmul.f32 %v5061, %v5184
      %v5278 = vmul.f32 %v5062, %v5189
      %v5279 = vmul.f32 %v5063, %v5194
      %v5280 = vmul.f32 %v5064, %v5199
      %v5281 = vmul.f32 %v5065, %v5204
      %v5282 = vmul.f32 %v5066, %v5209
      %v5283 = vmul.f32 %v5067, %v5214
      %v5284 = vmul.f32 %v5068, %v5219
      %v5285 = vmul.f32 %v5069, %v5224
      %v5286 = vmul.f32 %v5070, %v5229
      %v5287 = vmul.f32 %v5071, %v5234
      %v5288 = vmul.f32 %v5072, %v5239
      %v5289 = vmul.f32 %v5073, %v5244
      %v5290 = vmul.f32 %v5074, %v5249
      %v5291 = vmul.f32 %v5075, %v5254
      %5292 = vst.msk [vmem:[#allocation3] sm:$0xff] %vm376, 0.0
      %5293 = vst.msk [vmem:[#allocation3 + $0x8] sm:$0xff] %vm376, 0.0
      %5294 = vst.msk [vmem:[#allocation3 + $0x10] sm:$0xff] %vm376, 0.0
      %5295 = vst.msk [vmem:[#allocation3 + $0x18] sm:$0xff] %vm376, 0.0
      %5296 = vst.msk [vmem:[#allocation3 + $0x20] sm:$0xff] %vm376, 0.0
      %5297 = vst.msk [vmem:[#allocation3 + $0x28] sm:$0xff] %vm376, 0.0
      %5298 = vst.msk [vmem:[#allocation3 + $0x30] sm:$0xff] %vm376, 0.0
      %5299 = vst.msk [vmem:[#allocation3 + $0x38] sm:$0xff] %vm376, 0.0
      %5300 = vst.msk [vmem:[#allocation3 + $0x40] sm:$0xff] %vm376, 0.0
      %5301 = vst.msk [vmem:[#allocation3 + $0x48] sm:$0xff] %vm376, 0.0
      %5302 = vst.msk [vmem:[#allocation3 + $0x50] sm:$0xff] %vm376, 0.0
      %5303 = vst.msk [vmem:[#allocation3 + $0x58] sm:$0xff] %vm376, 0.0
      %5304 = vst.msk [vmem:[#allocation3 + $0x60] sm:$0xff] %vm376, 0.0
      %5305 = vst.msk [vmem:[#allocation3 + $0x68] sm:$0xff] %vm376, 0.0
      %5306 = vst.msk [vmem:[#allocation3 + $0x70] sm:$0xff] %vm376, 0.0
      %5307 = vst.msk [vmem:[#allocation3 + $0x78] sm:$0xff] %vm376, 0.0
      %5308 = vst.msk [vmem:[#allocation3 + $0x80] sm:$0xff] %vm376, 0.0
      %5309 = vst.msk [vmem:[#allocation3 + $0x88] sm:$0xff] %vm376, 0.0
      %5310 = vst.msk [vmem:[#allocation3 + $0x90] sm:$0xff] %vm376, 0.0
      %5311 = vst.msk [vmem:[#allocation3 + $0x98] sm:$0xff] %vm376, 0.0
      %5312 = vst.msk [vmem:[#allocation3 + $0xa0] sm:$0xff] %vm376, 0.0
      %5313 = vst.msk [vmem:[#allocation3 + $0xa8] sm:$0xff] %vm376, 0.0
      %5314 = vst.msk [vmem:[#allocation3 + $0xb0] sm:$0xff] %vm376, 0.0
      %5315 = vst.msk [vmem:[#allocation3 + $0xb8] sm:$0xff] %vm376, 0.0
      %5316 = vst.msk [vmem:[#allocation3 + $0xc0] sm:$0xff] %vm376, 0.0
      %5317 = vst.msk [vmem:[#allocation3 + $0xc8] sm:$0xff] %vm376, 0.0
      %5318 = vst.msk [vmem:[#allocation3 + $0xd0] sm:$0xff] %vm376, 0.0
      %5319 = vst.msk [vmem:[#allocation3 + $0xd8] sm:$0xff] %vm376, 0.0
      %5320 = vst.msk [vmem:[#allocation3 + $0xe0] sm:$0xff] %vm376, 0.0
      %5321 = vst.msk [vmem:[#allocation3 + $0xe8] sm:$0xff] %vm376, 0.0
      %5322 = vst.msk [vmem:[#allocation3 + $0xf0] sm:$0xff] %vm376, 0.0
      %5323 = vst.msk [vmem:[#allocation3 + $0xf8] sm:$0xff] %vm376, 0.0
      %5324 = vst.msk [vmem:[#allocation3 + $0x100] sm:$0xff] %vm376, 0.0
      %5325 = vst.msk [vmem:[#allocation3 + $0x108] sm:$0xff] %vm376, 0.0
      %5326 = vst.msk [vmem:[#allocation3 + $0x110] sm:$0xff] %vm376, 0.0
      %5327 = vst.msk [vmem:[#allocation3 + $0x118] sm:$0xff] %vm376, 0.0
      %5328 = vst.msk [vmem:[#allocation3 + $0x120] sm:$0xff] %vm376, 0.0
      %5329 = vst.msk [vmem:[#allocation3 + $0x128] sm:$0xff] %vm376, 0.0
      %5330 = vst.msk [vmem:[#allocation3 + $0x130] sm:$0xff] %vm376, 0.0
      %5331 = vst.msk [vmem:[#allocation3 + $0x138] sm:$0xff] %vm376, 0.0
      %5332 = vst.msk [vmem:[#allocation3 + $0x140] sm:$0xff] %vm376, 0.0
      %5333 = vst.msk [vmem:[#allocation3 + $0x148] sm:$0xff] %vm376, 0.0
      %5334 = vst.msk [vmem:[#allocation3 + $0x150] sm:$0xff] %vm376, 0.0
      %vm5335 = vcmask 59392
      %5336 = vst.msk [vmem:[#allocation3 + $0x158] sm:$0x7] %vm5335, 0.0
      %v5337 = vsel %vm376, %v5256, 0.0
      %v5338 = vsel %vm376, %v5257, 0.0
      %v5339 = vadd.f32 %v5337, %v5338
      %v5340 = vsel %vm376, %v5258, 0.0
      %v5341 = vadd.f32 %v5339, %v5340
      %v5342 = vsel %vm376, %v5259, 0.0
      %v5343 = vadd.f32 %v5341, %v5342
      %v5344 = vsel %vm376, %v5260, 0.0
      %v5345 = vadd.f32 %v5343, %v5344
      %v5346 = vsel %vm376, %v5261, 0.0
      %v5347 = vadd.f32 %v5345, %v5346
      %v5348 = vsel %vm376, %v5262, 0.0
      %v5349 = vadd.f32 %v5347, %v5348
      %v5350 = vsel %vm376, %v5263, 0.0
      %v5351 = vadd.f32 %v5349, %v5350
      %v5352 = vsel %vm376, %v5264, 0.0
      %v5353 = vadd.f32 %v5351, %v5352
      %v5354 = vsel %vm376, %v5265, 0.0
      %v5355 = vadd.f32 %v5353, %v5354
      %v5356 = vsel %vm376, %v5266, 0.0
      %v5357 = vadd.f32 %v5355, %v5356
      %v5358 = vsel %vm376, %v5267, 0.0
      %v5359 = vadd.f32 %v5357, %v5358
      %v5360 = vsel %vm376, %v5268, 0.0
      %v5361 = vadd.f32 %v5359, %v5360
      %v5362 = vsel %vm376, %v5269, 0.0
      %v5363 = vadd.f32 %v5361, %v5362
      %v5364 = vsel %vm376, %v5270, 0.0
      %v5365 = vadd.f32 %v5363, %v5364
      %v5366 = vsel %vm376, %v5271, 0.0
      %v5367 = vadd.f32 %v5365, %v5366
      %v5368 = vsel %vm376, %v5272, 0.0
      %v5369 = vadd.f32 %v5367, %v5368
      %v5370 = vsel %vm376, %v5273, 0.0
      %v5371 = vadd.f32 %v5369, %v5370
      %v5372 = vsel %vm376, %v5274, 0.0
      %v5373 = vadd.f32 %v5371, %v5372
      %v5374 = vsel %vm376, %v5275, 0.0
      %v5375 = vadd.f32 %v5373, %v5374
      %v5376 = vsel %vm376, %v5276, 0.0
      %v5377 = vadd.f32 %v5375, %v5376
      %v5378 = vsel %vm376, %v5277, 0.0
      %v5379 = vadd.f32 %v5377, %v5378
      %v5380 = vsel %vm376, %v5278, 0.0
      %v5381 = vadd.f32 %v5379, %v5380
      %v5382 = vsel %vm376, %v5279, 0.0
      %v5383 = vadd.f32 %v5381, %v5382
      %v5384 = vsel %vm376, %v5280, 0.0
      %v5385 = vadd.f32 %v5383, %v5384
      %v5386 = vsel %vm376, %v5281, 0.0
      %v5387 = vadd.f32 %v5385, %v5386
      %v5388 = vsel %vm376, %v5282, 0.0
      %v5389 = vadd.f32 %v5387, %v5388
      %v5390 = vsel %vm376, %v5283, 0.0
      %v5391 = vadd.f32 %v5389, %v5390
      %v5392 = vsel %vm376, %v5284, 0.0
      %v5393 = vadd.f32 %v5391, %v5392
      %v5394 = vsel %vm376, %v5285, 0.0
      %v5395 = vadd.f32 %v5393, %v5394
      %v5396 = vsel %vm376, %v5286, 0.0
      %v5397 = vadd.f32 %v5395, %v5396
      %v5398 = vsel %vm376, %v5287, 0.0
      %v5399 = vadd.f32 %v5397, %v5398
      %v5400 = vsel %vm376, %v5288, 0.0
      %v5401 = vadd.f32 %v5399, %v5400
      %v5402 = vsel %vm376, %v5289, 0.0
      %v5403 = vadd.f32 %v5401, %v5402
      %v5404 = vsel %vm376, %v5290, 0.0
      %v5405 = vadd.f32 %v5403, %v5404
      %v5406 = vsel %vm376, %v5291, 0.0
      %v5407 = vadd.f32 %v5405, %v5406
      %v5408 = vrot.slane %v5407, 4
      %v5409 = vadd.f32 %v5407, %v5408
      %v5410 = vrot.slane %v5409, 2
      %v5411 = vadd.f32 %v5409, %v5410
      %v5412 = vrot.slane %v5411, 1
      %v5413 = vadd.f32 %v5411, %v5412
      %v5414 = vmul.f32 %v5256, %v5256
      %v5415 = vmul.f32 %v5257, %v5257
      %v5416 = vmul.f32 %v5258, %v5258
      %v5417 = vmul.f32 %v5259, %v5259
      %v5418 = vmul.f32 %v5260, %v5260
      %v5419 = vmul.f32 %v5261, %v5261
      %v5420 = vmul.f32 %v5262, %v5262
      %v5421 = vmul.f32 %v5263, %v5263
      %v5422 = vmul.f32 %v5264, %v5264
      %v5423 = vmul.f32 %v5265, %v5265
      %v5424 = vmul.f32 %v5266, %v5266
      %v5425 = vmul.f32 %v5267, %v5267
      %v5426 = vmul.f32 %v5268, %v5268
      %v5427 = vmul.f32 %v5269, %v5269
      %v5428 = vmul.f32 %v5270, %v5270
      %v5429 = vmul.f32 %v5271, %v5271
      %v5430 = vmul.f32 %v5272, %v5272
      %v5431 = vmul.f32 %v5273, %v5273
      %v5432 = vmul.f32 %v5274, %v5274
      %v5433 = vmul.f32 %v5275, %v5275
      %v5434 = vmul.f32 %v5276, %v5276
      %v5435 = vmul.f32 %v5277, %v5277
      %v5436 = vmul.f32 %v5278, %v5278
      %v5437 = vmul.f32 %v5279, %v5279
      %v5438 = vmul.f32 %v5280, %v5280
      %v5439 = vmul.f32 %v5281, %v5281
      %v5440 = vmul.f32 %v5282, %v5282
      %v5441 = vmul.f32 %v5283, %v5283
      %v5442 = vmul.f32 %v5284, %v5284
      %v5443 = vmul.f32 %v5285, %v5285
      %v5444 = vmul.f32 %v5286, %v5286
      %v5445 = vmul.f32 %v5287, %v5287
      %v5446 = vmul.f32 %v5288, %v5288
      %v5447 = vmul.f32 %v5289, %v5289
      %v5448 = vmul.f32 %v5290, %v5290
      %v5449 = vmul.f32 %v5291, %v5291
      %v5450 = vsel %vm376, %v5414, 0.0
      %v5451 = vsel %vm376, %v5415, 0.0
      %v5452 = vadd.f32 %v5450, %v5451
      %v5453 = vsel %vm376, %v5416, 0.0
      %v5454 = vadd.f32 %v5452, %v5453
      %v5455 = vsel %vm376, %v5417, 0.0
      %v5456 = vadd.f32 %v5454, %v5455
      %v5457 = vsel %vm376, %v5418, 0.0
      %v5458 = vadd.f32 %v5456, %v5457
      %v5459 = vsel %vm376, %v5419, 0.0
      %v5460 = vadd.f32 %v5458, %v5459
      %v5461 = vsel %vm376, %v5420, 0.0
      %v5462 = vadd.f32 %v5460, %v5461
      %v5463 = vsel %vm376, %v5421, 0.0
      %v5464 = vadd.f32 %v5462, %v5463
      %v5465 = vsel %vm376, %v5422, 0.0
      %v5466 = vadd.f32 %v5464, %v5465
      %v5467 = vsel %vm376, %v5423, 0.0
      %v5468 = vadd.f32 %v5466, %v5467
      %v5469 = vsel %vm376, %v5424, 0.0
      %v5470 = vadd.f32 %v5468, %v5469
      %v5471 = vsel %vm376, %v5425, 0.0
      %v5472 = vadd.f32 %v5470, %v5471
      %v5473 = vsel %vm376, %v5426, 0.0
      %v5474 = vadd.f32 %v5472, %v5473
      %v5475 = vsel %vm376, %v5427, 0.0
      %v5476 = vadd.f32 %v5474, %v5475
      %v5477 = vsel %vm376, %v5428, 0.0
      %v5478 = vadd.f32 %v5476, %v5477
      %v5479 = vsel %vm376, %v5429, 0.0
      %v5480 = vadd.f32 %v5478, %v5479
      %v5481 = vsel %vm376, %v5430, 0.0
      %v5482 = vadd.f32 %v5480, %v5481
      %v5483 = vsel %vm376, %v5431, 0.0
      %v5484 = vadd.f32 %v5482, %v5483
      %v5485 = vsel %vm376, %v5432, 0.0
      %v5486 = vadd.f32 %v5484, %v5485
      %v5487 = vsel %vm376, %v5433, 0.0
      %v5488 = vadd.f32 %v5486, %v5487
      %v5489 = vsel %vm376, %v5434, 0.0
      %v5490 = vadd.f32 %v5488, %v5489
      %v5491 = vsel %vm376, %v5435, 0.0
      %v5492 = vadd.f32 %v5490, %v5491
      %v5493 = vsel %vm376, %v5436, 0.0
      %v5494 = vadd.f32 %v5492, %v5493
      %v5495 = vsel %vm376, %v5437, 0.0
      %v5496 = vadd.f32 %v5494, %v5495
      %v5497 = vsel %vm376, %v5438, 0.0
      %v5498 = vadd.f32 %v5496, %v5497
      %v5499 = vsel %vm376, %v5439, 0.0
      %v5500 = vadd.f32 %v5498, %v5499
      %v5501 = vsel %vm376, %v5440, 0.0
      %v5502 = vadd.f32 %v5500, %v5501
      %v5503 = vsel %vm376, %v5441, 0.0
      %v5504 = vadd.f32 %v5502, %v5503
      %v5505 = vsel %vm376, %v5442, 0.0
      %v5506 = vadd.f32 %v5504, %v5505
      %v5507 = vsel %vm376, %v5443, 0.0
      %v5508 = vadd.f32 %v5506, %v5507
      %v5509 = vsel %vm376, %v5444, 0.0
      %v5510 = vadd.f32 %v5508, %v5509
      %v5511 = vsel %vm376, %v5445, 0.0
      %v5512 = vadd.f32 %v5510, %v5511
      %v5513 = vsel %vm376, %v5446, 0.0
      %v5514 = vadd.f32 %v5512, %v5513
      %v5515 = vsel %vm376, %v5447, 0.0
      %v5516 = vadd.f32 %v5514, %v5515
      %v5517 = vsel %vm376, %v5448, 0.0
      %v5518 = vadd.f32 %v5516, %v5517
      %v5519 = vsel %vm376, %v5449, 0.0
      %v5520 = vadd.f32 %v5518, %v5519
      %v5521 = vrot.slane %v5520, 4
      %v5522 = vadd.f32 %v5520, %v5521
      %v5523 = vrot.slane %v5522, 2
      %v5524 = vadd.f32 %v5522, %v5523
      %v5525 = vrot.slane %v5524, 1
      %v5526 = vadd.f32 %v5524, %v5525
      %v5527 = vmul.f32 %v5413, 0.00390625
      %v5528 = vmul.f32 %v5526, 0.00390625
      %v5529 = vmul.f32 %v5527, %v5527
      %v5530 = vsub.f32 %v5528, %v5529
      %v5531 = vadd.f32 %v5530, 1e-05
      %v5532 = vrsqrt.pop %v5531
      %v5533 = vsub.f32 %v5256, %v5527
      %v5534 = vsub.f32 %v5257, %v5527
      %v5535 = vsub.f32 %v5258, %v5527
      %v5536 = vsub.f32 %v5259, %v5527
      %v5537 = vsub.f32 %v5260, %v5527
      %v5538 = vsub.f32 %v5261, %v5527
      %v5539 = vsub.f32 %v5262, %v5527
      %v5540 = vsub.f32 %v5263, %v5527
      %v5541 = vsub.f32 %v5264, %v5527
      %v5542 = vsub.f32 %v5265, %v5527
      %v5543 = vsub.f32 %v5266, %v5527
      %v5544 = vsub.f32 %v5267, %v5527
      %v5545 = vsub.f32 %v5268, %v5527
      %v5546 = vsub.f32 %v5269, %v5527
      %v5547 = vsub.f32 %v5270, %v5527
      %v5548 = vsub.f32 %v5271, %v5527
      %v5549 = vsub.f32 %v5272, %v5527
      %v5550 = vsub.f32 %v5273, %v5527
      %v5551 = vsub.f32 %v5274, %v5527
      %v5552 = vsub.f32 %v5275, %v5527
      %v5553 = vsub.f32 %v5276, %v5527
      %v5554 = vsub.f32 %v5277, %v5527
      %v5555 = vsub.f32 %v5278, %v5527
      %v5556 = vsub.f32 %v5279, %v5527
      %v5557 = vsub.f32 %v5280, %v5527
      %v5558 = vsub.f32 %v5281, %v5527
      %v5559 = vsub.f32 %v5282, %v5527
      %v5560 = vsub.f32 %v5283, %v5527
      %v5561 = vsub.f32 %v5284, %v5527
      %v5562 = vsub.f32 %v5285, %v5527
      %v5563 = vsub.f32 %v5286, %v5527
      %v5564 = vsub.f32 %v5287, %v5527
      %v5565 = vsub.f32 %v5288, %v5527
      %v5566 = vsub.f32 %v5289, %v5527
      %v5567 = vsub.f32 %v5290, %v5527
      %v5568 = vsub.f32 %v5291, %v5527
      %v5569 = vmul.f32 %v5533, %v5532
      %v5570 = vmul.f32 %v5534, %v5532
      %v5571 = vmul.f32 %v5535, %v5532
      %v5572 = vmul.f32 %v5536, %v5532
      %v5573 = vmul.f32 %v5537, %v5532
      %v5574 = vmul.f32 %v5538, %v5532
      %v5575 = vmul.f32 %v5539, %v5532
      %v5576 = vmul.f32 %v5540, %v5532
      %v5577 = vmul.f32 %v5541, %v5532
      %v5578 = vmul.f32 %v5542, %v5532
      %v5579 = vmul.f32 %v5543, %v5532
      %v5580 = vmul.f32 %v5544, %v5532
      %v5581 = vmul.f32 %v5545, %v5532
      %v5582 = vmul.f32 %v5546, %v5532
      %v5583 = vmul.f32 %v5547, %v5532
      %v5584 = vmul.f32 %v5548, %v5532
      %v5585 = vmul.f32 %v5549, %v5532
      %v5586 = vmul.f32 %v5550, %v5532
      %v5587 = vmul.f32 %v5551, %v5532
      %v5588 = vmul.f32 %v5552, %v5532
      %v5589 = vmul.f32 %v5553, %v5532
      %v5590 = vmul.f32 %v5554, %v5532
      %v5591 = vmul.f32 %v5555, %v5532
      %v5592 = vmul.f32 %v5556, %v5532
      %v5593 = vmul.f32 %v5557, %v5532
      %v5594 = vmul.f32 %v5558, %v5532
      %v5595 = vmul.f32 %v5559, %v5532
      %v5596 = vmul.f32 %v5560, %v5532
      %v5597 = vmul.f32 %v5561, %v5532
      %v5598 = vmul.f32 %v5562, %v5532
      %v5599 = vmul.f32 %v5563, %v5532
      %v5600 = vmul.f32 %v5564, %v5532
      %v5601 = vmul.f32 %v5565, %v5532
      %v5602 = vmul.f32 %v5566, %v5532
      %v5603 = vmul.f32 %v5567, %v5532
      %v5604 = vmul.f32 %v5568, %v5532
      %v5605 = vlaneseq
      %v5606 = vshrl.u32 %v5605, 7
      %v5607 = vsub.s32 2, %v5606
      %v5608 = vrot.slane %v252, %v5607
      %v5609 = vmul.f32 %v5569, %v5608
      %v5610 = vmul.f32 %v5570, %v5608
      %v5611 = vmul.f32 %v5571, %v5608
      %v5612 = vmul.f32 %v5572, %v5608
      %v5613 = vmul.f32 %v5573, %v5608
      %v5614 = vmul.f32 %v5574, %v5608
      %v5615 = vmul.f32 %v5575, %v5608
      %v5616 = vmul.f32 %v5576, %v5608
      %v5617 = vmul.f32 %v5577, %v5608
      %v5618 = vmul.f32 %v5578, %v5608
      %v5619 = vmul.f32 %v5579, %v5608
      %v5620 = vmul.f32 %v5580, %v5608
      %v5621 = vmul.f32 %v5581, %v5608
      %v5622 = vmul.f32 %v5582, %v5608
      %v5623 = vmul.f32 %v5583, %v5608
      %v5624 = vmul.f32 %v5584, %v5608
      %v5625 = vmul.f32 %v5585, %v5608
      %v5626 = vmul.f32 %v5586, %v5608
      %v5627 = vmul.f32 %v5587, %v5608
      %v5628 = vmul.f32 %v5588, %v5608
      %v5629 = vmul.f32 %v5589, %v5608
      %v5630 = vmul.f32 %v5590, %v5608
      %v5631 = vmul.f32 %v5591, %v5608
      %v5632 = vmul.f32 %v5592, %v5608
      %v5633 = vmul.f32 %v5593, %v5608
      %v5634 = vmul.f32 %v5594, %v5608
      %v5635 = vmul.f32 %v5595, %v5608
      %v5636 = vmul.f32 %v5596, %v5608
      %v5637 = vmul.f32 %v5597, %v5608
      %v5638 = vmul.f32 %v5598, %v5608
      %v5639 = vmul.f32 %v5599, %v5608
      %v5640 = vmul.f32 %v5600, %v5608
      %v5641 = vmul.f32 %v5601, %v5608
      %v5642 = vmul.f32 %v5602, %v5608
      %v5643 = vmul.f32 %v5603, %v5608
      %v5644 = vmul.f32 %v5604, %v5608
      %v5645 = vlaneseq
      %v5646 = vshrl.u32 %v5645, 7
      %v5647 = vsub.s32 3, %v5646
      %v5648 = vrot.slane %v252, %v5647
      %v5649 = vadd.f32 %v5609, %v5648
      %v5650 = vadd.f32 %v5610, %v5648
      %v5651 = vadd.f32 %v5611, %v5648
      %v5652 = vadd.f32 %v5612, %v5648
      %v5653 = vadd.f32 %v5613, %v5648
      %v5654 = vadd.f32 %v5614, %v5648
      %v5655 = vadd.f32 %v5615, %v5648
      %v5656 = vadd.f32 %v5616, %v5648
      %v5657 = vadd.f32 %v5617, %v5648
      %v5658 = vadd.f32 %v5618, %v5648
      %v5659 = vadd.f32 %v5619, %v5648
      %v5660 = vadd.f32 %v5620, %v5648
      %v5661 = vadd.f32 %v5621, %v5648
      %v5662 = vadd.f32 %v5622, %v5648
      %v5663 = vadd.f32 %v5623, %v5648
      %v5664 = vadd.f32 %v5624, %v5648
      %v5665 = vadd.f32 %v5625, %v5648
      %v5666 = vadd.f32 %v5626, %v5648
      %v5667 = vadd.f32 %v5627, %v5648
      %v5668 = vadd.f32 %v5628, %v5648
      %v5669 = vadd.f32 %v5629, %v5648
      %v5670 = vadd.f32 %v5630, %v5648
      %v5671 = vadd.f32 %v5631, %v5648
      %v5672 = vadd.f32 %v5632, %v5648
      %v5673 = vadd.f32 %v5633, %v5648
      %v5674 = vadd.f32 %v5634, %v5648
      %v5675 = vadd.f32 %v5635, %v5648
      %v5676 = vadd.f32 %v5636, %v5648
      %v5677 = vadd.f32 %v5637, %v5648
      %v5678 = vadd.f32 %v5638, %v5648
      %v5679 = vadd.f32 %v5639, %v5648
      %v5680 = vadd.f32 %v5640, %v5648
      %v5681 = vadd.f32 %v5641, %v5648
      %v5682 = vadd.f32 %v5642, %v5648
      %v5683 = vadd.f32 %v5643, %v5648
      %v5684 = vadd.f32 %v5644, %v5648
      %vm5685 = vcmp.ge.f32.partialorder %v5649, 0.0
      %vm5686 = vcmp.ge.f32.partialorder %v5650, 0.0
      %vm5687 = vcmp.ge.f32.partialorder %v5651, 0.0
      %vm5688 = vcmp.ge.f32.partialorder %v5652, 0.0
      %vm5689 = vcmp.ge.f32.partialorder %v5653, 0.0
      %vm5690 = vcmp.ge.f32.partialorder %v5654, 0.0
      %vm5691 = vcmp.ge.f32.partialorder %v5655, 0.0
      %vm5692 = vcmp.ge.f32.partialorder %v5656, 0.0
      %vm5693 = vcmp.ge.f32.partialorder %v5657, 0.0
      %vm5694 = vcmp.ge.f32.partialorder %v5658, 0.0
      %vm5695 = vcmp.ge.f32.partialorder %v5659, 0.0
      %vm5696 = vcmp.ge.f32.partialorder %v5660, 0.0
      %vm5697 = vcmp.ge.f32.partialorder %v5661, 0.0
      %vm5698 = vcmp.ge.f32.partialorder %v5662, 0.0
      %vm5699 = vcmp.ge.f32.partialorder %v5663, 0.0
      %vm5700 = vcmp.ge.f32.partialorder %v5664, 0.0
      %vm5701 = vcmp.ge.f32.partialorder %v5665, 0.0
      %vm5702 = vcmp.ge.f32.partialorder %v5666, 0.0
      %vm5703 = vcmp.ge.f32.partialorder %v5667, 0.0
      %vm5704 = vcmp.ge.f32.partialorder %v5668, 0.0
      %vm5705 = vcmp.ge.f32.partialorder %v5669, 0.0
      %vm5706 = vcmp.ge.f32.partialorder %v5670, 0.0
      %vm5707 = vcmp.ge.f32.partialorder %v5671, 0.0
      %vm5708 = vcmp.ge.f32.partialorder %v5672, 0.0
      %vm5709 = vcmp.ge.f32.partialorder %v5673, 0.0
      %vm5710 = vcmp.ge.f32.partialorder %v5674, 0.0
      %vm5711 = vcmp.ge.f32.partialorder %v5675, 0.0
      %vm5712 = vcmp.ge.f32.partialorder %v5676, 0.0
      %vm5713 = vcmp.ge.f32.partialorder %v5677, 0.0
      %vm5714 = vcmp.ge.f32.partialorder %v5678, 0.0
      %vm5715 = vcmp.ge.f32.partialorder %v5679, 0.0
      %vm5716 = vcmp.ge.f32.partialorder %v5680, 0.0
      %vm5717 = vcmp.ge.f32.partialorder %v5681, 0.0
      %vm5718 = vcmp.ge.f32.partialorder %v5682, 0.0
      %vm5719 = vcmp.ge.f32.partialorder %v5683, 0.0
      %vm5720 = vcmp.ge.f32.partialorder %v5684, 0.0
      %v5721 = vmul.f32 %v5649, 0.2
      %v5722 = vmul.f32 %v5650, 0.2
      %v5723 = vmul.f32 %v5651, 0.2
      %v5724 = vmul.f32 %v5652, 0.2
      %v5725 = vmul.f32 %v5653, 0.2
      %v5726 = vmul.f32 %v5654, 0.2
      %v5727 = vmul.f32 %v5655, 0.2
      %v5728 = vmul.f32 %v5656, 0.2
      %v5729 = vmul.f32 %v5657, 0.2
      %v5730 = vmul.f32 %v5658, 0.2
      %v5731 = vmul.f32 %v5659, 0.2
      %v5732 = vmul.f32 %v5660, 0.2
      %v5733 = vmul.f32 %v5661, 0.2
      %v5734 = vmul.f32 %v5662, 0.2
      %v5735 = vmul.f32 %v5663, 0.2
      %v5736 = vmul.f32 %v5664, 0.2
      %v5737 = vmul.f32 %v5665, 0.2
      %v5738 = vmul.f32 %v5666, 0.2
      %v5739 = vmul.f32 %v5667, 0.2
      %v5740 = vmul.f32 %v5668, 0.2
      %v5741 = vmul.f32 %v5669, 0.2
      %v5742 = vmul.f32 %v5670, 0.2
      %v5743 = vmul.f32 %v5671, 0.2
      %v5744 = vmul.f32 %v5672, 0.2
      %v5745 = vmul.f32 %v5673, 0.2
      %v5746 = vmul.f32 %v5674, 0.2
      %v5747 = vmul.f32 %v5675, 0.2
      %v5748 = vmul.f32 %v5676, 0.2
      %v5749 = vmul.f32 %v5677, 0.2
      %v5750 = vmul.f32 %v5678, 0.2
      %v5751 = vmul.f32 %v5679, 0.2
      %v5752 = vmul.f32 %v5680, 0.2
      %v5753 = vmul.f32 %v5681, 0.2
      %v5754 = vmul.f32 %v5682, 0.2
      %v5755 = vmul.f32 %v5683, 0.2
      %v5756 = vmul.f32 %v5684, 0.2
      %v5757 = vsel %vm5685, %v5649, %v5721
      %v5758 = vsel %vm5686, %v5650, %v5722
      %v5759 = vsel %vm5687, %v5651, %v5723
      %v5760 = vsel %vm5688, %v5652, %v5724
      %v5761 = vsel %vm5689, %v5653, %v5725
      %v5762 = vsel %vm5690, %v5654, %v5726
      %v5763 = vsel %vm5691, %v5655, %v5727
      %v5764 = vsel %vm5692, %v5656, %v5728
      %v5765 = vsel %vm5693, %v5657, %v5729
      %v5766 = vsel %vm5694, %v5658, %v5730
      %v5767 = vsel %vm5695, %v5659, %v5731
      %v5768 = vsel %vm5696, %v5660, %v5732
      %v5769 = vsel %vm5697, %v5661, %v5733
      %v5770 = vsel %vm5698, %v5662, %v5734
      %v5771 = vsel %vm5699, %v5663, %v5735
      %v5772 = vsel %vm5700, %v5664, %v5736
      %v5773 = vsel %vm5701, %v5665, %v5737
      %v5774 = vsel %vm5702, %v5666, %v5738
      %v5775 = vsel %vm5703, %v5667, %v5739
      %v5776 = vsel %vm5704, %v5668, %v5740
      %v5777 = vsel %vm5705, %v5669, %v5741
      %v5778 = vsel %vm5706, %v5670, %v5742
      %v5779 = vsel %vm5707, %v5671, %v5743
      %v5780 = vsel %vm5708, %v5672, %v5744
      %v5781 = vsel %vm5709, %v5673, %v5745
      %v5782 = vsel %vm5710, %v5674, %v5746
      %v5783 = vsel %vm5711, %v5675, %v5747
      %v5784 = vsel %vm5712, %v5676, %v5748
      %v5785 = vsel %vm5713, %v5677, %v5749
      %v5786 = vsel %vm5714, %v5678, %v5750
      %v5787 = vsel %vm5715, %v5679, %v5751
      %v5788 = vsel %vm5716, %v5680, %v5752
      %v5789 = vsel %vm5717, %v5681, %v5753
      %v5790 = vsel %vm5718, %v5682, %v5754
      %v5791 = vsel %vm5719, %v5683, %v5755
      %v5792 = vsel %vm5720, %v5684, %v5756
      %v5793 = vadd.f32 %v5757, %v921
      %v5794 = vadd.f32 %v5758, %v921
      %v5795 = vadd.f32 %v5759, %v921
      %v5796 = vadd.f32 %v5760, %v921
      %v5797 = vadd.f32 %v5761, %v921
      %v5798 = vadd.f32 %v5762, %v921
      %v5799 = vadd.f32 %v5763, %v921
      %v5800 = vadd.f32 %v5764, %v921
      %v5801 = vadd.f32 %v5765, %v921
      %v5802 = vadd.f32 %v5766, %v921
      %v5803 = vadd.f32 %v5767, %v921
      %v5804 = vadd.f32 %v5768, %v921
      %v5805 = vadd.f32 %v5769, %v921
      %v5806 = vadd.f32 %v5770, %v921
      %v5807 = vadd.f32 %v5771, %v921
      %v5808 = vadd.f32 %v5772, %v921
      %v5809 = vadd.f32 %v5773, %v921
      %v5810 = vadd.f32 %v5774, %v921
      %v5811 = vadd.f32 %v5775, %v921
      %v5812 = vadd.f32 %v5776, %v921
      %v5813 = vadd.f32 %v5777, %v921
      %v5814 = vadd.f32 %v5778, %v921
      %v5815 = vadd.f32 %v5779, %v921
      %v5816 = vadd.f32 %v5780, %v921
      %v5817 = vadd.f32 %v5781, %v921
      %v5818 = vadd.f32 %v5782, %v921
      %v5819 = vadd.f32 %v5783, %v921
      %v5820 = vadd.f32 %v5784, %v921
      %v5821 = vadd.f32 %v5785, %v921
      %v5822 = vadd.f32 %v5786, %v921
      %v5823 = vadd.f32 %v5787, %v921
      %v5824 = vadd.f32 %v5788, %v921
      %v5825 = vadd.f32 %v5789, %v921
      %v5826 = vadd.f32 %v5790, %v921
      %v5827 = vadd.f32 %v5791, %v921
      %v5828 = vadd.f32 %v5792, %v921
      %v5829 = vmul.f32 %v5793, %v5079
      %v5830 = vmul.f32 %v5794, %v5084
      %v5831 = vmul.f32 %v5795, %v5089
      %v5832 = vmul.f32 %v5796, %v5094
      %v5833 = vmul.f32 %v5797, %v5099
      %v5834 = vmul.f32 %v5798, %v5104
      %v5835 = vmul.f32 %v5799, %v5109
      %v5836 = vmul.f32 %v5800, %v5114
      %v5837 = vmul.f32 %v5801, %v5119
      %v5838 = vmul.f32 %v5802, %v5124
      %v5839 = vmul.f32 %v5803, %v5129
      %v5840 = vmul.f32 %v5804, %v5134
      %v5841 = vmul.f32 %v5805, %v5139
      %v5842 = vmul.f32 %v5806, %v5144
      %v5843 = vmul.f32 %v5807, %v5149
      %v5844 = vmul.f32 %v5808, %v5154
      %v5845 = vmul.f32 %v5809, %v5159
      %v5846 = vmul.f32 %v5810, %v5164
      %v5847 = vmul.f32 %v5811, %v5169
      %v5848 = vmul.f32 %v5812, %v5174
      %v5849 = vmul.f32 %v5813, %v5179
      %v5850 = vmul.f32 %v5814, %v5184
      %v5851 = vmul.f32 %v5815, %v5189
      %v5852 = vmul.f32 %v5816, %v5194
      %v5853 = vmul.f32 %v5817, %v5199
      %v5854 = vmul.f32 %v5818, %v5204
      %v5855 = vmul.f32 %v5819, %v5209
      %v5856 = vmul.f32 %v5820, %v5214
      %v5857 = vmul.f32 %v5821, %v5219
      %v5858 = vmul.f32 %v5822, %v5224
      %v5859 = vmul.f32 %v5823, %v5229
      %v5860 = vmul.f32 %v5824, %v5234
      %v5861 = vmul.f32 %v5825, %v5239
      %v5862 = vmul.f32 %v5826, %v5244
      %v5863 = vmul.f32 %v5827, %v5249
      %v5864 = vmul.f32 %v5828, %v5254
      %5865 = vst.msk [vmem:[#allocation3 + $0x18] sm:$0xff] %vm376, %v5829
      %5866 = vst.msk [vmem:[#allocation3 + $0x20] sm:$0xff] %vm376, %v5830
      %5867 = vst.msk [vmem:[#allocation3 + $0x28] sm:$0xff] %vm376, %v5831
      %5868 = vst.msk [vmem:[#allocation3 + $0x30] sm:$0xff] %vm376, %v5832
      %5869 = vst.msk [vmem:[#allocation3 + $0x38] sm:$0xff] %vm376, %v5833
      %5870 = vst.msk [vmem:[#allocation3 + $0x40] sm:$0xff] %vm376, %v5834
      %5871 = vst.msk [vmem:[#allocation3 + $0x48] sm:$0xff] %vm376, %v5835
      %5872 = vst.msk [vmem:[#allocation3 + $0x50] sm:$0xff] %vm376, %v5836
      %5873 = vst.msk [vmem:[#allocation3 + $0x58] sm:$0xff] %vm376, %v5837
      %5874 = vst.msk [vmem:[#allocation3 + $0x60] sm:$0xff] %vm376, %v5838
      %5875 = vst.msk [vmem:[#allocation3 + $0x68] sm:$0xff] %vm376, %v5839
      %5876 = vst.msk [vmem:[#allocation3 + $0x70] sm:$0xff] %vm376, %v5840
      %5877 = vst.msk [vmem:[#allocation3 + $0x78] sm:$0xff] %vm376, %v5841
      %5878 = vst.msk [vmem:[#allocation3 + $0x80] sm:$0xff] %vm376, %v5842
      %5879 = vst.msk [vmem:[#allocation3 + $0x88] sm:$0xff] %vm376, %v5843
      %5880 = vst.msk [vmem:[#allocation3 + $0x90] sm:$0xff] %vm376, %v5844
      %5881 = vst.msk [vmem:[#allocation3 + $0x98] sm:$0xff] %vm376, %v5845
      %5882 = vst.msk [vmem:[#allocation3 + $0xa0] sm:$0xff] %vm376, %v5846
      %5883 = vst.msk [vmem:[#allocation3 + $0xa8] sm:$0xff] %vm376, %v5847
      %5884 = vst.msk [vmem:[#allocation3 + $0xb0] sm:$0xff] %vm376, %v5848
      %5885 = vst.msk [vmem:[#allocation3 + $0xb8] sm:$0xff] %vm376, %v5849
      %5886 = vst.msk [vmem:[#allocation3 + $0xc0] sm:$0xff] %vm376, %v5850
      %5887 = vst.msk [vmem:[#allocation3 + $0xc8] sm:$0xff] %vm376, %v5851
      %5888 = vst.msk [vmem:[#allocation3 + $0xd0] sm:$0xff] %vm376, %v5852
      %5889 = vst.msk [vmem:[#allocation3 + $0xd8] sm:$0xff] %vm376, %v5853
      %5890 = vst.msk [vmem:[#allocation3 + $0xe0] sm:$0xff] %vm376, %v5854
      %5891 = vst.msk [vmem:[#allocation3 + $0xe8] sm:$0xff] %vm376, %v5855
      %5892 = vst.msk [vmem:[#allocation3 + $0xf0] sm:$0xff] %vm376, %v5856
      %5893 = vst.msk [vmem:[#allocation3 + $0xf8] sm:$0xff] %vm376, %v5857
      %5894 = vst.msk [vmem:[#allocation3 + $0x100] sm:$0xff] %vm376, %v5858
      %5895 = vst.msk [vmem:[#allocation3 + $0x108] sm:$0xff] %vm376, %v5859
      %5896 = vst.msk [vmem:[#allocation3 + $0x110] sm:$0xff] %vm376, %v5860
      %5897 = vst.msk [vmem:[#allocation3 + $0x118] sm:$0xff] %vm376, %v5861
      %5898 = vst.msk [vmem:[#allocation3 + $0x120] sm:$0xff] %vm376, %v5862
      %5899 = vst.msk [vmem:[#allocation3 + $0x128] sm:$0xff] %vm376, %v5863
      %5900 = vst.msk [vmem:[#allocation3 + $0x130] sm:$0xff] %vm376, %v5864
      %v5901 = vld [vmem:[#allocation3 + $0x5] sm:$0xff]
      %v5902 = vld [vmem:[#allocation3 + $0xd] sm:$0xff]
      %v5903 = vld [vmem:[#allocation3 + $0x15] sm:$0xff]
      %v5904 = vld [vmem:[#allocation3 + $0x1d] sm:$0xff]
      %v5905 = vld [vmem:[#allocation3 + $0x25] sm:$0xff]
      %v5906 = vld [vmem:[#allocation3 + $0x2d] sm:$0xff]
      %v5907 = vld [vmem:[#allocation3 + $0x35] sm:$0xff]
      %v5908 = vld [vmem:[#allocation3 + $0x3d] sm:$0xff]
      %v5909 = vld [vmem:[#allocation3 + $0x45] sm:$0xff]
      %v5910 = vld [vmem:[#allocation3 + $0x4d] sm:$0xff]
      %v5911 = vld [vmem:[#allocation3 + $0x55] sm:$0xff]
      %v5912 = vld [vmem:[#allocation3 + $0x5d] sm:$0xff]
      %v5913 = vld [vmem:[#allocation3 + $0x65] sm:$0xff]
      %v5914 = vld [vmem:[#allocation3 + $0x6d] sm:$0xff]
      %v5915 = vld [vmem:[#allocation3 + $0x75] sm:$0xff]
      %v5916 = vld [vmem:[#allocation3 + $0x7d] sm:$0xff]
      %v5917 = vld [vmem:[#allocation3 + $0x85] sm:$0xff]
      %v5918 = vld [vmem:[#allocation3 + $0x8d] sm:$0xff]
      %v5919 = vld [vmem:[#allocation3 + $0x95] sm:$0xff]
      %v5920 = vld [vmem:[#allocation3 + $0x9d] sm:$0xff]
      %v5921 = vld [vmem:[#allocation3 + $0xa5] sm:$0xff]
      %v5922 = vld [vmem:[#allocation3 + $0xad] sm:$0xff]
      %v5923 = vld [vmem:[#allocation3 + $0xb5] sm:$0xff]
      %v5924 = vld [vmem:[#allocation3 + $0xbd] sm:$0xff]
      %v5925 = vld [vmem:[#allocation3 + $0xc5] sm:$0xff]
      %v5926 = vld [vmem:[#allocation3 + $0xcd] sm:$0xff]
      %v5927 = vld [vmem:[#allocation3 + $0xd5] sm:$0xff]
      %v5928 = vld [vmem:[#allocation3 + $0xdd] sm:$0xff]
      %v5929 = vld [vmem:[#allocation3 + $0xe5] sm:$0xff]
      %v5930 = vld [vmem:[#allocation3 + $0xed] sm:$0xff]
      %v5931 = vld [vmem:[#allocation3 + $0xf5] sm:$0xff]
      %v5932 = vld [vmem:[#allocation3 + $0xfd] sm:$0xff]
      %v5933 = vld [vmem:[#allocation3 + $0x105] sm:$0xff]
      %v5934 = vld [vmem:[#allocation3 + $0x10d] sm:$0xff]
      %v5935 = vld [vmem:[#allocation3 + $0x115] sm:$0xff]
      %v5936 = vld [vmem:[#allocation3 + $0x11d] sm:$0xff]
      %s5937 = scalar_lea.vmem %s5, 72
      %v5938 = vld [vmem:[%s5937] sm:$0xff]
      %v5939 = vld [vmem:[#allocation3 + $0x6] sm:$0xff]
      %v5940 = vld [vmem:[#allocation3 + $0xe] sm:$0xff]
      %v5941 = vld [vmem:[#allocation3 + $0x16] sm:$0xff]
      %v5942 = vld [vmem:[#allocation3 + $0x1e] sm:$0xff]
      %v5943 = vld [vmem:[#allocation3 + $0x26] sm:$0xff]
      %v5944 = vld [vmem:[#allocation3 + $0x2e] sm:$0xff]
      %v5945 = vld [vmem:[#allocation3 + $0x36] sm:$0xff]
      %v5946 = vld [vmem:[#allocation3 + $0x3e] sm:$0xff]
      %v5947 = vld [vmem:[#allocation3 + $0x46] sm:$0xff]
      %v5948 = vld [vmem:[#allocation3 + $0x4e] sm:$0xff]
      %v5949 = vld [vmem:[#allocation3 + $0x56] sm:$0xff]
      %v5950 = vld [vmem:[#allocation3 + $0x5e] sm:$0xff]
      %v5951 = vld [vmem:[#allocation3 + $0x66] sm:$0xff]
      %v5952 = vld [vmem:[#allocation3 + $0x6e] sm:$0xff]
      %v5953 = vld [vmem:[#allocation3 + $0x76] sm:$0xff]
      %v5954 = vld [vmem:[#allocation3 + $0x7e] sm:$0xff]
      %v5955 = vld [vmem:[#allocation3 + $0x86] sm:$0xff]
      %v5956 = vld [vmem:[#allocation3 + $0x8e] sm:$0xff]
      %v5957 = vld [vmem:[#allocation3 + $0x96] sm:$0xff]
      %v5958 = vld [vmem:[#allocation3 + $0x9e] sm:$0xff]
      %v5959 = vld [vmem:[#allocation3 + $0xa6] sm:$0xff]
      %v5960 = vld [vmem:[#allocation3 + $0xae] sm:$0xff]
      %v5961 = vld [vmem:[#allocation3 + $0xb6] sm:$0xff]
      %v5962 = vld [vmem:[#allocation3 + $0xbe] sm:$0xff]
      %v5963 = vld [vmem:[#allocation3 + $0xc6] sm:$0xff]
      %v5964 = vld [vmem:[#allocation3 + $0xce] sm:$0xff]
      %v5965 = vld [vmem:[#allocation3 + $0xd6] sm:$0xff]
      %v5966 = vld [vmem:[#allocation3 + $0xde] sm:$0xff]
      %v5967 = vld [vmem:[#allocation3 + $0xe6] sm:$0xff]
      %v5968 = vld [vmem:[#allocation3 + $0xee] sm:$0xff]
      %v5969 = vld [vmem:[#allocation3 + $0xf6] sm:$0xff]
      %v5970 = vld [vmem:[#allocation3 + $0xfe] sm:$0xff]
      %v5971 = vld [vmem:[#allocation3 + $0x106] sm:$0xff]
      %v5972 = vld [vmem:[#allocation3 + $0x10e] sm:$0xff]
      %v5973 = vld [vmem:[#allocation3 + $0x116] sm:$0xff]
      %v5974 = vld [vmem:[#allocation3 + $0x11e] sm:$0xff]
      %s5975 = scalar_lea.vmem %s5, 80
      %v5976 = vld [vmem:[%s5975] sm:$0xff]
      %v5978 = vsel %vm376, %v5939, 0
      %v5981 = vsel %vm376, %v5940, 0
      %v5984 = vsel %vm376, %v5941, 0
      %v5987 = vsel %vm376, %v5942, 0
      %v5990 = vsel %vm376, %v5943, 0
      %v5993 = vsel %vm376, %v5944, 0
      %v5996 = vsel %vm376, %v5945, 0
      %v5999 = vsel %vm376, %v5946, 0
      %v6002 = vsel %vm376, %v5947, 0
      %v6005 = vsel %vm376, %v5948, 0
      %v6008 = vsel %vm376, %v5949, 0
      %v6011 = vsel %vm376, %v5950, 0
      %v6014 = vsel %vm376, %v5951, 0
      %v6017 = vsel %vm376, %v5952, 0
      %v6020 = vsel %vm376, %v5953, 0
      %v6023 = vsel %vm376, %v5954, 0
      %v6026 = vsel %vm376, %v5955, 0
      %v6029 = vsel %vm376, %v5956, 0
      %v6032 = vsel %vm376, %v5957, 0
      %v6035 = vsel %vm376, %v5958, 0
      %v6038 = vsel %vm376, %v5959, 0
      %v6041 = vsel %vm376, %v5960, 0
      %v6044 = vsel %vm376, %v5961, 0
      %v6047 = vsel %vm376, %v5962, 0
      %v6050 = vsel %vm376, %v5963, 0
      %v6053 = vsel %vm376, %v5964, 0
      %v6056 = vsel %vm376, %v5965, 0
      %v6059 = vsel %vm376, %v5966, 0
      %v6062 = vsel %vm376, %v5967, 0
      %v6065 = vsel %vm376, %v5968, 0
      %v6068 = vsel %vm376, %v5969, 0
      %v6071 = vsel %vm376, %v5970, 0
      %v6074 = vsel %vm376, %v5971, 0
      %v6077 = vsel %vm376, %v5972, 0
      %v6080 = vsel %vm376, %v5973, 0
      %v6083 = vsel %vm376, %v5974, 0
      %6085 = vmatprep.subr.mxu0 0.0
      %6086 = vmatpush1.msra.mxu0 %v5976
      %6087 = vmatprep.subr.mxu0 0.0
      %6088 = vmatpush1.msra.mxu0 0.0
      %6089 = vmatprep.subr.mxu0 0.0
      %6090 = vmatpush1.msra.mxu0 0.0
      %6091 = vmatprep.subr.mxu0 0.0
      %6092 = vmatpush1.msra.mxu0 0.0
      %6093 = vmatprep.subr.mxu0 0.0
      %6094 = vmatpush1.msra.mxu0 0.0
      %6095 = vmatprep.subr.mxu0 0.0
      %6096 = vmatpush1.msra.mxu0 0.0
      %6097 = vmatprep.subr.mxu0 0.0
      %6098 = vmatpush1.msra.mxu0 0.0
      %6099 = vmatprep.subr.mxu0 0.0
      %6100 = vmatpush1.msra.mxu0 0.0
      %6101 = vmatprep.subr.mxu0 0.0
      %6102 = vmatpush1.msra.mxu0 0.0
      %6103 = vmatprep.subr.mxu0 0.0
      %6104 = vmatpush1.msra.mxu0 0.0
      %6105 = vmatprep.subr.mxu0 0.0
      %6106 = vmatpush1.msra.mxu0 0.0
      %6107 = vmatprep.subr.mxu0 0.0
      %6108 = vmatpush1.msra.mxu0 0.0
      %6109 = vmatprep.subr.mxu0 0.0
      %6110 = vmatpush1.msra.mxu0 0.0
      %6111 = vmatprep.subr.mxu0 0.0
      %6112 = vmatpush1.msra.mxu0 0.0
      %6113 = vmatprep.subr.mxu0 0.0
      %6114 = vmatpush1.msra.mxu0 0.0
      %6115 = vmatprep.subr.mxu0 0.0
      %6116 = vmatpush1.msra.mxu0 0.0
      %6117 = vmatprep.subr.mxu0 0.0
      %6118 = vmatpush1.msra.mxu0 0.0
      %6119 = vmatprep.subr.mxu0 0.0
      %6120 = vmatpush1.msra.mxu0 0.0
      %6121 = vmatprep.subr.mxu0 0.0
      %6122 = vmatpush1.msra.mxu0 0.0
      %6123 = vmatprep.subr.mxu0 0.0
      %6124 = vmatpush1.msra.mxu0 0.0
      %6125 = vmatprep.subr.mxu0 0.0
      %6126 = vmatpush1.msra.mxu0 0.0
      %6127 = vmatprep.subr.mxu0 0.0
      %6128 = vmatpush1.msra.mxu0 0.0
      %6129 = vmatprep.subr.mxu0 0.0
      %6130 = vmatpush1.msra.mxu0 0.0
      %6131 = vmatprep.subr.mxu0 0.0
      %6132 = vmatpush1.msra.mxu0 0.0
      %6133 = vmatprep.subr.mxu0 0.0
      %6134 = vmatpush1.msra.mxu0 0.0
      %6135 = vmatprep.subr.mxu0 0.0
      %6136 = vmatpush1.msra.mxu0 0.0
      %6137 = vmatprep.subr.mxu0 0.0
      %6138 = vmatpush1.msra.mxu0 0.0
      %6139 = vmatprep.subr.mxu0 0.0
      %6140 = vmatpush1.msra.mxu0 0.0
      %6141 = vmatprep.subr.mxu0 0.0
      %6142 = vmatpush1.msra.mxu0 0.0
      %6143 = vmatprep.subr.mxu0 0.0
      %6144 = vmatpush1.msra.mxu0 0.0
      %6145 = vmatprep.subr.mxu0 0.0
      %6146 = vmatpush1.msra.mxu0 0.0
      %6147 = vmatprep.subr.mxu0 0.0
      %6148 = vmatpush1.msra.mxu0 0.0
      %6149 = vmatprep.mubr.f32.mxu0 0.0
      %6150 = vmatmul.mubr.f32.gmra.mrb[0].mxu0 %v5978
      %v6151 = vpop.f32.mrb[0].mxu0
      %v6152 = vadd.f32 0.0, %v6151
      %v6153 = vpop.f32.mrb[0].mxu0
      %6154 = vmatprep.mubr.f32.mxu0 0.0
      %6155 = vmatmul.mubr.f32.gmra.mrb[0].mxu0 %v5981
      %v6156 = vpop.f32.mrb[0].mxu0
      %v6157 = vadd.f32 0.0, %v6156
      %v6158 = vpop.f32.mrb[0].mxu0
      %6159 = vmatprep.mubr.f32.mxu0 0.0
      %6160 = vmatmul.mubr.f32.gmra.mrb[0].mxu0 %v5984
      %v6161 = vpop.f32.mrb[0].mxu0
      %v6162 = vadd.f32 0.0, %v6161
      %v6163 = vpop.f32.mrb[0].mxu0
      %6164 = vmatprep.mubr.f32.mxu0 0.0
      %6165 = vmatmul.mubr.f32.gmra.mrb[0].mxu0 %v5987
      %v6166 = vpop.f32.mrb[0].mxu0
      %v6167 = vadd.f32 0.0, %v6166
      %v6168 = vpop.f32.mrb[0].mxu0
      %6169 = vmatprep.mubr.f32.mxu0 0.0
      %6170 = vmatmul.mubr.f32.gmra.mrb[0].mxu0 %v5990
      %v6171 = vpop.f32.mrb[0].mxu0
      %v6172 = vadd.f32 0.0, %v6171
      %v6173 = vpop.f32.mrb[0].mxu0
      %6174 = vmatprep.mubr.f32.mxu0 0.0
      %6175 = vmatmul.mubr.f32.gmra.mrb[0].mxu0 %v5993
      %v6176 = vpop.f32.mrb[0].mxu0
      %v6177 = vadd.f32 0.0, %v6176
      %v6178 = vpop.f32.mrb[0].mxu0
      %6179 = vmatprep.mubr.f32.mxu0 0.0
      %6180 = vmatmul.mubr.f32.gmra.mrb[0].mxu0 %v5996
      %v6181 = vpop.f32.mrb[0].mxu0
      %v6182 = vadd.f32 0.0, %v6181
      %v6183 = vpop.f32.mrb[0].mxu0
      %6184 = vmatprep.mubr.f32.mxu0 0.0
      %6185 = vmatmul.mubr.f32.gmra.mrb[0].mxu0 %v5999
      %v6186 = vpop.f32.mrb[0].mxu0
      %v6187 = vadd.f32 0.0, %v6186
      %v6188 = vpop.f32.mrb[0].mxu0
      %6189 = vmatprep.mubr.f32.mxu0 0.0
      %6190 = vmatmul.mubr.f32.gmra.mrb[0].mxu0 %v6002
      %v6191 = vpop.f32.mrb[0].mxu0
      %v6192 = vadd.f32 0.0, %v6191
      %v6193 = vpop.f32.mrb[0].mxu0
      %6194 = vmatprep.mubr.f32.mxu0 0.0
      %6195 = vmatmul.mubr.f32.gmra.mrb[0].mxu0 %v6005
      %v6196 = vpop.f32.mrb[0].mxu0
      %v6197 = vadd.f32 0.0, %v6196
      %v6198 = vpop.f32.mrb[0].mxu0
      %6199 = vmatprep.mubr.f32.mxu0 0.0
      %6200 = vmatmul.mubr.f32.gmra.mrb[0].mxu0 %v6008
      %v6201 = vpop.f32.mrb[0].mxu0
      %v6202 = vadd.f32 0.0, %v6201
      %v6203 = vpop.f32.mrb[0].mxu0
      %6204 = vmatprep.mubr.f32.mxu0 0.0
      %6205 = vmatmul.mubr.f32.gmra.mrb[0].mxu0 %v6011
      %v6206 = vpop.f32.mrb[0].mxu0
      %v6207 = vadd.f32 0.0, %v6206
      %v6208 = vpop.f32.mrb[0].mxu0
      %6209 = vmatprep.mubr.f32.mxu0 0.0
      %6210 = vmatmul.mubr.f32.gmra.mrb[0].mxu0 %v6014
      %v6211 = vpop.f32.mrb[0].mxu0
      %v6212 = vadd.f32 0.0, %v6211
      %v6213 = vpop.f32.mrb[0].mxu0
      %6214 = vmatprep.mubr.f32.mxu0 0.0
      %6215 = vmatmul.mubr.f32.gmra.mrb[0].mxu0 %v6017
      %v6216 = vpop.f32.mrb[0].mxu0
      %v6217 = vadd.f32 0.0, %v6216
      %v6218 = vpop.f32.mrb[0].mxu0
      %6219 = vmatprep.mubr.f32.mxu0 0.0
      %6220 = vmatmul.mubr.f32.gmra.mrb[0].mxu0 %v6020
      %v6221 = vpop.f32.mrb[0].mxu0
      %v6222 = vadd.f32 0.0, %v6221
      %v6223 = vpop.f32.mrb[0].mxu0
      %6224 = vmatprep.mubr.f32.mxu0 0.0
      %6225 = vmatmul.mubr.f32.gmra.mrb[0].mxu0 %v6023
      %v6226 = vpop.f32.mrb[0].mxu0
      %v6227 = vadd.f32 0.0, %v6226
      %v6228 = vpop.f32.mrb[0].mxu0
      %6229 = vmatprep.mubr.f32.mxu0 0.0
      %6230 = vmatmul.mubr.f32.gmra.mrb[0].mxu0 %v6026
      %v6231 = vpop.f32.mrb[0].mxu0
      %v6232 = vadd.f32 0.0, %v6231
      %v6233 = vpop.f32.mrb[0].mxu0
      %6234 = vmatprep.mubr.f32.mxu0 0.0
      %6235 = vmatmul.mubr.f32.gmra.mrb[0].mxu0 %v6029
      %v6236 = vpop.f32.mrb[0].mxu0
      %v6237 = vadd.f32 0.0, %v6236
      %v6238 = vpop.f32.mrb[0].mxu0
      %6239 = vmatprep.mubr.f32.mxu0 0.0
      %6240 = vmatmul.mubr.f32.gmra.mrb[0].mxu0 %v6032
      %v6241 = vpop.f32.mrb[0].mxu0
      %v6242 = vadd.f32 0.0, %v6241
      %v6243 = vpop.f32.mrb[0].mxu0
      %6244 = vmatprep.mubr.f32.mxu0 0.0
      %6245 = vmatmul.mubr.f32.gmra.mrb[0].mxu0 %v6035
      %v6246 = vpop.f32.mrb[0].mxu0
      %v6247 = vadd.f32 0.0, %v6246
      %v6248 = vpop.f32.mrb[0].mxu0
      %6249 = vmatprep.mubr.f32.mxu0 0.0
      %6250 = vmatmul.mubr.f32.gmra.mrb[0].mxu0 %v6038
      %v6251 = vpop.f32.mrb[0].mxu0
      %v6252 = vadd.f32 0.0, %v6251
      %v6253 = vpop.f32.mrb[0].mxu0
      %6254 = vmatprep.mubr.f32.mxu0 0.0
      %6255 = vmatmul.mubr.f32.gmra.mrb[0].mxu0 %v6041
      %v6256 = vpop.f32.mrb[0].mxu0
      %v6257 = vadd.f32 0.0, %v6256
      %v6258 = vpop.f32.mrb[0].mxu0
      %6259 = vmatprep.mubr.f32.mxu0 0.0
      %6260 = vmatmul.mubr.f32.gmra.mrb[0].mxu0 %v6044
      %v6261 = vpop.f32.mrb[0].mxu0
      %v6262 = vadd.f32 0.0, %v6261
      %v6263 = vpop.f32.mrb[0].mxu0
      %6264 = vmatprep.mubr.f32.mxu0 0.0
      %6265 = vmatmul.mubr.f32.gmra.mrb[0].mxu0 %v6047
      %v6266 = vpop.f32.mrb[0].mxu0
      %v6267 = vadd.f32 0.0, %v6266
      %v6268 = vpop.f32.mrb[0].mxu0
      %6269 = vmatprep.mubr.f32.mxu0 0.0
      %6270 = vmatmul.mubr.f32.gmra.mrb[0].mxu0 %v6050
      %v6271 = vpop.f32.mrb[0].mxu0
      %v6272 = vadd.f32 0.0, %v6271
      %v6273 = vpop.f32.mrb[0].mxu0
      %6274 = vmatprep.mubr.f32.mxu0 0.0
      %6275 = vmatmul.mubr.f32.gmra.mrb[0].mxu0 %v6053
      %v6276 = vpop.f32.mrb[0].mxu0
      %v6277 = vadd.f32 0.0, %v6276
      %v6278 = vpop.f32.mrb[0].mxu0
      %6279 = vmatprep.mubr.f32.mxu0 0.0
      %6280 = vmatmul.mubr.f32.gmra.mrb[0].mxu0 %v6056
      %v6281 = vpop.f32.mrb[0].mxu0
      %v6282 = vadd.f32 0.0, %v6281
      %v6283 = vpop.f32.mrb[0].mxu0
      %6284 = vmatprep.mubr.f32.mxu0 0.0
      %6285 = vmatmul.mubr.f32.gmra.mrb[0].mxu0 %v6059
      %v6286 = vpop.f32.mrb[0].mxu0
      %v6287 = vadd.f32 0.0, %v6286
      %v6288 = vpop.f32.mrb[0].mxu0
      %6289 = vmatprep.mubr.f32.mxu0 0.0
      %6290 = vmatmul.mubr.f32.gmra.mrb[0].mxu0 %v6062
      %v6291 = vpop.f32.mrb[0].mxu0
      %v6292 = vadd.f32 0.0, %v6291
      %v6293 = vpop.f32.mrb[0].mxu0
      %6294 = vmatprep.mubr.f32.mxu0 0.0
      %6295 = vmatmul.mubr.f32.gmra.mrb[0].mxu0 %v6065
      %v6296 = vpop.f32.mrb[0].mxu0
      %v6297 = vadd.f32 0.0, %v6296
      %v6298 = vpop.f32.mrb[0].mxu0
      %6299 = vmatprep.mubr.f32.mxu0 0.0
      %6300 = vmatmul.mubr.f32.gmra.mrb[0].mxu0 %v6068
      %v6301 = vpop.f32.mrb[0].mxu0
      %v6302 = vadd.f32 0.0, %v6301
      %v6303 = vpop.f32.mrb[0].mxu0
      %6304 = vmatprep.mubr.f32.mxu0 0.0
      %6305 = vmatmul.mubr.f32.gmra.mrb[0].mxu0 %v6071
      %v6306 = vpop.f32.mrb[0].mxu0
      %v6307 = vadd.f32 0.0, %v6306
      %v6308 = vpop.f32.mrb[0].mxu0
      %6309 = vmatprep.mubr.f32.mxu0 0.0
      %6310 = vmatmul.mubr.f32.gmra.mrb[0].mxu0 %v6074
      %v6311 = vpop.f32.mrb[0].mxu0
      %v6312 = vadd.f32 0.0, %v6311
      %v6313 = vpop.f32.mrb[0].mxu0
      %6314 = vmatprep.mubr.f32.mxu0 0.0
      %6315 = vmatmul.mubr.f32.gmra.mrb[0].mxu0 %v6077
      %v6316 = vpop.f32.mrb[0].mxu0
      %v6317 = vadd.f32 0.0, %v6316
      %v6318 = vpop.f32.mrb[0].mxu0
      %6319 = vmatprep.mubr.f32.mxu0 0.0
      %6320 = vmatmul.mubr.f32.gmra.mrb[0].mxu0 %v6080
      %v6321 = vpop.f32.mrb[0].mxu0
      %v6322 = vadd.f32 0.0, %v6321
      %v6323 = vpop.f32.mrb[0].mxu0
      %6324 = vmatprep.mubr.f32.mxu0 0.0
      %6325 = vmatmul.mubr.f32.gmra.mrb[0].mxu0 %v6083
      %v6326 = vpop.f32.mrb[0].mxu0
      %v6327 = vadd.f32 0.0, %v6326
      %v6328 = vpop.f32.mrb[0].mxu0
      %6329 = vdwg.mxu0
      %v6331 = vsel %vm376, %v5901, 0
      %v6334 = vsel %vm376, %v5902, 0
      %v6337 = vsel %vm376, %v5903, 0
      %v6340 = vsel %vm376, %v5904, 0
      %v6343 = vsel %vm376, %v5905, 0
      %v6346 = vsel %vm376, %v5906, 0
      %v6349 = vsel %vm376, %v5907, 0
      %v6352 = vsel %vm376, %v5908, 0
      %v6355 = vsel %vm376, %v5909, 0
      %v6358 = vsel %vm376, %v5910, 0
      %v6361 = vsel %vm376, %v5911, 0
      %v6364 = vsel %vm376, %v5912, 0
      %v6367 = vsel %vm376, %v5913, 0
      %v6370 = vsel %vm376, %v5914, 0
      %v6373 = vsel %vm376, %v5915, 0
      %v6376 = vsel %vm376, %v5916, 0
      %v6379 = vsel %vm376, %v5917, 0
      %v6382 = vsel %vm376, %v5918, 0
      %v6385 = vsel %vm376, %v5919, 0
      %v6388 = vsel %vm376, %v5920, 0
      %v6391 = vsel %vm376, %v5921, 0
      %v6394 = vsel %vm376, %v5922, 0
      %v6397 = vsel %vm376, %v5923, 0
      %v6400 = vsel %vm376, %v5924, 0
      %v6403 = vsel %vm376, %v5925, 0
      %v6406 = vsel %vm376, %v5926, 0
      %v6409 = vsel %vm376, %v5927, 0
      %v6412 = vsel %vm376, %v5928, 0
      %v6415 = vsel %vm376, %v5929, 0
      %v6418 = vsel %vm376, %v5930, 0
      %v6421 = vsel %vm376, %v5931, 0
      %v6424 = vsel %vm376, %v5932, 0
      %v6427 = vsel %vm376, %v5933, 0
      %v6430 = vsel %vm376, %v5934, 0
      %v6433 = vsel %vm376, %v5935, 0
      %v6436 = vsel %vm376, %v5936, 0
      %6438 = vmatprep.subr.mxu0 0.0
      %6439 = vmatpush1.msra.mxu0 %v5938
      %6440 = vmatprep.subr.mxu0 0.0
      %6441 = vmatpush1.msra.mxu0 0.0
      %6442 = vmatprep.subr.mxu0 0.0
      %6443 = vmatpush1.msra.mxu0 0.0
      %6444 = vmatprep.subr.mxu0 0.0
      %6445 = vmatpush1.msra.mxu0 0.0
      %6446 = vmatprep.subr.mxu0 0.0
      %6447 = vmatpush1.msra.mxu0 0.0
      %6448 = vmatprep.subr.mxu0 0.0
      %6449 = vmatpush1.msra.mxu0 0.0
      %6450 = vmatprep.subr.mxu0 0.0
      %6451 = vmatpush1.msra.mxu0 0.0
      %6452 = vmatprep.subr.mxu0 0.0
      %6453 = vmatpush1.msra.mxu0 0.0
      %6454 = vmatprep.subr.mxu0 0.0
      %6455 = vmatpush1.msra.mxu0 0.0
      %6456 = vmatprep.subr.mxu0 0.0
      %6457 = vmatpush1.msra.mxu0 0.0
      %6458 = vmatprep.subr.mxu0 0.0
      %6459 = vmatpush1.msra.mxu0 0.0
      %6460 = vmatprep.subr.mxu0 0.0
      %6461 = vmatpush1.msra.mxu0 0.0
      %6462 = vmatprep.subr.mxu0 0.0
      %6463 = vmatpush1.msra.mxu0 0.0
      %6464 = vmatprep.subr.mxu0 0.0
      %6465 = vmatpush1.msra.mxu0 0.0
      %6466 = vmatprep.subr.mxu0 0.0
      %6467 = vmatpush1.msra.mxu0 0.0
      %6468 = vmatprep.subr.mxu0 0.0
      %6469 = vmatpush1.msra.mxu0 0.0
      %6470 = vmatprep.subr.mxu0 0.0
      %6471 = vmatpush1.msra.mxu0 0.0
      %6472 = vmatprep.subr.mxu0 0.0
      %6473 = vmatpush1.msra.mxu0 0.0
      %6474 = vmatprep.subr.mxu0 0.0
      %6475 = vmatpush1.msra.mxu0 0.0
      %6476 = vmatprep.subr.mxu0 0.0
      %6477 = vmatpush1.msra.mxu0 0.0
      %6478 = vmatprep.subr.mxu0 0.0
      %6479 = vmatpush1.msra.mxu0 0.0
      %6480 = vmatprep.subr.mxu0 0.0
      %6481 = vmatpush1.msra.mxu0 0.0
      %6482 = vmatprep.subr.mxu0 0.0
      %6483 = vmatpush1.msra.mxu0 0.0
      %6484 = vmatprep.subr.mxu0 0.0
      %6485 = vmatpush1.msra.mxu0 0.0
      %6486 = vmatprep.subr.mxu0 0.0
      %6487 = vmatpush1.msra.mxu0 0.0
      %6488 = vmatprep.subr.mxu0 0.0
      %6489 = vmatpush1.msra.mxu0 0.0
      %6490 = vmatprep.subr.mxu0 0.0
      %6491 = vmatpush1.msra.mxu0 0.0
      %6492 = vmatprep.subr.mxu0 0.0
      %6493 = vmatpush1.msra.mxu0 0.0
      %6494 = vmatprep.subr.mxu0 0.0
      %6495 = vmatpush1.msra.mxu0 0.0
      %6496 = vmatprep.subr.mxu0 0.0
      %6497 = vmatpush1.msra.mxu0 0.0
      %6498 = vmatprep.subr.mxu0 0.0
      %6499 = vmatpush1.msra.mxu0 0.0
      %6500 = vmatprep.subr.mxu0 0.0
      %6501 = vmatpush1.msra.mxu0 0.0
      %6502 = vmatprep.mubr.f32.mxu0 0.0
      %6503 = vmatmul.mubr.f32.gmra.mrb[0].mxu0 %v6331
      %v6504 = vpop.f32.mrb[0].mxu0
      %v6505 = vadd.f32 %v6152, %v6504
      %v6506 = vpop.f32.mrb[0].mxu0
      %6507 = vmatprep.mubr.f32.mxu0 0.0
      %6508 = vmatmul.mubr.f32.gmra.mrb[0].mxu0 %v6334
      %v6509 = vpop.f32.mrb[0].mxu0
      %v6510 = vadd.f32 %v6157, %v6509
      %v6511 = vpop.f32.mrb[0].mxu0
      %6512 = vmatprep.mubr.f32.mxu0 0.0
      %6513 = vmatmul.mubr.f32.gmra.mrb[0].mxu0 %v6337
      %v6514 = vpop.f32.mrb[0].mxu0
      %v6515 = vadd.f32 %v6162, %v6514
      %v6516 = vpop.f32.mrb[0].mxu0
      %6517 = vmatprep.mubr.f32.mxu0 0.0
      %6518 = vmatmul.mubr.f32.gmra.mrb[0].mxu0 %v6340
      %v6519 = vpop.f32.mrb[0].mxu0
      %v6520 = vadd.f32 %v6167, %v6519
      %v6521 = vpop.f32.mrb[0].mxu0
      %6522 = vmatprep.mubr.f32.mxu0 0.0
      %6523 = vmatmul.mubr.f32.gmra.mrb[0].mxu0 %v6343
      %v6524 = vpop.f32.mrb[0].mxu0
      %v6525 = vadd.f32 %v6172, %v6524
      %v6526 = vpop.f32.mrb[0].mxu0
      %6527 = vmatprep.mubr.f32.mxu0 0.0
      %6528 = vmatmul.mubr.f32.gmra.mrb[0].mxu0 %v6346
      %v6529 = vpop.f32.mrb[0].mxu0
      %v6530 = vadd.f32 %v6177, %v6529
      %v6531 = vpop.f32.mrb[0].mxu0
      %6532 = vmatprep.mubr.f32.mxu0 0.0
      %6533 = vmatmul.mubr.f32.gmra.mrb[0].mxu0 %v6349
      %v6534 = vpop.f32.mrb[0].mxu0
      %v6535 = vadd.f32 %v6182, %v6534
      %v6536 = vpop.f32.mrb[0].mxu0
      %6537 = vmatprep.mubr.f32.mxu0 0.0
      %6538 = vmatmul.mubr.f32.gmra.mrb[0].mxu0 %v6352
      %v6539 = vpop.f32.mrb[0].mxu0
      %v6540 = vadd.f32 %v6187, %v6539
      %v6541 = vpop.f32.mrb[0].mxu0
      %6542 = vmatprep.mubr.f32.mxu0 0.0
      %6543 = vmatmul.mubr.f32.gmra.mrb[0].mxu0 %v6355
      %v6544 = vpop.f32.mrb[0].mxu0
      %v6545 = vadd.f32 %v6192, %v6544
      %v6546 = vpop.f32.mrb[0].mxu0
      %6547 = vmatprep.mubr.f32.mxu0 0.0
      %6548 = vmatmul.mubr.f32.gmra.mrb[0].mxu0 %v6358
      %v6549 = vpop.f32.mrb[0].mxu0
      %v6550 = vadd.f32 %v6197, %v6549
      %v6551 = vpop.f32.mrb[0].mxu0
      %6552 = vmatprep.mubr.f32.mxu0 0.0
      %6553 = vmatmul.mubr.f32.gmra.mrb[0].mxu0 %v6361
      %v6554 = vpop.f32.mrb[0].mxu0
      %v6555 = vadd.f32 %v6202, %v6554
      %v6556 = vpop.f32.mrb[0].mxu0
      %6557 = vmatprep.mubr.f32.mxu0 0.0
      %6558 = vmatmul.mubr.f32.gmra.mrb[0].mxu0 %v6364
      %v6559 = vpop.f32.mrb[0].mxu0
      %v6560 = vadd.f32 %v6207, %v6559
      %v6561 = vpop.f32.mrb[0].mxu0
      %6562 = vmatprep.mubr.f32.mxu0 0.0
      %6563 = vmatmul.mubr.f32.gmra.mrb[0].mxu0 %v6367
      %v6564 = vpop.f32.mrb[0].mxu0
      %v6565 = vadd.f32 %v6212, %v6564
      %v6566 = vpop.f32.mrb[0].mxu0
      %6567 = vmatprep.mubr.f32.mxu0 0.0
      %6568 = vmatmul.mubr.f32.gmra.mrb[0].mxu0 %v6370
      %v6569 = vpop.f32.mrb[0].mxu0
      %v6570 = vadd.f32 %v6217, %v6569
      %v6571 = vpop.f32.mrb[0].mxu0
      %6572 = vmatprep.mubr.f32.mxu0 0.0
      %6573 = vmatmul.mubr.f32.gmra.mrb[0].mxu0 %v6373
      %v6574 = vpop.f32.mrb[0].mxu0
      %v6575 = vadd.f32 %v6222, %v6574
      %v6576 = vpop.f32.mrb[0].mxu0
      %6577 = vmatprep.mubr.f32.mxu0 0.0
      %6578 = vmatmul.mubr.f32.gmra.mrb[0].mxu0 %v6376
      %v6579 = vpop.f32.mrb[0].mxu0
      %v6580 = vadd.f32 %v6227, %v6579
      %v6581 = vpop.f32.mrb[0].mxu0
      %6582 = vmatprep.mubr.f32.mxu0 0.0
      %6583 = vmatmul.mubr.f32.gmra.mrb[0].mxu0 %v6379
      %v6584 = vpop.f32.mrb[0].mxu0
      %v6585 = vadd.f32 %v6232, %v6584
      %v6586 = vpop.f32.mrb[0].mxu0
      %6587 = vmatprep.mubr.f32.mxu0 0.0
      %6588 = vmatmul.mubr.f32.gmra.mrb[0].mxu0 %v6382
      %v6589 = vpop.f32.mrb[0].mxu0
      %v6590 = vadd.f32 %v6237, %v6589
      %v6591 = vpop.f32.mrb[0].mxu0
      %6592 = vmatprep.mubr.f32.mxu0 0.0
      %6593 = vmatmul.mubr.f32.gmra.mrb[0].mxu0 %v6385
      %v6594 = vpop.f32.mrb[0].mxu0
      %v6595 = vadd.f32 %v6242, %v6594
      %v6596 = vpop.f32.mrb[0].mxu0
      %6597 = vmatprep.mubr.f32.mxu0 0.0
      %6598 = vmatmul.mubr.f32.gmra.mrb[0].mxu0 %v6388
      %v6599 = vpop.f32.mrb[0].mxu0
      %v6600 = vadd.f32 %v6247, %v6599
      %v6601 = vpop.f32.mrb[0].mxu0
      %6602 = vmatprep.mubr.f32.mxu0 0.0
      %6603 = vmatmul.mubr.f32.gmra.mrb[0].mxu0 %v6391
      %v6604 = vpop.f32.mrb[0].mxu0
      %v6605 = vadd.f32 %v6252, %v6604
      %v6606 = vpop.f32.mrb[0].mxu0
      %6607 = vmatprep.mubr.f32.mxu0 0.0
      %6608 = vmatmul.mubr.f32.gmra.mrb[0].mxu0 %v6394
      %v6609 = vpop.f32.mrb[0].mxu0
      %v6610 = vadd.f32 %v6257, %v6609
      %v6611 = vpop.f32.mrb[0].mxu0
      %6612 = vmatprep.mubr.f32.mxu0 0.0
      %6613 = vmatmul.mubr.f32.gmra.mrb[0].mxu0 %v6397
      %v6614 = vpop.f32.mrb[0].mxu0
      %v6615 = vadd.f32 %v6262, %v6614
      %v6616 = vpop.f32.mrb[0].mxu0
      %6617 = vmatprep.mubr.f32.mxu0 0.0
      %6618 = vmatmul.mubr.f32.gmra.mrb[0].mxu0 %v6400
      %v6619 = vpop.f32.mrb[0].mxu0
      %v6620 = vadd.f32 %v6267, %v6619
      %v6621 = vpop.f32.mrb[0].mxu0
      %6622 = vmatprep.mubr.f32.mxu0 0.0
      %6623 = vmatmul.mubr.f32.gmra.mrb[0].mxu0 %v6403
      %v6624 = vpop.f32.mrb[0].mxu0
      %v6625 = vadd.f32 %v6272, %v6624
      %v6626 = vpop.f32.mrb[0].mxu0
      %6627 = vmatprep.mubr.f32.mxu0 0.0
      %6628 = vmatmul.mubr.f32.gmra.mrb[0].mxu0 %v6406
      %v6629 = vpop.f32.mrb[0].mxu0
      %v6630 = vadd.f32 %v6277, %v6629
      %v6631 = vpop.f32.mrb[0].mxu0
      %6632 = vmatprep.mubr.f32.mxu0 0.0
      %6633 = vmatmul.mubr.f32.gmra.mrb[0].mxu0 %v6409
      %v6634 = vpop.f32.mrb[0].mxu0
      %v6635 = vadd.f32 %v6282, %v6634
      %v6636 = vpop.f32.mrb[0].mxu0
      %6637 = vmatprep.mubr.f32.mxu0 0.0
      %6638 = vmatmul.mubr.f32.gmra.mrb[0].mxu0 %v6412
      %v6639 = vpop.f32.mrb[0].mxu0
      %v6640 = vadd.f32 %v6287, %v6639
      %v6641 = vpop.f32.mrb[0].mxu0
      %6642 = vmatprep.mubr.f32.mxu0 0.0
      %6643 = vmatmul.mubr.f32.gmra.mrb[0].mxu0 %v6415
      %v6644 = vpop.f32.mrb[0].mxu0
      %v6645 = vadd.f32 %v6292, %v6644
      %v6646 = vpop.f32.mrb[0].mxu0
      %6647 = vmatprep.mubr.f32.mxu0 0.0
      %6648 = vmatmul.mubr.f32.gmra.mrb[0].mxu0 %v6418
      %v6649 = vpop.f32.mrb[0].mxu0
      %v6650 = vadd.f32 %v6297, %v6649
      %v6651 = vpop.f32.mrb[0].mxu0
      %6652 = vmatprep.mubr.f32.mxu0 0.0
      %6653 = vmatmul.mubr.f32.gmra.mrb[0].mxu0 %v6421
      %v6654 = vpop.f32.mrb[0].mxu0
      %v6655 = vadd.f32 %v6302, %v6654
      %v6656 = vpop.f32.mrb[0].mxu0
      %6657 = vmatprep.mubr.f32.mxu0 0.0
      %6658 = vmatmul.mubr.f32.gmra.mrb[0].mxu0 %v6424
      %v6659 = vpop.f32.mrb[0].mxu0
      %v6660 = vadd.f32 %v6307, %v6659
      %v6661 = vpop.f32.mrb[0].mxu0
      %6662 = vmatprep.mubr.f32.mxu0 0.0
      %6663 = vmatmul.mubr.f32.gmra.mrb[0].mxu0 %v6427
      %v6664 = vpop.f32.mrb[0].mxu0
      %v6665 = vadd.f32 %v6312, %v6664
      %v6666 = vpop.f32.mrb[0].mxu0
      %6667 = vmatprep.mubr.f32.mxu0 0.0
      %6668 = vmatmul.mubr.f32.gmra.mrb[0].mxu0 %v6430
      %v6669 = vpop.f32.mrb[0].mxu0
      %v6670 = vadd.f32 %v6317, %v6669
      %v6671 = vpop.f32.mrb[0].mxu0
      %6672 = vmatprep.mubr.f32.mxu0 0.0
      %6673 = vmatmul.mubr.f32.gmra.mrb[0].mxu0 %v6433
      %v6674 = vpop.f32.mrb[0].mxu0
      %v6675 = vadd.f32 %v6322, %v6674
      %v6676 = vpop.f32.mrb[0].mxu0
      %6677 = vmatprep.mubr.f32.mxu0 0.0
      %6678 = vmatmul.mubr.f32.gmra.mrb[0].mxu0 %v6436
      %v6679 = vpop.f32.mrb[0].mxu0
      %v6680 = vadd.f32 %v6327, %v6679
      %v6681 = vpop.f32.mrb[0].mxu0
      %6682 = vdwg.mxu0
      %v6683 = vld [vmem:[#allocation3 + $0x7] sm:$0xff]
      %v6684 = vld [vmem:[#allocation3 + $0xf] sm:$0xff]
      %v6685 = vld [vmem:[#allocation3 + $0x17] sm:$0xff]
      %v6686 = vld [vmem:[#allocation3 + $0x1f] sm:$0xff]
      %v6687 = vld [vmem:[#allocation3 + $0x27] sm:$0xff]
      %v6688 = vld [vmem:[#allocation3 + $0x2f] sm:$0xff]
      %v6689 = vld [vmem:[#allocation3 + $0x37] sm:$0xff]
      %v6690 = vld [vmem:[#allocation3 + $0x3f] sm:$0xff]
      %v6691 = vld [vmem:[#allocation3 + $0x47] sm:$0xff]
      %v6692 = vld [vmem:[#allocation3 + $0x4f] sm:$0xff]
      %v6693 = vld [vmem:[#allocation3 + $0x57] sm:$0xff]
      %v6694 = vld [vmem:[#allocation3 + $0x5f] sm:$0xff]
      %v6695 = vld [vmem:[#allocation3 + $0x67] sm:$0xff]
      %v6696 = vld [vmem:[#allocation3 + $0x6f] sm:$0xff]
      %v6697 = vld [vmem:[#allocation3 + $0x77] sm:$0xff]
      %v6698 = vld [vmem:[#allocation3 + $0x7f] sm:$0xff]
      %v6699 = vld [vmem:[#allocation3 + $0x87] sm:$0xff]
      %v6700 = vld [vmem:[#allocation3 + $0x8f] sm:$0xff]
      %v6701 = vld [vmem:[#allocation3 + $0x97] sm:$0xff]
      %v6702 = vld [vmem:[#allocation3 + $0x9f] sm:$0xff]
      %v6703 = vld [vmem:[#allocation3 + $0xa7] sm:$0xff]
      %v6704 = vld [vmem:[#allocation3 + $0xaf] sm:$0xff]
      %v6705 = vld [vmem:[#allocation3 + $0xb7] sm:$0xff]
      %v6706 = vld [vmem:[#allocation3 + $0xbf] sm:$0xff]
      %v6707 = vld [vmem:[#allocation3 + $0xc7] sm:$0xff]
      %v6708 = vld [vmem:[#allocation3 + $0xcf] sm:$0xff]
      %v6709 = vld [vmem:[#allocation3 + $0xd7] sm:$0xff]
      %v6710 = vld [vmem:[#allocation3 + $0xdf] sm:$0xff]
      %v6711 = vld [vmem:[#allocation3 + $0xe7] sm:$0xff]
      %v6712 = vld [vmem:[#allocation3 + $0xef] sm:$0xff]
      %v6713 = vld [vmem:[#allocation3 + $0xf7] sm:$0xff]
      %v6714 = vld [vmem:[#allocation3 + $0xff] sm:$0xff]
      %v6715 = vld [vmem:[#allocation3 + $0x107] sm:$0xff]
      %v6716 = vld [vmem:[#allocation3 + $0x10f] sm:$0xff]
      %v6717 = vld [vmem:[#allocation3 + $0x117] sm:$0xff]
      %v6718 = vld [vmem:[#allocation3 + $0x11f] sm:$0xff]
      %s6719 = scalar_lea.vmem %s5, 88
      %v6720 = vld [vmem:[%s6719] sm:$0xff]
      %v6722 = vsel %vm376, %v6683, 0
      %v6725 = vsel %vm376, %v6684, 0
      %v6728 = vsel %vm376, %v6685, 0
      %v6731 = vsel %vm376, %v6686, 0
      %v6734 = vsel %vm376, %v6687, 0
      %v6737 = vsel %vm376, %v6688, 0
      %v6740 = vsel %vm376, %v6689, 0
      %v6743 = vsel %vm376, %v6690, 0
      %v6746 = vsel %vm376, %v6691, 0
      %v6749 = vsel %vm376, %v6692, 0
      %v6752 = vsel %vm376, %v6693, 0
      %v6755 = vsel %vm376, %v6694, 0
      %v6758 = vsel %vm376, %v6695, 0
      %v6761 = vsel %vm376, %v6696, 0
      %v6764 = vsel %vm376, %v6697, 0
      %v6767 = vsel %vm376, %v6698, 0
      %v6770 = vsel %vm376, %v6699, 0
      %v6773 = vsel %vm376, %v6700, 0
      %v6776 = vsel %vm376, %v6701, 0
      %v6779 = vsel %vm376, %v6702, 0
      %v6782 = vsel %vm376, %v6703, 0
      %v6785 = vsel %vm376, %v6704, 0
      %v6788 = vsel %vm376, %v6705, 0
      %v6791 = vsel %vm376, %v6706, 0
      %v6794 = vsel %vm376, %v6707, 0
      %v6797 = vsel %vm376, %v6708, 0
      %v6800 = vsel %vm376, %v6709, 0
      %v6803 = vsel %vm376, %v6710, 0
      %v6806 = vsel %vm376, %v6711, 0
      %v6809 = vsel %vm376, %v6712, 0
      %v6812 = vsel %vm376, %v6713, 0
      %v6815 = vsel %vm376, %v6714, 0
      %v6818 = vsel %vm376, %v6715, 0
      %v6821 = vsel %vm376, %v6716, 0
      %v6824 = vsel %vm376, %v6717, 0
      %v6827 = vsel %vm376, %v6718, 0
      %6829 = vmatprep.subr.mxu0 0.0
      %6830 = vmatpush1.msra.mxu0 %v6720
      %6831 = vmatprep.subr.mxu0 0.0
      %6832 = vmatpush1.msra.mxu0 0.0
      %6833 = vmatprep.subr.mxu0 0.0
      %6834 = vmatpush1.msra.mxu0 0.0
      %6835 = vmatprep.subr.mxu0 0.0
      %6836 = vmatpush1.msra.mxu0 0.0
      %6837 = vmatprep.subr.mxu0 0.0
      %6838 = vmatpush1.msra.mxu0 0.0
      %6839 = vmatprep.subr.mxu0 0.0
      %6840 = vmatpush1.msra.mxu0 0.0
      %6841 = vmatprep.subr.mxu0 0.0
      %6842 = vmatpush1.msra.mxu0 0.0
      %6843 = vmatprep.subr.mxu0 0.0
      %6844 = vmatpush1.msra.mxu0 0.0
      %6845 = vmatprep.subr.mxu0 0.0
      %6846 = vmatpush1.msra.mxu0 0.0
      %6847 = vmatprep.subr.mxu0 0.0
      %6848 = vmatpush1.msra.mxu0 0.0
      %6849 = vmatprep.subr.mxu0 0.0
      %6850 = vmatpush1.msra.mxu0 0.0
      %6851 = vmatprep.subr.mxu0 0.0
      %6852 = vmatpush1.msra.mxu0 0.0
      %6853 = vmatprep.subr.mxu0 0.0
      %6854 = vmatpush1.msra.mxu0 0.0
      %6855 = vmatprep.subr.mxu0 0.0
      %6856 = vmatpush1.msra.mxu0 0.0
      %6857 = vmatprep.subr.mxu0 0.0
      %6858 = vmatpush1.msra.mxu0 0.0
      %6859 = vmatprep.subr.mxu0 0.0
      %6860 = vmatpush1.msra.mxu0 0.0
      %6861 = vmatprep.subr.mxu0 0.0
      %6862 = vmatpush1.msra.mxu0 0.0
      %6863 = vmatprep.subr.mxu0 0.0
      %6864 = vmatpush1.msra.mxu0 0.0
      %6865 = vmatprep.subr.mxu0 0.0
      %6866 = vmatpush1.msra.mxu0 0.0
      %6867 = vmatprep.subr.mxu0 0.0
      %6868 = vmatpush1.msra.mxu0 0.0
      %6869 = vmatprep.subr.mxu0 0.0
      %6870 = vmatpush1.msra.mxu0 0.0
      %6871 = vmatprep.subr.mxu0 0.0
      %6872 = vmatpush1.msra.mxu0 0.0
      %6873 = vmatprep.subr.mxu0 0.0
      %6874 = vmatpush1.msra.mxu0 0.0
      %6875 = vmatprep.subr.mxu0 0.0
      %6876 = vmatpush1.msra.mxu0 0.0
      %6877 = vmatprep.subr.mxu0 0.0
      %6878 = vmatpush1.msra.mxu0 0.0
      %6879 = vmatprep.subr.mxu0 0.0
      %6880 = vmatpush1.msra.mxu0 0.0
      %6881 = vmatprep.subr.mxu0 0.0
      %6882 = vmatpush1.msra.mxu0 0.0
      %6883 = vmatprep.subr.mxu0 0.0
      %6884 = vmatpush1.msra.mxu0 0.0
      %6885 = vmatprep.subr.mxu0 0.0
      %6886 = vmatpush1.msra.mxu0 0.0
      %6887 = vmatprep.subr.mxu0 0.0
      %6888 = vmatpush1.msra.mxu0 0.0
      %6889 = vmatprep.subr.mxu0 0.0
      %6890 = vmatpush1.msra.mxu0 0.0
      %6891 = vmatprep.subr.mxu0 0.0
      %6892 = vmatpush1.msra.mxu0 0.0
      %6893 = vmatprep.mubr.f32.mxu0 0.0
      %6894 = vmatmul.mubr.f32.gmra.mrb[0].mxu0 %v6722
      %v6895 = vpop.f32.mrb[0].mxu0
      %v6896 = vadd.f32 0.0, %v6895
      %v6897 = vpop.f32.mrb[0].mxu0
      %6898 = vmatprep.mubr.f32.mxu0 0.0
      %6899 = vmatmul.mubr.f32.gmra.mrb[0].mxu0 %v6725
      %v6900 = vpop.f32.mrb[0].mxu0
      %v6901 = vadd.f32 0.0, %v6900
      %v6902 = vpop.f32.mrb[0].mxu0
      %6903 = vmatprep.mubr.f32.mxu0 0.0
      %6904 = vmatmul.mubr.f32.gmra.mrb[0].mxu0 %v6728
      %v6905 = vpop.f32.mrb[0].mxu0
      %v6906 = vadd.f32 0.0, %v6905
      %v6907 = vpop.f32.mrb[0].mxu0
      %6908 = vmatprep.mubr.f32.mxu0 0.0
      %6909 = vmatmul.mubr.f32.gmra.mrb[0].mxu0 %v6731
      %v6910 = vpop.f32.mrb[0].mxu0
      %v6911 = vadd.f32 0.0, %v6910
      %v6912 = vpop.f32.mrb[0].mxu0
      %6913 = vmatprep.mubr.f32.mxu0 0.0
      %6914 = vmatmul.mubr.f32.gmra.mrb[0].mxu0 %v6734
      %v6915 = vpop.f32.mrb[0].mxu0
      %v6916 = vadd.f32 0.0, %v6915
      %v6917 = vpop.f32.mrb[0].mxu0
      %6918 = vmatprep.mubr.f32.mxu0 0.0
      %6919 = vmatmul.mubr.f32.gmra.mrb[0].mxu0 %v6737
      %v6920 = vpop.f32.mrb[0].mxu0
      %v6921 = vadd.f32 0.0, %v6920
      %v6922 = vpop.f32.mrb[0].mxu0
      %6923 = vmatprep.mubr.f32.mxu0 0.0
      %6924 = vmatmul.mubr.f32.gmra.mrb[0].mxu0 %v6740
      %v6925 = vpop.f32.mrb[0].mxu0
      %v6926 = vadd.f32 0.0, %v6925
      %v6927 = vpop.f32.mrb[0].mxu0
      %6928 = vmatprep.mubr.f32.mxu0 0.0
      %6929 = vmatmul.mubr.f32.gmra.mrb[0].mxu0 %v6743
      %v6930 = vpop.f32.mrb[0].mxu0
      %v6931 = vadd.f32 0.0, %v6930
      %v6932 = vpop.f32.mrb[0].mxu0
      %6933 = vmatprep.mubr.f32.mxu0 0.0
      %6934 = vmatmul.mubr.f32.gmra.mrb[0].mxu0 %v6746
      %v6935 = vpop.f32.mrb[0].mxu0
      %v6936 = vadd.f32 0.0, %v6935
      %v6937 = vpop.f32.mrb[0].mxu0
      %6938 = vmatprep.mubr.f32.mxu0 0.0
      %6939 = vmatmul.mubr.f32.gmra.mrb[0].mxu0 %v6749
      %v6940 = vpop.f32.mrb[0].mxu0
      %v6941 = vadd.f32 0.0, %v6940
      %v6942 = vpop.f32.mrb[0].mxu0
      %6943 = vmatprep.mubr.f32.mxu0 0.0
      %6944 = vmatmul.mubr.f32.gmra.mrb[0].mxu0 %v6752
      %v6945 = vpop.f32.mrb[0].mxu0
      %v6946 = vadd.f32 0.0, %v6945
      %v6947 = vpop.f32.mrb[0].mxu0
      %6948 = vmatprep.mubr.f32.mxu0 0.0
      %6949 = vmatmul.mubr.f32.gmra.mrb[0].mxu0 %v6755
      %v6950 = vpop.f32.mrb[0].mxu0
      %v6951 = vadd.f32 0.0, %v6950
      %v6952 = vpop.f32.mrb[0].mxu0
      %6953 = vmatprep.mubr.f32.mxu0 0.0
      %6954 = vmatmul.mubr.f32.gmra.mrb[0].mxu0 %v6758
      %v6955 = vpop.f32.mrb[0].mxu0
      %v6956 = vadd.f32 0.0, %v6955
      %v6957 = vpop.f32.mrb[0].mxu0
      %6958 = vmatprep.mubr.f32.mxu0 0.0
      %6959 = vmatmul.mubr.f32.gmra.mrb[0].mxu0 %v6761
      %v6960 = vpop.f32.mrb[0].mxu0
      %v6961 = vadd.f32 0.0, %v6960
      %v6962 = vpop.f32.mrb[0].mxu0
      %6963 = vmatprep.mubr.f32.mxu0 0.0
      %6964 = vmatmul.mubr.f32.gmra.mrb[0].mxu0 %v6764
      %v6965 = vpop.f32.mrb[0].mxu0
      %v6966 = vadd.f32 0.0, %v6965
      %v6967 = vpop.f32.mrb[0].mxu0
      %6968 = vmatprep.mubr.f32.mxu0 0.0
      %6969 = vmatmul.mubr.f32.gmra.mrb[0].mxu0 %v6767
      %v6970 = vpop.f32.mrb[0].mxu0
      %v6971 = vadd.f32 0.0, %v6970
      %v6972 = vpop.f32.mrb[0].mxu0
      %6973 = vmatprep.mubr.f32.mxu0 0.0
      %6974 = vmatmul.mubr.f32.gmra.mrb[0].mxu0 %v6770
      %v6975 = vpop.f32.mrb[0].mxu0
      %v6976 = vadd.f32 0.0, %v6975
      %v6977 = vpop.f32.mrb[0].mxu0
      %6978 = vmatprep.mubr.f32.mxu0 0.0
      %6979 = vmatmul.mubr.f32.gmra.mrb[0].mxu0 %v6773
      %v6980 = vpop.f32.mrb[0].mxu0
      %v6981 = vadd.f32 0.0, %v6980
      %v6982 = vpop.f32.mrb[0].mxu0
      %6983 = vmatprep.mubr.f32.mxu0 0.0
      %6984 = vmatmul.mubr.f32.gmra.mrb[0].mxu0 %v6776
      %v6985 = vpop.f32.mrb[0].mxu0
      %v6986 = vadd.f32 0.0, %v6985
      %v6987 = vpop.f32.mrb[0].mxu0
      %6988 = vmatprep.mubr.f32.mxu0 0.0
      %6989 = vmatmul.mubr.f32.gmra.mrb[0].mxu0 %v6779
      %v6990 = vpop.f32.mrb[0].mxu0
      %v6991 = vadd.f32 0.0, %v6990
      %v6992 = vpop.f32.mrb[0].mxu0
      %6993 = vmatprep.mubr.f32.mxu0 0.0
      %6994 = vmatmul.mubr.f32.gmra.mrb[0].mxu0 %v6782
      %v6995 = vpop.f32.mrb[0].mxu0
      %v6996 = vadd.f32 0.0, %v6995
      %v6997 = vpop.f32.mrb[0].mxu0
      %6998 = vmatprep.mubr.f32.mxu0 0.0
      %6999 = vmatmul.mubr.f32.gmra.mrb[0].mxu0 %v6785
      %v7000 = vpop.f32.mrb[0].mxu0
      %v7001 = vadd.f32 0.0, %v7000
      %v7002 = vpop.f32.mrb[0].mxu0
      %7003 = vmatprep.mubr.f32.mxu0 0.0
      %7004 = vmatmul.mubr.f32.gmra.mrb[0].mxu0 %v6788
      %v7005 = vpop.f32.mrb[0].mxu0
      %v7006 = vadd.f32 0.0, %v7005
      %v7007 = vpop.f32.mrb[0].mxu0
      %7008 = vmatprep.mubr.f32.mxu0 0.0
      %7009 = vmatmul.mubr.f32.gmra.mrb[0].mxu0 %v6791
      %v7010 = vpop.f32.mrb[0].mxu0
      %v7011 = vadd.f32 0.0, %v7010
      %v7012 = vpop.f32.mrb[0].mxu0
      %7013 = vmatprep.mubr.f32.mxu0 0.0
      %7014 = vmatmul.mubr.f32.gmra.mrb[0].mxu0 %v6794
      %v7015 = vpop.f32.mrb[0].mxu0
      %v7016 = vadd.f32 0.0, %v7015
      %v7017 = vpop.f32.mrb[0].mxu0
      %7018 = vmatprep.mubr.f32.mxu0 0.0
      %7019 = vmatmul.mubr.f32.gmra.mrb[0].mxu0 %v6797
      %v7020 = vpop.f32.mrb[0].mxu0
      %v7021 = vadd.f32 0.0, %v7020
      %v7022 = vpop.f32.mrb[0].mxu0
      %7023 = vmatprep.mubr.f32.mxu0 0.0
      %7024 = vmatmul.mubr.f32.gmra.mrb[0].mxu0 %v6800
      %v7025 = vpop.f32.mrb[0].mxu0
      %v7026 = vadd.f32 0.0, %v7025
      %v7027 = vpop.f32.mrb[0].mxu0
      %7028 = vmatprep.mubr.f32.mxu0 0.0
      %7029 = vmatmul.mubr.f32.gmra.mrb[0].mxu0 %v6803
      %v7030 = vpop.f32.mrb[0].mxu0
      %v7031 = vadd.f32 0.0, %v7030
      %v7032 = vpop.f32.mrb[0].mxu0
      %7033 = vmatprep.mubr.f32.mxu0 0.0
      %7034 = vmatmul.mubr.f32.gmra.mrb[0].mxu0 %v6806
      %v7035 = vpop.f32.mrb[0].mxu0
      %v7036 = vadd.f32 0.0, %v7035
      %v7037 = vpop.f32.mrb[0].mxu0
      %7038 = vmatprep.mubr.f32.mxu0 0.0
      %7039 = vmatmul.mubr.f32.gmra.mrb[0].mxu0 %v6809
      %v7040 = vpop.f32.mrb[0].mxu0
      %v7041 = vadd.f32 0.0, %v7040
      %v7042 = vpop.f32.mrb[0].mxu0
      %7043 = vmatprep.mubr.f32.mxu0 0.0
      %7044 = vmatmul.mubr.f32.gmra.mrb[0].mxu0 %v6812
      %v7045 = vpop.f32.mrb[0].mxu0
      %v7046 = vadd.f32 0.0, %v7045
      %v7047 = vpop.f32.mrb[0].mxu0
      %7048 = vmatprep.mubr.f32.mxu0 0.0
      %7049 = vmatmul.mubr.f32.gmra.mrb[0].mxu0 %v6815
      %v7050 = vpop.f32.mrb[0].mxu0
      %v7051 = vadd.f32 0.0, %v7050
      %v7052 = vpop.f32.mrb[0].mxu0
      %7053 = vmatprep.mubr.f32.mxu0 0.0
      %7054 = vmatmul.mubr.f32.gmra.mrb[0].mxu0 %v6818
      %v7055 = vpop.f32.mrb[0].mxu0
      %v7056 = vadd.f32 0.0, %v7055
      %v7057 = vpop.f32.mrb[0].mxu0
      %7058 = vmatprep.mubr.f32.mxu0 0.0
      %7059 = vmatmul.mubr.f32.gmra.mrb[0].mxu0 %v6821
      %v7060 = vpop.f32.mrb[0].mxu0
      %v7061 = vadd.f32 0.0, %v7060
      %v7062 = vpop.f32.mrb[0].mxu0
      %7063 = vmatprep.mubr.f32.mxu0 0.0
      %7064 = vmatmul.mubr.f32.gmra.mrb[0].mxu0 %v6824
      %v7065 = vpop.f32.mrb[0].mxu0
      %v7066 = vadd.f32 0.0, %v7065
      %v7067 = vpop.f32.mrb[0].mxu0
      %7068 = vmatprep.mubr.f32.mxu0 0.0
      %7069 = vmatmul.mubr.f32.gmra.mrb[0].mxu0 %v6827
      %v7070 = vpop.f32.mrb[0].mxu0
      %v7071 = vadd.f32 0.0, %v7070
      %v7072 = vpop.f32.mrb[0].mxu0
      %7073 = vdwg.mxu0
      %v7074 = vadd.f32 %v6505, %v6896
      %v7075 = vadd.f32 %v6510, %v6901
      %v7076 = vadd.f32 %v6515, %v6906
      %v7077 = vadd.f32 %v6520, %v6911
      %v7078 = vadd.f32 %v6525, %v6916
      %v7079 = vadd.f32 %v6530, %v6921
      %v7080 = vadd.f32 %v6535, %v6926
      %v7081 = vadd.f32 %v6540, %v6931
      %v7082 = vadd.f32 %v6545, %v6936
      %v7083 = vadd.f32 %v6550, %v6941
      %v7084 = vadd.f32 %v6555, %v6946
      %v7085 = vadd.f32 %v6560, %v6951
      %v7086 = vadd.f32 %v6565, %v6956
      %v7087 = vadd.f32 %v6570, %v6961
      %v7088 = vadd.f32 %v6575, %v6966
      %v7089 = vadd.f32 %v6580, %v6971
      %v7090 = vadd.f32 %v6585, %v6976
      %v7091 = vadd.f32 %v6590, %v6981
      %v7092 = vadd.f32 %v6595, %v6986
      %v7093 = vadd.f32 %v6600, %v6991
      %v7094 = vadd.f32 %v6605, %v6996
      %v7095 = vadd.f32 %v6610, %v7001
      %v7096 = vadd.f32 %v6615, %v7006
      %v7097 = vadd.f32 %v6620, %v7011
      %v7098 = vadd.f32 %v6625, %v7016
      %v7099 = vadd.f32 %v6630, %v7021
      %v7100 = vadd.f32 %v6635, %v7026
      %v7101 = vadd.f32 %v6640, %v7031
      %v7102 = vadd.f32 %v6645, %v7036
      %v7103 = vadd.f32 %v6650, %v7041
      %v7104 = vadd.f32 %v6655, %v7046
      %v7105 = vadd.f32 %v6660, %v7051
      %v7106 = vadd.f32 %v6665, %v7056
      %v7107 = vadd.f32 %v6670, %v7061
      %v7108 = vadd.f32 %v6675, %v7066
      %v7109 = vadd.f32 %v6680, %v7071
      %v7110 = vld [vmem:[#allocation3 + $0x17] sm:$0xff]
      %v7111 = vld [vmem:[#allocation3 + $0x1f] sm:$0xff]
      %v7112 = vld [vmem:[#allocation3 + $0x27] sm:$0xff]
      %v7113 = vld [vmem:[#allocation3 + $0x2f] sm:$0xff]
      %v7114 = vld [vmem:[#allocation3 + $0x37] sm:$0xff]
      %v7115 = vld [vmem:[#allocation3 + $0x3f] sm:$0xff]
      %v7116 = vld [vmem:[#allocation3 + $0x47] sm:$0xff]
      %v7117 = vld [vmem:[#allocation3 + $0x4f] sm:$0xff]
      %v7118 = vld [vmem:[#allocation3 + $0x57] sm:$0xff]
      %v7119 = vld [vmem:[#allocation3 + $0x5f] sm:$0xff]
      %v7120 = vld [vmem:[#allocation3 + $0x67] sm:$0xff]
      %v7121 = vld [vmem:[#allocation3 + $0x6f] sm:$0xff]
      %v7122 = vld [vmem:[#allocation3 + $0x77] sm:$0xff]
      %v7123 = vld [vmem:[#allocation3 + $0x7f] sm:$0xff]
      %v7124 = vld [vmem:[#allocation3 + $0x87] sm:$0xff]
      %v7125 = vld [vmem:[#allocation3 + $0x8f] sm:$0xff]
      %v7126 = vld [vmem:[#allocation3 + $0x97] sm:$0xff]
      %v7127 = vld [vmem:[#allocation3 + $0x9f] sm:$0xff]
      %v7128 = vld [vmem:[#allocation3 + $0xa7] sm:$0xff]
      %v7129 = vld [vmem:[#allocation3 + $0xaf] sm:$0xff]
      %v7130 = vld [vmem:[#allocation3 + $0xb7] sm:$0xff]
      %v7131 = vld [vmem:[#allocation3 + $0xbf] sm:$0xff]
      %v7132 = vld [vmem:[#allocation3 + $0xc7] sm:$0xff]
      %v7133 = vld [vmem:[#allocation3 + $0xcf] sm:$0xff]
      %v7134 = vld [vmem:[#allocation3 + $0xd7] sm:$0xff]
      %v7135 = vld [vmem:[#allocation3 + $0xdf] sm:$0xff]
      %v7136 = vld [vmem:[#allocation3 + $0xe7] sm:$0xff]
      %v7137 = vld [vmem:[#allocation3 + $0xef] sm:$0xff]
      %v7138 = vld [vmem:[#allocation3 + $0xf7] sm:$0xff]
      %v7139 = vld [vmem:[#allocation3 + $0xff] sm:$0xff]
      %v7140 = vld [vmem:[#allocation3 + $0x107] sm:$0xff]
      %v7141 = vld [vmem:[#allocation3 + $0x10f] sm:$0xff]
      %v7142 = vld [vmem:[#allocation3 + $0x117] sm:$0xff]
      %v7143 = vld [vmem:[#allocation3 + $0x11f] sm:$0xff]
      %v7144 = vld [vmem:[#allocation3 + $0x127] sm:$0xff]
      %v7145 = vld [vmem:[#allocation3 + $0x12f] sm:$0xff]
      %s7146 = scalar_lea.vmem %s5, 96
      %v7147 = vld [vmem:[%s7146] sm:$0xff]
      %v7149 = vsel %vm376, %v7110, 0
      %v7152 = vsel %vm376, %v7111, 0
      %v7155 = vsel %vm376, %v7112, 0
      %v7158 = vsel %vm376, %v7113, 0
      %v7161 = vsel %vm376, %v7114, 0
      %v7164 = vsel %vm376, %v7115, 0
      %v7167 = vsel %vm376, %v7116, 0
      %v7170 = vsel %vm376, %v7117, 0
      %v7173 = vsel %vm376, %v7118, 0
      %v7176 = vsel %vm376, %v7119, 0
      %v7179 = vsel %vm376, %v7120, 0
      %v7182 = vsel %vm376, %v7121, 0
      %v7185 = vsel %vm376, %v7122, 0
      %v7188 = vsel %vm376, %v7123, 0
      %v7191 = vsel %vm376, %v7124, 0
      %v7194 = vsel %vm376, %v7125, 0
      %v7197 = vsel %vm376, %v7126, 0
      %v7200 = vsel %vm376, %v7127, 0
      %v7203 = vsel %vm376, %v7128, 0
      %v7206 = vsel %vm376, %v7129, 0
      %v7209 = vsel %vm376, %v7130, 0
      %v7212 = vsel %vm376, %v7131, 0
      %v7215 = vsel %vm376, %v7132, 0
      %v7218 = vsel %vm376, %v7133, 0
      %v7221 = vsel %vm376, %v7134, 0
      %v7224 = vsel %vm376, %v7135, 0
      %v7227 = vsel %vm376, %v7136, 0
      %v7230 = vsel %vm376, %v7137, 0
      %v7233 = vsel %vm376, %v7138, 0
      %v7236 = vsel %vm376, %v7139, 0
      %v7239 = vsel %vm376, %v7140, 0
      %v7242 = vsel %vm376, %v7141, 0
      %v7245 = vsel %vm376, %v7142, 0
      %v7248 = vsel %vm376, %v7143, 0
      %v7251 = vsel %vm376, %v7144, 0
      %v7254 = vsel %vm376, %v7145, 0
      %7256 = vmatprep.subr.mxu0 0.0
      %7257 = vmatpush1.msra.mxu0 %v7147
      %7258 = vmatprep.subr.mxu0 0.0
      %7259 = vmatpush1.msra.mxu0 0.0
      %7260 = vmatprep.subr.mxu0 0.0
      %7261 = vmatpush1.msra.mxu0 0.0
      %7262 = vmatprep.subr.mxu0 0.0
      %7263 = vmatpush1.msra.mxu0 0.0
      %7264 = vmatprep.subr.mxu0 0.0
      %7265 = vmatpush1.msra.mxu0 0.0
      %7266 = vmatprep.subr.mxu0 0.0
      %7267 = vmatpush1.msra.mxu0 0.0
      %7268 = vmatprep.subr.mxu0 0.0
      %7269 = vmatpush1.msra.mxu0 0.0
      %7270 = vmatprep.subr.mxu0 0.0
      %7271 = vmatpush1.msra.mxu0 0.0
      %7272 = vmatprep.subr.mxu0 0.0
      %7273 = vmatpush1.msra.mxu0 0.0
      %7274 = vmatprep.subr.mxu0 0.0
      %7275 = vmatpush1.msra.mxu0 0.0
      %7276 = vmatprep.subr.mxu0 0.0
      %7277 = vmatpush1.msra.mxu0 0.0
      %7278 = vmatprep.subr.mxu0 0.0
      %7279 = vmatpush1.msra.mxu0 0.0
      %7280 = vmatprep.subr.mxu0 0.0
      %7281 = vmatpush1.msra.mxu0 0.0
      %7282 = vmatprep.subr.mxu0 0.0
      %7283 = vmatpush1.msra.mxu0 0.0
      %7284 = vmatprep.subr.mxu0 0.0
      %7285 = vmatpush1.msra.mxu0 0.0
      %7286 = vmatprep.subr.mxu0 0.0
      %7287 = vmatpush1.msra.mxu0 0.0
      %7288 = vmatprep.subr.mxu0 0.0
      %7289 = vmatpush1.msra.mxu0 0.0
      %7290 = vmatprep.subr.mxu0 0.0
      %7291 = vmatpush1.msra.mxu0 0.0
      %7292 = vmatprep.subr.mxu0 0.0
      %7293 = vmatpush1.msra.mxu0 0.0
      %7294 = vmatprep.subr.mxu0 0.0
      %7295 = vmatpush1.msra.mxu0 0.0
      %7296 = vmatprep.subr.mxu0 0.0
      %7297 = vmatpush1.msra.mxu0 0.0
      %7298 = vmatprep.subr.mxu0 0.0
      %7299 = vmatpush1.msra.mxu0 0.0
      %7300 = vmatprep.subr.mxu0 0.0
      %7301 = vmatpush1.msra.mxu0 0.0
      %7302 = vmatprep.subr.mxu0 0.0
      %7303 = vmatpush1.msra.mxu0 0.0
      %7304 = vmatprep.subr.mxu0 0.0
      %7305 = vmatpush1.msra.mxu0 0.0
      %7306 = vmatprep.subr.mxu0 0.0
      %7307 = vmatpush1.msra.mxu0 0.0
      %7308 = vmatprep.subr.mxu0 0.0
      %7309 = vmatpush1.msra.mxu0 0.0
      %7310 = vmatprep.subr.mxu0 0.0
      %7311 = vmatpush1.msra.mxu0 0.0
      %7312 = vmatprep.subr.mxu0 0.0
      %7313 = vmatpush1.msra.mxu0 0.0
      %7314 = vmatprep.subr.mxu0 0.0
      %7315 = vmatpush1.msra.mxu0 0.0
      %7316 = vmatprep.subr.mxu0 0.0
      %7317 = vmatpush1.msra.mxu0 0.0
      %7318 = vmatprep.subr.mxu0 0.0
      %7319 = vmatpush1.msra.mxu0 0.0
      %7320 = vmatprep.mubr.f32.mxu0 0.0
      %7321 = vmatmul.mubr.f32.gmra.mrb[0].mxu0 %v7149
      %v7322 = vpop.f32.mrb[0].mxu0
      %v7323 = vadd.f32 0.0, %v7322
      %v7324 = vpop.f32.mrb[0].mxu0
      %7325 = vmatprep.mubr.f32.mxu0 0.0
      %7326 = vmatmul.mubr.f32.gmra.mrb[0].mxu0 %v7152
      %v7327 = vpop.f32.mrb[0].mxu0
      %v7328 = vadd.f32 0.0, %v7327
      %v7329 = vpop.f32.mrb[0].mxu0
      %7330 = vmatprep.mubr.f32.mxu0 0.0
      %7331 = vmatmul.mubr.f32.gmra.mrb[0].mxu0 %v7155
      %v7332 = vpop.f32.mrb[0].mxu0
      %v7333 = vadd.f32 0.0, %v7332
      %v7334 = vpop.f32.mrb[0].mxu0
      %7335 = vmatprep.mubr.f32.mxu0 0.0
      %7336 = vmatmul.mubr.f32.gmra.mrb[0].mxu0 %v7158
      %v7337 = vpop.f32.mrb[0].mxu0
      %v7338 = vadd.f32 0.0, %v7337
      %v7339 = vpop.f32.mrb[0].mxu0
      %7340 = vmatprep.mubr.f32.mxu0 0.0
      %7341 = vmatmul.mubr.f32.gmra.mrb[0].mxu0 %v7161
      %v7342 = vpop.f32.mrb[0].mxu0
      %v7343 = vadd.f32 0.0, %v7342
      %v7344 = vpop.f32.mrb[0].mxu0
      %7345 = vmatprep.mubr.f32.mxu0 0.0
      %7346 = vmatmul.mubr.f32.gmra.mrb[0].mxu0 %v7164
      %v7347 = vpop.f32.mrb[0].mxu0
      %v7348 = vadd.f32 0.0, %v7347
      %v7349 = vpop.f32.mrb[0].mxu0
      %7350 = vmatprep.mubr.f32.mxu0 0.0
      %7351 = vmatmul.mubr.f32.gmra.mrb[0].mxu0 %v7167
      %v7352 = vpop.f32.mrb[0].mxu0
      %v7353 = vadd.f32 0.0, %v7352
      %v7354 = vpop.f32.mrb[0].mxu0
      %7355 = vmatprep.mubr.f32.mxu0 0.0
      %7356 = vmatmul.mubr.f32.gmra.mrb[0].mxu0 %v7170
      %v7357 = vpop.f32.mrb[0].mxu0
      %v7358 = vadd.f32 0.0, %v7357
      %v7359 = vpop.f32.mrb[0].mxu0
      %7360 = vmatprep.mubr.f32.mxu0 0.0
      %7361 = vmatmul.mubr.f32.gmra.mrb[0].mxu0 %v7173
      %v7362 = vpop.f32.mrb[0].mxu0
      %v7363 = vadd.f32 0.0, %v7362
      %v7364 = vpop.f32.mrb[0].mxu0
      %7365 = vmatprep.mubr.f32.mxu0 0.0
      %7366 = vmatmul.mubr.f32.gmra.mrb[0].mxu0 %v7176
      %v7367 = vpop.f32.mrb[0].mxu0
      %v7368 = vadd.f32 0.0, %v7367
      %v7369 = vpop.f32.mrb[0].mxu0
      %7370 = vmatprep.mubr.f32.mxu0 0.0
      %7371 = vmatmul.mubr.f32.gmra.mrb[0].mxu0 %v7179
      %v7372 = vpop.f32.mrb[0].mxu0
      %v7373 = vadd.f32 0.0, %v7372
      %v7374 = vpop.f32.mrb[0].mxu0
      %7375 = vmatprep.mubr.f32.mxu0 0.0
      %7376 = vmatmul.mubr.f32.gmra.mrb[0].mxu0 %v7182
      %v7377 = vpop.f32.mrb[0].mxu0
      %v7378 = vadd.f32 0.0, %v7377
      %v7379 = vpop.f32.mrb[0].mxu0
      %7380 = vmatprep.mubr.f32.mxu0 0.0
      %7381 = vmatmul.mubr.f32.gmra.mrb[0].mxu0 %v7185
      %v7382 = vpop.f32.mrb[0].mxu0
      %v7383 = vadd.f32 0.0, %v7382
      %v7384 = vpop.f32.mrb[0].mxu0
      %7385 = vmatprep.mubr.f32.mxu0 0.0
      %7386 = vmatmul.mubr.f32.gmra.mrb[0].mxu0 %v7188
      %v7387 = vpop.f32.mrb[0].mxu0
      %v7388 = vadd.f32 0.0, %v7387
      %v7389 = vpop.f32.mrb[0].mxu0
      %7390 = vmatprep.mubr.f32.mxu0 0.0
      %7391 = vmatmul.mubr.f32.gmra.mrb[0].mxu0 %v7191
      %v7392 = vpop.f32.mrb[0].mxu0
      %v7393 = vadd.f32 0.0, %v7392
      %v7394 = vpop.f32.mrb[0].mxu0
      %7395 = vmatprep.mubr.f32.mxu0 0.0
      %7396 = vmatmul.mubr.f32.gmra.mrb[0].mxu0 %v7194
      %v7397 = vpop.f32.mrb[0].mxu0
      %v7398 = vadd.f32 0.0, %v7397
      %v7399 = vpop.f32.mrb[0].mxu0
      %7400 = vmatprep.mubr.f32.mxu0 0.0
      %7401 = vmatmul.mubr.f32.gmra.mrb[0].mxu0 %v7197
      %v7402 = vpop.f32.mrb[0].mxu0
      %v7403 = vadd.f32 0.0, %v7402
      %v7404 = vpop.f32.mrb[0].mxu0
      %7405 = vmatprep.mubr.f32.mxu0 0.0
      %7406 = vmatmul.mubr.f32.gmra.mrb[0].mxu0 %v7200
      %v7407 = vpop.f32.mrb[0].mxu0
      %v7408 = vadd.f32 0.0, %v7407
      %v7409 = vpop.f32.mrb[0].mxu0
      %7410 = vmatprep.mubr.f32.mxu0 0.0
      %7411 = vmatmul.mubr.f32.gmra.mrb[0].mxu0 %v7203
      %v7412 = vpop.f32.mrb[0].mxu0
      %v7413 = vadd.f32 0.0, %v7412
      %v7414 = vpop.f32.mrb[0].mxu0
      %7415 = vmatprep.mubr.f32.mxu0 0.0
      %7416 = vmatmul.mubr.f32.gmra.mrb[0].mxu0 %v7206
      %v7417 = vpop.f32.mrb[0].mxu0
      %v7418 = vadd.f32 0.0, %v7417
      %v7419 = vpop.f32.mrb[0].mxu0
      %7420 = vmatprep.mubr.f32.mxu0 0.0
      %7421 = vmatmul.mubr.f32.gmra.mrb[0].mxu0 %v7209
      %v7422 = vpop.f32.mrb[0].mxu0
      %v7423 = vadd.f32 0.0, %v7422
      %v7424 = vpop.f32.mrb[0].mxu0
      %7425 = vmatprep.mubr.f32.mxu0 0.0
      %7426 = vmatmul.mubr.f32.gmra.mrb[0].mxu0 %v7212
      %v7427 = vpop.f32.mrb[0].mxu0
      %v7428 = vadd.f32 0.0, %v7427
      %v7429 = vpop.f32.mrb[0].mxu0
      %7430 = vmatprep.mubr.f32.mxu0 0.0
      %7431 = vmatmul.mubr.f32.gmra.mrb[0].mxu0 %v7215
      %v7432 = vpop.f32.mrb[0].mxu0
      %v7433 = vadd.f32 0.0, %v7432
      %v7434 = vpop.f32.mrb[0].mxu0
      %7435 = vmatprep.mubr.f32.mxu0 0.0
      %7436 = vmatmul.mubr.f32.gmra.mrb[0].mxu0 %v7218
      %v7437 = vpop.f32.mrb[0].mxu0
      %v7438 = vadd.f32 0.0, %v7437
      %v7439 = vpop.f32.mrb[0].mxu0
      %7440 = vmatprep.mubr.f32.mxu0 0.0
      %7441 = vmatmul.mubr.f32.gmra.mrb[0].mxu0 %v7221
      %v7442 = vpop.f32.mrb[0].mxu0
      %v7443 = vadd.f32 0.0, %v7442
      %v7444 = vpop.f32.mrb[0].mxu0
      %7445 = vmatprep.mubr.f32.mxu0 0.0
      %7446 = vmatmul.mubr.f32.gmra.mrb[0].mxu0 %v7224
      %v7447 = vpop.f32.mrb[0].mxu0
      %v7448 = vadd.f32 0.0, %v7447
      %v7449 = vpop.f32.mrb[0].mxu0
      %7450 = vmatprep.mubr.f32.mxu0 0.0
      %7451 = vmatmul.mubr.f32.gmra.mrb[0].mxu0 %v7227
      %v7452 = vpop.f32.mrb[0].mxu0
      %v7453 = vadd.f32 0.0, %v7452
      %v7454 = vpop.f32.mrb[0].mxu0
      %7455 = vmatprep.mubr.f32.mxu0 0.0
      %7456 = vmatmul.mubr.f32.gmra.mrb[0].mxu0 %v7230
      %v7457 = vpop.f32.mrb[0].mxu0
      %v7458 = vadd.f32 0.0, %v7457
      %v7459 = vpop.f32.mrb[0].mxu0
      %7460 = vmatprep.mubr.f32.mxu0 0.0
      %7461 = vmatmul.mubr.f32.gmra.mrb[0].mxu0 %v7233
      %v7462 = vpop.f32.mrb[0].mxu0
      %v7463 = vadd.f32 0.0, %v7462
      %v7464 = vpop.f32.mrb[0].mxu0
      %7465 = vmatprep.mubr.f32.mxu0 0.0
      %7466 = vmatmul.mubr.f32.gmra.mrb[0].mxu0 %v7236
      %v7467 = vpop.f32.mrb[0].mxu0
      %v7468 = vadd.f32 0.0, %v7467
      %v7469 = vpop.f32.mrb[0].mxu0
      %7470 = vmatprep.mubr.f32.mxu0 0.0
      %7471 = vmatmul.mubr.f32.gmra.mrb[0].mxu0 %v7239
      %v7472 = vpop.f32.mrb[0].mxu0
      %v7473 = vadd.f32 0.0, %v7472
      %v7474 = vpop.f32.mrb[0].mxu0
      %7475 = vmatprep.mubr.f32.mxu0 0.0
      %7476 = vmatmul.mubr.f32.gmra.mrb[0].mxu0 %v7242
      %v7477 = vpop.f32.mrb[0].mxu0
      %v7478 = vadd.f32 0.0, %v7477
      %v7479 = vpop.f32.mrb[0].mxu0
      %7480 = vmatprep.mubr.f32.mxu0 0.0
      %7481 = vmatmul.mubr.f32.gmra.mrb[0].mxu0 %v7245
      %v7482 = vpop.f32.mrb[0].mxu0
      %v7483 = vadd.f32 0.0, %v7482
      %v7484 = vpop.f32.mrb[0].mxu0
      %7485 = vmatprep.mubr.f32.mxu0 0.0
      %7486 = vmatmul.mubr.f32.gmra.mrb[0].mxu0 %v7248
      %v7487 = vpop.f32.mrb[0].mxu0
      %v7488 = vadd.f32 0.0, %v7487
      %v7489 = vpop.f32.mrb[0].mxu0
      %7490 = vmatprep.mubr.f32.mxu0 0.0
      %7491 = vmatmul.mubr.f32.gmra.mrb[0].mxu0 %v7251
      %v7492 = vpop.f32.mrb[0].mxu0
      %v7493 = vadd.f32 0.0, %v7492
      %v7494 = vpop.f32.mrb[0].mxu0
      %7495 = vmatprep.mubr.f32.mxu0 0.0
      %7496 = vmatmul.mubr.f32.gmra.mrb[0].mxu0 %v7254
      %v7497 = vpop.f32.mrb[0].mxu0
      %v7498 = vadd.f32 0.0, %v7497
      %v7499 = vpop.f32.mrb[0].mxu0
      %7500 = vdwg.mxu0
      %v7501 = vadd.f32 %v7074, %v7323
      %v7502 = vadd.f32 %v7075, %v7328
      %v7503 = vadd.f32 %v7076, %v7333
      %v7504 = vadd.f32 %v7077, %v7338
      %v7505 = vadd.f32 %v7078, %v7343
      %v7506 = vadd.f32 %v7079, %v7348
      %v7507 = vadd.f32 %v7080, %v7353
      %v7508 = vadd.f32 %v7081, %v7358
      %v7509 = vadd.f32 %v7082, %v7363
      %v7510 = vadd.f32 %v7083, %v7368
      %v7511 = vadd.f32 %v7084, %v7373
      %v7512 = vadd.f32 %v7085, %v7378
      %v7513 = vadd.f32 %v7086, %v7383
      %v7514 = vadd.f32 %v7087, %v7388
      %v7515 = vadd.f32 %v7088, %v7393
      %v7516 = vadd.f32 %v7089, %v7398
      %v7517 = vadd.f32 %v7090, %v7403
      %v7518 = vadd.f32 %v7091, %v7408
      %v7519 = vadd.f32 %v7092, %v7413
      %v7520 = vadd.f32 %v7093, %v7418
      %v7521 = vadd.f32 %v7094, %v7423
      %v7522 = vadd.f32 %v7095, %v7428
      %v7523 = vadd.f32 %v7096, %v7433
      %v7524 = vadd.f32 %v7097, %v7438
      %v7525 = vadd.f32 %v7098, %v7443
      %v7526 = vadd.f32 %v7099, %v7448
      %v7527 = vadd.f32 %v7100, %v7453
      %v7528 = vadd.f32 %v7101, %v7458
      %v7529 = vadd.f32 %v7102, %v7463
      %v7530 = vadd.f32 %v7103, %v7468
      %v7531 = vadd.f32 %v7104, %v7473
      %v7532 = vadd.f32 %v7105, %v7478
      %v7533 = vadd.f32 %v7106, %v7483
      %v7534 = vadd.f32 %v7107, %v7488
      %v7535 = vadd.f32 %v7108, %v7493
      %v7536 = vadd.f32 %v7109, %v7498
      %v7537 = vld [vmem:[#allocation3 + $0x18] sm:$0xff]
      %v7538 = vld [vmem:[#allocation3 + $0x20] sm:$0xff]
      %v7539 = vld [vmem:[#allocation3 + $0x28] sm:$0xff]
      %v7540 = vld [vmem:[#allocation3 + $0x30] sm:$0xff]
      %v7541 = vld [vmem:[#allocation3 + $0x38] sm:$0xff]
      %v7542 = vld [vmem:[#allocation3 + $0x40] sm:$0xff]
      %v7543 = vld [vmem:[#allocation3 + $0x48] sm:$0xff]
      %v7544 = vld [vmem:[#allocation3 + $0x50] sm:$0xff]
      %v7545 = vld [vmem:[#allocation3 + $0x58] sm:$0xff]
      %v7546 = vld [vmem:[#allocation3 + $0x60] sm:$0xff]
      %v7547 = vld [vmem:[#allocation3 + $0x68] sm:$0xff]
      %v7548 = vld [vmem:[#allocation3 + $0x70] sm:$0xff]
      %v7549 = vld [vmem:[#allocation3 + $0x78] sm:$0xff]
      %v7550 = vld [vmem:[#allocation3 + $0x80] sm:$0xff]
      %v7551 = vld [vmem:[#allocation3 + $0x88] sm:$0xff]
      %v7552 = vld [vmem:[#allocation3 + $0x90] sm:$0xff]
      %v7553 = vld [vmem:[#allocation3 + $0x98] sm:$0xff]
      %v7554 = vld [vmem:[#allocation3 + $0xa0] sm:$0xff]
      %v7555 = vld [vmem:[#allocation3 + $0xa8] sm:$0xff]
      %v7556 = vld [vmem:[#allocation3 + $0xb0] sm:$0xff]
      %v7557 = vld [vmem:[#allocation3 + $0xb8] sm:$0xff]
      %v7558 = vld [vmem:[#allocation3 + $0xc0] sm:$0xff]
      %v7559 = vld [vmem:[#allocation3 + $0xc8] sm:$0xff]
      %v7560 = vld [vmem:[#allocation3 + $0xd0] sm:$0xff]
      %v7561 = vld [vmem:[#allocation3 + $0xd8] sm:$0xff]
      %v7562 = vld [vmem:[#allocation3 + $0xe0] sm:$0xff]
      %v7563 = vld [vmem:[#allocation3 + $0xe8] sm:$0xff]
      %v7564 = vld [vmem:[#allocation3 + $0xf0] sm:$0xff]
      %v7565 = vld [vmem:[#allocation3 + $0xf8] sm:$0xff]
      %v7566 = vld [vmem:[#allocation3 + $0x100] sm:$0xff]
      %v7567 = vld [vmem:[#allocation3 + $0x108] sm:$0xff]
      %v7568 = vld [vmem:[#allocation3 + $0x110] sm:$0xff]
      %v7569 = vld [vmem:[#allocation3 + $0x118] sm:$0xff]
      %v7570 = vld [vmem:[#allocation3 + $0x120] sm:$0xff]
      %v7571 = vld [vmem:[#allocation3 + $0x128] sm:$0xff]
      %v7572 = vld [vmem:[#allocation3 + $0x130] sm:$0xff]
      %s7573 = scalar_lea.vmem %s5, 104
      %v7574 = vld [vmem:[%s7573] sm:$0xff]
      %v7576 = vsel %vm376, %v7537, 0
      %v7579 = vsel %vm376, %v7538, 0
      %v7582 = vsel %vm376, %v7539, 0
      %v7585 = vsel %vm376, %v7540, 0
      %v7588 = vsel %vm376, %v7541, 0
      %v7591 = vsel %vm376, %v7542, 0
      %v7594 = vsel %vm376, %v7543, 0
      %v7597 = vsel %vm376, %v7544, 0
      %v7600 = vsel %vm376, %v7545, 0
      %v7603 = vsel %vm376, %v7546, 0
      %v7606 = vsel %vm376, %v7547, 0
      %v7609 = vsel %vm376, %v7548, 0
      %v7612 = vsel %vm376, %v7549, 0
      %v7615 = vsel %vm376, %v7550, 0
      %v7618 = vsel %vm376, %v7551, 0
      %v7621 = vsel %vm376, %v7552, 0
      %v7624 = vsel %vm376, %v7553, 0
      %v7627 = vsel %vm376, %v7554, 0
      %v7630 = vsel %vm376, %v7555, 0
      %v7633 = vsel %vm376, %v7556, 0
      %v7636 = vsel %vm376, %v7557, 0
      %v7639 = vsel %vm376, %v7558, 0
      %v7642 = vsel %vm376, %v7559, 0
      %v7645 = vsel %vm376, %v7560, 0
      %v7648 = vsel %vm376, %v7561, 0
      %v7651 = vsel %vm376, %v7562, 0
      %v7654 = vsel %vm376, %v7563, 0
      %v7657 = vsel %vm376, %v7564, 0
      %v7660 = vsel %vm376, %v7565, 0
      %v7663 = vsel %vm376, %v7566, 0
      %v7666 = vsel %vm376, %v7567, 0
      %v7669 = vsel %vm376, %v7568, 0
      %v7672 = vsel %vm376, %v7569, 0
      %v7675 = vsel %vm376, %v7570, 0
      %v7678 = vsel %vm376, %v7571, 0
      %v7681 = vsel %vm376, %v7572, 0
      %7683 = vmatprep.subr.mxu0 0.0
      %7684 = vmatpush1.msra.mxu0 %v7574
      %7685 = vmatprep.subr.mxu0 0.0
      %7686 = vmatpush1.msra.mxu0 0.0
      %7687 = vmatprep.subr.mxu0 0.0
      %7688 = vmatpush1.msra.mxu0 0.0
      %7689 = vmatprep.subr.mxu0 0.0
      %7690 = vmatpush1.msra.mxu0 0.0
      %7691 = vmatprep.subr.mxu0 0.0
      %7692 = vmatpush1.msra.mxu0 0.0
      %7693 = vmatprep.subr.mxu0 0.0
      %7694 = vmatpush1.msra.mxu0 0.0
      %7695 = vmatprep.subr.mxu0 0.0
      %7696 = vmatpush1.msra.mxu0 0.0
      %7697 = vmatprep.subr.mxu0 0.0
      %7698 = vmatpush1.msra.mxu0 0.0
      %7699 = vmatprep.subr.mxu0 0.0
      %7700 = vmatpush1.msra.mxu0 0.0
      %7701 = vmatprep.subr.mxu0 0.0
      %7702 = vmatpush1.msra.mxu0 0.0
      %7703 = vmatprep.subr.mxu0 0.0
      %7704 = vmatpush1.msra.mxu0 0.0
      %7705 = vmatprep.subr.mxu0 0.0
      %7706 = vmatpush1.msra.mxu0 0.0
      %7707 = vmatprep.subr.mxu0 0.0
      %7708 = vmatpush1.msra.mxu0 0.0
      %7709 = vmatprep.subr.mxu0 0.0
      %7710 = vmatpush1.msra.mxu0 0.0
      %7711 = vmatprep.subr.mxu0 0.0
      %7712 = vmatpush1.msra.mxu0 0.0
      %7713 = vmatprep.subr.mxu0 0.0
      %7714 = vmatpush1.msra.mxu0 0.0
      %7715 = vmatprep.subr.mxu0 0.0
      %7716 = vmatpush1.msra.mxu0 0.0
      %7717 = vmatprep.subr.mxu0 0.0
      %7718 = vmatpush1.msra.mxu0 0.0
      %7719 = vmatprep.subr.mxu0 0.0
      %7720 = vmatpush1.msra.mxu0 0.0
      %7721 = vmatprep.subr.mxu0 0.0
      %7722 = vmatpush1.msra.mxu0 0.0
      %7723 = vmatprep.subr.mxu0 0.0
      %7724 = vmatpush1.msra.mxu0 0.0
      %7725 = vmatprep.subr.mxu0 0.0
      %7726 = vmatpush1.msra.mxu0 0.0
      %7727 = vmatprep.subr.mxu0 0.0
      %7728 = vmatpush1.msra.mxu0 0.0
      %7729 = vmatprep.subr.mxu0 0.0
      %7730 = vmatpush1.msra.mxu0 0.0
      %7731 = vmatprep.subr.mxu0 0.0
      %7732 = vmatpush1.msra.mxu0 0.0
      %7733 = vmatprep.subr.mxu0 0.0
      %7734 = vmatpush1.msra.mxu0 0.0
      %7735 = vmatprep.subr.mxu0 0.0
      %7736 = vmatpush1.msra.mxu0 0.0
      %7737 = vmatprep.subr.mxu0 0.0
      %7738 = vmatpush1.msra.mxu0 0.0
      %7739 = vmatprep.subr.mxu0 0.0
      %7740 = vmatpush1.msra.mxu0 0.0
      %7741 = vmatprep.subr.mxu0 0.0
      %7742 = vmatpush1.msra.mxu0 0.0
      %7743 = vmatprep.subr.mxu0 0.0
      %7744 = vmatpush1.msra.mxu0 0.0
      %7745 = vmatprep.subr.mxu0 0.0
      %7746 = vmatpush1.msra.mxu0 0.0
      %7747 = vmatprep.mubr.f32.mxu0 0.0
      %7748 = vmatmul.mubr.f32.gmra.mrb[0].mxu0 %v7576
      %v7749 = vpop.f32.mrb[0].mxu0
      %v7750 = vadd.f32 0.0, %v7749
      %v7751 = vpop.f32.mrb[0].mxu0
      %7752 = vmatprep.mubr.f32.mxu0 0.0
      %7753 = vmatmul.mubr.f32.gmra.mrb[0].mxu0 %v7579
      %v7754 = vpop.f32.mrb[0].mxu0
      %v7755 = vadd.f32 0.0, %v7754
      %v7756 = vpop.f32.mrb[0].mxu0
      %7757 = vmatprep.mubr.f32.mxu0 0.0
      %7758 = vmatmul.mubr.f32.gmra.mrb[0].mxu0 %v7582
      %v7759 = vpop.f32.mrb[0].mxu0
      %v7760 = vadd.f32 0.0, %v7759
      %v7761 = vpop.f32.mrb[0].mxu0
      %7762 = vmatprep.mubr.f32.mxu0 0.0
      %7763 = vmatmul.mubr.f32.gmra.mrb[0].mxu0 %v7585
      %v7764 = vpop.f32.mrb[0].mxu0
      %v7765 = vadd.f32 0.0, %v7764
      %v7766 = vpop.f32.mrb[0].mxu0
      %7767 = vmatprep.mubr.f32.mxu0 0.0
      %7768 = vmatmul.mubr.f32.gmra.mrb[0].mxu0 %v7588
      %v7769 = vpop.f32.mrb[0].mxu0
      %v7770 = vadd.f32 0.0, %v7769
      %v7771 = vpop.f32.mrb[0].mxu0
      %7772 = vmatprep.mubr.f32.mxu0 0.0
      %7773 = vmatmul.mubr.f32.gmra.mrb[0].mxu0 %v7591
      %v7774 = vpop.f32.mrb[0].mxu0
      %v7775 = vadd.f32 0.0, %v7774
      %v7776 = vpop.f32.mrb[0].mxu0
      %7777 = vmatprep.mubr.f32.mxu0 0.0
      %7778 = vmatmul.mubr.f32.gmra.mrb[0].mxu0 %v7594
      %v7779 = vpop.f32.mrb[0].mxu0
      %v7780 = vadd.f32 0.0, %v7779
      %v7781 = vpop.f32.mrb[0].mxu0
      %7782 = vmatprep.mubr.f32.mxu0 0.0
      %7783 = vmatmul.mubr.f32.gmra.mrb[0].mxu0 %v7597
      %v7784 = vpop.f32.mrb[0].mxu0
      %v7785 = vadd.f32 0.0, %v7784
      %v7786 = vpop.f32.mrb[0].mxu0
      %7787 = vmatprep.mubr.f32.mxu0 0.0
      %7788 = vmatmul.mubr.f32.gmra.mrb[0].mxu0 %v7600
      %v7789 = vpop.f32.mrb[0].mxu0
      %v7790 = vadd.f32 0.0, %v7789
      %v7791 = vpop.f32.mrb[0].mxu0
      %7792 = vmatprep.mubr.f32.mxu0 0.0
      %7793 = vmatmul.mubr.f32.gmra.mrb[0].mxu0 %v7603
      %v7794 = vpop.f32.mrb[0].mxu0
      %v7795 = vadd.f32 0.0, %v7794
      %v7796 = vpop.f32.mrb[0].mxu0
      %7797 = vmatprep.mubr.f32.mxu0 0.0
      %7798 = vmatmul.mubr.f32.gmra.mrb[0].mxu0 %v7606
      %v7799 = vpop.f32.mrb[0].mxu0
      %v7800 = vadd.f32 0.0, %v7799
      %v7801 = vpop.f32.mrb[0].mxu0
      %7802 = vmatprep.mubr.f32.mxu0 0.0
      %7803 = vmatmul.mubr.f32.gmra.mrb[0].mxu0 %v7609
      %v7804 = vpop.f32.mrb[0].mxu0
      %v7805 = vadd.f32 0.0, %v7804
      %v7806 = vpop.f32.mrb[0].mxu0
      %7807 = vmatprep.mubr.f32.mxu0 0.0
      %7808 = vmatmul.mubr.f32.gmra.mrb[0].mxu0 %v7612
      %v7809 = vpop.f32.mrb[0].mxu0
      %v7810 = vadd.f32 0.0, %v7809
      %v7811 = vpop.f32.mrb[0].mxu0
      %7812 = vmatprep.mubr.f32.mxu0 0.0
      %7813 = vmatmul.mubr.f32.gmra.mrb[0].mxu0 %v7615
      %v7814 = vpop.f32.mrb[0].mxu0
      %v7815 = vadd.f32 0.0, %v7814
      %v7816 = vpop.f32.mrb[0].mxu0
      %7817 = vmatprep.mubr.f32.mxu0 0.0
      %7818 = vmatmul.mubr.f32.gmra.mrb[0].mxu0 %v7618
      %v7819 = vpop.f32.mrb[0].mxu0
      %v7820 = vadd.f32 0.0, %v7819
      %v7821 = vpop.f32.mrb[0].mxu0
      %7822 = vmatprep.mubr.f32.mxu0 0.0
      %7823 = vmatmul.mubr.f32.gmra.mrb[0].mxu0 %v7621
      %v7824 = vpop.f32.mrb[0].mxu0
      %v7825 = vadd.f32 0.0, %v7824
      %v7826 = vpop.f32.mrb[0].mxu0
      %7827 = vmatprep.mubr.f32.mxu0 0.0
      %7828 = vmatmul.mubr.f32.gmra.mrb[0].mxu0 %v7624
      %v7829 = vpop.f32.mrb[0].mxu0
      %v7830 = vadd.f32 0.0, %v7829
      %v7831 = vpop.f32.mrb[0].mxu0
      %7832 = vmatprep.mubr.f32.mxu0 0.0
      %7833 = vmatmul.mubr.f32.gmra.mrb[0].mxu0 %v7627
      %v7834 = vpop.f32.mrb[0].mxu0
      %v7835 = vadd.f32 0.0, %v7834
      %v7836 = vpop.f32.mrb[0].mxu0
      %7837 = vmatprep.mubr.f32.mxu0 0.0
      %7838 = vmatmul.mubr.f32.gmra.mrb[0].mxu0 %v7630
      %v7839 = vpop.f32.mrb[0].mxu0
      %v7840 = vadd.f32 0.0, %v7839
      %v7841 = vpop.f32.mrb[0].mxu0
      %7842 = vmatprep.mubr.f32.mxu0 0.0
      %7843 = vmatmul.mubr.f32.gmra.mrb[0].mxu0 %v7633
      %v7844 = vpop.f32.mrb[0].mxu0
      %v7845 = vadd.f32 0.0, %v7844
      %v7846 = vpop.f32.mrb[0].mxu0
      %7847 = vmatprep.mubr.f32.mxu0 0.0
      %7848 = vmatmul.mubr.f32.gmra.mrb[0].mxu0 %v7636
      %v7849 = vpop.f32.mrb[0].mxu0
      %v7850 = vadd.f32 0.0, %v7849
      %v7851 = vpop.f32.mrb[0].mxu0
      %7852 = vmatprep.mubr.f32.mxu0 0.0
      %7853 = vmatmul.mubr.f32.gmra.mrb[0].mxu0 %v7639
      %v7854 = vpop.f32.mrb[0].mxu0
      %v7855 = vadd.f32 0.0, %v7854
      %v7856 = vpop.f32.mrb[0].mxu0
      %7857 = vmatprep.mubr.f32.mxu0 0.0
      %7858 = vmatmul.mubr.f32.gmra.mrb[0].mxu0 %v7642
      %v7859 = vpop.f32.mrb[0].mxu0
      %v7860 = vadd.f32 0.0, %v7859
      %v7861 = vpop.f32.mrb[0].mxu0
      %7862 = vmatprep.mubr.f32.mxu0 0.0
      %7863 = vmatmul.mubr.f32.gmra.mrb[0].mxu0 %v7645
      %v7864 = vpop.f32.mrb[0].mxu0
      %v7865 = vadd.f32 0.0, %v7864
      %v7866 = vpop.f32.mrb[0].mxu0
      %7867 = vmatprep.mubr.f32.mxu0 0.0
      %7868 = vmatmul.mubr.f32.gmra.mrb[0].mxu0 %v7648
      %v7869 = vpop.f32.mrb[0].mxu0
      %v7870 = vadd.f32 0.0, %v7869
      %v7871 = vpop.f32.mrb[0].mxu0
      %7872 = vmatprep.mubr.f32.mxu0 0.0
      %7873 = vmatmul.mubr.f32.gmra.mrb[0].mxu0 %v7651
      %v7874 = vpop.f32.mrb[0].mxu0
      %v7875 = vadd.f32 0.0, %v7874
      %v7876 = vpop.f32.mrb[0].mxu0
      %7877 = vmatprep.mubr.f32.mxu0 0.0
      %7878 = vmatmul.mubr.f32.gmra.mrb[0].mxu0 %v7654
      %v7879 = vpop.f32.mrb[0].mxu0
      %v7880 = vadd.f32 0.0, %v7879
      %v7881 = vpop.f32.mrb[0].mxu0
      %7882 = vmatprep.mubr.f32.mxu0 0.0
      %7883 = vmatmul.mubr.f32.gmra.mrb[0].mxu0 %v7657
      %v7884 = vpop.f32.mrb[0].mxu0
      %v7885 = vadd.f32 0.0, %v7884
      %v7886 = vpop.f32.mrb[0].mxu0
      %7887 = vmatprep.mubr.f32.mxu0 0.0
      %7888 = vmatmul.mubr.f32.gmra.mrb[0].mxu0 %v7660
      %v7889 = vpop.f32.mrb[0].mxu0
      %v7890 = vadd.f32 0.0, %v7889
      %v7891 = vpop.f32.mrb[0].mxu0
      %7892 = vmatprep.mubr.f32.mxu0 0.0
      %7893 = vmatmul.mubr.f32.gmra.mrb[0].mxu0 %v7663
      %v7894 = vpop.f32.mrb[0].mxu0
      %v7895 = vadd.f32 0.0, %v7894
      %v7896 = vpop.f32.mrb[0].mxu0
      %7897 = vmatprep.mubr.f32.mxu0 0.0
      %7898 = vmatmul.mubr.f32.gmra.mrb[0].mxu0 %v7666
      %v7899 = vpop.f32.mrb[0].mxu0
      %v7900 = vadd.f32 0.0, %v7899
      %v7901 = vpop.f32.mrb[0].mxu0
      %7902 = vmatprep.mubr.f32.mxu0 0.0
      %7903 = vmatmul.mubr.f32.gmra.mrb[0].mxu0 %v7669
      %v7904 = vpop.f32.mrb[0].mxu0
      %v7905 = vadd.f32 0.0, %v7904
      %v7906 = vpop.f32.mrb[0].mxu0
      %7907 = vmatprep.mubr.f32.mxu0 0.0
      %7908 = vmatmul.mubr.f32.gmra.mrb[0].mxu0 %v7672
      %v7909 = vpop.f32.mrb[0].mxu0
      %v7910 = vadd.f32 0.0, %v7909
      %v7911 = vpop.f32.mrb[0].mxu0
      %7912 = vmatprep.mubr.f32.mxu0 0.0
      %7913 = vmatmul.mubr.f32.gmra.mrb[0].mxu0 %v7675
      %v7914 = vpop.f32.mrb[0].mxu0
      %v7915 = vadd.f32 0.0, %v7914
      %v7916 = vpop.f32.mrb[0].mxu0
      %7917 = vmatprep.mubr.f32.mxu0 0.0
      %7918 = vmatmul.mubr.f32.gmra.mrb[0].mxu0 %v7678
      %v7919 = vpop.f32.mrb[0].mxu0
      %v7920 = vadd.f32 0.0, %v7919
      %v7921 = vpop.f32.mrb[0].mxu0
      %7922 = vmatprep.mubr.f32.mxu0 0.0
      %7923 = vmatmul.mubr.f32.gmra.mrb[0].mxu0 %v7681
      %v7924 = vpop.f32.mrb[0].mxu0
      %v7925 = vadd.f32 0.0, %v7924
      %v7926 = vpop.f32.mrb[0].mxu0
      %7927 = vdwg.mxu0
      %v7928 = vadd.f32 %v7501, %v7750
      %v7929 = vadd.f32 %v7502, %v7755
      %v7930 = vadd.f32 %v7503, %v7760
      %v7931 = vadd.f32 %v7504, %v7765
      %v7932 = vadd.f32 %v7505, %v7770
      %v7933 = vadd.f32 %v7506, %v7775
      %v7934 = vadd.f32 %v7507, %v7780
      %v7935 = vadd.f32 %v7508, %v7785
      %v7936 = vadd.f32 %v7509, %v7790
      %v7937 = vadd.f32 %v7510, %v7795
      %v7938 = vadd.f32 %v7511, %v7800
      %v7939 = vadd.f32 %v7512, %v7805
      %v7940 = vadd.f32 %v7513, %v7810
      %v7941 = vadd.f32 %v7514, %v7815
      %v7942 = vadd.f32 %v7515, %v7820
      %v7943 = vadd.f32 %v7516, %v7825
      %v7944 = vadd.f32 %v7517, %v7830
      %v7945 = vadd.f32 %v7518, %v7835
      %v7946 = vadd.f32 %v7519, %v7840
      %v7947 = vadd.f32 %v7520, %v7845
      %v7948 = vadd.f32 %v7521, %v7850
      %v7949 = vadd.f32 %v7522, %v7855
      %v7950 = vadd.f32 %v7523, %v7860
      %v7951 = vadd.f32 %v7524, %v7865
      %v7952 = vadd.f32 %v7525, %v7870
      %v7953 = vadd.f32 %v7526, %v7875
      %v7954 = vadd.f32 %v7527, %v7880
      %v7955 = vadd.f32 %v7528, %v7885
      %v7956 = vadd.f32 %v7529, %v7890
      %v7957 = vadd.f32 %v7530, %v7895
      %v7958 = vadd.f32 %v7531, %v7900
      %v7959 = vadd.f32 %v7532, %v7905
      %v7960 = vadd.f32 %v7533, %v7910
      %v7961 = vadd.f32 %v7534, %v7915
      %v7962 = vadd.f32 %v7535, %v7920
      %v7963 = vadd.f32 %v7536, %v7925
      %v7964 = vld [vmem:[#allocation3 + $0x19] sm:$0xff]
      %v7965 = vld [vmem:[#allocation3 + $0x21] sm:$0xff]
      %v7966 = vld [vmem:[#allocation3 + $0x29] sm:$0xff]
      %v7967 = vld [vmem:[#allocation3 + $0x31] sm:$0xff]
      %v7968 = vld [vmem:[#allocation3 + $0x39] sm:$0xff]
      %v7969 = vld [vmem:[#allocation3 + $0x41] sm:$0xff]
      %v7970 = vld [vmem:[#allocation3 + $0x49] sm:$0xff]
      %v7971 = vld [vmem:[#allocation3 + $0x51] sm:$0xff]
      %v7972 = vld [vmem:[#allocation3 + $0x59] sm:$0xff]
      %v7973 = vld [vmem:[#allocation3 + $0x61] sm:$0xff]
      %v7974 = vld [vmem:[#allocation3 + $0x69] sm:$0xff]
      %v7975 = vld [vmem:[#allocation3 + $0x71] sm:$0xff]
      %v7976 = vld [vmem:[#allocation3 + $0x79] sm:$0xff]
      %v7977 = vld [vmem:[#allocation3 + $0x81] sm:$0xff]
      %v7978 = vld [vmem:[#allocation3 + $0x89] sm:$0xff]
      %v7979 = vld [vmem:[#allocation3 + $0x91] sm:$0xff]
      %v7980 = vld [vmem:[#allocation3 + $0x99] sm:$0xff]
      %v7981 = vld [vmem:[#allocation3 + $0xa1] sm:$0xff]
      %v7982 = vld [vmem:[#allocation3 + $0xa9] sm:$0xff]
      %v7983 = vld [vmem:[#allocation3 + $0xb1] sm:$0xff]
      %v7984 = vld [vmem:[#allocation3 + $0xb9] sm:$0xff]
      %v7985 = vld [vmem:[#allocation3 + $0xc1] sm:$0xff]
      %v7986 = vld [vmem:[#allocation3 + $0xc9] sm:$0xff]
      %v7987 = vld [vmem:[#allocation3 + $0xd1] sm:$0xff]
      %v7988 = vld [vmem:[#allocation3 + $0xd9] sm:$0xff]
      %v7989 = vld [vmem:[#allocation3 + $0xe1] sm:$0xff]
      %v7990 = vld [vmem:[#allocation3 + $0xe9] sm:$0xff]
      %v7991 = vld [vmem:[#allocation3 + $0xf1] sm:$0xff]
      %v7992 = vld [vmem:[#allocation3 + $0xf9] sm:$0xff]
      %v7993 = vld [vmem:[#allocation3 + $0x101] sm:$0xff]
      %v7994 = vld [vmem:[#allocation3 + $0x109] sm:$0xff]
      %v7995 = vld [vmem:[#allocation3 + $0x111] sm:$0xff]
      %v7996 = vld [vmem:[#allocation3 + $0x119] sm:$0xff]
      %v7997 = vld [vmem:[#allocation3 + $0x121] sm:$0xff]
      %v7998 = vld [vmem:[#allocation3 + $0x129] sm:$0xff]
      %v7999 = vld [vmem:[#allocation3 + $0x131] sm:$0xff]
      %s8000 = scalar_lea.vmem %s5, 112
      %v8001 = vld [vmem:[%s8000] sm:$0xff]
      %v8003 = vsel %vm376, %v7964, 0
      %v8006 = vsel %vm376, %v7965, 0
      %v8009 = vsel %vm376, %v7966, 0
      %v8012 = vsel %vm376, %v7967, 0
      %v8015 = vsel %vm376, %v7968, 0
      %v8018 = vsel %vm376, %v7969, 0
      %v8021 = vsel %vm376, %v7970, 0
      %v8024 = vsel %vm376, %v7971, 0
      %v8027 = vsel %vm376, %v7972, 0
      %v8030 = vsel %vm376, %v7973, 0
      %v8033 = vsel %vm376, %v7974, 0
      %v8036 = vsel %vm376, %v7975, 0
      %v8039 = vsel %vm376, %v7976, 0
      %v8042 = vsel %vm376, %v7977, 0
      %v8045 = vsel %vm376, %v7978, 0
      %v8048 = vsel %vm376, %v7979, 0
      %v8051 = vsel %vm376, %v7980, 0
      %v8054 = vsel %vm376, %v7981, 0
      %v8057 = vsel %vm376, %v7982, 0
      %v8060 = vsel %vm376, %v7983, 0
      %v8063 = vsel %vm376, %v7984, 0
      %v8066 = vsel %vm376, %v7985, 0
      %v8069 = vsel %vm376, %v7986, 0
      %v8072 = vsel %vm376, %v7987, 0
      %v8075 = vsel %vm376, %v7988, 0
      %v8078 = vsel %vm376, %v7989, 0
      %v8081 = vsel %vm376, %v7990, 0
      %v8084 = vsel %vm376, %v7991, 0
      %v8087 = vsel %vm376, %v7992, 0
      %v8090 = vsel %vm376, %v7993, 0
      %v8093 = vsel %vm376, %v7994, 0
      %v8096 = vsel %vm376, %v7995, 0
      %v8099 = vsel %vm376, %v7996, 0
      %v8102 = vsel %vm376, %v7997, 0
      %v8105 = vsel %vm376, %v7998, 0
      %v8108 = vsel %vm376, %v7999, 0
      %8110 = vmatprep.subr.mxu0 0.0
      %8111 = vmatpush1.msra.mxu0 %v8001
      %8112 = vmatprep.subr.mxu0 0.0
      %8113 = vmatpush1.msra.mxu0 0.0
      %8114 = vmatprep.subr.mxu0 0.0
      %8115 = vmatpush1.msra.mxu0 0.0
      %8116 = vmatprep.subr.mxu0 0.0
      %8117 = vmatpush1.msra.mxu0 0.0
      %8118 = vmatprep.subr.mxu0 0.0
      %8119 = vmatpush1.msra.mxu0 0.0
      %8120 = vmatprep.subr.mxu0 0.0
      %8121 = vmatpush1.msra.mxu0 0.0
      %8122 = vmatprep.subr.mxu0 0.0
      %8123 = vmatpush1.msra.mxu0 0.0
      %8124 = vmatprep.subr.mxu0 0.0
      %8125 = vmatpush1.msra.mxu0 0.0
      %8126 = vmatprep.subr.mxu0 0.0
      %8127 = vmatpush1.msra.mxu0 0.0
      %8128 = vmatprep.subr.mxu0 0.0
      %8129 = vmatpush1.msra.mxu0 0.0
      %8130 = vmatprep.subr.mxu0 0.0
      %8131 = vmatpush1.msra.mxu0 0.0
      %8132 = vmatprep.subr.mxu0 0.0
      %8133 = vmatpush1.msra.mxu0 0.0
      %8134 = vmatprep.subr.mxu0 0.0
      %8135 = vmatpush1.msra.mxu0 0.0
      %8136 = vmatprep.subr.mxu0 0.0
      %8137 = vmatpush1.msra.mxu0 0.0
      %8138 = vmatprep.subr.mxu0 0.0
      %8139 = vmatpush1.msra.mxu0 0.0
      %8140 = vmatprep.subr.mxu0 0.0
      %8141 = vmatpush1.msra.mxu0 0.0
      %8142 = vmatprep.subr.mxu0 0.0
      %8143 = vmatpush1.msra.mxu0 0.0
      %8144 = vmatprep.subr.mxu0 0.0
      %8145 = vmatpush1.msra.mxu0 0.0
      %8146 = vmatprep.subr.mxu0 0.0
      %8147 = vmatpush1.msra.mxu0 0.0
      %8148 = vmatprep.subr.mxu0 0.0
      %8149 = vmatpush1.msra.mxu0 0.0
      %8150 = vmatprep.subr.mxu0 0.0
      %8151 = vmatpush1.msra.mxu0 0.0
      %8152 = vmatprep.subr.mxu0 0.0
      %8153 = vmatpush1.msra.mxu0 0.0
      %8154 = vmatprep.subr.mxu0 0.0
      %8155 = vmatpush1.msra.mxu0 0.0
      %8156 = vmatprep.subr.mxu0 0.0
      %8157 = vmatpush1.msra.mxu0 0.0
      %8158 = vmatprep.subr.mxu0 0.0
      %8159 = vmatpush1.msra.mxu0 0.0
      %8160 = vmatprep.subr.mxu0 0.0
      %8161 = vmatpush1.msra.mxu0 0.0
      %8162 = vmatprep.subr.mxu0 0.0
      %8163 = vmatpush1.msra.mxu0 0.0
      %8164 = vmatprep.subr.mxu0 0.0
      %8165 = vmatpush1.msra.mxu0 0.0
      %8166 = vmatprep.subr.mxu0 0.0
      %8167 = vmatpush1.msra.mxu0 0.0
      %8168 = vmatprep.subr.mxu0 0.0
      %8169 = vmatpush1.msra.mxu0 0.0
      %8170 = vmatprep.subr.mxu0 0.0
      %8171 = vmatpush1.msra.mxu0 0.0
      %8172 = vmatprep.subr.mxu0 0.0
      %8173 = vmatpush1.msra.mxu0 0.0
      %8174 = vmatprep.mubr.f32.mxu0 0.0
      %8175 = vmatmul.mubr.f32.gmra.mrb[0].mxu0 %v8003
      %v8176 = vpop.f32.mrb[0].mxu0
      %v8177 = vadd.f32 0.0, %v8176
      %v8178 = vpop.f32.mrb[0].mxu0
      %8179 = vmatprep.mubr.f32.mxu0 0.0
      %8180 = vmatmul.mubr.f32.gmra.mrb[0].mxu0 %v8006
      %v8181 = vpop.f32.mrb[0].mxu0
      %v8182 = vadd.f32 0.0, %v8181
      %v8183 = vpop.f32.mrb[0].mxu0
      %8184 = vmatprep.mubr.f32.mxu0 0.0
      %8185 = vmatmul.mubr.f32.gmra.mrb[0].mxu0 %v8009
      %v8186 = vpop.f32.mrb[0].mxu0
      %v8187 = vadd.f32 0.0, %v8186
      %v8188 = vpop.f32.mrb[0].mxu0
      %8189 = vmatprep.mubr.f32.mxu0 0.0
      %8190 = vmatmul.mubr.f32.gmra.mrb[0].mxu0 %v8012
      %v8191 = vpop.f32.mrb[0].mxu0
      %v8192 = vadd.f32 0.0, %v8191
      %v8193 = vpop.f32.mrb[0].mxu0
      %8194 = vmatprep.mubr.f32.mxu0 0.0
      %8195 = vmatmul.mubr.f32.gmra.mrb[0].mxu0 %v8015
      %v8196 = vpop.f32.mrb[0].mxu0
      %v8197 = vadd.f32 0.0, %v8196
      %v8198 = vpop.f32.mrb[0].mxu0
      %8199 = vmatprep.mubr.f32.mxu0 0.0
      %8200 = vmatmul.mubr.f32.gmra.mrb[0].mxu0 %v8018
      %v8201 = vpop.f32.mrb[0].mxu0
      %v8202 = vadd.f32 0.0, %v8201
      %v8203 = vpop.f32.mrb[0].mxu0
      %8204 = vmatprep.mubr.f32.mxu0 0.0
      %8205 = vmatmul.mubr.f32.gmra.mrb[0].mxu0 %v8021
      %v8206 = vpop.f32.mrb[0].mxu0
      %v8207 = vadd.f32 0.0, %v8206
      %v8208 = vpop.f32.mrb[0].mxu0
      %8209 = vmatprep.mubr.f32.mxu0 0.0
      %8210 = vmatmul.mubr.f32.gmra.mrb[0].mxu0 %v8024
      %v8211 = vpop.f32.mrb[0].mxu0
      %v8212 = vadd.f32 0.0, %v8211
      %v8213 = vpop.f32.mrb[0].mxu0
      %8214 = vmatprep.mubr.f32.mxu0 0.0
      %8215 = vmatmul.mubr.f32.gmra.mrb[0].mxu0 %v8027
      %v8216 = vpop.f32.mrb[0].mxu0
      %v8217 = vadd.f32 0.0, %v8216
      %v8218 = vpop.f32.mrb[0].mxu0
      %8219 = vmatprep.mubr.f32.mxu0 0.0
      %8220 = vmatmul.mubr.f32.gmra.mrb[0].mxu0 %v8030
      %v8221 = vpop.f32.mrb[0].mxu0
      %v8222 = vadd.f32 0.0, %v8221
      %v8223 = vpop.f32.mrb[0].mxu0
      %8224 = vmatprep.mubr.f32.mxu0 0.0
      %8225 = vmatmul.mubr.f32.gmra.mrb[0].mxu0 %v8033
      %v8226 = vpop.f32.mrb[0].mxu0
      %v8227 = vadd.f32 0.0, %v8226
      %v8228 = vpop.f32.mrb[0].mxu0
      %8229 = vmatprep.mubr.f32.mxu0 0.0
      %8230 = vmatmul.mubr.f32.gmra.mrb[0].mxu0 %v8036
      %v8231 = vpop.f32.mrb[0].mxu0
      %v8232 = vadd.f32 0.0, %v8231
      %v8233 = vpop.f32.mrb[0].mxu0
      %8234 = vmatprep.mubr.f32.mxu0 0.0
      %8235 = vmatmul.mubr.f32.gmra.mrb[0].mxu0 %v8039
      %v8236 = vpop.f32.mrb[0].mxu0
      %v8237 = vadd.f32 0.0, %v8236
      %v8238 = vpop.f32.mrb[0].mxu0
      %8239 = vmatprep.mubr.f32.mxu0 0.0
      %8240 = vmatmul.mubr.f32.gmra.mrb[0].mxu0 %v8042
      %v8241 = vpop.f32.mrb[0].mxu0
      %v8242 = vadd.f32 0.0, %v8241
      %v8243 = vpop.f32.mrb[0].mxu0
      %8244 = vmatprep.mubr.f32.mxu0 0.0
      %8245 = vmatmul.mubr.f32.gmra.mrb[0].mxu0 %v8045
      %v8246 = vpop.f32.mrb[0].mxu0
      %v8247 = vadd.f32 0.0, %v8246
      %v8248 = vpop.f32.mrb[0].mxu0
      %8249 = vmatprep.mubr.f32.mxu0 0.0
      %8250 = vmatmul.mubr.f32.gmra.mrb[0].mxu0 %v8048
      %v8251 = vpop.f32.mrb[0].mxu0
      %v8252 = vadd.f32 0.0, %v8251
      %v8253 = vpop.f32.mrb[0].mxu0
      %8254 = vmatprep.mubr.f32.mxu0 0.0
      %8255 = vmatmul.mubr.f32.gmra.mrb[0].mxu0 %v8051
      %v8256 = vpop.f32.mrb[0].mxu0
      %v8257 = vadd.f32 0.0, %v8256
      %v8258 = vpop.f32.mrb[0].mxu0
      %8259 = vmatprep.mubr.f32.mxu0 0.0
      %8260 = vmatmul.mubr.f32.gmra.mrb[0].mxu0 %v8054
      %v8261 = vpop.f32.mrb[0].mxu0
      %v8262 = vadd.f32 0.0, %v8261
      %v8263 = vpop.f32.mrb[0].mxu0
      %8264 = vmatprep.mubr.f32.mxu0 0.0
      %8265 = vmatmul.mubr.f32.gmra.mrb[0].mxu0 %v8057
      %v8266 = vpop.f32.mrb[0].mxu0
      %v8267 = vadd.f32 0.0, %v8266
      %v8268 = vpop.f32.mrb[0].mxu0
      %8269 = vmatprep.mubr.f32.mxu0 0.0
      %8270 = vmatmul.mubr.f32.gmra.mrb[0].mxu0 %v8060
      %v8271 = vpop.f32.mrb[0].mxu0
      %v8272 = vadd.f32 0.0, %v8271
      %v8273 = vpop.f32.mrb[0].mxu0
      %8274 = vmatprep.mubr.f32.mxu0 0.0
      %8275 = vmatmul.mubr.f32.gmra.mrb[0].mxu0 %v8063
      %v8276 = vpop.f32.mrb[0].mxu0
      %v8277 = vadd.f32 0.0, %v8276
      %v8278 = vpop.f32.mrb[0].mxu0
      %8279 = vmatprep.mubr.f32.mxu0 0.0
      %8280 = vmatmul.mubr.f32.gmra.mrb[0].mxu0 %v8066
      %v8281 = vpop.f32.mrb[0].mxu0
      %v8282 = vadd.f32 0.0, %v8281
      %v8283 = vpop.f32.mrb[0].mxu0
      %8284 = vmatprep.mubr.f32.mxu0 0.0
      %8285 = vmatmul.mubr.f32.gmra.mrb[0].mxu0 %v8069
      %v8286 = vpop.f32.mrb[0].mxu0
      %v8287 = vadd.f32 0.0, %v8286
      %v8288 = vpop.f32.mrb[0].mxu0
      %8289 = vmatprep.mubr.f32.mxu0 0.0
      %8290 = vmatmul.mubr.f32.gmra.mrb[0].mxu0 %v8072
      %v8291 = vpop.f32.mrb[0].mxu0
      %v8292 = vadd.f32 0.0, %v8291
      %v8293 = vpop.f32.mrb[0].mxu0
      %8294 = vmatprep.mubr.f32.mxu0 0.0
      %8295 = vmatmul.mubr.f32.gmra.mrb[0].mxu0 %v8075
      %v8296 = vpop.f32.mrb[0].mxu0
      %v8297 = vadd.f32 0.0, %v8296
      %v8298 = vpop.f32.mrb[0].mxu0
      %8299 = vmatprep.mubr.f32.mxu0 0.0
      %8300 = vmatmul.mubr.f32.gmra.mrb[0].mxu0 %v8078
      %v8301 = vpop.f32.mrb[0].mxu0
      %v8302 = vadd.f32 0.0, %v8301
      %v8303 = vpop.f32.mrb[0].mxu0
      %8304 = vmatprep.mubr.f32.mxu0 0.0
      %8305 = vmatmul.mubr.f32.gmra.mrb[0].mxu0 %v8081
      %v8306 = vpop.f32.mrb[0].mxu0
      %v8307 = vadd.f32 0.0, %v8306
      %v8308 = vpop.f32.mrb[0].mxu0
      %8309 = vmatprep.mubr.f32.mxu0 0.0
      %8310 = vmatmul.mubr.f32.gmra.mrb[0].mxu0 %v8084
      %v8311 = vpop.f32.mrb[0].mxu0
      %v8312 = vadd.f32 0.0, %v8311
      %v8313 = vpop.f32.mrb[0].mxu0
      %8314 = vmatprep.mubr.f32.mxu0 0.0
      %8315 = vmatmul.mubr.f32.gmra.mrb[0].mxu0 %v8087
      %v8316 = vpop.f32.mrb[0].mxu0
      %v8317 = vadd.f32 0.0, %v8316
      %v8318 = vpop.f32.mrb[0].mxu0
      %8319 = vmatprep.mubr.f32.mxu0 0.0
      %8320 = vmatmul.mubr.f32.gmra.mrb[0].mxu0 %v8090
      %v8321 = vpop.f32.mrb[0].mxu0
      %v8322 = vadd.f32 0.0, %v8321
      %v8323 = vpop.f32.mrb[0].mxu0
      %8324 = vmatprep.mubr.f32.mxu0 0.0
      %8325 = vmatmul.mubr.f32.gmra.mrb[0].mxu0 %v8093
      %v8326 = vpop.f32.mrb[0].mxu0
      %v8327 = vadd.f32 0.0, %v8326
      %v8328 = vpop.f32.mrb[0].mxu0
      %8329 = vmatprep.mubr.f32.mxu0 0.0
      %8330 = vmatmul.mubr.f32.gmra.mrb[0].mxu0 %v8096
      %v8331 = vpop.f32.mrb[0].mxu0
      %v8332 = vadd.f32 0.0, %v8331
      %v8333 = vpop.f32.mrb[0].mxu0
      %8334 = vmatprep.mubr.f32.mxu0 0.0
      %8335 = vmatmul.mubr.f32.gmra.mrb[0].mxu0 %v8099
      %v8336 = vpop.f32.mrb[0].mxu0
      %v8337 = vadd.f32 0.0, %v8336
      %v8338 = vpop.f32.mrb[0].mxu0
      %8339 = vmatprep.mubr.f32.mxu0 0.0
      %8340 = vmatmul.mubr.f32.gmra.mrb[0].mxu0 %v8102
      %v8341 = vpop.f32.mrb[0].mxu0
      %v8342 = vadd.f32 0.0, %v8341
      %v8343 = vpop.f32.mrb[0].mxu0
      %8344 = vmatprep.mubr.f32.mxu0 0.0
      %8345 = vmatmul.mubr.f32.gmra.mrb[0].mxu0 %v8105
      %v8346 = vpop.f32.mrb[0].mxu0
      %v8347 = vadd.f32 0.0, %v8346
      %v8348 = vpop.f32.mrb[0].mxu0
      %8349 = vmatprep.mubr.f32.mxu0 0.0
      %8350 = vmatmul.mubr.f32.gmra.mrb[0].mxu0 %v8108
      %v8351 = vpop.f32.mrb[0].mxu0
      %v8352 = vadd.f32 0.0, %v8351
      %v8353 = vpop.f32.mrb[0].mxu0
      %8354 = vdwg.mxu0
      %v8355 = vadd.f32 %v7928, %v8177
      %v8356 = vadd.f32 %v7929, %v8182
      %v8357 = vadd.f32 %v7930, %v8187
      %v8358 = vadd.f32 %v7931, %v8192
      %v8359 = vadd.f32 %v7932, %v8197
      %v8360 = vadd.f32 %v7933, %v8202
      %v8361 = vadd.f32 %v7934, %v8207
      %v8362 = vadd.f32 %v7935, %v8212
      %v8363 = vadd.f32 %v7936, %v8217
      %v8364 = vadd.f32 %v7937, %v8222
      %v8365 = vadd.f32 %v7938, %v8227
      %v8366 = vadd.f32 %v7939, %v8232
      %v8367 = vadd.f32 %v7940, %v8237
      %v8368 = vadd.f32 %v7941, %v8242
      %v8369 = vadd.f32 %v7942, %v8247
      %v8370 = vadd.f32 %v7943, %v8252
      %v8371 = vadd.f32 %v7944, %v8257
      %v8372 = vadd.f32 %v7945, %v8262
      %v8373 = vadd.f32 %v7946, %v8267
      %v8374 = vadd.f32 %v7947, %v8272
      %v8375 = vadd.f32 %v7948, %v8277
      %v8376 = vadd.f32 %v7949, %v8282
      %v8377 = vadd.f32 %v7950, %v8287
      %v8378 = vadd.f32 %v7951, %v8292
      %v8379 = vadd.f32 %v7952, %v8297
      %v8380 = vadd.f32 %v7953, %v8302
      %v8381 = vadd.f32 %v7954, %v8307
      %v8382 = vadd.f32 %v7955, %v8312
      %v8383 = vadd.f32 %v7956, %v8317
      %v8384 = vadd.f32 %v7957, %v8322
      %v8385 = vadd.f32 %v7958, %v8327
      %v8386 = vadd.f32 %v7959, %v8332
      %v8387 = vadd.f32 %v7960, %v8337
      %v8388 = vadd.f32 %v7961, %v8342
      %v8389 = vadd.f32 %v7962, %v8347
      %v8390 = vadd.f32 %v7963, %v8352
      %v8391 = vld [vmem:[#allocation3 + $0x29] sm:$0xff]
      %v8392 = vld [vmem:[#allocation3 + $0x31] sm:$0xff]
      %v8393 = vld [vmem:[#allocation3 + $0x39] sm:$0xff]
      %v8394 = vld [vmem:[#allocation3 + $0x41] sm:$0xff]
      %v8395 = vld [vmem:[#allocation3 + $0x49] sm:$0xff]
      %v8396 = vld [vmem:[#allocation3 + $0x51] sm:$0xff]
      %v8397 = vld [vmem:[#allocation3 + $0x59] sm:$0xff]
      %v8398 = vld [vmem:[#allocation3 + $0x61] sm:$0xff]
      %v8399 = vld [vmem:[#allocation3 + $0x69] sm:$0xff]
      %v8400 = vld [vmem:[#allocation3 + $0x71] sm:$0xff]
      %v8401 = vld [vmem:[#allocation3 + $0x79] sm:$0xff]
      %v8402 = vld [vmem:[#allocation3 + $0x81] sm:$0xff]
      %v8403 = vld [vmem:[#allocation3 + $0x89] sm:$0xff]
      %v8404 = vld [vmem:[#allocation3 + $0x91] sm:$0xff]
      %v8405 = vld [vmem:[#allocation3 + $0x99] sm:$0xff]
      %v8406 = vld [vmem:[#allocation3 + $0xa1] sm:$0xff]
      %v8407 = vld [vmem:[#allocation3 + $0xa9] sm:$0xff]
      %v8408 = vld [vmem:[#allocation3 + $0xb1] sm:$0xff]
      %v8409 = vld [vmem:[#allocation3 + $0xb9] sm:$0xff]
      %v8410 = vld [vmem:[#allocation3 + $0xc1] sm:$0xff]
      %v8411 = vld [vmem:[#allocation3 + $0xc9] sm:$0xff]
      %v8412 = vld [vmem:[#allocation3 + $0xd1] sm:$0xff]
      %v8413 = vld [vmem:[#allocation3 + $0xd9] sm:$0xff]
      %v8414 = vld [vmem:[#allocation3 + $0xe1] sm:$0xff]
      %v8415 = vld [vmem:[#allocation3 + $0xe9] sm:$0xff]
      %v8416 = vld [vmem:[#allocation3 + $0xf1] sm:$0xff]
      %v8417 = vld [vmem:[#allocation3 + $0xf9] sm:$0xff]
      %v8418 = vld [vmem:[#allocation3 + $0x101] sm:$0xff]
      %v8419 = vld [vmem:[#allocation3 + $0x109] sm:$0xff]
      %v8420 = vld [vmem:[#allocation3 + $0x111] sm:$0xff]
      %v8421 = vld [vmem:[#allocation3 + $0x119] sm:$0xff]
      %v8422 = vld [vmem:[#allocation3 + $0x121] sm:$0xff]
      %v8423 = vld [vmem:[#allocation3 + $0x129] sm:$0xff]
      %v8424 = vld [vmem:[#allocation3 + $0x131] sm:$0xff]
      %v8425 = vld [vmem:[#allocation3 + $0x139] sm:$0xff]
      %v8426 = vld [vmem:[#allocation3 + $0x141] sm:$0xff]
      %s8427 = scalar_lea.vmem %s5, 120
      %v8428 = vld [vmem:[%s8427] sm:$0xff]
      %v8430 = vsel %vm376, %v8391, 0
      %v8433 = vsel %vm376, %v8392, 0
      %v8436 = vsel %vm376, %v8393, 0
      %v8439 = vsel %vm376, %v8394, 0
      %v8442 = vsel %vm376, %v8395, 0
      %v8445 = vsel %vm376, %v8396, 0
      %v8448 = vsel %vm376, %v8397, 0
      %v8451 = vsel %vm376, %v8398, 0
      %v8454 = vsel %vm376, %v8399, 0
      %v8457 = vsel %vm376, %v8400, 0
      %v8460 = vsel %vm376, %v8401, 0
      %v8463 = vsel %vm376, %v8402, 0
      %v8466 = vsel %vm376, %v8403, 0
      %v8469 = vsel %vm376, %v8404, 0
      %v8472 = vsel %vm376, %v8405, 0
      %v8475 = vsel %vm376, %v8406, 0
      %v8478 = vsel %vm376, %v8407, 0
      %v8481 = vsel %vm376, %v8408, 0
      %v8484 = vsel %vm376, %v8409, 0
      %v8487 = vsel %vm376, %v8410, 0
      %v8490 = vsel %vm376, %v8411, 0
      %v8493 = vsel %vm376, %v8412, 0
      %v8496 = vsel %vm376, %v8413, 0
      %v8499 = vsel %vm376, %v8414, 0
      %v8502 = vsel %vm376, %v8415, 0
      %v8505 = vsel %vm376, %v8416, 0
      %v8508 = vsel %vm376, %v8417, 0
      %v8511 = vsel %vm376, %v8418, 0
      %v8514 = vsel %vm376, %v8419, 0
      %v8517 = vsel %vm376, %v8420, 0
      %v8520 = vsel %vm376, %v8421, 0
      %v8523 = vsel %vm376, %v8422, 0
      %v8526 = vsel %vm376, %v8423, 0
      %v8529 = vsel %vm376, %v8424, 0
      %v8532 = vsel %vm376, %v8425, 0
      %v8535 = vsel %vm376, %v8426, 0
      %8537 = vmatprep.subr.mxu0 0.0
      %8538 = vmatpush1.msra.mxu0 %v8428
      %8539 = vmatprep.subr.mxu0 0.0
      %8540 = vmatpush1.msra.mxu0 0.0
      %8541 = vmatprep.subr.mxu0 0.0
      %8542 = vmatpush1.msra.mxu0 0.0
      %8543 = vmatprep.subr.mxu0 0.0
      %8544 = vmatpush1.msra.mxu0 0.0
      %8545 = vmatprep.subr.mxu0 0.0
      %8546 = vmatpush1.msra.mxu0 0.0
      %8547 = vmatprep.subr.mxu0 0.0
      %8548 = vmatpush1.msra.mxu0 0.0
      %8549 = vmatprep.subr.mxu0 0.0
      %8550 = vmatpush1.msra.mxu0 0.0
      %8551 = vmatprep.subr.mxu0 0.0
      %8552 = vmatpush1.msra.mxu0 0.0
      %8553 = vmatprep.subr.mxu0 0.0
      %8554 = vmatpush1.msra.mxu0 0.0
      %8555 = vmatprep.subr.mxu0 0.0
      %8556 = vmatpush1.msra.mxu0 0.0
      %8557 = vmatprep.subr.mxu0 0.0
      %8558 = vmatpush1.msra.mxu0 0.0
      %8559 = vmatprep.subr.mxu0 0.0
      %8560 = vmatpush1.msra.mxu0 0.0
      %8561 = vmatprep.subr.mxu0 0.0
      %8562 = vmatpush1.msra.mxu0 0.0
      %8563 = vmatprep.subr.mxu0 0.0
      %8564 = vmatpush1.msra.mxu0 0.0
      %8565 = vmatprep.subr.mxu0 0.0
      %8566 = vmatpush1.msra.mxu0 0.0
      %8567 = vmatprep.subr.mxu0 0.0
      %8568 = vmatpush1.msra.mxu0 0.0
      %8569 = vmatprep.subr.mxu0 0.0
      %8570 = vmatpush1.msra.mxu0 0.0
      %8571 = vmatprep.subr.mxu0 0.0
      %8572 = vmatpush1.msra.mxu0 0.0
      %8573 = vmatprep.subr.mxu0 0.0
      %8574 = vmatpush1.msra.mxu0 0.0
      %8575 = vmatprep.subr.mxu0 0.0
      %8576 = vmatpush1.msra.mxu0 0.0
      %8577 = vmatprep.subr.mxu0 0.0
      %8578 = vmatpush1.msra.mxu0 0.0
      %8579 = vmatprep.subr.mxu0 0.0
      %8580 = vmatpush1.msra.mxu0 0.0
      %8581 = vmatprep.subr.mxu0 0.0
      %8582 = vmatpush1.msra.mxu0 0.0
      %8583 = vmatprep.subr.mxu0 0.0
      %8584 = vmatpush1.msra.mxu0 0.0
      %8585 = vmatprep.subr.mxu0 0.0
      %8586 = vmatpush1.msra.mxu0 0.0
      %8587 = vmatprep.subr.mxu0 0.0
      %8588 = vmatpush1.msra.mxu0 0.0
      %8589 = vmatprep.subr.mxu0 0.0
      %8590 = vmatpush1.msra.mxu0 0.0
      %8591 = vmatprep.subr.mxu0 0.0
      %8592 = vmatpush1.msra.mxu0 0.0
      %8593 = vmatprep.subr.mxu0 0.0
      %8594 = vmatpush1.msra.mxu0 0.0
      %8595 = vmatprep.subr.mxu0 0.0
      %8596 = vmatpush1.msra.mxu0 0.0
      %8597 = vmatprep.subr.mxu0 0.0
      %8598 = vmatpush1.msra.mxu0 0.0
      %8599 = vmatprep.subr.mxu0 0.0
      %8600 = vmatpush1.msra.mxu0 0.0
      %8601 = vmatprep.mubr.f32.mxu0 0.0
      %8602 = vmatmul.mubr.f32.gmra.mrb[0].mxu0 %v8430
      %v8603 = vpop.f32.mrb[0].mxu0
      %v8604 = vadd.f32 0.0, %v8603
      %v8605 = vpop.f32.mrb[0].mxu0
      %8606 = vmatprep.mubr.f32.mxu0 0.0
      %8607 = vmatmul.mubr.f32.gmra.mrb[0].mxu0 %v8433
      %v8608 = vpop.f32.mrb[0].mxu0
      %v8609 = vadd.f32 0.0, %v8608
      %v8610 = vpop.f32.mrb[0].mxu0
      %8611 = vmatprep.mubr.f32.mxu0 0.0
      %8612 = vmatmul.mubr.f32.gmra.mrb[0].mxu0 %v8436
      %v8613 = vpop.f32.mrb[0].mxu0
      %v8614 = vadd.f32 0.0, %v8613
      %v8615 = vpop.f32.mrb[0].mxu0
      %8616 = vmatprep.mubr.f32.mxu0 0.0
      %8617 = vmatmul.mubr.f32.gmra.mrb[0].mxu0 %v8439
      %v8618 = vpop.f32.mrb[0].mxu0
      %v8619 = vadd.f32 0.0, %v8618
      %v8620 = vpop.f32.mrb[0].mxu0
      %8621 = vmatprep.mubr.f32.mxu0 0.0
      %8622 = vmatmul.mubr.f32.gmra.mrb[0].mxu0 %v8442
      %v8623 = vpop.f32.mrb[0].mxu0
      %v8624 = vadd.f32 0.0, %v8623
      %v8625 = vpop.f32.mrb[0].mxu0
      %8626 = vmatprep.mubr.f32.mxu0 0.0
      %8627 = vmatmul.mubr.f32.gmra.mrb[0].mxu0 %v8445
      %v8628 = vpop.f32.mrb[0].mxu0
      %v8629 = vadd.f32 0.0, %v8628
      %v8630 = vpop.f32.mrb[0].mxu0
      %8631 = vmatprep.mubr.f32.mxu0 0.0
      %8632 = vmatmul.mubr.f32.gmra.mrb[0].mxu0 %v8448
      %v8633 = vpop.f32.mrb[0].mxu0
      %v8634 = vadd.f32 0.0, %v8633
      %v8635 = vpop.f32.mrb[0].mxu0
      %8636 = vmatprep.mubr.f32.mxu0 0.0
      %8637 = vmatmul.mubr.f32.gmra.mrb[0].mxu0 %v8451
      %v8638 = vpop.f32.mrb[0].mxu0
      %v8639 = vadd.f32 0.0, %v8638
      %v8640 = vpop.f32.mrb[0].mxu0
      %8641 = vmatprep.mubr.f32.mxu0 0.0
      %8642 = vmatmul.mubr.f32.gmra.mrb[0].mxu0 %v8454
      %v8643 = vpop.f32.mrb[0].mxu0
      %v8644 = vadd.f32 0.0, %v8643
      %v8645 = vpop.f32.mrb[0].mxu0
      %8646 = vmatprep.mubr.f32.mxu0 0.0
      %8647 = vmatmul.mubr.f32.gmra.mrb[0].mxu0 %v8457
      %v8648 = vpop.f32.mrb[0].mxu0
      %v8649 = vadd.f32 0.0, %v8648
      %v8650 = vpop.f32.mrb[0].mxu0
      %8651 = vmatprep.mubr.f32.mxu0 0.0
      %8652 = vmatmul.mubr.f32.gmra.mrb[0].mxu0 %v8460
      %v8653 = vpop.f32.mrb[0].mxu0
      %v8654 = vadd.f32 0.0, %v8653
      %v8655 = vpop.f32.mrb[0].mxu0
      %8656 = vmatprep.mubr.f32.mxu0 0.0
      %8657 = vmatmul.mubr.f32.gmra.mrb[0].mxu0 %v8463
      %v8658 = vpop.f32.mrb[0].mxu0
      %v8659 = vadd.f32 0.0, %v8658
      %v8660 = vpop.f32.mrb[0].mxu0
      %8661 = vmatprep.mubr.f32.mxu0 0.0
      %8662 = vmatmul.mubr.f32.gmra.mrb[0].mxu0 %v8466
      %v8663 = vpop.f32.mrb[0].mxu0
      %v8664 = vadd.f32 0.0, %v8663
      %v8665 = vpop.f32.mrb[0].mxu0
      %8666 = vmatprep.mubr.f32.mxu0 0.0
      %8667 = vmatmul.mubr.f32.gmra.mrb[0].mxu0 %v8469
      %v8668 = vpop.f32.mrb[0].mxu0
      %v8669 = vadd.f32 0.0, %v8668
      %v8670 = vpop.f32.mrb[0].mxu0
      %8671 = vmatprep.mubr.f32.mxu0 0.0
      %8672 = vmatmul.mubr.f32.gmra.mrb[0].mxu0 %v8472
      %v8673 = vpop.f32.mrb[0].mxu0
      %v8674 = vadd.f32 0.0, %v8673
      %v8675 = vpop.f32.mrb[0].mxu0
      %8676 = vmatprep.mubr.f32.mxu0 0.0
      %8677 = vmatmul.mubr.f32.gmra.mrb[0].mxu0 %v8475
      %v8678 = vpop.f32.mrb[0].mxu0
      %v8679 = vadd.f32 0.0, %v8678
      %v8680 = vpop.f32.mrb[0].mxu0
      %8681 = vmatprep.mubr.f32.mxu0 0.0
      %8682 = vmatmul.mubr.f32.gmra.mrb[0].mxu0 %v8478
      %v8683 = vpop.f32.mrb[0].mxu0
      %v8684 = vadd.f32 0.0, %v8683
      %v8685 = vpop.f32.mrb[0].mxu0
      %8686 = vmatprep.mubr.f32.mxu0 0.0
      %8687 = vmatmul.mubr.f32.gmra.mrb[0].mxu0 %v8481
      %v8688 = vpop.f32.mrb[0].mxu0
      %v8689 = vadd.f32 0.0, %v8688
      %v8690 = vpop.f32.mrb[0].mxu0
      %8691 = vmatprep.mubr.f32.mxu0 0.0
      %8692 = vmatmul.mubr.f32.gmra.mrb[0].mxu0 %v8484
      %v8693 = vpop.f32.mrb[0].mxu0
      %v8694 = vadd.f32 0.0, %v8693
      %v8695 = vpop.f32.mrb[0].mxu0
      %8696 = vmatprep.mubr.f32.mxu0 0.0
      %8697 = vmatmul.mubr.f32.gmra.mrb[0].mxu0 %v8487
      %v8698 = vpop.f32.mrb[0].mxu0
      %v8699 = vadd.f32 0.0, %v8698
      %v8700 = vpop.f32.mrb[0].mxu0
      %8701 = vmatprep.mubr.f32.mxu0 0.0
      %8702 = vmatmul.mubr.f32.gmra.mrb[0].mxu0 %v8490
      %v8703 = vpop.f32.mrb[0].mxu0
      %v8704 = vadd.f32 0.0, %v8703
      %v8705 = vpop.f32.mrb[0].mxu0
      %8706 = vmatprep.mubr.f32.mxu0 0.0
      %8707 = vmatmul.mubr.f32.gmra.mrb[0].mxu0 %v8493
      %v8708 = vpop.f32.mrb[0].mxu0
      %v8709 = vadd.f32 0.0, %v8708
      %v8710 = vpop.f32.mrb[0].mxu0
      %8711 = vmatprep.mubr.f32.mxu0 0.0
      %8712 = vmatmul.mubr.f32.gmra.mrb[0].mxu0 %v8496
      %v8713 = vpop.f32.mrb[0].mxu0
      %v8714 = vadd.f32 0.0, %v8713
      %v8715 = vpop.f32.mrb[0].mxu0
      %8716 = vmatprep.mubr.f32.mxu0 0.0
      %8717 = vmatmul.mubr.f32.gmra.mrb[0].mxu0 %v8499
      %v8718 = vpop.f32.mrb[0].mxu0
      %v8719 = vadd.f32 0.0, %v8718
      %v8720 = vpop.f32.mrb[0].mxu0
      %8721 = vmatprep.mubr.f32.mxu0 0.0
      %8722 = vmatmul.mubr.f32.gmra.mrb[0].mxu0 %v8502
      %v8723 = vpop.f32.mrb[0].mxu0
      %v8724 = vadd.f32 0.0, %v8723
      %v8725 = vpop.f32.mrb[0].mxu0
      %8726 = vmatprep.mubr.f32.mxu0 0.0
      %8727 = vmatmul.mubr.f32.gmra.mrb[0].mxu0 %v8505
      %v8728 = vpop.f32.mrb[0].mxu0
      %v8729 = vadd.f32 0.0, %v8728
      %v8730 = vpop.f32.mrb[0].mxu0
      %8731 = vmatprep.mubr.f32.mxu0 0.0
      %8732 = vmatmul.mubr.f32.gmra.mrb[0].mxu0 %v8508
      %v8733 = vpop.f32.mrb[0].mxu0
      %v8734 = vadd.f32 0.0, %v8733
      %v8735 = vpop.f32.mrb[0].mxu0
      %8736 = vmatprep.mubr.f32.mxu0 0.0
      %8737 = vmatmul.mubr.f32.gmra.mrb[0].mxu0 %v8511
      %v8738 = vpop.f32.mrb[0].mxu0
      %v8739 = vadd.f32 0.0, %v8738
      %v8740 = vpop.f32.mrb[0].mxu0
      %8741 = vmatprep.mubr.f32.mxu0 0.0
      %8742 = vmatmul.mubr.f32.gmra.mrb[0].mxu0 %v8514
      %v8743 = vpop.f32.mrb[0].mxu0
      %v8744 = vadd.f32 0.0, %v8743
      %v8745 = vpop.f32.mrb[0].mxu0
      %8746 = vmatprep.mubr.f32.mxu0 0.0
      %8747 = vmatmul.mubr.f32.gmra.mrb[0].mxu0 %v8517
      %v8748 = vpop.f32.mrb[0].mxu0
      %v8749 = vadd.f32 0.0, %v8748
      %v8750 = vpop.f32.mrb[0].mxu0
      %8751 = vmatprep.mubr.f32.mxu0 0.0
      %8752 = vmatmul.mubr.f32.gmra.mrb[0].mxu0 %v8520
      %v8753 = vpop.f32.mrb[0].mxu0
      %v8754 = vadd.f32 0.0, %v8753
      %v8755 = vpop.f32.mrb[0].mxu0
      %8756 = vmatprep.mubr.f32.mxu0 0.0
      %8757 = vmatmul.mubr.f32.gmra.mrb[0].mxu0 %v8523
      %v8758 = vpop.f32.mrb[0].mxu0
      %v8759 = vadd.f32 0.0, %v8758
      %v8760 = vpop.f32.mrb[0].mxu0
      %8761 = vmatprep.mubr.f32.mxu0 0.0
      %8762 = vmatmul.mubr.f32.gmra.mrb[0].mxu0 %v8526
      %v8763 = vpop.f32.mrb[0].mxu0
      %v8764 = vadd.f32 0.0, %v8763
      %v8765 = vpop.f32.mrb[0].mxu0
      %8766 = vmatprep.mubr.f32.mxu0 0.0
      %8767 = vmatmul.mubr.f32.gmra.mrb[0].mxu0 %v8529
      %v8768 = vpop.f32.mrb[0].mxu0
      %v8769 = vadd.f32 0.0, %v8768
      %v8770 = vpop.f32.mrb[0].mxu0
      %8771 = vmatprep.mubr.f32.mxu0 0.0
      %8772 = vmatmul.mubr.f32.gmra.mrb[0].mxu0 %v8532
      %v8773 = vpop.f32.mrb[0].mxu0
      %v8774 = vadd.f32 0.0, %v8773
      %v8775 = vpop.f32.mrb[0].mxu0
      %8776 = vmatprep.mubr.f32.mxu0 0.0
      %8777 = vmatmul.mubr.f32.gmra.mrb[0].mxu0 %v8535
      %v8778 = vpop.f32.mrb[0].mxu0
      %v8779 = vadd.f32 0.0, %v8778
      %v8780 = vpop.f32.mrb[0].mxu0
      %8781 = vdwg.mxu0
      %v8782 = vadd.f32 %v8355, %v8604
      %v8783 = vadd.f32 %v8356, %v8609
      %v8784 = vadd.f32 %v8357, %v8614
      %v8785 = vadd.f32 %v8358, %v8619
      %v8786 = vadd.f32 %v8359, %v8624
      %v8787 = vadd.f32 %v8360, %v8629
      %v8788 = vadd.f32 %v8361, %v8634
      %v8789 = vadd.f32 %v8362, %v8639
      %v8790 = vadd.f32 %v8363, %v8644
      %v8791 = vadd.f32 %v8364, %v8649
      %v8792 = vadd.f32 %v8365, %v8654
      %v8793 = vadd.f32 %v8366, %v8659
      %v8794 = vadd.f32 %v8367, %v8664
      %v8795 = vadd.f32 %v8368, %v8669
      %v8796 = vadd.f32 %v8369, %v8674
      %v8797 = vadd.f32 %v8370, %v8679
      %v8798 = vadd.f32 %v8371, %v8684
      %v8799 = vadd.f32 %v8372, %v8689
      %v8800 = vadd.f32 %v8373, %v8694
      %v8801 = vadd.f32 %v8374, %v8699
      %v8802 = vadd.f32 %v8375, %v8704
      %v8803 = vadd.f32 %v8376, %v8709
      %v8804 = vadd.f32 %v8377, %v8714
      %v8805 = vadd.f32 %v8378, %v8719
      %v8806 = vadd.f32 %v8379, %v8724
      %v8807 = vadd.f32 %v8380, %v8729
      %v8808 = vadd.f32 %v8381, %v8734
      %v8809 = vadd.f32 %v8382, %v8739
      %v8810 = vadd.f32 %v8383, %v8744
      %v8811 = vadd.f32 %v8384, %v8749
      %v8812 = vadd.f32 %v8385, %v8754
      %v8813 = vadd.f32 %v8386, %v8759
      %v8814 = vadd.f32 %v8387, %v8764
      %v8815 = vadd.f32 %v8388, %v8769
      %v8816 = vadd.f32 %v8389, %v8774
      %v8817 = vadd.f32 %v8390, %v8779
      %v8818 = vld [vmem:[#allocation3 + $0x2a] sm:$0xff]
      %v8819 = vld [vmem:[#allocation3 + $0x32] sm:$0xff]
      %v8820 = vld [vmem:[#allocation3 + $0x3a] sm:$0xff]
      %v8821 = vld [vmem:[#allocation3 + $0x42] sm:$0xff]
      %v8822 = vld [vmem:[#allocation3 + $0x4a] sm:$0xff]
      %v8823 = vld [vmem:[#allocation3 + $0x52] sm:$0xff]
      %v8824 = vld [vmem:[#allocation3 + $0x5a] sm:$0xff]
      %v8825 = vld [vmem:[#allocation3 + $0x62] sm:$0xff]
      %v8826 = vld [vmem:[#allocation3 + $0x6a] sm:$0xff]
      %v8827 = vld [vmem:[#allocation3 + $0x72] sm:$0xff]
      %v8828 = vld [vmem:[#allocation3 + $0x7a] sm:$0xff]
      %v8829 = vld [vmem:[#allocation3 + $0x82] sm:$0xff]
      %v8830 = vld [vmem:[#allocation3 + $0x8a] sm:$0xff]
      %v8831 = vld [vmem:[#allocation3 + $0x92] sm:$0xff]
      %v8832 = vld [vmem:[#allocation3 + $0x9a] sm:$0xff]
      %v8833 = vld [vmem:[#allocation3 + $0xa2] sm:$0xff]
      %v8834 = vld [vmem:[#allocation3 + $0xaa] sm:$0xff]
      %v8835 = vld [vmem:[#allocation3 + $0xb2] sm:$0xff]
      %v8836 = vld [vmem:[#allocation3 + $0xba] sm:$0xff]
      %v8837 = vld [vmem:[#allocation3 + $0xc2] sm:$0xff]
      %v8838 = vld [vmem:[#allocation3 + $0xca] sm:$0xff]
      %v8839 = vld [vmem:[#allocation3 + $0xd2] sm:$0xff]
      %v8840 = vld [vmem:[#allocation3 + $0xda] sm:$0xff]
      %v8841 = vld [vmem:[#allocation3 + $0xe2] sm:$0xff]
      %v8842 = vld [vmem:[#allocation3 + $0xea] sm:$0xff]
      %v8843 = vld [vmem:[#allocation3 + $0xf2] sm:$0xff]
      %v8844 = vld [vmem:[#allocation3 + $0xfa] sm:$0xff]
      %v8845 = vld [vmem:[#allocation3 + $0x102] sm:$0xff]
      %v8846 = vld [vmem:[#allocation3 + $0x10a] sm:$0xff]
      %v8847 = vld [vmem:[#allocation3 + $0x112] sm:$0xff]
      %v8848 = vld [vmem:[#allocation3 + $0x11a] sm:$0xff]
      %v8849 = vld [vmem:[#allocation3 + $0x122] sm:$0xff]
      %v8850 = vld [vmem:[#allocation3 + $0x12a] sm:$0xff]
      %v8851 = vld [vmem:[#allocation3 + $0x132] sm:$0xff]
      %v8852 = vld [vmem:[#allocation3 + $0x13a] sm:$0xff]
      %v8853 = vld [vmem:[#allocation3 + $0x142] sm:$0xff]
      %s8854 = scalar_lea.vmem %s5, 128
      %v8855 = vld [vmem:[%s8854] sm:$0xff]
      %v8857 = vsel %vm376, %v8818, 0
      %v8860 = vsel %vm376, %v8819, 0
      %v8863 = vsel %vm376, %v8820, 0
      %v8866 = vsel %vm376, %v8821, 0
      %v8869 = vsel %vm376, %v8822, 0
      %v8872 = vsel %vm376, %v8823, 0
      %v8875 = vsel %vm376, %v8824, 0
      %v8878 = vsel %vm376, %v8825, 0
      %v8881 = vsel %vm376, %v8826, 0
      %v8884 = vsel %vm376, %v8827, 0
      %v8887 = vsel %vm376, %v8828, 0
      %v8890 = vsel %vm376, %v8829, 0
      %v8893 = vsel %vm376, %v8830, 0
      %v8896 = vsel %vm376, %v8831, 0
      %v8899 = vsel %vm376, %v8832, 0
      %v8902 = vsel %vm376, %v8833, 0
      %v8905 = vsel %vm376, %v8834, 0
      %v8908 = vsel %vm376, %v8835, 0
      %v8911 = vsel %vm376, %v8836, 0
      %v8914 = vsel %vm376, %v8837, 0
      %v8917 = vsel %vm376, %v8838, 0
      %v8920 = vsel %vm376, %v8839, 0
      %v8923 = vsel %vm376, %v8840, 0
      %v8926 = vsel %vm376, %v8841, 0
      %v8929 = vsel %vm376, %v8842, 0
      %v8932 = vsel %vm376, %v8843, 0
      %v8935 = vsel %vm376, %v8844, 0
      %v8938 = vsel %vm376, %v8845, 0
      %v8941 = vsel %vm376, %v8846, 0
      %v8944 = vsel %vm376, %v8847, 0
      %v8947 = vsel %vm376, %v8848, 0
      %v8950 = vsel %vm376, %v8849, 0
      %v8953 = vsel %vm376, %v8850, 0
      %v8956 = vsel %vm376, %v8851, 0
      %v8959 = vsel %vm376, %v8852, 0
      %v8962 = vsel %vm376, %v8853, 0
      %8964 = vmatprep.subr.mxu0 0.0
      %8965 = vmatpush1.msra.mxu0 %v8855
      %8966 = vmatprep.subr.mxu0 0.0
      %8967 = vmatpush1.msra.mxu0 0.0
      %8968 = vmatprep.subr.mxu0 0.0
      %8969 = vmatpush1.msra.mxu0 0.0
      %8970 = vmatprep.subr.mxu0 0.0
      %8971 = vmatpush1.msra.mxu0 0.0
      %8972 = vmatprep.subr.mxu0 0.0
      %8973 = vmatpush1.msra.mxu0 0.0
      %8974 = vmatprep.subr.mxu0 0.0
      %8975 = vmatpush1.msra.mxu0 0.0
      %8976 = vmatprep.subr.mxu0 0.0
      %8977 = vmatpush1.msra.mxu0 0.0
      %8978 = vmatprep.subr.mxu0 0.0
      %8979 = vmatpush1.msra.mxu0 0.0
      %8980 = vmatprep.subr.mxu0 0.0
      %8981 = vmatpush1.msra.mxu0 0.0
      %8982 = vmatprep.subr.mxu0 0.0
      %8983 = vmatpush1.msra.mxu0 0.0
      %8984 = vmatprep.subr.mxu0 0.0
      %8985 = vmatpush1.msra.mxu0 0.0
      %8986 = vmatprep.subr.mxu0 0.0
      %8987 = vmatpush1.msra.mxu0 0.0
      %8988 = vmatprep.subr.mxu0 0.0
      %8989 = vmatpush1.msra.mxu0 0.0
      %8990 = vmatprep.subr.mxu0 0.0
      %8991 = vmatpush1.msra.mxu0 0.0
      %8992 = vmatprep.subr.mxu0 0.0
      %8993 = vmatpush1.msra.mxu0 0.0
      %8994 = vmatprep.subr.mxu0 0.0
      %8995 = vmatpush1.msra.mxu0 0.0
      %8996 = vmatprep.subr.mxu0 0.0
      %8997 = vmatpush1.msra.mxu0 0.0
      %8998 = vmatprep.subr.mxu0 0.0
      %8999 = vmatpush1.msra.mxu0 0.0
      %9000 = vmatprep.subr.mxu0 0.0
      %9001 = vmatpush1.msra.mxu0 0.0
      %9002 = vmatprep.subr.mxu0 0.0
      %9003 = vmatpush1.msra.mxu0 0.0
      %9004 = vmatprep.subr.mxu0 0.0
      %9005 = vmatpush1.msra.mxu0 0.0
      %9006 = vmatprep.subr.mxu0 0.0
      %9007 = vmatpush1.msra.mxu0 0.0
      %9008 = vmatprep.subr.mxu0 0.0
      %9009 = vmatpush1.msra.mxu0 0.0
      %9010 = vmatprep.subr.mxu0 0.0
      %9011 = vmatpush1.msra.mxu0 0.0
      %9012 = vmatprep.subr.mxu0 0.0
      %9013 = vmatpush1.msra.mxu0 0.0
      %9014 = vmatprep.subr.mxu0 0.0
      %9015 = vmatpush1.msra.mxu0 0.0
      %9016 = vmatprep.subr.mxu0 0.0
      %9017 = vmatpush1.msra.mxu0 0.0
      %9018 = vmatprep.subr.mxu0 0.0
      %9019 = vmatpush1.msra.mxu0 0.0
      %9020 = vmatprep.subr.mxu0 0.0
      %9021 = vmatpush1.msra.mxu0 0.0
      %9022 = vmatprep.subr.mxu0 0.0
      %9023 = vmatpush1.msra.mxu0 0.0
      %9024 = vmatprep.subr.mxu0 0.0
      %9025 = vmatpush1.msra.mxu0 0.0
      %9026 = vmatprep.subr.mxu0 0.0
      %9027 = vmatpush1.msra.mxu0 0.0
      %9028 = vmatprep.mubr.f32.mxu0 0.0
      %9029 = vmatmul.mubr.f32.gmra.mrb[0].mxu0 %v8857
      %v9030 = vpop.f32.mrb[0].mxu0
      %v9031 = vadd.f32 0.0, %v9030
      %v9032 = vpop.f32.mrb[0].mxu0
      %9033 = vmatprep.mubr.f32.mxu0 0.0
      %9034 = vmatmul.mubr.f32.gmra.mrb[0].mxu0 %v8860
      %v9035 = vpop.f32.mrb[0].mxu0
      %v9036 = vadd.f32 0.0, %v9035
      %v9037 = vpop.f32.mrb[0].mxu0
      %9038 = vmatprep.mubr.f32.mxu0 0.0
      %9039 = vmatmul.mubr.f32.gmra.mrb[0].mxu0 %v8863
      %v9040 = vpop.f32.mrb[0].mxu0
      %v9041 = vadd.f32 0.0, %v9040
      %v9042 = vpop.f32.mrb[0].mxu0
      %9043 = vmatprep.mubr.f32.mxu0 0.0
      %9044 = vmatmul.mubr.f32.gmra.mrb[0].mxu0 %v8866
      %v9045 = vpop.f32.mrb[0].mxu0
      %v9046 = vadd.f32 0.0, %v9045
      %v9047 = vpop.f32.mrb[0].mxu0
      %9048 = vmatprep.mubr.f32.mxu0 0.0
      %9049 = vmatmul.mubr.f32.gmra.mrb[0].mxu0 %v8869
      %v9050 = vpop.f32.mrb[0].mxu0
      %v9051 = vadd.f32 0.0, %v9050
      %v9052 = vpop.f32.mrb[0].mxu0
      %9053 = vmatprep.mubr.f32.mxu0 0.0
      %9054 = vmatmul.mubr.f32.gmra.mrb[0].mxu0 %v8872
      %v9055 = vpop.f32.mrb[0].mxu0
      %v9056 = vadd.f32 0.0, %v9055
      %v9057 = vpop.f32.mrb[0].mxu0
      %9058 = vmatprep.mubr.f32.mxu0 0.0
      %9059 = vmatmul.mubr.f32.gmra.mrb[0].mxu0 %v8875
      %v9060 = vpop.f32.mrb[0].mxu0
      %v9061 = vadd.f32 0.0, %v9060
      %v9062 = vpop.f32.mrb[0].mxu0
      %9063 = vmatprep.mubr.f32.mxu0 0.0
      %9064 = vmatmul.mubr.f32.gmra.mrb[0].mxu0 %v8878
      %v9065 = vpop.f32.mrb[0].mxu0
      %v9066 = vadd.f32 0.0, %v9065
      %v9067 = vpop.f32.mrb[0].mxu0
      %9068 = vmatprep.mubr.f32.mxu0 0.0
      %9069 = vmatmul.mubr.f32.gmra.mrb[0].mxu0 %v8881
      %v9070 = vpop.f32.mrb[0].mxu0
      %v9071 = vadd.f32 0.0, %v9070
      %v9072 = vpop.f32.mrb[0].mxu0
      %9073 = vmatprep.mubr.f32.mxu0 0.0
      %9074 = vmatmul.mubr.f32.gmra.mrb[0].mxu0 %v8884
      %v9075 = vpop.f32.mrb[0].mxu0
      %v9076 = vadd.f32 0.0, %v9075
      %v9077 = vpop.f32.mrb[0].mxu0
      %9078 = vmatprep.mubr.f32.mxu0 0.0
      %9079 = vmatmul.mubr.f32.gmra.mrb[0].mxu0 %v8887
      %v9080 = vpop.f32.mrb[0].mxu0
      %v9081 = vadd.f32 0.0, %v9080
      %v9082 = vpop.f32.mrb[0].mxu0
      %9083 = vmatprep.mubr.f32.mxu0 0.0
      %9084 = vmatmul.mubr.f32.gmra.mrb[0].mxu0 %v8890
      %v9085 = vpop.f32.mrb[0].mxu0
      %v9086 = vadd.f32 0.0, %v9085
      %v9087 = vpop.f32.mrb[0].mxu0
      %9088 = vmatprep.mubr.f32.mxu0 0.0
      %9089 = vmatmul.mubr.f32.gmra.mrb[0].mxu0 %v8893
      %v9090 = vpop.f32.mrb[0].mxu0
      %v9091 = vadd.f32 0.0, %v9090
      %v9092 = vpop.f32.mrb[0].mxu0
      %9093 = vmatprep.mubr.f32.mxu0 0.0
      %9094 = vmatmul.mubr.f32.gmra.mrb[0].mxu0 %v8896
      %v9095 = vpop.f32.mrb[0].mxu0
      %v9096 = vadd.f32 0.0, %v9095
      %v9097 = vpop.f32.mrb[0].mxu0
      %9098 = vmatprep.mubr.f32.mxu0 0.0
      %9099 = vmatmul.mubr.f32.gmra.mrb[0].mxu0 %v8899
      %v9100 = vpop.f32.mrb[0].mxu0
      %v9101 = vadd.f32 0.0, %v9100
      %v9102 = vpop.f32.mrb[0].mxu0
      %9103 = vmatprep.mubr.f32.mxu0 0.0
      %9104 = vmatmul.mubr.f32.gmra.mrb[0].mxu0 %v8902
      %v9105 = vpop.f32.mrb[0].mxu0
      %v9106 = vadd.f32 0.0, %v9105
      %v9107 = vpop.f32.mrb[0].mxu0
      %9108 = vmatprep.mubr.f32.mxu0 0.0
      %9109 = vmatmul.mubr.f32.gmra.mrb[0].mxu0 %v8905
      %v9110 = vpop.f32.mrb[0].mxu0
      %v9111 = vadd.f32 0.0, %v9110
      %v9112 = vpop.f32.mrb[0].mxu0
      %9113 = vmatprep.mubr.f32.mxu0 0.0
      %9114 = vmatmul.mubr.f32.gmra.mrb[0].mxu0 %v8908
      %v9115 = vpop.f32.mrb[0].mxu0
      %v9116 = vadd.f32 0.0, %v9115
      %v9117 = vpop.f32.mrb[0].mxu0
      %9118 = vmatprep.mubr.f32.mxu0 0.0
      %9119 = vmatmul.mubr.f32.gmra.mrb[0].mxu0 %v8911
      %v9120 = vpop.f32.mrb[0].mxu0
      %v9121 = vadd.f32 0.0, %v9120
      %v9122 = vpop.f32.mrb[0].mxu0
      %9123 = vmatprep.mubr.f32.mxu0 0.0
      %9124 = vmatmul.mubr.f32.gmra.mrb[0].mxu0 %v8914
      %v9125 = vpop.f32.mrb[0].mxu0
      %v9126 = vadd.f32 0.0, %v9125
      %v9127 = vpop.f32.mrb[0].mxu0
      %9128 = vmatprep.mubr.f32.mxu0 0.0
      %9129 = vmatmul.mubr.f32.gmra.mrb[0].mxu0 %v8917
      %v9130 = vpop.f32.mrb[0].mxu0
      %v9131 = vadd.f32 0.0, %v9130
      %v9132 = vpop.f32.mrb[0].mxu0
      %9133 = vmatprep.mubr.f32.mxu0 0.0
      %9134 = vmatmul.mubr.f32.gmra.mrb[0].mxu0 %v8920
      %v9135 = vpop.f32.mrb[0].mxu0
      %v9136 = vadd.f32 0.0, %v9135
      %v9137 = vpop.f32.mrb[0].mxu0
      %9138 = vmatprep.mubr.f32.mxu0 0.0
      %9139 = vmatmul.mubr.f32.gmra.mrb[0].mxu0 %v8923
      %v9140 = vpop.f32.mrb[0].mxu0
      %v9141 = vadd.f32 0.0, %v9140
      %v9142 = vpop.f32.mrb[0].mxu0
      %9143 = vmatprep.mubr.f32.mxu0 0.0
      %9144 = vmatmul.mubr.f32.gmra.mrb[0].mxu0 %v8926
      %v9145 = vpop.f32.mrb[0].mxu0
      %v9146 = vadd.f32 0.0, %v9145
      %v9147 = vpop.f32.mrb[0].mxu0
      %9148 = vmatprep.mubr.f32.mxu0 0.0
      %9149 = vmatmul.mubr.f32.gmra.mrb[0].mxu0 %v8929
      %v9150 = vpop.f32.mrb[0].mxu0
      %v9151 = vadd.f32 0.0, %v9150
      %v9152 = vpop.f32.mrb[0].mxu0
      %9153 = vmatprep.mubr.f32.mxu0 0.0
      %9154 = vmatmul.mubr.f32.gmra.mrb[0].mxu0 %v8932
      %v9155 = vpop.f32.mrb[0].mxu0
      %v9156 = vadd.f32 0.0, %v9155
      %v9157 = vpop.f32.mrb[0].mxu0
      %9158 = vmatprep.mubr.f32.mxu0 0.0
      %9159 = vmatmul.mubr.f32.gmra.mrb[0].mxu0 %v8935
      %v9160 = vpop.f32.mrb[0].mxu0
      %v9161 = vadd.f32 0.0, %v9160
      %v9162 = vpop.f32.mrb[0].mxu0
      %9163 = vmatprep.mubr.f32.mxu0 0.0
      %9164 = vmatmul.mubr.f32.gmra.mrb[0].mxu0 %v8938
      %v9165 = vpop.f32.mrb[0].mxu0
      %v9166 = vadd.f32 0.0, %v9165
      %v9167 = vpop.f32.mrb[0].mxu0
      %9168 = vmatprep.mubr.f32.mxu0 0.0
      %9169 = vmatmul.mubr.f32.gmra.mrb[0].mxu0 %v8941
      %v9170 = vpop.f32.mrb[0].mxu0
      %v9171 = vadd.f32 0.0, %v9170
      %v9172 = vpop.f32.mrb[0].mxu0
      %9173 = vmatprep.mubr.f32.mxu0 0.0
      %9174 = vmatmul.mubr.f32.gmra.mrb[0].mxu0 %v8944
      %v9175 = vpop.f32.mrb[0].mxu0
      %v9176 = vadd.f32 0.0, %v9175
      %v9177 = vpop.f32.mrb[0].mxu0
      %9178 = vmatprep.mubr.f32.mxu0 0.0
      %9179 = vmatmul.mubr.f32.gmra.mrb[0].mxu0 %v8947
      %v9180 = vpop.f32.mrb[0].mxu0
      %v9181 = vadd.f32 0.0, %v9180
      %v9182 = vpop.f32.mrb[0].mxu0
      %9183 = vmatprep.mubr.f32.mxu0 0.0
      %9184 = vmatmul.mubr.f32.gmra.mrb[0].mxu0 %v8950
      %v9185 = vpop.f32.mrb[0].mxu0
      %v9186 = vadd.f32 0.0, %v9185
      %v9187 = vpop.f32.mrb[0].mxu0
      %9188 = vmatprep.mubr.f32.mxu0 0.0
      %9189 = vmatmul.mubr.f32.gmra.mrb[0].mxu0 %v8953
      %v9190 = vpop.f32.mrb[0].mxu0
      %v9191 = vadd.f32 0.0, %v9190
      %v9192 = vpop.f32.mrb[0].mxu0
      %9193 = vmatprep.mubr.f32.mxu0 0.0
      %9194 = vmatmul.mubr.f32.gmra.mrb[0].mxu0 %v8956
      %v9195 = vpop.f32.mrb[0].mxu0
      %v9196 = vadd.f32 0.0, %v9195
      %v9197 = vpop.f32.mrb[0].mxu0
      %9198 = vmatprep.mubr.f32.mxu0 0.0
      %9199 = vmatmul.mubr.f32.gmra.mrb[0].mxu0 %v8959
      %v9200 = vpop.f32.mrb[0].mxu0
      %v9201 = vadd.f32 0.0, %v9200
      %v9202 = vpop.f32.mrb[0].mxu0
      %9203 = vmatprep.mubr.f32.mxu0 0.0
      %9204 = vmatmul.mubr.f32.gmra.mrb[0].mxu0 %v8962
      %v9205 = vpop.f32.mrb[0].mxu0
      %v9206 = vadd.f32 0.0, %v9205
      %v9207 = vpop.f32.mrb[0].mxu0
      %9208 = vdwg.mxu0
      %v9209 = vadd.f32 %v8782, %v9031
      %v9210 = vadd.f32 %v8783, %v9036
      %v9211 = vadd.f32 %v8784, %v9041
      %v9212 = vadd.f32 %v8785, %v9046
      %v9213 = vadd.f32 %v8786, %v9051
      %v9214 = vadd.f32 %v8787, %v9056
      %v9215 = vadd.f32 %v8788, %v9061
      %v9216 = vadd.f32 %v8789, %v9066
      %v9217 = vadd.f32 %v8790, %v9071
      %v9218 = vadd.f32 %v8791, %v9076
      %v9219 = vadd.f32 %v8792, %v9081
      %v9220 = vadd.f32 %v8793, %v9086
      %v9221 = vadd.f32 %v8794, %v9091
      %v9222 = vadd.f32 %v8795, %v9096
      %v9223 = vadd.f32 %v8796, %v9101
      %v9224 = vadd.f32 %v8797, %v9106
      %v9225 = vadd.f32 %v8798, %v9111
      %v9226 = vadd.f32 %v8799, %v9116
      %v9227 = vadd.f32 %v8800, %v9121
      %v9228 = vadd.f32 %v8801, %v9126
      %v9229 = vadd.f32 %v8802, %v9131
      %v9230 = vadd.f32 %v8803, %v9136
      %v9231 = vadd.f32 %v8804, %v9141
      %v9232 = vadd.f32 %v8805, %v9146
      %v9233 = vadd.f32 %v8806, %v9151
      %v9234 = vadd.f32 %v8807, %v9156
      %v9235 = vadd.f32 %v8808, %v9161
      %v9236 = vadd.f32 %v8809, %v9166
      %v9237 = vadd.f32 %v8810, %v9171
      %v9238 = vadd.f32 %v8811, %v9176
      %v9239 = vadd.f32 %v8812, %v9181
      %v9240 = vadd.f32 %v8813, %v9186
      %v9241 = vadd.f32 %v8814, %v9191
      %v9242 = vadd.f32 %v8815, %v9196
      %v9243 = vadd.f32 %v8816, %v9201
      %v9244 = vadd.f32 %v8817, %v9206
      %v9245 = vld [vmem:[#allocation3 + $0x2b] sm:$0xff]
      %v9246 = vld [vmem:[#allocation3 + $0x33] sm:$0xff]
      %v9247 = vld [vmem:[#allocation3 + $0x3b] sm:$0xff]
      %v9248 = vld [vmem:[#allocation3 + $0x43] sm:$0xff]
      %v9249 = vld [vmem:[#allocation3 + $0x4b] sm:$0xff]
      %v9250 = vld [vmem:[#allocation3 + $0x53] sm:$0xff]
      %v9251 = vld [vmem:[#allocation3 + $0x5b] sm:$0xff]
      %v9252 = vld [vmem:[#allocation3 + $0x63] sm:$0xff]
      %v9253 = vld [vmem:[#allocation3 + $0x6b] sm:$0xff]
      %v9254 = vld [vmem:[#allocation3 + $0x73] sm:$0xff]
      %v9255 = vld [vmem:[#allocation3 + $0x7b] sm:$0xff]
      %v9256 = vld [vmem:[#allocation3 + $0x83] sm:$0xff]
      %v9257 = vld [vmem:[#allocation3 + $0x8b] sm:$0xff]
      %v9258 = vld [vmem:[#allocation3 + $0x93] sm:$0xff]
      %v9259 = vld [vmem:[#allocation3 + $0x9b] sm:$0xff]
      %v9260 = vld [vmem:[#allocation3 + $0xa3] sm:$0xff]
      %v9261 = vld [vmem:[#allocation3 + $0xab] sm:$0xff]
      %v9262 = vld [vmem:[#allocation3 + $0xb3] sm:$0xff]
      %v9263 = vld [vmem:[#allocation3 + $0xbb] sm:$0xff]
      %v9264 = vld [vmem:[#allocation3 + $0xc3] sm:$0xff]
      %v9265 = vld [vmem:[#allocation3 + $0xcb] sm:$0xff]
      %v9266 = vld [vmem:[#allocation3 + $0xd3] sm:$0xff]
      %v9267 = vld [vmem:[#allocation3 + $0xdb] sm:$0xff]
      %v9268 = vld [vmem:[#allocation3 + $0xe3] sm:$0xff]
      %v9269 = vld [vmem:[#allocation3 + $0xeb] sm:$0xff]
      %v9270 = vld [vmem:[#allocation3 + $0xf3] sm:$0xff]
      %v9271 = vld [vmem:[#allocation3 + $0xfb] sm:$0xff]
      %v9272 = vld [vmem:[#allocation3 + $0x103] sm:$0xff]
      %v9273 = vld [vmem:[#allocation3 + $0x10b] sm:$0xff]
      %v9274 = vld [vmem:[#allocation3 + $0x113] sm:$0xff]
      %v9275 = vld [vmem:[#allocation3 + $0x11b] sm:$0xff]
      %v9276 = vld [vmem:[#allocation3 + $0x123] sm:$0xff]
      %v9277 = vld [vmem:[#allocation3 + $0x12b] sm:$0xff]
      %v9278 = vld [vmem:[#allocation3 + $0x133] sm:$0xff]
      %v9279 = vld [vmem:[#allocation3 + $0x13b] sm:$0xff]
      %v9280 = vld [vmem:[#allocation3 + $0x143] sm:$0xff]
      %s9281 = scalar_lea.vmem %s5, 136
      %v9282 = vld [vmem:[%s9281] sm:$0xff]
      %v9284 = vsel %vm376, %v9245, 0
      %v9287 = vsel %vm376, %v9246, 0
      %v9290 = vsel %vm376, %v9247, 0
      %v9293 = vsel %vm376, %v9248, 0
      %v9296 = vsel %vm376, %v9249, 0
      %v9299 = vsel %vm376, %v9250, 0
      %v9302 = vsel %vm376, %v9251, 0
      %v9305 = vsel %vm376, %v9252, 0
      %v9308 = vsel %vm376, %v9253, 0
      %v9311 = vsel %vm376, %v9254, 0
      %v9314 = vsel %vm376, %v9255, 0
      %v9317 = vsel %vm376, %v9256, 0
      %v9320 = vsel %vm376, %v9257, 0
      %v9323 = vsel %vm376, %v9258, 0
      %v9326 = vsel %vm376, %v9259, 0
      %v9329 = vsel %vm376, %v9260, 0
      %v9332 = vsel %vm376, %v9261, 0
      %v9335 = vsel %vm376, %v9262, 0
      %v9338 = vsel %vm376, %v9263, 0
      %v9341 = vsel %vm376, %v9264, 0
      %v9344 = vsel %vm376, %v9265, 0
      %v9347 = vsel %vm376, %v9266, 0
      %v9350 = vsel %vm376, %v9267, 0
      %v9353 = vsel %vm376, %v9268, 0
      %v9356 = vsel %vm376, %v9269, 0
      %v9359 = vsel %vm376, %v9270, 0
      %v9362 = vsel %vm376, %v9271, 0
      %v9365 = vsel %vm376, %v9272, 0
      %v9368 = vsel %vm376, %v9273, 0
      %v9371 = vsel %vm376, %v9274, 0
      %v9374 = vsel %vm376, %v9275, 0
      %v9377 = vsel %vm376, %v9276, 0
      %v9380 = vsel %vm376, %v9277, 0
      %v9383 = vsel %vm376, %v9278, 0
      %v9386 = vsel %vm376, %v9279, 0
      %v9389 = vsel %vm376, %v9280, 0
      %9391 = vmatprep.subr.mxu0 0.0
      %9392 = vmatpush1.msra.mxu0 %v9282
      %9393 = vmatprep.subr.mxu0 0.0
      %9394 = vmatpush1.msra.mxu0 0.0
      %9395 = vmatprep.subr.mxu0 0.0
      %9396 = vmatpush1.msra.mxu0 0.0
      %9397 = vmatprep.subr.mxu0 0.0
      %9398 = vmatpush1.msra.mxu0 0.0
      %9399 = vmatprep.subr.mxu0 0.0
      %9400 = vmatpush1.msra.mxu0 0.0
      %9401 = vmatprep.subr.mxu0 0.0
      %9402 = vmatpush1.msra.mxu0 0.0
      %9403 = vmatprep.subr.mxu0 0.0
      %9404 = vmatpush1.msra.mxu0 0.0
      %9405 = vmatprep.subr.mxu0 0.0
      %9406 = vmatpush1.msra.mxu0 0.0
      %9407 = vmatprep.subr.mxu0 0.0
      %9408 = vmatpush1.msra.mxu0 0.0
      %9409 = vmatprep.subr.mxu0 0.0
      %9410 = vmatpush1.msra.mxu0 0.0
      %9411 = vmatprep.subr.mxu0 0.0
      %9412 = vmatpush1.msra.mxu0 0.0
      %9413 = vmatprep.subr.mxu0 0.0
      %9414 = vmatpush1.msra.mxu0 0.0
      %9415 = vmatprep.subr.mxu0 0.0
      %9416 = vmatpush1.msra.mxu0 0.0
      %9417 = vmatprep.subr.mxu0 0.0
      %9418 = vmatpush1.msra.mxu0 0.0
      %9419 = vmatprep.subr.mxu0 0.0
      %9420 = vmatpush1.msra.mxu0 0.0
      %9421 = vmatprep.subr.mxu0 0.0
      %9422 = vmatpush1.msra.mxu0 0.0
      %9423 = vmatprep.subr.mxu0 0.0
      %9424 = vmatpush1.msra.mxu0 0.0
      %9425 = vmatprep.subr.mxu0 0.0
      %9426 = vmatpush1.msra.mxu0 0.0
      %9427 = vmatprep.subr.mxu0 0.0
      %9428 = vmatpush1.msra.mxu0 0.0
      %9429 = vmatprep.subr.mxu0 0.0
      %9430 = vmatpush1.msra.mxu0 0.0
      %9431 = vmatprep.subr.mxu0 0.0
      %9432 = vmatpush1.msra.mxu0 0.0
      %9433 = vmatprep.subr.mxu0 0.0
      %9434 = vmatpush1.msra.mxu0 0.0
      %9435 = vmatprep.subr.mxu0 0.0
      %9436 = vmatpush1.msra.mxu0 0.0
      %9437 = vmatprep.subr.mxu0 0.0
      %9438 = vmatpush1.msra.mxu0 0.0
      %9439 = vmatprep.subr.mxu0 0.0
      %9440 = vmatpush1.msra.mxu0 0.0
      %9441 = vmatprep.subr.mxu0 0.0
      %9442 = vmatpush1.msra.mxu0 0.0
      %9443 = vmatprep.subr.mxu0 0.0
      %9444 = vmatpush1.msra.mxu0 0.0
      %9445 = vmatprep.subr.mxu0 0.0
      %9446 = vmatpush1.msra.mxu0 0.0
      %9447 = vmatprep.subr.mxu0 0.0
      %9448 = vmatpush1.msra.mxu0 0.0
      %9449 = vmatprep.subr.mxu0 0.0
      %9450 = vmatpush1.msra.mxu0 0.0
      %9451 = vmatprep.subr.mxu0 0.0
      %9452 = vmatpush1.msra.mxu0 0.0
      %9453 = vmatprep.subr.mxu0 0.0
      %9454 = vmatpush1.msra.mxu0 0.0
      %9455 = vmatprep.mubr.f32.mxu0 0.0
      %9456 = vmatmul.mubr.f32.gmra.mrb[0].mxu0 %v9284
      %v9457 = vpop.f32.mrb[0].mxu0
      %v9458 = vadd.f32 0.0, %v9457
      %v9459 = vpop.f32.mrb[0].mxu0
      %9460 = vmatprep.mubr.f32.mxu0 0.0
      %9461 = vmatmul.mubr.f32.gmra.mrb[0].mxu0 %v9287
      %v9462 = vpop.f32.mrb[0].mxu0
      %v9463 = vadd.f32 0.0, %v9462
      %v9464 = vpop.f32.mrb[0].mxu0
      %9465 = vmatprep.mubr.f32.mxu0 0.0
      %9466 = vmatmul.mubr.f32.gmra.mrb[0].mxu0 %v9290
      %v9467 = vpop.f32.mrb[0].mxu0
      %v9468 = vadd.f32 0.0, %v9467
      %v9469 = vpop.f32.mrb[0].mxu0
      %9470 = vmatprep.mubr.f32.mxu0 0.0
      %9471 = vmatmul.mubr.f32.gmra.mrb[0].mxu0 %v9293
      %v9472 = vpop.f32.mrb[0].mxu0
      %v9473 = vadd.f32 0.0, %v9472
      %v9474 = vpop.f32.mrb[0].mxu0
      %9475 = vmatprep.mubr.f32.mxu0 0.0
      %9476 = vmatmul.mubr.f32.gmra.mrb[0].mxu0 %v9296
      %v9477 = vpop.f32.mrb[0].mxu0
      %v9478 = vadd.f32 0.0, %v9477
      %v9479 = vpop.f32.mrb[0].mxu0
      %9480 = vmatprep.mubr.f32.mxu0 0.0
      %9481 = vmatmul.mubr.f32.gmra.mrb[0].mxu0 %v9299
      %v9482 = vpop.f32.mrb[0].mxu0
      %v9483 = vadd.f32 0.0, %v9482
      %v9484 = vpop.f32.mrb[0].mxu0
      %9485 = vmatprep.mubr.f32.mxu0 0.0
      %9486 = vmatmul.mubr.f32.gmra.mrb[0].mxu0 %v9302
      %v9487 = vpop.f32.mrb[0].mxu0
      %v9488 = vadd.f32 0.0, %v9487
      %v9489 = vpop.f32.mrb[0].mxu0
      %9490 = vmatprep.mubr.f32.mxu0 0.0
      %9491 = vmatmul.mubr.f32.gmra.mrb[0].mxu0 %v9305
      %v9492 = vpop.f32.mrb[0].mxu0
      %v9493 = vadd.f32 0.0, %v9492
      %v9494 = vpop.f32.mrb[0].mxu0
      %9495 = vmatprep.mubr.f32.mxu0 0.0
      %9496 = vmatmul.mubr.f32.gmra.mrb[0].mxu0 %v9308
      %v9497 = vpop.f32.mrb[0].mxu0
      %v9498 = vadd.f32 0.0, %v9497
      %v9499 = vpop.f32.mrb[0].mxu0
      %9500 = vmatprep.mubr.f32.mxu0 0.0
      %9501 = vmatmul.mubr.f32.gmra.mrb[0].mxu0 %v9311
      %v9502 = vpop.f32.mrb[0].mxu0
      %v9503 = vadd.f32 0.0, %v9502
      %v9504 = vpop.f32.mrb[0].mxu0
      %9505 = vmatprep.mubr.f32.mxu0 0.0
      %9506 = vmatmul.mubr.f32.gmra.mrb[0].mxu0 %v9314
      %v9507 = vpop.f32.mrb[0].mxu0
      %v9508 = vadd.f32 0.0, %v9507
      %v9509 = vpop.f32.mrb[0].mxu0
      %9510 = vmatprep.mubr.f32.mxu0 0.0
      %9511 = vmatmul.mubr.f32.gmra.mrb[0].mxu0 %v9317
      %v9512 = vpop.f32.mrb[0].mxu0
      %v9513 = vadd.f32 0.0, %v9512
      %v9514 = vpop.f32.mrb[0].mxu0
      %9515 = vmatprep.mubr.f32.mxu0 0.0
      %9516 = vmatmul.mubr.f32.gmra.mrb[0].mxu0 %v9320
      %v9517 = vpop.f32.mrb[0].mxu0
      %v9518 = vadd.f32 0.0, %v9517
      %v9519 = vpop.f32.mrb[0].mxu0
      %9520 = vmatprep.mubr.f32.mxu0 0.0
      %9521 = vmatmul.mubr.f32.gmra.mrb[0].mxu0 %v9323
      %v9522 = vpop.f32.mrb[0].mxu0
      %v9523 = vadd.f32 0.0, %v9522
      %v9524 = vpop.f32.mrb[0].mxu0
      %9525 = vmatprep.mubr.f32.mxu0 0.0
      %9526 = vmatmul.mubr.f32.gmra.mrb[0].mxu0 %v9326
      %v9527 = vpop.f32.mrb[0].mxu0
      %v9528 = vadd.f32 0.0, %v9527
      %v9529 = vpop.f32.mrb[0].mxu0
      %9530 = vmatprep.mubr.f32.mxu0 0.0
      %9531 = vmatmul.mubr.f32.gmra.mrb[0].mxu0 %v9329
      %v9532 = vpop.f32.mrb[0].mxu0
      %v9533 = vadd.f32 0.0, %v9532
      %v9534 = vpop.f32.mrb[0].mxu0
      %9535 = vmatprep.mubr.f32.mxu0 0.0
      %9536 = vmatmul.mubr.f32.gmra.mrb[0].mxu0 %v9332
      %v9537 = vpop.f32.mrb[0].mxu0
      %v9538 = vadd.f32 0.0, %v9537
      %v9539 = vpop.f32.mrb[0].mxu0
      %9540 = vmatprep.mubr.f32.mxu0 0.0
      %9541 = vmatmul.mubr.f32.gmra.mrb[0].mxu0 %v9335
      %v9542 = vpop.f32.mrb[0].mxu0
      %v9543 = vadd.f32 0.0, %v9542
      %v9544 = vpop.f32.mrb[0].mxu0
      %9545 = vmatprep.mubr.f32.mxu0 0.0
      %9546 = vmatmul.mubr.f32.gmra.mrb[0].mxu0 %v9338
      %v9547 = vpop.f32.mrb[0].mxu0
      %v9548 = vadd.f32 0.0, %v9547
      %v9549 = vpop.f32.mrb[0].mxu0
      %9550 = vmatprep.mubr.f32.mxu0 0.0
      %9551 = vmatmul.mubr.f32.gmra.mrb[0].mxu0 %v9341
      %v9552 = vpop.f32.mrb[0].mxu0
      %v9553 = vadd.f32 0.0, %v9552
      %v9554 = vpop.f32.mrb[0].mxu0
      %9555 = vmatprep.mubr.f32.mxu0 0.0
      %9556 = vmatmul.mubr.f32.gmra.mrb[0].mxu0 %v9344
      %v9557 = vpop.f32.mrb[0].mxu0
      %v9558 = vadd.f32 0.0, %v9557
      %v9559 = vpop.f32.mrb[0].mxu0
      %9560 = vmatprep.mubr.f32.mxu0 0.0
      %9561 = vmatmul.mubr.f32.gmra.mrb[0].mxu0 %v9347
      %v9562 = vpop.f32.mrb[0].mxu0
      %v9563 = vadd.f32 0.0, %v9562
      %v9564 = vpop.f32.mrb[0].mxu0
      %9565 = vmatprep.mubr.f32.mxu0 0.0
      %9566 = vmatmul.mubr.f32.gmra.mrb[0].mxu0 %v9350
      %v9567 = vpop.f32.mrb[0].mxu0
      %v9568 = vadd.f32 0.0, %v9567
      %v9569 = vpop.f32.mrb[0].mxu0
      %9570 = vmatprep.mubr.f32.mxu0 0.0
      %9571 = vmatmul.mubr.f32.gmra.mrb[0].mxu0 %v9353
      %v9572 = vpop.f32.mrb[0].mxu0
      %v9573 = vadd.f32 0.0, %v9572
      %v9574 = vpop.f32.mrb[0].mxu0
      %9575 = vmatprep.mubr.f32.mxu0 0.0
      %9576 = vmatmul.mubr.f32.gmra.mrb[0].mxu0 %v9356
      %v9577 = vpop.f32.mrb[0].mxu0
      %v9578 = vadd.f32 0.0, %v9577
      %v9579 = vpop.f32.mrb[0].mxu0
      %9580 = vmatprep.mubr.f32.mxu0 0.0
      %9581 = vmatmul.mubr.f32.gmra.mrb[0].mxu0 %v9359
      %v9582 = vpop.f32.mrb[0].mxu0
      %v9583 = vadd.f32 0.0, %v9582
      %v9584 = vpop.f32.mrb[0].mxu0
      %9585 = vmatprep.mubr.f32.mxu0 0.0
      %9586 = vmatmul.mubr.f32.gmra.mrb[0].mxu0 %v9362
      %v9587 = vpop.f32.mrb[0].mxu0
      %v9588 = vadd.f32 0.0, %v9587
      %v9589 = vpop.f32.mrb[0].mxu0
      %9590 = vmatprep.mubr.f32.mxu0 0.0
      %9591 = vmatmul.mubr.f32.gmra.mrb[0].mxu0 %v9365
      %v9592 = vpop.f32.mrb[0].mxu0
      %v9593 = vadd.f32 0.0, %v9592
      %v9594 = vpop.f32.mrb[0].mxu0
      %9595 = vmatprep.mubr.f32.mxu0 0.0
      %9596 = vmatmul.mubr.f32.gmra.mrb[0].mxu0 %v9368
      %v9597 = vpop.f32.mrb[0].mxu0
      %v9598 = vadd.f32 0.0, %v9597
      %v9599 = vpop.f32.mrb[0].mxu0
      %9600 = vmatprep.mubr.f32.mxu0 0.0
      %9601 = vmatmul.mubr.f32.gmra.mrb[0].mxu0 %v9371
      %v9602 = vpop.f32.mrb[0].mxu0
      %v9603 = vadd.f32 0.0, %v9602
      %v9604 = vpop.f32.mrb[0].mxu0
      %9605 = vmatprep.mubr.f32.mxu0 0.0
      %9606 = vmatmul.mubr.f32.gmra.mrb[0].mxu0 %v9374
      %v9607 = vpop.f32.mrb[0].mxu0
      %v9608 = vadd.f32 0.0, %v9607
      %v9609 = vpop.f32.mrb[0].mxu0
      %9610 = vmatprep.mubr.f32.mxu0 0.0
      %9611 = vmatmul.mubr.f32.gmra.mrb[0].mxu0 %v9377
      %v9612 = vpop.f32.mrb[0].mxu0
      %v9613 = vadd.f32 0.0, %v9612
      %v9614 = vpop.f32.mrb[0].mxu0
      %9615 = vmatprep.mubr.f32.mxu0 0.0
      %9616 = vmatmul.mubr.f32.gmra.mrb[0].mxu0 %v9380
      %v9617 = vpop.f32.mrb[0].mxu0
      %v9618 = vadd.f32 0.0, %v9617
      %v9619 = vpop.f32.mrb[0].mxu0
      %9620 = vmatprep.mubr.f32.mxu0 0.0
      %9621 = vmatmul.mubr.f32.gmra.mrb[0].mxu0 %v9383
      %v9622 = vpop.f32.mrb[0].mxu0
      %v9623 = vadd.f32 0.0, %v9622
      %v9624 = vpop.f32.mrb[0].mxu0
      %9625 = vmatprep.mubr.f32.mxu0 0.0
      %9626 = vmatmul.mubr.f32.gmra.mrb[0].mxu0 %v9386
      %v9627 = vpop.f32.mrb[0].mxu0
      %v9628 = vadd.f32 0.0, %v9627
      %v9629 = vpop.f32.mrb[0].mxu0
      %9630 = vmatprep.mubr.f32.mxu0 0.0
      %9631 = vmatmul.mubr.f32.gmra.mrb[0].mxu0 %v9389
      %v9632 = vpop.f32.mrb[0].mxu0
      %v9633 = vadd.f32 0.0, %v9632
      %v9634 = vpop.f32.mrb[0].mxu0
      %9635 = vdwg.mxu0
      %v9636 = vadd.f32 %v9209, %v9458
      %v9637 = vadd.f32 %v9210, %v9463
      %v9638 = vadd.f32 %v9211, %v9468
      %v9639 = vadd.f32 %v9212, %v9473
      %v9640 = vadd.f32 %v9213, %v9478
      %v9641 = vadd.f32 %v9214, %v9483
      %v9642 = vadd.f32 %v9215, %v9488
      %v9643 = vadd.f32 %v9216, %v9493
      %v9644 = vadd.f32 %v9217, %v9498
      %v9645 = vadd.f32 %v9218, %v9503
      %v9646 = vadd.f32 %v9219, %v9508
      %v9647 = vadd.f32 %v9220, %v9513
      %v9648 = vadd.f32 %v9221, %v9518
      %v9649 = vadd.f32 %v9222, %v9523
      %v9650 = vadd.f32 %v9223, %v9528
      %v9651 = vadd.f32 %v9224, %v9533
      %v9652 = vadd.f32 %v9225, %v9538
      %v9653 = vadd.f32 %v9226, %v9543
      %v9654 = vadd.f32 %v9227, %v9548
      %v9655 = vadd.f32 %v9228, %v9553
      %v9656 = vadd.f32 %v9229, %v9558
      %v9657 = vadd.f32 %v9230, %v9563
      %v9658 = vadd.f32 %v9231, %v9568
      %v9659 = vadd.f32 %v9232, %v9573
      %v9660 = vadd.f32 %v9233, %v9578
      %v9661 = vadd.f32 %v9234, %v9583
      %v9662 = vadd.f32 %v9235, %v9588
      %v9663 = vadd.f32 %v9236, %v9593
      %v9664 = vadd.f32 %v9237, %v9598
      %v9665 = vadd.f32 %v9238, %v9603
      %v9666 = vadd.f32 %v9239, %v9608
      %v9667 = vadd.f32 %v9240, %v9613
      %v9668 = vadd.f32 %v9241, %v9618
      %v9669 = vadd.f32 %v9242, %v9623
      %v9670 = vadd.f32 %v9243, %v9628
      %v9671 = vadd.f32 %v9244, %v9633
      %v9672 = vlaneseq
      %v9673 = vshrl.u32 %v9672, 7
      %v9674 = vsub.s32 7, %v9673
      %v9675 = vrot.slane %v252, %v9674
      %v9676 = vadd.f32 %v9636, %v9675
      %v9677 = vadd.f32 %v9637, %v9675
      %v9678 = vadd.f32 %v9638, %v9675
      %v9679 = vadd.f32 %v9639, %v9675
      %v9680 = vadd.f32 %v9640, %v9675
      %v9681 = vadd.f32 %v9641, %v9675
      %v9682 = vadd.f32 %v9642, %v9675
      %v9683 = vadd.f32 %v9643, %v9675
      %v9684 = vadd.f32 %v9644, %v9675
      %v9685 = vadd.f32 %v9645, %v9675
      %v9686 = vadd.f32 %v9646, %v9675
      %v9687 = vadd.f32 %v9647, %v9675
      %v9688 = vadd.f32 %v9648, %v9675
      %v9689 = vadd.f32 %v9649, %v9675
      %v9690 = vadd.f32 %v9650, %v9675
      %v9691 = vadd.f32 %v9651, %v9675
      %v9692 = vadd.f32 %v9652, %v9675
      %v9693 = vadd.f32 %v9653, %v9675
      %v9694 = vadd.f32 %v9654, %v9675
      %v9695 = vadd.f32 %v9655, %v9675
      %v9696 = vadd.f32 %v9656, %v9675
      %v9697 = vadd.f32 %v9657, %v9675
      %v9698 = vadd.f32 %v9658, %v9675
      %v9699 = vadd.f32 %v9659, %v9675
      %v9700 = vadd.f32 %v9660, %v9675
      %v9701 = vadd.f32 %v9661, %v9675
      %v9702 = vadd.f32 %v9662, %v9675
      %v9703 = vadd.f32 %v9663, %v9675
      %v9704 = vadd.f32 %v9664, %v9675
      %v9705 = vadd.f32 %v9665, %v9675
      %v9706 = vadd.f32 %v9666, %v9675
      %v9707 = vadd.f32 %v9667, %v9675
      %v9708 = vadd.f32 %v9668, %v9675
      %v9709 = vadd.f32 %v9669, %v9675
      %v9710 = vadd.f32 %v9670, %v9675
      %v9711 = vadd.f32 %v9671, %v9675
      %v9712 = vmul.f32 %v9676, %v5079
      %v9713 = vmul.f32 %v9677, %v5084
      %v9714 = vmul.f32 %v9678, %v5089
      %v9715 = vmul.f32 %v9679, %v5094
      %v9716 = vmul.f32 %v9680, %v5099
      %v9717 = vmul.f32 %v9681, %v5104
      %v9718 = vmul.f32 %v9682, %v5109
      %v9719 = vmul.f32 %v9683, %v5114
      %v9720 = vmul.f32 %v9684, %v5119
      %v9721 = vmul.f32 %v9685, %v5124
      %v9722 = vmul.f32 %v9686, %v5129
      %v9723 = vmul.f32 %v9687, %v5134
      %v9724 = vmul.f32 %v9688, %v5139
      %v9725 = vmul.f32 %v9689, %v5144
      %v9726 = vmul.f32 %v9690, %v5149
      %v9727 = vmul.f32 %v9691, %v5154
      %v9728 = vmul.f32 %v9692, %v5159
      %v9729 = vmul.f32 %v9693, %v5164
      %v9730 = vmul.f32 %v9694, %v5169
      %v9731 = vmul.f32 %v9695, %v5174
      %v9732 = vmul.f32 %v9696, %v5179
      %v9733 = vmul.f32 %v9697, %v5184
      %v9734 = vmul.f32 %v9698, %v5189
      %v9735 = vmul.f32 %v9699, %v5194
      %v9736 = vmul.f32 %v9700, %v5199
      %v9737 = vmul.f32 %v9701, %v5204
      %v9738 = vmul.f32 %v9702, %v5209
      %v9739 = vmul.f32 %v9703, %v5214
      %v9740 = vmul.f32 %v9704, %v5219
      %v9741 = vmul.f32 %v9705, %v5224
      %v9742 = vmul.f32 %v9706, %v5229
      %v9743 = vmul.f32 %v9707, %v5234
      %v9744 = vmul.f32 %v9708, %v5239
      %v9745 = vmul.f32 %v9709, %v5244
      %v9746 = vmul.f32 %v9710, %v5249
      %v9747 = vmul.f32 %v9711, %v5254
      %v9748 = vsel %vm376, %v9712, 0.0
      %v9749 = vsel %vm376, %v9713, 0.0
      %v9750 = vadd.f32 %v9748, %v9749
      %v9751 = vsel %vm376, %v9714, 0.0
      %v9752 = vadd.f32 %v9750, %v9751
      %v9753 = vsel %vm376, %v9715, 0.0
      %v9754 = vadd.f32 %v9752, %v9753
      %v9755 = vsel %vm376, %v9716, 0.0
      %v9756 = vadd.f32 %v9754, %v9755
      %v9757 = vsel %vm376, %v9717, 0.0
      %v9758 = vadd.f32 %v9756, %v9757
      %v9759 = vsel %vm376, %v9718, 0.0
      %v9760 = vadd.f32 %v9758, %v9759
      %v9761 = vsel %vm376, %v9719, 0.0
      %v9762 = vadd.f32 %v9760, %v9761
      %v9763 = vsel %vm376, %v9720, 0.0
      %v9764 = vadd.f32 %v9762, %v9763
      %v9765 = vsel %vm376, %v9721, 0.0
      %v9766 = vadd.f32 %v9764, %v9765
      %v9767 = vsel %vm376, %v9722, 0.0
      %v9768 = vadd.f32 %v9766, %v9767
      %v9769 = vsel %vm376, %v9723, 0.0
      %v9770 = vadd.f32 %v9768, %v9769
      %v9771 = vsel %vm376, %v9724, 0.0
      %v9772 = vadd.f32 %v9770, %v9771
      %v9773 = vsel %vm376, %v9725, 0.0
      %v9774 = vadd.f32 %v9772, %v9773
      %v9775 = vsel %vm376, %v9726, 0.0
      %v9776 = vadd.f32 %v9774, %v9775
      %v9777 = vsel %vm376, %v9727, 0.0
      %v9778 = vadd.f32 %v9776, %v9777
      %v9779 = vsel %vm376, %v9728, 0.0
      %v9780 = vadd.f32 %v9778, %v9779
      %v9781 = vsel %vm376, %v9729, 0.0
      %v9782 = vadd.f32 %v9780, %v9781
      %v9783 = vsel %vm376, %v9730, 0.0
      %v9784 = vadd.f32 %v9782, %v9783
      %v9785 = vsel %vm376, %v9731, 0.0
      %v9786 = vadd.f32 %v9784, %v9785
      %v9787 = vsel %vm376, %v9732, 0.0
      %v9788 = vadd.f32 %v9786, %v9787
      %v9789 = vsel %vm376, %v9733, 0.0
      %v9790 = vadd.f32 %v9788, %v9789
      %v9791 = vsel %vm376, %v9734, 0.0
      %v9792 = vadd.f32 %v9790, %v9791
      %v9793 = vsel %vm376, %v9735, 0.0
      %v9794 = vadd.f32 %v9792, %v9793
      %v9795 = vsel %vm376, %v9736, 0.0
      %v9796 = vadd.f32 %v9794, %v9795
      %v9797 = vsel %vm376, %v9737, 0.0
      %v9798 = vadd.f32 %v9796, %v9797
      %v9799 = vsel %vm376, %v9738, 0.0
      %v9800 = vadd.f32 %v9798, %v9799
      %v9801 = vsel %vm376, %v9739, 0.0
      %v9802 = vadd.f32 %v9800, %v9801
      %v9803 = vsel %vm376, %v9740, 0.0
      %v9804 = vadd.f32 %v9802, %v9803
      %v9805 = vsel %vm376, %v9741, 0.0
      %v9806 = vadd.f32 %v9804, %v9805
      %v9807 = vsel %vm376, %v9742, 0.0
      %v9808 = vadd.f32 %v9806, %v9807
      %v9809 = vsel %vm376, %v9743, 0.0
      %v9810 = vadd.f32 %v9808, %v9809
      %v9811 = vsel %vm376, %v9744, 0.0
      %v9812 = vadd.f32 %v9810, %v9811
      %v9813 = vsel %vm376, %v9745, 0.0
      %v9814 = vadd.f32 %v9812, %v9813
      %v9815 = vsel %vm376, %v9746, 0.0
      %v9816 = vadd.f32 %v9814, %v9815
      %v9817 = vsel %vm376, %v9747, 0.0
      %v9818 = vadd.f32 %v9816, %v9817
      %v9819 = vrot.slane %v9818, 4
      %v9820 = vadd.f32 %v9818, %v9819
      %v9821 = vrot.slane %v9820, 2
      %v9822 = vadd.f32 %v9820, %v9821
      %v9823 = vrot.slane %v9822, 1
      %v9824 = vadd.f32 %v9822, %v9823
      %v9825 = vmul.f32 %v9712, %v9712
      %v9826 = vmul.f32 %v9713, %v9713
      %v9827 = vmul.f32 %v9714, %v9714
      %v9828 = vmul.f32 %v9715, %v9715
      %v9829 = vmul.f32 %v9716, %v9716
      %v9830 = vmul.f32 %v9717, %v9717
      %v9831 = vmul.f32 %v9718, %v9718
      %v9832 = vmul.f32 %v9719, %v9719
      %v9833 = vmul.f32 %v9720, %v9720
      %v9834 = vmul.f32 %v9721, %v9721
      %v9835 = vmul.f32 %v9722, %v9722
      %v9836 = vmul.f32 %v9723, %v9723
      %v9837 = vmul.f32 %v9724, %v9724
      %v9838 = vmul.f32 %v9725, %v9725
      %v9839 = vmul.f32 %v9726, %v9726
      %v9840 = vmul.f32 %v9727, %v9727
      %v9841 = vmul.f32 %v9728, %v9728
      %v9842 = vmul.f32 %v9729, %v9729
      %v9843 = vmul.f32 %v9730, %v9730
      %v9844 = vmul.f32 %v9731, %v9731
      %v9845 = vmul.f32 %v9732, %v9732
      %v9846 = vmul.f32 %v9733, %v9733
      %v9847 = vmul.f32 %v9734, %v9734
      %v9848 = vmul.f32 %v9735, %v9735
      %v9849 = vmul.f32 %v9736, %v9736
      %v9850 = vmul.f32 %v9737, %v9737
      %v9851 = vmul.f32 %v9738, %v9738
      %v9852 = vmul.f32 %v9739, %v9739
      %v9853 = vmul.f32 %v9740, %v9740
      %v9854 = vmul.f32 %v9741, %v9741
      %v9855 = vmul.f32 %v9742, %v9742
      %v9856 = vmul.f32 %v9743, %v9743
      %v9857 = vmul.f32 %v9744, %v9744
      %v9858 = vmul.f32 %v9745, %v9745
      %v9859 = vmul.f32 %v9746, %v9746
      %v9860 = vmul.f32 %v9747, %v9747
      %v9861 = vsel %vm376, %v9825, 0.0
      %v9862 = vsel %vm376, %v9826, 0.0
      %v9863 = vadd.f32 %v9861, %v9862
      %v9864 = vsel %vm376, %v9827, 0.0
      %v9865 = vadd.f32 %v9863, %v9864
      %v9866 = vsel %vm376, %v9828, 0.0
      %v9867 = vadd.f32 %v9865, %v9866
      %v9868 = vsel %vm376, %v9829, 0.0
      %v9869 = vadd.f32 %v9867, %v9868
      %v9870 = vsel %vm376, %v9830, 0.0
      %v9871 = vadd.f32 %v9869, %v9870
      %v9872 = vsel %vm376, %v9831, 0.0
      %v9873 = vadd.f32 %v9871, %v9872
      %v9874 = vsel %vm376, %v9832, 0.0
      %v9875 = vadd.f32 %v9873, %v9874
      %v9876 = vsel %vm376, %v9833, 0.0
      %v9877 = vadd.f32 %v9875, %v9876
      %v9878 = vsel %vm376, %v9834, 0.0
      %v9879 = vadd.f32 %v9877, %v9878
      %v9880 = vsel %vm376, %v9835, 0.0
      %v9881 = vadd.f32 %v9879, %v9880
      %v9882 = vsel %vm376, %v9836, 0.0
      %v9883 = vadd.f32 %v9881, %v9882
      %v9884 = vsel %vm376, %v9837, 0.0
      %v9885 = vadd.f32 %v9883, %v9884
      %v9886 = vsel %vm376, %v9838, 0.0
      %v9887 = vadd.f32 %v9885, %v9886
      %v9888 = vsel %vm376, %v9839, 0.0
      %v9889 = vadd.f32 %v9887, %v9888
      %v9890 = vsel %vm376, %v9840, 0.0
      %v9891 = vadd.f32 %v9889, %v9890
      %v9892 = vsel %vm376, %v9841, 0.0
      %v9893 = vadd.f32 %v9891, %v9892
      %v9894 = vsel %vm376, %v9842, 0.0
      %v9895 = vadd.f32 %v9893, %v9894
      %v9896 = vsel %vm376, %v9843, 0.0
      %v9897 = vadd.f32 %v9895, %v9896
      %v9898 = vsel %vm376, %v9844, 0.0
      %v9899 = vadd.f32 %v9897, %v9898
      %v9900 = vsel %vm376, %v9845, 0.0
      %v9901 = vadd.f32 %v9899, %v9900
      %v9902 = vsel %vm376, %v9846, 0.0
      %v9903 = vadd.f32 %v9901, %v9902
      %v9904 = vsel %vm376, %v9847, 0.0
      %v9905 = vadd.f32 %v9903, %v9904
      %v9906 = vsel %vm376, %v9848, 0.0
      %v9907 = vadd.f32 %v9905, %v9906
      %v9908 = vsel %vm376, %v9849, 0.0
      %v9909 = vadd.f32 %v9907, %v9908
      %v9910 = vsel %vm376, %v9850, 0.0
      %v9911 = vadd.f32 %v9909, %v9910
      %v9912 = vsel %vm376, %v9851, 0.0
      %v9913 = vadd.f32 %v9911, %v9912
      %v9914 = vsel %vm376, %v9852, 0.0
      %v9915 = vadd.f32 %v9913, %v9914
      %v9916 = vsel %vm376, %v9853, 0.0
      %v9917 = vadd.f32 %v9915, %v9916
      %v9918 = vsel %vm376, %v9854, 0.0
      %v9919 = vadd.f32 %v9917, %v9918
      %v9920 = vsel %vm376, %v9855, 0.0
      %v9921 = vadd.f32 %v9919, %v9920
      %v9922 = vsel %vm376, %v9856, 0.0
      %v9923 = vadd.f32 %v9921, %v9922
      %v9924 = vsel %vm376, %v9857, 0.0
      %v9925 = vadd.f32 %v9923, %v9924
      %v9926 = vsel %vm376, %v9858, 0.0
      %v9927 = vadd.f32 %v9925, %v9926
      %v9928 = vsel %vm376, %v9859, 0.0
      %v9929 = vadd.f32 %v9927, %v9928
      %v9930 = vsel %vm376, %v9860, 0.0
      %v9931 = vadd.f32 %v9929, %v9930
      %v9932 = vrot.slane %v9931, 4
      %v9933 = vadd.f32 %v9931, %v9932
      %v9934 = vrot.slane %v9933, 2
      %v9935 = vadd.f32 %v9933, %v9934
      %v9936 = vrot.slane %v9935, 1
      %v9937 = vadd.f32 %v9935, %v9936
      %v9938 = vmul.f32 %v9824, 0.00390625
      %v9939 = vmul.f32 %v9937, 0.00390625
      %v9940 = vmul.f32 %v9938, %v9938
      %v9941 = vsub.f32 %v9939, %v9940
      %v9942 = vadd.f32 %v9941, 1e-05
      %v9943 = vrsqrt.pop %v9942
      %v9944 = vsub.f32 %v9712, %v9938
      %v9945 = vsub.f32 %v9713, %v9938
      %v9946 = vsub.f32 %v9714, %v9938
      %v9947 = vsub.f32 %v9715, %v9938
      %v9948 = vsub.f32 %v9716, %v9938
      %v9949 = vsub.f32 %v9717, %v9938
      %v9950 = vsub.f32 %v9718, %v9938
      %v9951 = vsub.f32 %v9719, %v9938
      %v9952 = vsub.f32 %v9720, %v9938
      %v9953 = vsub.f32 %v9721, %v9938
      %v9954 = vsub.f32 %v9722, %v9938
      %v9955 = vsub.f32 %v9723, %v9938
      %v9956 = vsub.f32 %v9724, %v9938
      %v9957 = vsub.f32 %v9725, %v9938
      %v9958 = vsub.f32 %v9726, %v9938
      %v9959 = vsub.f32 %v9727, %v9938
      %v9960 = vsub.f32 %v9728, %v9938
      %v9961 = vsub.f32 %v9729, %v9938
      %v9962 = vsub.f32 %v9730, %v9938
      %v9963 = vsub.f32 %v9731, %v9938
      %v9964 = vsub.f32 %v9732, %v9938
      %v9965 = vsub.f32 %v9733, %v9938
      %v9966 = vsub.f32 %v9734, %v9938
      %v9967 = vsub.f32 %v9735, %v9938
      %v9968 = vsub.f32 %v9736, %v9938
      %v9969 = vsub.f32 %v9737, %v9938
      %v9970 = vsub.f32 %v9738, %v9938
      %v9971 = vsub.f32 %v9739, %v9938
      %v9972 = vsub.f32 %v9740, %v9938
      %v9973 = vsub.f32 %v9741, %v9938
      %v9974 = vsub.f32 %v9742, %v9938
      %v9975 = vsub.f32 %v9743, %v9938
      %v9976 = vsub.f32 %v9744, %v9938
      %v9977 = vsub.f32 %v9745, %v9938
      %v9978 = vsub.f32 %v9746, %v9938
      %v9979 = vsub.f32 %v9747, %v9938
      %v9980 = vmul.f32 %v9944, %v9943
      %v9981 = vmul.f32 %v9945, %v9943
      %v9982 = vmul.f32 %v9946, %v9943
      %v9983 = vmul.f32 %v9947, %v9943
      %v9984 = vmul.f32 %v9948, %v9943
      %v9985 = vmul.f32 %v9949, %v9943
      %v9986 = vmul.f32 %v9950, %v9943
      %v9987 = vmul.f32 %v9951, %v9943
      %v9988 = vmul.f32 %v9952, %v9943
      %v9989 = vmul.f32 %v9953, %v9943
      %v9990 = vmul.f32 %v9954, %v9943
      %v9991 = vmul.f32 %v9955, %v9943
      %v9992 = vmul.f32 %v9956, %v9943
      %v9993 = vmul.f32 %v9957, %v9943
      %v9994 = vmul.f32 %v9958, %v9943
      %v9995 = vmul.f32 %v9959, %v9943
      %v9996 = vmul.f32 %v9960, %v9943
      %v9997 = vmul.f32 %v9961, %v9943
      %v9998 = vmul.f32 %v9962, %v9943
      %v9999 = vmul.f32 %v9963, %v9943
      %v10000 = vmul.f32 %v9964, %v9943
      %v10001 = vmul.f32 %v9965, %v9943
      %v10002 = vmul.f32 %v9966, %v9943
      %v10003 = vmul.f32 %v9967, %v9943
      %v10004 = vmul.f32 %v9968, %v9943
      %v10005 = vmul.f32 %v9969, %v9943
      %v10006 = vmul.f32 %v9970, %v9943
      %v10007 = vmul.f32 %v9971, %v9943
      %v10008 = vmul.f32 %v9972, %v9943
      %v10009 = vmul.f32 %v9973, %v9943
      %v10010 = vmul.f32 %v9974, %v9943
      %v10011 = vmul.f32 %v9975, %v9943
      %v10012 = vmul.f32 %v9976, %v9943
      %v10013 = vmul.f32 %v9977, %v9943
      %v10014 = vmul.f32 %v9978, %v9943
      %v10015 = vmul.f32 %v9979, %v9943
      %v10016 = vlaneseq
      %v10017 = vshrl.u32 %v10016, 7
      %v10018 = vsub.s32 4, %v10017
      %v10019 = vrot.slane %v252, %v10018
      %v10020 = vmul.f32 %v9980, %v10019
      %v10021 = vmul.f32 %v9981, %v10019
      %v10022 = vmul.f32 %v9982, %v10019
      %v10023 = vmul.f32 %v9983, %v10019
      %v10024 = vmul.f32 %v9984, %v10019
      %v10025 = vmul.f32 %v9985, %v10019
      %v10026 = vmul.f32 %v9986, %v10019
      %v10027 = vmul.f32 %v9987, %v10019
      %v10028 = vmul.f32 %v9988, %v10019
      %v10029 = vmul.f32 %v9989, %v10019
      %v10030 = vmul.f32 %v9990, %v10019
      %v10031 = vmul.f32 %v9991, %v10019
      %v10032 = vmul.f32 %v9992, %v10019
      %v10033 = vmul.f32 %v9993, %v10019
      %v10034 = vmul.f32 %v9994, %v10019
      %v10035 = vmul.f32 %v9995, %v10019
      %v10036 = vmul.f32 %v9996, %v10019
      %v10037 = vmul.f32 %v9997, %v10019
      %v10038 = vmul.f32 %v9998, %v10019
      %v10039 = vmul.f32 %v9999, %v10019
      %v10040 = vmul.f32 %v10000, %v10019
      %v10041 = vmul.f32 %v10001, %v10019
      %v10042 = vmul.f32 %v10002, %v10019
      %v10043 = vmul.f32 %v10003, %v10019
      %v10044 = vmul.f32 %v10004, %v10019
      %v10045 = vmul.f32 %v10005, %v10019
      %v10046 = vmul.f32 %v10006, %v10019
      %v10047 = vmul.f32 %v10007, %v10019
      %v10048 = vmul.f32 %v10008, %v10019
      %v10049 = vmul.f32 %v10009, %v10019
      %v10050 = vmul.f32 %v10010, %v10019
      %v10051 = vmul.f32 %v10011, %v10019
      %v10052 = vmul.f32 %v10012, %v10019
      %v10053 = vmul.f32 %v10013, %v10019
      %v10054 = vmul.f32 %v10014, %v10019
      %v10055 = vmul.f32 %v10015, %v10019
      %v10056 = vlaneseq
      %v10057 = vshrl.u32 %v10056, 7
      %v10058 = vsub.s32 5, %v10057
      %v10059 = vrot.slane %v252, %v10058
      %v10060 = vadd.f32 %v10020, %v10059
      %v10061 = vadd.f32 %v10021, %v10059
      %v10062 = vadd.f32 %v10022, %v10059
      %v10063 = vadd.f32 %v10023, %v10059
      %v10064 = vadd.f32 %v10024, %v10059
      %v10065 = vadd.f32 %v10025, %v10059
      %v10066 = vadd.f32 %v10026, %v10059
      %v10067 = vadd.f32 %v10027, %v10059
      %v10068 = vadd.f32 %v10028, %v10059
      %v10069 = vadd.f32 %v10029, %v10059
      %v10070 = vadd.f32 %v10030, %v10059
      %v10071 = vadd.f32 %v10031, %v10059
      %v10072 = vadd.f32 %v10032, %v10059
      %v10073 = vadd.f32 %v10033, %v10059
      %v10074 = vadd.f32 %v10034, %v10059
      %v10075 = vadd.f32 %v10035, %v10059
      %v10076 = vadd.f32 %v10036, %v10059
      %v10077 = vadd.f32 %v10037, %v10059
      %v10078 = vadd.f32 %v10038, %v10059
      %v10079 = vadd.f32 %v10039, %v10059
      %v10080 = vadd.f32 %v10040, %v10059
      %v10081 = vadd.f32 %v10041, %v10059
      %v10082 = vadd.f32 %v10042, %v10059
      %v10083 = vadd.f32 %v10043, %v10059
      %v10084 = vadd.f32 %v10044, %v10059
      %v10085 = vadd.f32 %v10045, %v10059
      %v10086 = vadd.f32 %v10046, %v10059
      %v10087 = vadd.f32 %v10047, %v10059
      %v10088 = vadd.f32 %v10048, %v10059
      %v10089 = vadd.f32 %v10049, %v10059
      %v10090 = vadd.f32 %v10050, %v10059
      %v10091 = vadd.f32 %v10051, %v10059
      %v10092 = vadd.f32 %v10052, %v10059
      %v10093 = vadd.f32 %v10053, %v10059
      %v10094 = vadd.f32 %v10054, %v10059
      %v10095 = vadd.f32 %v10055, %v10059
      %v10096 = vmul.f32 %v10060, %v5079
      %v10097 = vmul.f32 %v10061, %v5084
      %v10098 = vmul.f32 %v10062, %v5089
      %v10099 = vmul.f32 %v10063, %v5094
      %v10100 = vmul.f32 %v10064, %v5099
      %v10101 = vmul.f32 %v10065, %v5104
      %v10102 = vmul.f32 %v10066, %v5109
      %v10103 = vmul.f32 %v10067, %v5114
      %v10104 = vmul.f32 %v10068, %v5119
      %v10105 = vmul.f32 %v10069, %v5124
      %v10106 = vmul.f32 %v10070, %v5129
      %v10107 = vmul.f32 %v10071, %v5134
      %v10108 = vmul.f32 %v10072, %v5139
      %v10109 = vmul.f32 %v10073, %v5144
      %v10110 = vmul.f32 %v10074, %v5149
      %v10111 = vmul.f32 %v10075, %v5154
      %v10112 = vmul.f32 %v10076, %v5159
      %v10113 = vmul.f32 %v10077, %v5164
      %v10114 = vmul.f32 %v10078, %v5169
      %v10115 = vmul.f32 %v10079, %v5174
      %v10116 = vmul.f32 %v10080, %v5179
      %v10117 = vmul.f32 %v10081, %v5184
      %v10118 = vmul.f32 %v10082, %v5189
      %v10119 = vmul.f32 %v10083, %v5194
      %v10120 = vmul.f32 %v10084, %v5199
      %v10121 = vmul.f32 %v10085, %v5204
      %v10122 = vmul.f32 %v10086, %v5209
      %v10123 = vmul.f32 %v10087, %v5214
      %v10124 = vmul.f32 %v10088, %v5219
      %v10125 = vmul.f32 %v10089, %v5224
      %v10126 = vmul.f32 %v10090, %v5229
      %v10127 = vmul.f32 %v10091, %v5234
      %v10128 = vmul.f32 %v10092, %v5239
      %v10129 = vmul.f32 %v10093, %v5244
      %v10130 = vmul.f32 %v10094, %v5249
      %v10131 = vmul.f32 %v10095, %v5254
      %10132 = vst.msk [vmem:[%s251] sm:$0xff] %vm376, %v10096
      %10133 = vst.msk [vmem:[%s251 + $0x8] sm:$0xff] %vm376, %v10097
      %10134 = vst.msk [vmem:[%s251 + $0x10] sm:$0xff] %vm376, %v10098
      %10135 = vst.msk [vmem:[%s251 + $0x18] sm:$0xff] %vm376, %v10099
      %10136 = vst.msk [vmem:[%s251 + $0x20] sm:$0xff] %vm376, %v10100
      %10137 = vst.msk [vmem:[%s251 + $0x28] sm:$0xff] %vm376, %v10101
      %10138 = vst.msk [vmem:[%s251 + $0x30] sm:$0xff] %vm376, %v10102
      %10139 = vst.msk [vmem:[%s251 + $0x38] sm:$0xff] %vm376, %v10103
      %10140 = vst.msk [vmem:[%s251 + $0x40] sm:$0xff] %vm376, %v10104
      %10141 = vst.msk [vmem:[%s251 + $0x48] sm:$0xff] %vm376, %v10105
      %10142 = vst.msk [vmem:[%s251 + $0x50] sm:$0xff] %vm376, %v10106
      %10143 = vst.msk [vmem:[%s251 + $0x58] sm:$0xff] %vm376, %v10107
      %10144 = vst.msk [vmem:[%s251 + $0x60] sm:$0xff] %vm376, %v10108
      %10145 = vst.msk [vmem:[%s251 + $0x68] sm:$0xff] %vm376, %v10109
      %10146 = vst.msk [vmem:[%s251 + $0x70] sm:$0xff] %vm376, %v10110
      %10147 = vst.msk [vmem:[%s251 + $0x78] sm:$0xff] %vm376, %v10111
      %10148 = vst.msk [vmem:[%s251 + $0x80] sm:$0xff] %vm376, %v10112
      %10149 = vst.msk [vmem:[%s251 + $0x88] sm:$0xff] %vm376, %v10113
      %10150 = vst.msk [vmem:[%s251 + $0x90] sm:$0xff] %vm376, %v10114
      %10151 = vst.msk [vmem:[%s251 + $0x98] sm:$0xff] %vm376, %v10115
      %10152 = vst.msk [vmem:[%s251 + $0xa0] sm:$0xff] %vm376, %v10116
      %10153 = vst.msk [vmem:[%s251 + $0xa8] sm:$0xff] %vm376, %v10117
      %10154 = vst.msk [vmem:[%s251 + $0xb0] sm:$0xff] %vm376, %v10118
      %10155 = vst.msk [vmem:[%s251 + $0xb8] sm:$0xff] %vm376, %v10119
      %10156 = vst.msk [vmem:[%s251 + $0xc0] sm:$0xff] %vm376, %v10120
      %10157 = vst.msk [vmem:[%s251 + $0xc8] sm:$0xff] %vm376, %v10121
      %10158 = vst.msk [vmem:[%s251 + $0xd0] sm:$0xff] %vm376, %v10122
      %10159 = vst.msk [vmem:[%s251 + $0xd8] sm:$0xff] %vm376, %v10123
      %10160 = vst.msk [vmem:[%s251 + $0xe0] sm:$0xff] %vm376, %v10124
      %10161 = vst.msk [vmem:[%s251 + $0xe8] sm:$0xff] %vm376, %v10125
      %10162 = vst.msk [vmem:[%s251 + $0xf0] sm:$0xff] %vm376, %v10126
      %10163 = vst.msk [vmem:[%s251 + $0xf8] sm:$0xff] %vm376, %v10127
      %10164 = vst.msk [vmem:[%s251 + $0x100] sm:$0xff] %vm376, %v10128
      %10165 = vst.msk [vmem:[%s251 + $0x108] sm:$0xff] %vm376, %v10129
      %10166 = vst.msk [vmem:[%s251 + $0x110] sm:$0xff] %vm376, %v10130
      %10167 = vst.msk [vmem:[%s251 + $0x118] sm:$0xff] %vm376, %v10131
      %p10168 = scmp.lt.s32.totalorder %s17, 1
      %s10169 = scalar_select %p10168, %s17, 1
      %s10170 = smul.addr %s10169, 36
      %s10171 = smul.addr %s10170, 8
      %s10172 = scalar_lea.vmem %s6, %s10171
      // Predicated region
      $region45: #{odefunc_forward.1} parent=43 // pred_check
        %p10173 = pneg %p166
      $region46: #{odefunc_forward.1} parent=43 // pred_check_branch
        %10175 = sbr.rel (%p10173) target = $region48
      $region47: #{odefunc_forward.1} parent=43 // pred_region
        _
      $region48: #{odefunc_forward.1} parent=43 // pred_fallthru
        _
    $region44: #{odefunc_forward.1} parent=5 // pred_fallthru
      _
    %p10176 = scmp.le.s32.totalorder 2, %s12
    // Predicated region
    $region49: #{odefunc_forward.1} parent=5 // pred_check
      %p10177 = pneg %p10176
    $region50: #{odefunc_forward.1} parent=5 // pred_check_branch
      %10179 = sbr.rel (%p10177) target = $region52
    $region51: #{odefunc_forward.1} parent=5 // pred_region
      %s10180 = ssub.s32 %s12, 2
      // Predicated region
      $region53: #{odefunc_forward.1} parent=51 // pred_check
        %p10181 = pneg %p172
      $region54: #{odefunc_forward.1} parent=51 // pred_check_branch
        %10183 = sbr.rel (%p10181) target = $region56
      $region55: #{odefunc_forward.1} parent=51 // pred_region
        %p10184 = scmp.lt.s32.totalorder %s18, 1
        %s10185 = scalar_select %p10184, %s18, 1
        %s10186 = smul.addr %s10185, 36
        %s10187 = smul.addr %s10186, 8
        %s10188 = scalar_lea.vmem %s6, %s10187
      $region56: #{odefunc_forward.1} parent=51 // pred_fallthru
        _
    $region52: #{odefunc_forward.1} parent=5 // pred_fallthru
      _
  $region6: #{odefunc_forward.1} parent=0 // loop_footer
    %s16 = sadd.s32 1, %s12
  $region7: #{odefunc_forward.1} parent=0 // loop_footer_branch
    %11 = sbr.rel target = $region3
  $region8: #{odefunc_forward.1} parent=0 // loop_exit
    _

</llo_original>
